<compile_context>
chip_gen: v5e
topology: v5e:2x2
jax: 0.10.0
libtpu: 0.0.40
codegen_flags: <defaults>
</compile_context>

<pallas_src>
import jax
import jax.numpy as jnp
from jax.experimental import pallas as pl
from jax.experimental.pallas import tpu as pltpu

BN_EPS = 1e-5

H_IN = 28                                  # input spatial size (MNIST-like)
ROW1 = 28                                  # lane row-stride before the pool
ROW2 = 9                                   # lane row-stride after the pool
N_PRE = 5                                  # conv layers before the pool
L_IMG = H_IN * ROW1                        # 784 flat pixels per image
SEG1 = L_IMG + N_PRE * (2 * ROW1 + 2)      # 1074: per-image lane stride pre-pool
L_POST = ROW2 * ROW2                       # 81: per-image lane stride post-pool
DEC_LEN = 2 * (ROW2 - 1) * ROW1 + 2 * (ROW2 - 1) + 1   # 465: decimation depth
BLOCK_BATCH = 8                            # images per grid step (lane-batched)

# (cin, cout) per conv block, in network order.
LAYER_CHANNELS = ((1, 8), (8, 16), (16, 16), (16, 16), (16, 8),
                  (8, 16), (16, 16), (16, 32))


# ----------------------------------------------------------------------------
# Fused kernel: whole forward pass for one lane-batched block of images.
# ----------------------------------------------------------------------------
def _make_kernel(batch):
    def kernel(x_ref, wslab_ref, bslab_ref, w8_ref, psel_ref, gmat_ref, o_ref):
        wslab = wslab_ref[...]                       # (8, 32, 144) packed taps
        bslab = bslab_ref[...]                       # (8, 32, 1) folded biases

        def conv3x3_bn_relu(a, li, row):
            # a: (Cin, L) activation, per-image lane stride `row` (valid-window
            # scheme: lanes outside the shrinking valid window hold harmless
            # finite garbage that no valid output ever reads).
            cin, cout = LAYER_CHANNELS[li]
            l_out = a.shape[1] - (2 * row + 2)
            taps = [a[:, dy * row + dx: dy * row + dx + l_out]
                    for dy in range(3) for dx in range(3)]
            stacked = jnp.concatenate(taps, axis=0)          # (9*cin, l_out)
            w = wslab[li][:cout, :9 * cin]                   # (cout, 9*cin)
            b = bslab[li][:cout]                             # (cout, 1)
            y = jnp.dot(w, stacked, preferred_element_type=jnp.float32)
            return jnp.maximum(y + b, 0.0)

        a = x_ref[0].astype(jnp.float32)             # (1, batch*1074)
        for li in range(N_PRE):                      # 5 pre-pool conv blocks
            a = conv3x3_bn_relu(a, li, ROW1)         # -> (8, batch*1074 - 290)

        # fused 2x2 / stride-2 maxpool: 4-tap elementwise max, then a per-image
        # 0/1 decimation matmul repacking stride-28 -> dense stride-9.
        lm = a.shape[1] - (ROW1 + 1)
        m4 = jnp.maximum(
            jnp.maximum(a[:, 0:lm], a[:, 1:1 + lm]),
            jnp.maximum(a[:, ROW1:ROW1 + lm], a[:, ROW1 + 1:ROW1 + 1 + lm]))
        psel = psel_ref[...]                         # (465, 81)
        a = jnp.concatenate(
            [jnp.dot(m4[:, bi * SEG1: bi * SEG1 + DEC_LEN], psel,
                     preferred_element_type=jnp.float32)
             for bi in range(batch)], axis=1)        # (8, batch*81)

        for li in range(N_PRE, 8):                   # 3 post-pool conv blocks
            a = conv3x3_bn_relu(a, li, ROW2)         # -> (32, batch*81 - 60)

        # head: GAP over each image's valid 3x3 window, then 1x1 conv (linear
        # ops commute), then log_softmax over the 10 classes.
        feat = jnp.dot(a, gmat_ref[...],
                       preferred_element_type=jnp.float32)           # (32, batch)
        logits = jnp.dot(w8_ref[...], feat,
                         preferred_element_type=jnp.float32)         # (10, batch)
        z = logits - jnp.max(logits, axis=0, keepdims=True)
        lse = jnp.log(jnp.sum(jnp.exp(z), axis=0, keepdims=True))
        o_ref[0] = (z - lse).astype(o_ref.dtype)     # lane-major (10, batch)
    return kernel


# ----------------------------------------------------------------------------
# Wrapper: one pallas_call for the whole (padded) batch.
# ----------------------------------------------------------------------------
@jax.jit
def net_forward(x_nchw, params):
    # TODO(synk): eval-mode semantics only (BN running stats folded; Dropout is
    # identity); training-mode batch statistics / dropout masks not implemented.
    n = x_nchw.shape[0]
    bb = max(1, min(BLOCK_BATCH, n))
    n_pad = -(-n // bb) * bb
    n_blocks = n_pad // bb

    # channels-first, flattened spatial, per-image tail padding so every tap
    # slice in the kernel is a fixed contiguous lane slice; then the bb images
    # of each grid block are laid side by side along the lane axis.
    xf = x_nchw.reshape(n, 1, L_IMG).astype(jnp.float32)
    xf = jnp.pad(xf, ((0, n_pad - n), (0, 0), (0, SEG1 - L_IMG)))
    xf = xf.reshape(n_blocks, bb, 1, SEG1).transpose(0, 2, 1, 3)
    xf = xf.reshape(n_blocks, 1, bb * SEG1)

    # constant pool-decimation matrix: column j = po*9+qo selects source lane
    # (2*po)*28 + 2*qo of the per-image 4-tap max.
    j = jnp.arange(L_POST)
    src = 2 * (j // ROW2) * ROW1 + 2 * (j % ROW2)
    psel = (jnp.arange(DEC_LEN)[:, None] == src[None, :]).astype(jnp.float32)

    # constant batched GAP matrix: gmat[p, bi] = 1/9 on the 9 valid lanes of
    # image bi's final 3x3 map (per-image stride 81), 0 elsewhere.
    l_final = bb * L_POST - 3 * (2 * ROW2 + 2)        # bb*81 - 60
    p = jnp.arange(l_final)
    q = p % L_POST
    valid = ((q // ROW2) < 3) & ((q % ROW2) < 3)
    gmat = jnp.where(valid[:, None]
                     & ((p[:, None] // L_POST) == jnp.arange(bb)[None, :]),
                     jnp.float32(1.0 / 9.0), jnp.float32(0.0))

    w_slab, b_slab, w8 = params["w_slab"], params["b_slab"], params["w8"]

    out = pl.pallas_call(
        _make_kernel(bb),
        out_shape=jax.ShapeDtypeStruct((n_blocks, 10, bb), jnp.float32),
        grid=(n_blocks,),
        in_specs=[
            pl.BlockSpec((1, 1, bb * SEG1), lambda i: (i, 0, 0)),
            pl.BlockSpec(w_slab.shape, lambda i: (0, 0, 0)),
            pl.BlockSpec(b_slab.shape, lambda i: (0, 0, 0)),
            pl.BlockSpec(w8.shape, lambda i: (0, 0)),
            pl.BlockSpec(psel.shape, lambda i: (0, 0)),
            pl.BlockSpec(gmat.shape, lambda i: (0, 0)),
        ],
        out_specs=pl.BlockSpec((1, 10, bb), lambda i: (i, 0, 0)),
        compiler_params=pltpu.CompilerParams(
            dimension_semantics=("parallel",),
            vmem_limit_bytes=32 * 1024 * 1024),
    )(xf, w_slab, b_slab, w8, psel, gmat)

    return out.transpose(0, 2, 1).reshape(n_pad, 10)[:n]


# ----------------------------------------------------------------------------
# Parameters (deterministic; PyTorch-default BN stats, eval mode, BN pre-folded)
# ----------------------------------------------------------------------------
def fold_bn(conv_w, conv_b, gamma, beta, running_mean, running_var, eps=BN_EPS):
    s = gamma / jnp.sqrt(running_var + eps)
    return conv_w * s[:, None, None, None], (conv_b - running_mean) * s + beta


def make_params(key):
    layers = []
    w_slab = jnp.zeros((8, 32, 144), jnp.float32)
    b_slab = jnp.zeros((8, 32, 1), jnp.float32)
    for li, (cin, cout) in enumerate(LAYER_CHANNELS):
        key, kw, kb = jax.random.split(key, 3)
        w = 0.1 * jax.random.normal(kw, (cout, cin, 3, 3), dtype=jnp.float32)
        conv_b = 0.01 * jax.random.normal(kb, (cout,), dtype=jnp.float32)
        gamma = jnp.ones((cout,), jnp.float32)
        beta = jnp.zeros((cout,), jnp.float32)
        rmean = jnp.zeros((cout,), jnp.float32)
        rvar = jnp.ones((cout,), jnp.float32)
        wf, bf = fold_bn(w, conv_b, gamma, beta, rmean, rvar)
        layers.append((wf, bf))
        # (Cout,Cin,3,3) -> (Cout, 9*Cin) with contraction index (dy*3+dx)*Cin+c,
        # matching the in-kernel tap stacking order.
        wp = jnp.transpose(wf, (0, 2, 3, 1)).reshape(cout, 9 * cin)
        w_slab = w_slab.at[li, :cout, :9 * cin].set(wp)
        b_slab = b_slab.at[li, :cout, 0].set(bf)
    key, kw8 = jax.random.split(key)
    w8 = 0.1 * jax.random.normal(kw8, (10, 32), dtype=jnp.float32)
    return {"w_slab": w_slab, "b_slab": b_slab, "w8": w8, "layers": layers}


# ----------------------------------------------------------------------------
# Pure-XLA reference (same folded params) for correctness checking.
# ----------------------------------------------------------------------------
def _ref_conv_block(x, w, b):
    y = jax.lax.conv_general_dilated(
        x, w, window_strides=(1, 1), padding="VALID",
        dimension_numbers=("NCHW", "OIHW", "NCHW"),
        precision=jax.lax.Precision.HIGHEST)
    return jnp.maximum(y + b.reshape(1, -1, 1, 1), 0.0)


def net_forward_reference(x, params):
    for w, b in params["layers"][:N_PRE]:
        x = _ref_conv_block(x, w, b)
    x = jax.lax.reduce_window(x, -jnp.inf, jax.lax.max,
                              (1, 1, 2, 2), (1, 1, 2, 2), "VALID")
    for w, b in params["layers"][N_PRE:]:
        x = _ref_conv_block(x, w, b)
    logits = jnp.einsum("oc,nchw->no", params["w8"], x,
                        precision=jax.lax.Precision.HIGHEST)
    logits = logits / (x.shape[2] * x.shape[3])
    return jax.nn.log_softmax(logits, axis=-1)


if __name__ == "__main__":
    key = jax.random.PRNGKey(0)
    kx, kp = jax.random.split(key)
    # MNIST-like input: batch=2, 1 channel, 28x28 (NCHW, as in PyTorch)
    x = jax.random.normal(kx, (2, 1, 28, 28), dtype=jnp.float32)
    params = make_params(kp)

    out = jax.block_until_ready(net_forward(x, params))
    assert out.shape == (2, 10), out.shape
    # log_softmax rows should sum to ~1 in prob space
    assert bool(jnp.all(jnp.abs(jnp.sum(jnp.exp(out), axis=1) - 1.0) < 1e-3))
    # match the pure-XLA reference
    ref = net_forward_reference(x, params)
    assert bool(jnp.allclose(out, ref, atol=3e-2, rtol=3e-2)), \
        float(jnp.max(jnp.abs(out - ref)))
    print("KERNEL_OK")
</pallas_src>

<mosaic_0001>
module attributes {stable_mosaic.version = 11 : i64} {
  func.func @kernel(%arg0: i32, %arg1: memref<1x1x2148xf32, #tpu.memory_space<vmem>>, %arg2: memref<8x32x144xf32, #tpu.memory_space<vmem>>, %arg3: memref<8x32x1xf32, #tpu.memory_space<vmem>>, %arg4: memref<10x32xf32, #tpu.memory_space<vmem>>, %arg5: memref<465x81xf32, #tpu.memory_space<vmem>>, %arg6: memref<102x2xf32, #tpu.memory_space<vmem>>, %arg7: memref<1x10x2xf32, #tpu.memory_space<vmem>>) attributes {dimension_semantics = [#tpu.dimension_semantics<parallel>], iteration_bounds = array<i64: 1>, scalar_prefetch = 0 : i64, scratch_operands = 0 : i64, tpu.core_type = #tpu.core_type<tc>, window_params = [{transform_indices = @transform_0, window_bounds = array<i64: 1, 1, 2148>}, {pipeline_mode = #tpu.pipeline_mode<synchronous>, transform_indices = @transform_1, window_bounds = array<i64: 8, 32, 144>}, {pipeline_mode = #tpu.pipeline_mode<synchronous>, transform_indices = @transform_2, window_bounds = array<i64: 8, 32, 1>}, {pipeline_mode = #tpu.pipeline_mode<synchronous>, transform_indices = @transform_3, window_bounds = array<i64: 10, 32>}, {pipeline_mode = #tpu.pipeline_mode<synchronous>, transform_indices = @transform_4, window_bounds = array<i64: 465, 81>}, {pipeline_mode = #tpu.pipeline_mode<synchronous>, transform_indices = @transform_5, window_bounds = array<i64: 102, 2>}, {transform_indices = @transform_6, window_bounds = array<i64: 1, 10, 2>}]} {
    %c0 = arith.constant 0 : index
    %c0_0 = arith.constant 0 : index
    %c0_1 = arith.constant 0 : index
    %0 = vector.load %arg2[%c0, %c0_0, %c0_1] : memref<8x32x144xf32, #tpu.memory_space<vmem>>, vector<8x32x144xf32>
    %c0_2 = arith.constant 0 : index
    %c0_3 = arith.constant 0 : index
    %c0_4 = arith.constant 0 : index
    %1 = vector.load %arg3[%c0_2, %c0_3, %c0_4] : memref<8x32x1xf32, #tpu.memory_space<vmem>>, vector<8x32x1xf32>
    %c0_5 = arith.constant 0 : index
    %c0_6 = arith.constant 0 : index
    %c0_7 = arith.constant 0 : index
    %2 = vector.load %arg1[%c0_5, %c0_6, %c0_7] : memref<1x1x2148xf32, #tpu.memory_space<vmem>>, vector<1x1x2148xf32>
    %3 = vector.shape_cast %2 : vector<1x1x2148xf32> to vector<1x2148xf32>
    %4 = vector.extract_strided_slice %3 {offsets = [0, 0], sizes = [1, 2090], strides = [1, 1]} : vector<1x2148xf32> to vector<1x2090xf32>
    %5 = vector.extract_strided_slice %3 {offsets = [0, 1], sizes = [1, 2090], strides = [1, 1]} : vector<1x2148xf32> to vector<1x2090xf32>
    %6 = vector.extract_strided_slice %3 {offsets = [0, 2], sizes = [1, 2090], strides = [1, 1]} : vector<1x2148xf32> to vector<1x2090xf32>
    %7 = vector.extract_strided_slice %3 {offsets = [0, 28], sizes = [1, 2090], strides = [1, 1]} : vector<1x2148xf32> to vector<1x2090xf32>
    %8 = vector.extract_strided_slice %3 {offsets = [0, 29], sizes = [1, 2090], strides = [1, 1]} : vector<1x2148xf32> to vector<1x2090xf32>
    %9 = vector.extract_strided_slice %3 {offsets = [0, 30], sizes = [1, 2090], strides = [1, 1]} : vector<1x2148xf32> to vector<1x2090xf32>
    %10 = vector.extract_strided_slice %3 {offsets = [0, 56], sizes = [1, 2090], strides = [1, 1]} : vector<1x2148xf32> to vector<1x2090xf32>
    %11 = vector.extract_strided_slice %3 {offsets = [0, 57], sizes = [1, 2090], strides = [1, 1]} : vector<1x2148xf32> to vector<1x2090xf32>
    %12 = vector.extract_strided_slice %3 {offsets = [0, 58], sizes = [1, 2090], strides = [1, 1]} : vector<1x2148xf32> to vector<1x2090xf32>
    %13 = tpu.concatenate %4, %5, %6, %7, %8, %9, %10, %11, %12 in 0 : vector<1x2090xf32>, vector<1x2090xf32>, vector<1x2090xf32>, vector<1x2090xf32>, vector<1x2090xf32>, vector<1x2090xf32>, vector<1x2090xf32>, vector<1x2090xf32>, vector<1x2090xf32> -> vector<9x2090xf32>
    %14 = vector.extract_strided_slice %0 {offsets = [0, 0, 0], sizes = [1, 32, 144], strides = [1, 1, 1]} : vector<8x32x144xf32> to vector<1x32x144xf32>
    %15 = vector.shape_cast %14 : vector<1x32x144xf32> to vector<32x144xf32>
    %16 = vector.extract_strided_slice %15 {offsets = [0, 0], sizes = [8, 9], strides = [1, 1]} : vector<32x144xf32> to vector<8x9xf32>
    %17 = vector.extract_strided_slice %1 {offsets = [0, 0, 0], sizes = [1, 32, 1], strides = [1, 1, 1]} : vector<8x32x1xf32> to vector<1x32x1xf32>
    %18 = vector.shape_cast %17 : vector<1x32x1xf32> to vector<32x1xf32>
    %19 = vector.extract_strided_slice %18 {offsets = [0, 0], sizes = [8, 1], strides = [1, 1]} : vector<32x1xf32> to vector<8x1xf32>
    %cst = arith.constant dense<0.000000e+00> : vector<8x2090xf32>
    %20 = tpu.matmul %16, %13, %cst {dimension_numbers = #tpu.dot_dimension_numbers<[1], [0], [0], [1], [0, 0, 1, 1], [], []>} : vector<8x9xf32>, vector<9x2090xf32>, vector<8x2090xf32> -> vector<8x2090xf32>
    %21 = vector.broadcast %19 : vector<8x1xf32> to vector<8x2090xf32>
    %22 = arith.addf %20, %21 : vector<8x2090xf32>
    %cst_8 = arith.constant 0.000000e+00 : f32
    %23 = vector.broadcast %cst_8 : f32 to vector<8x2090xf32>
    %24 = arith.maximumf %22, %23 : vector<8x2090xf32>
    %25 = vector.extract_strided_slice %24 {offsets = [0, 0], sizes = [8, 2032], strides = [1, 1]} : vector<8x2090xf32> to vector<8x2032xf32>
    %26 = vector.extract_strided_slice %24 {offsets = [0, 1], sizes = [8, 2032], strides = [1, 1]} : vector<8x2090xf32> to vector<8x2032xf32>
    %27 = vector.extract_strided_slice %24 {offsets = [0, 2], sizes = [8, 2032], strides = [1, 1]} : vector<8x2090xf32> to vector<8x2032xf32>
    %28 = vector.extract_strided_slice %24 {offsets = [0, 28], sizes = [8, 2032], strides = [1, 1]} : vector<8x2090xf32> to vector<8x2032xf32>
    %29 = vector.extract_strided_slice %24 {offsets = [0, 29], sizes = [8, 2032], strides = [1, 1]} : vector<8x2090xf32> to vector<8x2032xf32>
    %30 = vector.extract_strided_slice %24 {offsets = [0, 30], sizes = [8, 2032], strides = [1, 1]} : vector<8x2090xf32> to vector<8x2032xf32>
    %31 = vector.extract_strided_slice %24 {offsets = [0, 56], sizes = [8, 2032], strides = [1, 1]} : vector<8x2090xf32> to vector<8x2032xf32>
    %32 = vector.extract_strided_slice %24 {offsets = [0, 57], sizes = [8, 2032], strides = [1, 1]} : vector<8x2090xf32> to vector<8x2032xf32>
    %33 = vector.extract_strided_slice %24 {offsets = [0, 58], sizes = [8, 2032], strides = [1, 1]} : vector<8x2090xf32> to vector<8x2032xf32>
    %34 = tpu.concatenate %25, %26, %27, %28, %29, %30, %31, %32, %33 in 0 : vector<8x2032xf32>, vector<8x2032xf32>, vector<8x2032xf32>, vector<8x2032xf32>, vector<8x2032xf32>, vector<8x2032xf32>, vector<8x2032xf32>, vector<8x2032xf32>, vector<8x2032xf32> -> vector<72x2032xf32>
    %35 = vector.extract_strided_slice %0 {offsets = [1, 0, 0], sizes = [1, 32, 144], strides = [1, 1, 1]} : vector<8x32x144xf32> to vector<1x32x144xf32>
    %36 = vector.shape_cast %35 : vector<1x32x144xf32> to vector<32x144xf32>
    %37 = vector.extract_strided_slice %36 {offsets = [0, 0], sizes = [16, 72], strides = [1, 1]} : vector<32x144xf32> to vector<16x72xf32>
    %38 = vector.extract_strided_slice %1 {offsets = [1, 0, 0], sizes = [1, 32, 1], strides = [1, 1, 1]} : vector<8x32x1xf32> to vector<1x32x1xf32>
    %39 = vector.shape_cast %38 : vector<1x32x1xf32> to vector<32x1xf32>
    %40 = vector.extract_strided_slice %39 {offsets = [0, 0], sizes = [16, 1], strides = [1, 1]} : vector<32x1xf32> to vector<16x1xf32>
    %cst_9 = arith.constant dense<0.000000e+00> : vector<16x2032xf32>
    %41 = tpu.matmul %37, %34, %cst_9 {dimension_numbers = #tpu.dot_dimension_numbers<[1], [0], [0], [1], [0, 0, 1, 1], [], []>} : vector<16x72xf32>, vector<72x2032xf32>, vector<16x2032xf32> -> vector<16x2032xf32>
    %42 = vector.broadcast %40 : vector<16x1xf32> to vector<16x2032xf32>
    %43 = arith.addf %41, %42 : vector<16x2032xf32>
    %cst_10 = arith.constant 0.000000e+00 : f32
    %44 = vector.broadcast %cst_10 : f32 to vector<16x2032xf32>
    %45 = arith.maximumf %43, %44 : vector<16x2032xf32>
    %46 = vector.extract_strided_slice %45 {offsets = [0, 0], sizes = [16, 1974], strides = [1, 1]} : vector<16x2032xf32> to vector<16x1974xf32>
    %47 = vector.extract_strided_slice %45 {offsets = [0, 1], sizes = [16, 1974], strides = [1, 1]} : vector<16x2032xf32> to vector<16x1974xf32>
    %48 = vector.extract_strided_slice %45 {offsets = [0, 2], sizes = [16, 1974], strides = [1, 1]} : vector<16x2032xf32> to vector<16x1974xf32>
    %49 = vector.extract_strided_slice %45 {offsets = [0, 28], sizes = [16, 1974], strides = [1, 1]} : vector<16x2032xf32> to vector<16x1974xf32>
    %50 = vector.extract_strided_slice %45 {offsets = [0, 29], sizes = [16, 1974], strides = [1, 1]} : vector<16x2032xf32> to vector<16x1974xf32>
    %51 = vector.extract_strided_slice %45 {offsets = [0, 30], sizes = [16, 1974], strides = [1, 1]} : vector<16x2032xf32> to vector<16x1974xf32>
    %52 = vector.extract_strided_slice %45 {offsets = [0, 56], sizes = [16, 1974], strides = [1, 1]} : vector<16x2032xf32> to vector<16x1974xf32>
    %53 = vector.extract_strided_slice %45 {offsets = [0, 57], sizes = [16, 1974], strides = [1, 1]} : vector<16x2032xf32> to vector<16x1974xf32>
    %54 = vector.extract_strided_slice %45 {offsets = [0, 58], sizes = [16, 1974], strides = [1, 1]} : vector<16x2032xf32> to vector<16x1974xf32>
    %55 = tpu.concatenate %46, %47, %48, %49, %50, %51, %52, %53, %54 in 0 : vector<16x1974xf32>, vector<16x1974xf32>, vector<16x1974xf32>, vector<16x1974xf32>, vector<16x1974xf32>, vector<16x1974xf32>, vector<16x1974xf32>, vector<16x1974xf32>, vector<16x1974xf32> -> vector<144x1974xf32>
    %56 = vector.extract_strided_slice %0 {offsets = [2, 0, 0], sizes = [1, 32, 144], strides = [1, 1, 1]} : vector<8x32x144xf32> to vector<1x32x144xf32>
    %57 = vector.shape_cast %56 : vector<1x32x144xf32> to vector<32x144xf32>
    %58 = vector.extract_strided_slice %57 {offsets = [0, 0], sizes = [16, 144], strides = [1, 1]} : vector<32x144xf32> to vector<16x144xf32>
    %59 = vector.extract_strided_slice %1 {offsets = [2, 0, 0], sizes = [1, 32, 1], strides = [1, 1, 1]} : vector<8x32x1xf32> to vector<1x32x1xf32>
    %60 = vector.shape_cast %59 : vector<1x32x1xf32> to vector<32x1xf32>
    %61 = vector.extract_strided_slice %60 {offsets = [0, 0], sizes = [16, 1], strides = [1, 1]} : vector<32x1xf32> to vector<16x1xf32>
    %cst_11 = arith.constant dense<0.000000e+00> : vector<16x1974xf32>
    %62 = tpu.matmul %58, %55, %cst_11 {dimension_numbers = #tpu.dot_dimension_numbers<[1], [0], [0], [1], [0, 0, 1, 1], [], []>} : vector<16x144xf32>, vector<144x1974xf32>, vector<16x1974xf32> -> vector<16x1974xf32>
    %63 = vector.broadcast %61 : vector<16x1xf32> to vector<16x1974xf32>
    %64 = arith.addf %62, %63 : vector<16x1974xf32>
    %cst_12 = arith.constant 0.000000e+00 : f32
    %65 = vector.broadcast %cst_12 : f32 to vector<16x1974xf32>
    %66 = arith.maximumf %64, %65 : vector<16x1974xf32>
    %67 = vector.extract_strided_slice %66 {offsets = [0, 0], sizes = [16, 1916], strides = [1, 1]} : vector<16x1974xf32> to vector<16x1916xf32>
    %68 = vector.extract_strided_slice %66 {offsets = [0, 1], sizes = [16, 1916], strides = [1, 1]} : vector<16x1974xf32> to vector<16x1916xf32>
    %69 = vector.extract_strided_slice %66 {offsets = [0, 2], sizes = [16, 1916], strides = [1, 1]} : vector<16x1974xf32> to vector<16x1916xf32>
    %70 = vector.extract_strided_slice %66 {offsets = [0, 28], sizes = [16, 1916], strides = [1, 1]} : vector<16x1974xf32> to vector<16x1916xf32>
    %71 = vector.extract_strided_slice %66 {offsets = [0, 29], sizes = [16, 1916], strides = [1, 1]} : vector<16x1974xf32> to vector<16x1916xf32>
    %72 = vector.extract_strided_slice %66 {offsets = [0, 30], sizes = [16, 1916], strides = [1, 1]} : vector<16x1974xf32> to vector<16x1916xf32>
    %73 = vector.extract_strided_slice %66 {offsets = [0, 56], sizes = [16, 1916], strides = [1, 1]} : vector<16x1974xf32> to vector<16x1916xf32>
    %74 = vector.extract_strided_slice %66 {offsets = [0, 57], sizes = [16, 1916], strides = [1, 1]} : vector<16x1974xf32> to vector<16x1916xf32>
    %75 = vector.extract_strided_slice %66 {offsets = [0, 58], sizes = [16, 1916], strides = [1, 1]} : vector<16x1974xf32> to vector<16x1916xf32>
    %76 = tpu.concatenate %67, %68, %69, %70, %71, %72, %73, %74, %75 in 0 : vector<16x1916xf32>, vector<16x1916xf32>, vector<16x1916xf32>, vector<16x1916xf32>, vector<16x1916xf32>, vector<16x1916xf32>, vector<16x1916xf32>, vector<16x1916xf32>, vector<16x1916xf32> -> vector<144x1916xf32>
    %77 = vector.extract_strided_slice %0 {offsets = [3, 0, 0], sizes = [1, 32, 144], strides = [1, 1, 1]} : vector<8x32x144xf32> to vector<1x32x144xf32>
    %78 = vector.shape_cast %77 : vector<1x32x144xf32> to vector<32x144xf32>
    %79 = vector.extract_strided_slice %78 {offsets = [0, 0], sizes = [16, 144], strides = [1, 1]} : vector<32x144xf32> to vector<16x144xf32>
    %80 = vector.extract_strided_slice %1 {offsets = [3, 0, 0], sizes = [1, 32, 1], strides = [1, 1, 1]} : vector<8x32x1xf32> to vector<1x32x1xf32>
    %81 = vector.shape_cast %80 : vector<1x32x1xf32> to vector<32x1xf32>
    %82 = vector.extract_strided_slice %81 {offsets = [0, 0], sizes = [16, 1], strides = [1, 1]} : vector<32x1xf32> to vector<16x1xf32>
    %cst_13 = arith.constant dense<0.000000e+00> : vector<16x1916xf32>
    %83 = tpu.matmul %79, %76, %cst_13 {dimension_numbers = #tpu.dot_dimension_numbers<[1], [0], [0], [1], [0, 0, 1, 1], [], []>} : vector<16x144xf32>, vector<144x1916xf32>, vector<16x1916xf32> -> vector<16x1916xf32>
    %84 = vector.broadcast %82 : vector<16x1xf32> to vector<16x1916xf32>
    %85 = arith.addf %83, %84 : vector<16x1916xf32>
    %cst_14 = arith.constant 0.000000e+00 : f32
    %86 = vector.broadcast %cst_14 : f32 to vector<16x1916xf32>
    %87 = arith.maximumf %85, %86 : vector<16x1916xf32>
    %88 = vector.extract_strided_slice %87 {offsets = [0, 0], sizes = [16, 1858], strides = [1, 1]} : vector<16x1916xf32> to vector<16x1858xf32>
    %89 = vector.extract_strided_slice %87 {offsets = [0, 1], sizes = [16, 1858], strides = [1, 1]} : vector<16x1916xf32> to vector<16x1858xf32>
    %90 = vector.extract_strided_slice %87 {offsets = [0, 2], sizes = [16, 1858], strides = [1, 1]} : vector<16x1916xf32> to vector<16x1858xf32>
    %91 = vector.extract_strided_slice %87 {offsets = [0, 28], sizes = [16, 1858], strides = [1, 1]} : vector<16x1916xf32> to vector<16x1858xf32>
    %92 = vector.extract_strided_slice %87 {offsets = [0, 29], sizes = [16, 1858], strides = [1, 1]} : vector<16x1916xf32> to vector<16x1858xf32>
    %93 = vector.extract_strided_slice %87 {offsets = [0, 30], sizes = [16, 1858], strides = [1, 1]} : vector<16x1916xf32> to vector<16x1858xf32>
    %94 = vector.extract_strided_slice %87 {offsets = [0, 56], sizes = [16, 1858], strides = [1, 1]} : vector<16x1916xf32> to vector<16x1858xf32>
    %95 = vector.extract_strided_slice %87 {offsets = [0, 57], sizes = [16, 1858], strides = [1, 1]} : vector<16x1916xf32> to vector<16x1858xf32>
    %96 = vector.extract_strided_slice %87 {offsets = [0, 58], sizes = [16, 1858], strides = [1, 1]} : vector<16x1916xf32> to vector<16x1858xf32>
    %97 = tpu.concatenate %88, %89, %90, %91, %92, %93, %94, %95, %96 in 0 : vector<16x1858xf32>, vector<16x1858xf32>, vector<16x1858xf32>, vector<16x1858xf32>, vector<16x1858xf32>, vector<16x1858xf32>, vector<16x1858xf32>, vector<16x1858xf32>, vector<16x1858xf32> -> vector<144x1858xf32>
    %98 = vector.extract_strided_slice %0 {offsets = [4, 0, 0], sizes = [1, 32, 144], strides = [1, 1, 1]} : vector<8x32x144xf32> to vector<1x32x144xf32>
    %99 = vector.shape_cast %98 : vector<1x32x144xf32> to vector<32x144xf32>
    %100 = vector.extract_strided_slice %99 {offsets = [0, 0], sizes = [8, 144], strides = [1, 1]} : vector<32x144xf32> to vector<8x144xf32>
    %101 = vector.extract_strided_slice %1 {offsets = [4, 0, 0], sizes = [1, 32, 1], strides = [1, 1, 1]} : vector<8x32x1xf32> to vector<1x32x1xf32>
    %102 = vector.shape_cast %101 : vector<1x32x1xf32> to vector<32x1xf32>
    %103 = vector.extract_strided_slice %102 {offsets = [0, 0], sizes = [8, 1], strides = [1, 1]} : vector<32x1xf32> to vector<8x1xf32>
    %cst_15 = arith.constant dense<0.000000e+00> : vector<8x1858xf32>
    %104 = tpu.matmul %100, %97, %cst_15 {dimension_numbers = #tpu.dot_dimension_numbers<[1], [0], [0], [1], [0, 0, 1, 1], [], []>} : vector<8x144xf32>, vector<144x1858xf32>, vector<8x1858xf32> -> vector<8x1858xf32>
    %105 = vector.broadcast %103 : vector<8x1xf32> to vector<8x1858xf32>
    %106 = arith.addf %104, %105 : vector<8x1858xf32>
    %cst_16 = arith.constant 0.000000e+00 : f32
    %107 = vector.broadcast %cst_16 : f32 to vector<8x1858xf32>
    %108 = arith.maximumf %106, %107 : vector<8x1858xf32>
    %109 = vector.extract_strided_slice %108 {offsets = [0, 0], sizes = [8, 1829], strides = [1, 1]} : vector<8x1858xf32> to vector<8x1829xf32>
    %110 = vector.extract_strided_slice %108 {offsets = [0, 1], sizes = [8, 1829], strides = [1, 1]} : vector<8x1858xf32> to vector<8x1829xf32>
    %111 = arith.maximumf %109, %110 : vector<8x1829xf32>
    %112 = vector.extract_strided_slice %108 {offsets = [0, 28], sizes = [8, 1829], strides = [1, 1]} : vector<8x1858xf32> to vector<8x1829xf32>
    %113 = vector.extract_strided_slice %108 {offsets = [0, 29], sizes = [8, 1829], strides = [1, 1]} : vector<8x1858xf32> to vector<8x1829xf32>
    %114 = arith.maximumf %112, %113 : vector<8x1829xf32>
    %115 = arith.maximumf %111, %114 : vector<8x1829xf32>
    %c0_17 = arith.constant 0 : index
    %c0_18 = arith.constant 0 : index
    %116 = vector.load %arg5[%c0_17, %c0_18] : memref<465x81xf32, #tpu.memory_space<vmem>>, vector<465x81xf32>
    %117 = vector.extract_strided_slice %115 {offsets = [0, 0], sizes = [8, 465], strides = [1, 1]} : vector<8x1829xf32> to vector<8x465xf32>
    %cst_19 = arith.constant dense<0.000000e+00> : vector<8x81xf32>
    %118 = tpu.matmul %117, %116, %cst_19 {dimension_numbers = #tpu.dot_dimension_numbers<[1], [0], [0], [1], [0, 0, 1, 1], [], []>} : vector<8x465xf32>, vector<465x81xf32>, vector<8x81xf32> -> vector<8x81xf32>
    %119 = vector.extract_strided_slice %115 {offsets = [0, 1074], sizes = [8, 465], strides = [1, 1]} : vector<8x1829xf32> to vector<8x465xf32>
    %cst_20 = arith.constant dense<0.000000e+00> : vector<8x81xf32>
    %120 = tpu.matmul %119, %116, %cst_20 {dimension_numbers = #tpu.dot_dimension_numbers<[1], [0], [0], [1], [0, 0, 1, 1], [], []>} : vector<8x465xf32>, vector<465x81xf32>, vector<8x81xf32> -> vector<8x81xf32>
    %121 = tpu.concatenate %118, %120 in 1 : vector<8x81xf32>, vector<8x81xf32> -> vector<8x162xf32>
    %122 = vector.extract_strided_slice %121 {offsets = [0, 0], sizes = [8, 142], strides = [1, 1]} : vector<8x162xf32> to vector<8x142xf32>
    %123 = vector.extract_strided_slice %121 {offsets = [0, 1], sizes = [8, 142], strides = [1, 1]} : vector<8x162xf32> to vector<8x142xf32>
    %124 = vector.extract_strided_slice %121 {offsets = [0, 2], sizes = [8, 142], strides = [1, 1]} : vector<8x162xf32> to vector<8x142xf32>
    %125 = vector.extract_strided_slice %121 {offsets = [0, 9], sizes = [8, 142], strides = [1, 1]} : vector<8x162xf32> to vector<8x142xf32>
    %126 = vector.extract_strided_slice %121 {offsets = [0, 10], sizes = [8, 142], strides = [1, 1]} : vector<8x162xf32> to vector<8x142xf32>
    %127 = vector.extract_strided_slice %121 {offsets = [0, 11], sizes = [8, 142], strides = [1, 1]} : vector<8x162xf32> to vector<8x142xf32>
    %128 = vector.extract_strided_slice %121 {offsets = [0, 18], sizes = [8, 142], strides = [1, 1]} : vector<8x162xf32> to vector<8x142xf32>
    %129 = vector.extract_strided_slice %121 {offsets = [0, 19], sizes = [8, 142], strides = [1, 1]} : vector<8x162xf32> to vector<8x142xf32>
    %130 = vector.extract_strided_slice %121 {offsets = [0, 20], sizes = [8, 142], strides = [1, 1]} : vector<8x162xf32> to vector<8x142xf32>
    %131 = tpu.concatenate %122, %123, %124, %125, %126, %127, %128, %129, %130 in 0 : vector<8x142xf32>, vector<8x142xf32>, vector<8x142xf32>, vector<8x142xf32>, vector<8x142xf32>, vector<8x142xf32>, vector<8x142xf32>, vector<8x142xf32>, vector<8x142xf32> -> vector<72x142xf32>
    %132 = vector.extract_strided_slice %0 {offsets = [5, 0, 0], sizes = [1, 32, 144], strides = [1, 1, 1]} : vector<8x32x144xf32> to vector<1x32x144xf32>
    %133 = vector.shape_cast %132 : vector<1x32x144xf32> to vector<32x144xf32>
    %134 = vector.extract_strided_slice %133 {offsets = [0, 0], sizes = [16, 72], strides = [1, 1]} : vector<32x144xf32> to vector<16x72xf32>
    %135 = vector.extract_strided_slice %1 {offsets = [5, 0, 0], sizes = [1, 32, 1], strides = [1, 1, 1]} : vector<8x32x1xf32> to vector<1x32x1xf32>
    %136 = vector.shape_cast %135 : vector<1x32x1xf32> to vector<32x1xf32>
    %137 = vector.extract_strided_slice %136 {offsets = [0, 0], sizes = [16, 1], strides = [1, 1]} : vector<32x1xf32> to vector<16x1xf32>
    %cst_21 = arith.constant dense<0.000000e+00> : vector<16x142xf32>
    %138 = tpu.matmul %134, %131, %cst_21 {dimension_numbers = #tpu.dot_dimension_numbers<[1], [0], [0], [1], [0, 0, 1, 1], [], []>} : vector<16x72xf32>, vector<72x142xf32>, vector<16x142xf32> -> vector<16x142xf32>
    %139 = vector.broadcast %137 : vector<16x1xf32> to vector<16x142xf32>
    %140 = arith.addf %138, %139 : vector<16x142xf32>
    %cst_22 = arith.constant 0.000000e+00 : f32
    %141 = vector.broadcast %cst_22 : f32 to vector<16x142xf32>
    %142 = arith.maximumf %140, %141 : vector<16x142xf32>
    %143 = vector.extract_strided_slice %142 {offsets = [0, 0], sizes = [16, 122], strides = [1, 1]} : vector<16x142xf32> to vector<16x122xf32>
    %144 = vector.extract_strided_slice %142 {offsets = [0, 1], sizes = [16, 122], strides = [1, 1]} : vector<16x142xf32> to vector<16x122xf32>
    %145 = vector.extract_strided_slice %142 {offsets = [0, 2], sizes = [16, 122], strides = [1, 1]} : vector<16x142xf32> to vector<16x122xf32>
    %146 = vector.extract_strided_slice %142 {offsets = [0, 9], sizes = [16, 122], strides = [1, 1]} : vector<16x142xf32> to vector<16x122xf32>
    %147 = vector.extract_strided_slice %142 {offsets = [0, 10], sizes = [16, 122], strides = [1, 1]} : vector<16x142xf32> to vector<16x122xf32>
    %148 = vector.extract_strided_slice %142 {offsets = [0, 11], sizes = [16, 122], strides = [1, 1]} : vector<16x142xf32> to vector<16x122xf32>
    %149 = vector.extract_strided_slice %142 {offsets = [0, 18], sizes = [16, 122], strides = [1, 1]} : vector<16x142xf32> to vector<16x122xf32>
    %150 = vector.extract_strided_slice %142 {offsets = [0, 19], sizes = [16, 122], strides = [1, 1]} : vector<16x142xf32> to vector<16x122xf32>
    %151 = vector.extract_strided_slice %142 {offsets = [0, 20], sizes = [16, 122], strides = [1, 1]} : vector<16x142xf32> to vector<16x122xf32>
    %152 = tpu.concatenate %143, %144, %145, %146, %147, %148, %149, %150, %151 in 0 : vector<16x122xf32>, vector<16x122xf32>, vector<16x122xf32>, vector<16x122xf32>, vector<16x122xf32>, vector<16x122xf32>, vector<16x122xf32>, vector<16x122xf32>, vector<16x122xf32> -> vector<144x122xf32>
    %153 = vector.extract_strided_slice %0 {offsets = [6, 0, 0], sizes = [1, 32, 144], strides = [1, 1, 1]} : vector<8x32x144xf32> to vector<1x32x144xf32>
    %154 = vector.shape_cast %153 : vector<1x32x144xf32> to vector<32x144xf32>
    %155 = vector.extract_strided_slice %154 {offsets = [0, 0], sizes = [16, 144], strides = [1, 1]} : vector<32x144xf32> to vector<16x144xf32>
    %156 = vector.extract_strided_slice %1 {offsets = [6, 0, 0], sizes = [1, 32, 1], strides = [1, 1, 1]} : vector<8x32x1xf32> to vector<1x32x1xf32>
    %157 = vector.shape_cast %156 : vector<1x32x1xf32> to vector<32x1xf32>
    %158 = vector.extract_strided_slice %157 {offsets = [0, 0], sizes = [16, 1], strides = [1, 1]} : vector<32x1xf32> to vector<16x1xf32>
    %cst_23 = arith.constant dense<0.000000e+00> : vector<16x122xf32>
    %159 = tpu.matmul %155, %152, %cst_23 {dimension_numbers = #tpu.dot_dimension_numbers<[1], [0], [0], [1], [0, 0, 1, 1], [], []>} : vector<16x144xf32>, vector<144x122xf32>, vector<16x122xf32> -> vector<16x122xf32>
    %160 = vector.broadcast %158 : vector<16x1xf32> to vector<16x122xf32>
    %161 = arith.addf %159, %160 : vector<16x122xf32>
    %cst_24 = arith.constant 0.000000e+00 : f32
    %162 = vector.broadcast %cst_24 : f32 to vector<16x122xf32>
    %163 = arith.maximumf %161, %162 : vector<16x122xf32>
    %164 = vector.extract_strided_slice %163 {offsets = [0, 0], sizes = [16, 102], strides = [1, 1]} : vector<16x122xf32> to vector<16x102xf32>
    %165 = vector.extract_strided_slice %163 {offsets = [0, 1], sizes = [16, 102], strides = [1, 1]} : vector<16x122xf32> to vector<16x102xf32>
    %166 = vector.extract_strided_slice %163 {offsets = [0, 2], sizes = [16, 102], strides = [1, 1]} : vector<16x122xf32> to vector<16x102xf32>
    %167 = vector.extract_strided_slice %163 {offsets = [0, 9], sizes = [16, 102], strides = [1, 1]} : vector<16x122xf32> to vector<16x102xf32>
    %168 = vector.extract_strided_slice %163 {offsets = [0, 10], sizes = [16, 102], strides = [1, 1]} : vector<16x122xf32> to vector<16x102xf32>
    %169 = vector.extract_strided_slice %163 {offsets = [0, 11], sizes = [16, 102], strides = [1, 1]} : vector<16x122xf32> to vector<16x102xf32>
    %170 = vector.extract_strided_slice %163 {offsets = [0, 18], sizes = [16, 102], strides = [1, 1]} : vector<16x122xf32> to vector<16x102xf32>
    %171 = vector.extract_strided_slice %163 {offsets = [0, 19], sizes = [16, 102], strides = [1, 1]} : vector<16x122xf32> to vector<16x102xf32>
    %172 = vector.extract_strided_slice %163 {offsets = [0, 20], sizes = [16, 102], strides = [1, 1]} : vector<16x122xf32> to vector<16x102xf32>
    %173 = tpu.concatenate %164, %165, %166, %167, %168, %169, %170, %171, %172 in 0 : vector<16x102xf32>, vector<16x102xf32>, vector<16x102xf32>, vector<16x102xf32>, vector<16x102xf32>, vector<16x102xf32>, vector<16x102xf32>, vector<16x102xf32>, vector<16x102xf32> -> vector<144x102xf32>
    %174 = vector.extract_strided_slice %0 {offsets = [7, 0, 0], sizes = [1, 32, 144], strides = [1, 1, 1]} : vector<8x32x144xf32> to vector<1x32x144xf32>
    %175 = vector.shape_cast %174 : vector<1x32x144xf32> to vector<32x144xf32>
    %176 = vector.extract_strided_slice %1 {offsets = [7, 0, 0], sizes = [1, 32, 1], strides = [1, 1, 1]} : vector<8x32x1xf32> to vector<1x32x1xf32>
    %177 = vector.shape_cast %176 : vector<1x32x1xf32> to vector<32x1xf32>
    %cst_25 = arith.constant dense<0.000000e+00> : vector<32x102xf32>
    %178 = tpu.matmul %175, %173, %cst_25 {dimension_numbers = #tpu.dot_dimension_numbers<[1], [0], [0], [1], [0, 0, 1, 1], [], []>} : vector<32x144xf32>, vector<144x102xf32>, vector<32x102xf32> -> vector<32x102xf32>
    %179 = vector.broadcast %177 : vector<32x1xf32> to vector<32x102xf32>
    %180 = arith.addf %178, %179 : vector<32x102xf32>
    %cst_26 = arith.constant 0.000000e+00 : f32
    %181 = vector.broadcast %cst_26 : f32 to vector<32x102xf32>
    %182 = arith.maximumf %180, %181 : vector<32x102xf32>
    %c0_27 = arith.constant 0 : index
    %c0_28 = arith.constant 0 : index
    %183 = vector.load %arg6[%c0_27, %c0_28] : memref<102x2xf32, #tpu.memory_space<vmem>>, vector<102x2xf32>
    %cst_29 = arith.constant dense<0.000000e+00> : vector<32x2xf32>
    %184 = tpu.matmul %182, %183, %cst_29 {dimension_numbers = #tpu.dot_dimension_numbers<[1], [0], [0], [1], [0, 0, 1, 1], [], []>} : vector<32x102xf32>, vector<102x2xf32>, vector<32x2xf32> -> vector<32x2xf32>
    %c0_30 = arith.constant 0 : index
    %c0_31 = arith.constant 0 : index
    %185 = vector.load %arg4[%c0_30, %c0_31] : memref<10x32xf32, #tpu.memory_space<vmem>>, vector<10x32xf32>
    %cst_32 = arith.constant dense<0.000000e+00> : vector<10x2xf32>
    %186 = tpu.matmul %185, %184, %cst_32 {dimension_numbers = #tpu.dot_dimension_numbers<[1], [0], [0], [1], [0, 0, 1, 1], [], []>} : vector<10x32xf32>, vector<32x2xf32>, vector<10x2xf32> -> vector<10x2xf32>
    %cst_33 = arith.constant dense<0xFF800000> : vector<2xf32>
    %187 = vector.multi_reduction <maximumf>, %186, %cst_33 [0] : vector<10x2xf32> to vector<2xf32>
    %188 = vector.shape_cast %187 : vector<2xf32> to vector<1x2xf32>
    %189 = vector.broadcast %188 : vector<1x2xf32> to vector<10x2xf32>
    %190 = arith.subf %186, %189 : vector<10x2xf32>
    %191 = math.exp %190 : vector<10x2xf32>
    %cst_34 = arith.constant dense<0.000000e+00> : vector<2xf32>
    %192 = vector.multi_reduction <add>, %191, %cst_34 [0] : vector<10x2xf32> to vector<2xf32>
    %193 = vector.shape_cast %192 : vector<2xf32> to vector<1x2xf32>
    %194 = math.log %193 : vector<1x2xf32>
    %195 = vector.broadcast %194 : vector<1x2xf32> to vector<10x2xf32>
    %196 = arith.subf %190, %195 : vector<10x2xf32>
    %c0_35 = arith.constant 0 : index
    %c0_36 = arith.constant 0 : index
    %c0_37 = arith.constant 0 : index
    %197 = vector.load %arg7[%c0_35, %c0_36, %c0_37] : memref<1x10x2xf32, #tpu.memory_space<vmem>>, vector<1x10x2xf32>
    %198 = vector.shape_cast %197 : vector<1x10x2xf32> to vector<10x2xf32>
    %199 = vector.shape_cast %196 : vector<10x2xf32> to vector<1x10x2xf32>
    tpu.vector_store %arg7[%c0_35, %c0_36, %c0_37], %199 {strides = array<i32>} : memref<1x10x2xf32, #tpu.memory_space<vmem>>, vector<1x10x2xf32>,
    return
  }
  func.func @transform_0(%arg0: i32) -> (i32, i32, i32) {
    %c0_i32 = arith.constant 0 : i32
    %c0_i32_0 = arith.constant 0 : i32
    %c0_i32_1 = arith.constant 0 : i32
    return %arg0, %c0_i32, %c0_i32_0 : i32, i32, i32
  }
  func.func @transform_1(%arg0: i32) -> (i32, i32, i32) {
    %c0_i32 = arith.constant 0 : i32
    %c0_i32_0 = arith.constant 0 : i32
    %c0_i32_1 = arith.constant 0 : i32
    %c0_i32_2 = arith.constant 0 : i32
    return %c0_i32, %c0_i32_0, %c0_i32_1 : i32, i32, i32
  }
  func.func @transform_2(%arg0: i32) -> (i32, i32, i32) {
    %c0_i32 = arith.constant 0 : i32
    %c0_i32_0 = arith.constant 0 : i32
    %c0_i32_1 = arith.constant 0 : i32
    %c0_i32_2 = arith.constant 0 : i32
    return %c0_i32, %c0_i32_0, %c0_i32_1 : i32, i32, i32
  }
  func.func @transform_3(%arg0: i32) -> (i32, i32) {
    %c0_i32 = arith.constant 0 : i32
    %c0_i32_0 = arith.constant 0 : i32
    %c0_i32_1 = arith.constant 0 : i32
    return %c0_i32, %c0_i32_0 : i32, i32
  }
  func.func @transform_4(%arg0: i32) -> (i32, i32) {
    %c0_i32 = arith.constant 0 : i32
    %c0_i32_0 = arith.constant 0 : i32
    %c0_i32_1 = arith.constant 0 : i32
    return %c0_i32, %c0_i32_0 : i32, i32
  }
  func.func @transform_5(%arg0: i32) -> (i32, i32) {
    %c0_i32 = arith.constant 0 : i32
    %c0_i32_0 = arith.constant 0 : i32
    %c0_i32_1 = arith.constant 0 : i32
    return %c0_i32, %c0_i32_0 : i32, i32
  }
  func.func @transform_6(%arg0: i32) -> (i32, i32, i32) {
    %c0_i32 = arith.constant 0 : i32
    %c0_i32_0 = arith.constant 0 : i32
    %c0_i32_1 = arith.constant 0 : i32
    return %arg0, %c0_i32, %c0_i32_0 : i32, i32, i32
  }
}

</mosaic_0001>

<llo_original>
// kernel: net_forward.1
$region0: #{net_forward.1}
  #allocation0 [shape = 'u32[]', space=smem, size = 0x4, offset = 0x4, fixed_abs, tag = 'smem constant byte address 0x4 - core index']
  #allocation1 [shape = 'u32[72,128]{1,0:T(1,128)}', space=vmem, size = 0x9000, scoped, tag = 'internal scratch']
  %s0 = inlined_call_operand.vmem [shape: f32[1,1,2148], index: 0, kind: input, shape index: {}]
  %s1 = inlined_call_operand.vmem [shape: f32[8,32,144], index: 1, kind: input, shape index: {}]
  %s2 = inlined_call_operand.vmem [shape: f32[8,32,1], index: 2, kind: input, shape index: {}]
  %s3 = inlined_call_operand.vmem [shape: f32[10,32], index: 3, kind: input, shape index: {}]
  %s4 = inlined_call_operand.vmem [shape: f32[465,81], index: 4, kind: input, shape index: {}]
  %s5 = inlined_call_operand.vmem [shape: f32[102,2], index: 5, kind: input, shape index: {}]
  %s6 = inlined_call_operand.vmem [shape: f32[1,10,2], index: 6, kind: output, shape index: {}]
  %s7 = sld [smem:[#allocation0]]
  $region34: #{net_forward.1} parent=0
    _
  %s9 = ssub.s32 1, %s7
  %s10 = scalar_select 0, %s9, %s7
  // Predicated region
  $region2: #{net_forward.1} parent=0 // pred_check
    _
  $region3: #{net_forward.1} parent=0 // pred_check_branch
    %12 = sbr.rel (0) target = $region5
  $region4: #{net_forward.1} parent=0 // pred_region
    _
  $region5: #{net_forward.1} parent=0 // pred_fallthru
    _
  // Predicated region
  $region6: #{net_forward.1} parent=0 // pred_check
    _
  $region7: #{net_forward.1} parent=0 // pred_check_branch
    %14 = sbr.rel (0) target = $region9
  $region8: #{net_forward.1} parent=0 // pred_region
    _
  $region9: #{net_forward.1} parent=0 // pred_fallthru
    _
  // Predicated region
  $region10: #{net_forward.1} parent=0 // pred_check
    _
  $region11: #{net_forward.1} parent=0 // pred_check_branch
    %16 = sbr.rel (0) target = $region13
  $region12: #{net_forward.1} parent=0 // pred_region
    _
  $region13: #{net_forward.1} parent=0 // pred_fallthru
    _
  // Predicated region
  $region14: #{net_forward.1} parent=0 // pred_check
    _
  $region15: #{net_forward.1} parent=0 // pred_check_branch
    %18 = sbr.rel (0) target = $region17
  $region16: #{net_forward.1} parent=0 // pred_region
    _
  $region17: #{net_forward.1} parent=0 // pred_fallthru
    _
  // Predicated region
  $region18: #{net_forward.1} parent=0 // pred_check
    _
  $region19: #{net_forward.1} parent=0 // pred_check_branch
    %20 = sbr.rel (0) target = $region21
  $region20: #{net_forward.1} parent=0 // pred_region
    _
  $region21: #{net_forward.1} parent=0 // pred_fallthru
    _
  // Predicated region
  $region22: #{net_forward.1} parent=0 // pred_check
    _
  $region23: #{net_forward.1} parent=0 // pred_check_branch
    %22 = sbr.rel (0) target = $region25
  $region24: #{net_forward.1} parent=0 // pred_region
    _
  $region25: #{net_forward.1} parent=0 // pred_fallthru
    _
  %v23 = vld [vmem:[%s1] sm:$0xff]
  %v24 = vld [vmem:[%s1 + $0x40] sm:$0xff]
  %v25 = vld [vmem:[%s1 + $0x50] sm:$0xff]
  %v26 = vld [vmem:[%s1 + $0x80] sm:$0xff]
  %v27 = vld [vmem:[%s1 + $0x88] sm:$0xff]
  %v28 = vld [vmem:[%s1 + $0x90] sm:$0xff]
  %v29 = vld [vmem:[%s1 + $0x98] sm:$0xff]
  %v30 = vld [vmem:[%s1 + $0xc0] sm:$0xff]
  %v31 = vld [vmem:[%s1 + $0xc8] sm:$0xff]
  %v32 = vld [vmem:[%s1 + $0xd0] sm:$0xff]
  %v33 = vld [vmem:[%s1 + $0xd8] sm:$0xff]
  %v34 = vld [vmem:[%s1 + $0x100] sm:$0xff]
  %v35 = vld [vmem:[%s1 + $0x108] sm:$0xff]
  %v36 = vld [vmem:[%s1 + $0x140] sm:$0xff]
  %v37 = vld [vmem:[%s1 + $0x150] sm:$0xff]
  %v38 = vld [vmem:[%s1 + $0x180] sm:$0xff]
  %v39 = vld [vmem:[%s1 + $0x188] sm:$0xff]
  %v40 = vld [vmem:[%s1 + $0x190] sm:$0xff]
  %v41 = vld [vmem:[%s1 + $0x198] sm:$0xff]
  %v42 = vld [vmem:[%s1 + $0x1c0] sm:$0xff]
  %v43 = vld [vmem:[%s1 + $0x1c8] sm:$0xff]
  %v44 = vld [vmem:[%s1 + $0x1d0] sm:$0xff]
  %v45 = vld [vmem:[%s1 + $0x1d8] sm:$0xff]
  %v46 = vld [vmem:[%s1 + $0x1e0] sm:$0xff]
  %v47 = vld [vmem:[%s1 + $0x1e8] sm:$0xff]
  %v48 = vld [vmem:[%s1 + $0x1f0] sm:$0xff]
  %v49 = vld [vmem:[%s1 + $0x1f8] sm:$0xff]
  %v50 = vld [vmem:[%s2] sm:$0xff]
  %v51 = vld [vmem:[%s2 + $0x20] sm:$0xff]
  %v52 = vld [vmem:[%s2 + $0x28] sm:$0xff]
  %v53 = vld [vmem:[%s2 + $0x40] sm:$0xff]
  %v54 = vld [vmem:[%s2 + $0x48] sm:$0xff]
  %v55 = vld [vmem:[%s2 + $0x60] sm:$0xff]
  %v56 = vld [vmem:[%s2 + $0x68] sm:$0xff]
  %v57 = vld [vmem:[%s2 + $0x80] sm:$0xff]
  %v58 = vld [vmem:[%s2 + $0xa0] sm:$0xff]
  %v59 = vld [vmem:[%s2 + $0xa8] sm:$0xff]
  %v60 = vld [vmem:[%s2 + $0xc0] sm:$0xff]
  %v61 = vld [vmem:[%s2 + $0xc8] sm:$0xff]
  %v62 = vld [vmem:[%s2 + $0xe0] sm:$0xff]
  %v63 = vld [vmem:[%s2 + $0xe8] sm:$0xff]
  %v64 = vld [vmem:[%s2 + $0xf0] sm:$0xff]
  %v65 = vld [vmem:[%s2 + $0xf8] sm:$0xff]
  %v66 = vld [vmem:[%s0] sm:$0xff]
  %v67 = vld [vmem:[%s0 + $0x8] sm:$0xff]
  %v68 = vld [vmem:[%s0 + $0x10] sm:$0x1]
  %v72 = vperm.slane %v66, 0
  %v73 = vperm.slane %v66, 1
  %v74 = vperm.slane %v66, 2
  %v75 = vperm.slane %v66, 3
  %v76 = vperm.slane %v66, 4
  %v77 = vperm.slane %v66, 5
  %v78 = vperm.slane %v66, 6
  %v79 = vperm.slane %v66, 7
  %v80 = vperm.slane %v67, 0
  %v81 = vperm.slane %v67, 1
  %v82 = vperm.slane %v67, 2
  %v83 = vperm.slane %v67, 3
  %v84 = vperm.slane %v67, 4
  %v85 = vperm.slane %v67, 5
  %v86 = vperm.slane %v67, 6
  %v87 = vperm.slane %v67, 7
  %v88 = vperm.slane %v68, 0
  %106 = vrot.lane.b32.xlu0 %v72, 127
  %v107 = vpop.permute.xlu0 %106
  %108 = vrot.lane.b32.xlu0 %v73, 127
  %v109 = vpop.permute.xlu0 %108
  %110 = vrot.lane.b32.xlu0 %v74, 127
  %v111 = vpop.permute.xlu0 %110
  %112 = vrot.lane.b32.xlu0 %v75, 127
  %v113 = vpop.permute.xlu0 %112
  %114 = vrot.lane.b32.xlu0 %v76, 127
  %v115 = vpop.permute.xlu0 %114
  %116 = vrot.lane.b32.xlu0 %v77, 127
  %v117 = vpop.permute.xlu0 %116
  %118 = vrot.lane.b32.xlu0 %v78, 127
  %v119 = vpop.permute.xlu0 %118
  %120 = vrot.lane.b32.xlu0 %v79, 127
  %v121 = vpop.permute.xlu0 %120
  %122 = vrot.lane.b32.xlu0 %v80, 127
  %v123 = vpop.permute.xlu0 %122
  %124 = vrot.lane.b32.xlu0 %v81, 127
  %v125 = vpop.permute.xlu0 %124
  %126 = vrot.lane.b32.xlu0 %v82, 127
  %v127 = vpop.permute.xlu0 %126
  %128 = vrot.lane.b32.xlu0 %v83, 127
  %v129 = vpop.permute.xlu0 %128
  %130 = vrot.lane.b32.xlu0 %v84, 127
  %v131 = vpop.permute.xlu0 %130
  %132 = vrot.lane.b32.xlu0 %v85, 127
  %v133 = vpop.permute.xlu0 %132
  %134 = vrot.lane.b32.xlu0 %v86, 127
  %v135 = vpop.permute.xlu0 %134
  %136 = vrot.lane.b32.xlu0 %v87, 127
  %v137 = vpop.permute.xlu0 %136
  %138 = vrot.lane.b32.xlu0 %v88, 127
  %v139 = vpop.permute.xlu0 %138
  %vm140 = vcmask 1039360
  %v141 = vsel %vm140, %v107, %v109
  %v142 = vsel %vm140, %v109, %v111
  %v143 = vsel %vm140, %v111, %v113
  %v144 = vsel %vm140, %v113, %v115
  %v145 = vsel %vm140, %v115, %v117
  %v146 = vsel %vm140, %v117, %v119
  %v147 = vsel %vm140, %v119, %v121
  %v148 = vsel %vm140, %v121, %v123
  %v149 = vsel %vm140, %v123, %v125
  %v150 = vsel %vm140, %v125, %v127
  %v151 = vsel %vm140, %v127, %v129
  %v152 = vsel %vm140, %v129, %v131
  %v153 = vsel %vm140, %v131, %v133
  %v154 = vsel %vm140, %v133, %v135
  %v155 = vsel %vm140, %v135, %v137
  %v156 = vsel %vm140, %v137, %v139
  %174 = vrot.lane.b32.xlu0 %v72, 126
  %v175 = vpop.permute.xlu0 %174
  %176 = vrot.lane.b32.xlu0 %v73, 126
  %v177 = vpop.permute.xlu0 %176
  %178 = vrot.lane.b32.xlu0 %v74, 126
  %v179 = vpop.permute.xlu0 %178
  %180 = vrot.lane.b32.xlu0 %v75, 126
  %v181 = vpop.permute.xlu0 %180
  %182 = vrot.lane.b32.xlu0 %v76, 126
  %v183 = vpop.permute.xlu0 %182
  %184 = vrot.lane.b32.xlu0 %v77, 126
  %v185 = vpop.permute.xlu0 %184
  %186 = vrot.lane.b32.xlu0 %v78, 126
  %v187 = vpop.permute.xlu0 %186
  %188 = vrot.lane.b32.xlu0 %v79, 126
  %v189 = vpop.permute.xlu0 %188
  %190 = vrot.lane.b32.xlu0 %v80, 126
  %v191 = vpop.permute.xlu0 %190
  %192 = vrot.lane.b32.xlu0 %v81, 126
  %v193 = vpop.permute.xlu0 %192
  %194 = vrot.lane.b32.xlu0 %v82, 126
  %v195 = vpop.permute.xlu0 %194
  %196 = vrot.lane.b32.xlu0 %v83, 126
  %v197 = vpop.permute.xlu0 %196
  %198 = vrot.lane.b32.xlu0 %v84, 126
  %v199 = vpop.permute.xlu0 %198
  %200 = vrot.lane.b32.xlu0 %v85, 126
  %v201 = vpop.permute.xlu0 %200
  %202 = vrot.lane.b32.xlu0 %v86, 126
  %v203 = vpop.permute.xlu0 %202
  %204 = vrot.lane.b32.xlu0 %v87, 126
  %v205 = vpop.permute.xlu0 %204
  %206 = vrot.lane.b32.xlu0 %v88, 126
  %v207 = vpop.permute.xlu0 %206
  %vm208 = vcmask 1031168
  %v209 = vsel %vm208, %v175, %v177
  %v210 = vsel %vm208, %v177, %v179
  %v211 = vsel %vm208, %v179, %v181
  %v212 = vsel %vm208, %v181, %v183
  %v213 = vsel %vm208, %v183, %v185
  %v214 = vsel %vm208, %v185, %v187
  %v215 = vsel %vm208, %v187, %v189
  %v216 = vsel %vm208, %v189, %v191
  %v217 = vsel %vm208, %v191, %v193
  %v218 = vsel %vm208, %v193, %v195
  %v219 = vsel %vm208, %v195, %v197
  %v220 = vsel %vm208, %v197, %v199
  %v221 = vsel %vm208, %v199, %v201
  %v222 = vsel %vm208, %v201, %v203
  %v223 = vsel %vm208, %v203, %v205
  %v224 = vsel %vm208, %v205, %v207
  %242 = vrot.lane.b32.xlu0 %v72, 100
  %v243 = vpop.permute.xlu0 %242
  %244 = vrot.lane.b32.xlu0 %v73, 100
  %v245 = vpop.permute.xlu0 %244
  %246 = vrot.lane.b32.xlu0 %v74, 100
  %v247 = vpop.permute.xlu0 %246
  %248 = vrot.lane.b32.xlu0 %v75, 100
  %v249 = vpop.permute.xlu0 %248
  %250 = vrot.lane.b32.xlu0 %v76, 100
  %v251 = vpop.permute.xlu0 %250
  %252 = vrot.lane.b32.xlu0 %v77, 100
  %v253 = vpop.permute.xlu0 %252
  %254 = vrot.lane.b32.xlu0 %v78, 100
  %v255 = vpop.permute.xlu0 %254
  %256 = vrot.lane.b32.xlu0 %v79, 100
  %v257 = vpop.permute.xlu0 %256
  %258 = vrot.lane.b32.xlu0 %v80, 100
  %v259 = vpop.permute.xlu0 %258
  %260 = vrot.lane.b32.xlu0 %v81, 100
  %v261 = vpop.permute.xlu0 %260
  %262 = vrot.lane.b32.xlu0 %v82, 100
  %v263 = vpop.permute.xlu0 %262
  %264 = vrot.lane.b32.xlu0 %v83, 100
  %v265 = vpop.permute.xlu0 %264
  %266 = vrot.lane.b32.xlu0 %v84, 100
  %v267 = vpop.permute.xlu0 %266
  %268 = vrot.lane.b32.xlu0 %v85, 100
  %v269 = vpop.permute.xlu0 %268
  %270 = vrot.lane.b32.xlu0 %v86, 100
  %v271 = vpop.permute.xlu0 %270
  %272 = vrot.lane.b32.xlu0 %v87, 100
  %v273 = vpop.permute.xlu0 %272
  %274 = vrot.lane.b32.xlu0 %v88, 100
  %v275 = vpop.permute.xlu0 %274
  %vm276 = vcmask 818176
  %v277 = vsel %vm276, %v243, %v245
  %v278 = vsel %vm276, %v245, %v247
  %v279 = vsel %vm276, %v247, %v249
  %v280 = vsel %vm276, %v249, %v251
  %v281 = vsel %vm276, %v251, %v253
  %v282 = vsel %vm276, %v253, %v255
  %v283 = vsel %vm276, %v255, %v257
  %v284 = vsel %vm276, %v257, %v259
  %v285 = vsel %vm276, %v259, %v261
  %v286 = vsel %vm276, %v261, %v263
  %v287 = vsel %vm276, %v263, %v265
  %v288 = vsel %vm276, %v265, %v267
  %v289 = vsel %vm276, %v267, %v269
  %v290 = vsel %vm276, %v269, %v271
  %v291 = vsel %vm276, %v271, %v273
  %v292 = vsel %vm276, %v273, %v275
  %310 = vrot.lane.b32.xlu0 %v72, 99
  %v311 = vpop.permute.xlu0 %310
  %312 = vrot.lane.b32.xlu0 %v73, 99
  %v313 = vpop.permute.xlu0 %312
  %314 = vrot.lane.b32.xlu0 %v74, 99
  %v315 = vpop.permute.xlu0 %314
  %316 = vrot.lane.b32.xlu0 %v75, 99
  %v317 = vpop.permute.xlu0 %316
  %318 = vrot.lane.b32.xlu0 %v76, 99
  %v319 = vpop.permute.xlu0 %318
  %320 = vrot.lane.b32.xlu0 %v77, 99
  %v321 = vpop.permute.xlu0 %320
  %322 = vrot.lane.b32.xlu0 %v78, 99
  %v323 = vpop.permute.xlu0 %322
  %324 = vrot.lane.b32.xlu0 %v79, 99
  %v325 = vpop.permute.xlu0 %324
  %326 = vrot.lane.b32.xlu0 %v80, 99
  %v327 = vpop.permute.xlu0 %326
  %328 = vrot.lane.b32.xlu0 %v81, 99
  %v329 = vpop.permute.xlu0 %328
  %330 = vrot.lane.b32.xlu0 %v82, 99
  %v331 = vpop.permute.xlu0 %330
  %332 = vrot.lane.b32.xlu0 %v83, 99
  %v333 = vpop.permute.xlu0 %332
  %334 = vrot.lane.b32.xlu0 %v84, 99
  %v335 = vpop.permute.xlu0 %334
  %336 = vrot.lane.b32.xlu0 %v85, 99
  %v337 = vpop.permute.xlu0 %336
  %338 = vrot.lane.b32.xlu0 %v86, 99
  %v339 = vpop.permute.xlu0 %338
  %340 = vrot.lane.b32.xlu0 %v87, 99
  %v341 = vpop.permute.xlu0 %340
  %342 = vrot.lane.b32.xlu0 %v88, 99
  %v343 = vpop.permute.xlu0 %342
  %vm344 = vcmask 809984
  %v345 = vsel %vm344, %v311, %v313
  %v346 = vsel %vm344, %v313, %v315
  %v347 = vsel %vm344, %v315, %v317
  %v348 = vsel %vm344, %v317, %v319
  %v349 = vsel %vm344, %v319, %v321
  %v350 = vsel %vm344, %v321, %v323
  %v351 = vsel %vm344, %v323, %v325
  %v352 = vsel %vm344, %v325, %v327
  %v353 = vsel %vm344, %v327, %v329
  %v354 = vsel %vm344, %v329, %v331
  %v355 = vsel %vm344, %v331, %v333
  %v356 = vsel %vm344, %v333, %v335
  %v357 = vsel %vm344, %v335, %v337
  %v358 = vsel %vm344, %v337, %v339
  %v359 = vsel %vm344, %v339, %v341
  %v360 = vsel %vm344, %v341, %v343
  %378 = vrot.lane.b32.xlu0 %v72, 98
  %v379 = vpop.permute.xlu0 %378
  %380 = vrot.lane.b32.xlu0 %v73, 98
  %v381 = vpop.permute.xlu0 %380
  %382 = vrot.lane.b32.xlu0 %v74, 98
  %v383 = vpop.permute.xlu0 %382
  %384 = vrot.lane.b32.xlu0 %v75, 98
  %v385 = vpop.permute.xlu0 %384
  %386 = vrot.lane.b32.xlu0 %v76, 98
  %v387 = vpop.permute.xlu0 %386
  %388 = vrot.lane.b32.xlu0 %v77, 98
  %v389 = vpop.permute.xlu0 %388
  %390 = vrot.lane.b32.xlu0 %v78, 98
  %v391 = vpop.permute.xlu0 %390
  %392 = vrot.lane.b32.xlu0 %v79, 98
  %v393 = vpop.permute.xlu0 %392
  %394 = vrot.lane.b32.xlu0 %v80, 98
  %v395 = vpop.permute.xlu0 %394
  %396 = vrot.lane.b32.xlu0 %v81, 98
  %v397 = vpop.permute.xlu0 %396
  %398 = vrot.lane.b32.xlu0 %v82, 98
  %v399 = vpop.permute.xlu0 %398
  %400 = vrot.lane.b32.xlu0 %v83, 98
  %v401 = vpop.permute.xlu0 %400
  %402 = vrot.lane.b32.xlu0 %v84, 98
  %v403 = vpop.permute.xlu0 %402
  %404 = vrot.lane.b32.xlu0 %v85, 98
  %v405 = vpop.permute.xlu0 %404
  %406 = vrot.lane.b32.xlu0 %v86, 98
  %v407 = vpop.permute.xlu0 %406
  %408 = vrot.lane.b32.xlu0 %v87, 98
  %v409 = vpop.permute.xlu0 %408
  %410 = vrot.lane.b32.xlu0 %v88, 98
  %v411 = vpop.permute.xlu0 %410
  %vm412 = vcmask 801792
  %v413 = vsel %vm412, %v379, %v381
  %v414 = vsel %vm412, %v381, %v383
  %v415 = vsel %vm412, %v383, %v385
  %v416 = vsel %vm412, %v385, %v387
  %v417 = vsel %vm412, %v387, %v389
  %v418 = vsel %vm412, %v389, %v391
  %v419 = vsel %vm412, %v391, %v393
  %v420 = vsel %vm412, %v393, %v395
  %v421 = vsel %vm412, %v395, %v397
  %v422 = vsel %vm412, %v397, %v399
  %v423 = vsel %vm412, %v399, %v401
  %v424 = vsel %vm412, %v401, %v403
  %v425 = vsel %vm412, %v403, %v405
  %v426 = vsel %vm412, %v405, %v407
  %v427 = vsel %vm412, %v407, %v409
  %v428 = vsel %vm412, %v409, %v411
  %446 = vrot.lane.b32.xlu0 %v72, 72
  %v447 = vpop.permute.xlu0 %446
  %448 = vrot.lane.b32.xlu0 %v73, 72
  %v449 = vpop.permute.xlu0 %448
  %450 = vrot.lane.b32.xlu0 %v74, 72
  %v451 = vpop.permute.xlu0 %450
  %452 = vrot.lane.b32.xlu0 %v75, 72
  %v453 = vpop.permute.xlu0 %452
  %454 = vrot.lane.b32.xlu0 %v76, 72
  %v455 = vpop.permute.xlu0 %454
  %456 = vrot.lane.b32.xlu0 %v77, 72
  %v457 = vpop.permute.xlu0 %456
  %458 = vrot.lane.b32.xlu0 %v78, 72
  %v459 = vpop.permute.xlu0 %458
  %460 = vrot.lane.b32.xlu0 %v79, 72
  %v461 = vpop.permute.xlu0 %460
  %462 = vrot.lane.b32.xlu0 %v80, 72
  %v463 = vpop.permute.xlu0 %462
  %464 = vrot.lane.b32.xlu0 %v81, 72
  %v465 = vpop.permute.xlu0 %464
  %466 = vrot.lane.b32.xlu0 %v82, 72
  %v467 = vpop.permute.xlu0 %466
  %468 = vrot.lane.b32.xlu0 %v83, 72
  %v469 = vpop.permute.xlu0 %468
  %470 = vrot.lane.b32.xlu0 %v84, 72
  %v471 = vpop.permute.xlu0 %470
  %472 = vrot.lane.b32.xlu0 %v85, 72
  %v473 = vpop.permute.xlu0 %472
  %474 = vrot.lane.b32.xlu0 %v86, 72
  %v475 = vpop.permute.xlu0 %474
  %476 = vrot.lane.b32.xlu0 %v87, 72
  %v477 = vpop.permute.xlu0 %476
  %478 = vrot.lane.b32.xlu0 %v88, 72
  %v479 = vpop.permute.xlu0 %478
  %vm480 = vcmask 588800
  %v481 = vsel %vm480, %v447, %v449
  %v482 = vsel %vm480, %v449, %v451
  %v483 = vsel %vm480, %v451, %v453
  %v484 = vsel %vm480, %v453, %v455
  %v485 = vsel %vm480, %v455, %v457
  %v486 = vsel %vm480, %v457, %v459
  %v487 = vsel %vm480, %v459, %v461
  %v488 = vsel %vm480, %v461, %v463
  %v489 = vsel %vm480, %v463, %v465
  %v490 = vsel %vm480, %v465, %v467
  %v491 = vsel %vm480, %v467, %v469
  %v492 = vsel %vm480, %v469, %v471
  %v493 = vsel %vm480, %v471, %v473
  %v494 = vsel %vm480, %v473, %v475
  %v495 = vsel %vm480, %v475, %v477
  %v496 = vsel %vm480, %v477, %v479
  %514 = vrot.lane.b32.xlu0 %v72, 71
  %v515 = vpop.permute.xlu0 %514
  %516 = vrot.lane.b32.xlu0 %v73, 71
  %v517 = vpop.permute.xlu0 %516
  %518 = vrot.lane.b32.xlu0 %v74, 71
  %v519 = vpop.permute.xlu0 %518
  %520 = vrot.lane.b32.xlu0 %v75, 71
  %v521 = vpop.permute.xlu0 %520
  %522 = vrot.lane.b32.xlu0 %v76, 71
  %v523 = vpop.permute.xlu0 %522
  %524 = vrot.lane.b32.xlu0 %v77, 71
  %v525 = vpop.permute.xlu0 %524
  %526 = vrot.lane.b32.xlu0 %v78, 71
  %v527 = vpop.permute.xlu0 %526
  %528 = vrot.lane.b32.xlu0 %v79, 71
  %v529 = vpop.permute.xlu0 %528
  %530 = vrot.lane.b32.xlu0 %v80, 71
  %v531 = vpop.permute.xlu0 %530
  %532 = vrot.lane.b32.xlu0 %v81, 71
  %v533 = vpop.permute.xlu0 %532
  %534 = vrot.lane.b32.xlu0 %v82, 71
  %v535 = vpop.permute.xlu0 %534
  %536 = vrot.lane.b32.xlu0 %v83, 71
  %v537 = vpop.permute.xlu0 %536
  %538 = vrot.lane.b32.xlu0 %v84, 71
  %v539 = vpop.permute.xlu0 %538
  %540 = vrot.lane.b32.xlu0 %v85, 71
  %v541 = vpop.permute.xlu0 %540
  %542 = vrot.lane.b32.xlu0 %v86, 71
  %v543 = vpop.permute.xlu0 %542
  %544 = vrot.lane.b32.xlu0 %v87, 71
  %v545 = vpop.permute.xlu0 %544
  %546 = vrot.lane.b32.xlu0 %v88, 71
  %v547 = vpop.permute.xlu0 %546
  %vm548 = vcmask 580608
  %v549 = vsel %vm548, %v515, %v517
  %v550 = vsel %vm548, %v517, %v519
  %v551 = vsel %vm548, %v519, %v521
  %v552 = vsel %vm548, %v521, %v523
  %v553 = vsel %vm548, %v523, %v525
  %v554 = vsel %vm548, %v525, %v527
  %v555 = vsel %vm548, %v527, %v529
  %v556 = vsel %vm548, %v529, %v531
  %v557 = vsel %vm548, %v531, %v533
  %v558 = vsel %vm548, %v533, %v535
  %v559 = vsel %vm548, %v535, %v537
  %v560 = vsel %vm548, %v537, %v539
  %v561 = vsel %vm548, %v539, %v541
  %v562 = vsel %vm548, %v541, %v543
  %v563 = vsel %vm548, %v543, %v545
  %v564 = vsel %vm548, %v545, %v547
  %582 = vrot.lane.b32.xlu0 %v72, 70
  %v583 = vpop.permute.xlu0 %582
  %584 = vrot.lane.b32.xlu0 %v73, 70
  %v585 = vpop.permute.xlu0 %584
  %586 = vrot.lane.b32.xlu0 %v74, 70
  %v587 = vpop.permute.xlu0 %586
  %588 = vrot.lane.b32.xlu0 %v75, 70
  %v589 = vpop.permute.xlu0 %588
  %590 = vrot.lane.b32.xlu0 %v76, 70
  %v591 = vpop.permute.xlu0 %590
  %592 = vrot.lane.b32.xlu0 %v77, 70
  %v593 = vpop.permute.xlu0 %592
  %594 = vrot.lane.b32.xlu0 %v78, 70
  %v595 = vpop.permute.xlu0 %594
  %596 = vrot.lane.b32.xlu0 %v79, 70
  %v597 = vpop.permute.xlu0 %596
  %598 = vrot.lane.b32.xlu0 %v80, 70
  %v599 = vpop.permute.xlu0 %598
  %600 = vrot.lane.b32.xlu0 %v81, 70
  %v601 = vpop.permute.xlu0 %600
  %602 = vrot.lane.b32.xlu0 %v82, 70
  %v603 = vpop.permute.xlu0 %602
  %604 = vrot.lane.b32.xlu0 %v83, 70
  %v605 = vpop.permute.xlu0 %604
  %606 = vrot.lane.b32.xlu0 %v84, 70
  %v607 = vpop.permute.xlu0 %606
  %608 = vrot.lane.b32.xlu0 %v85, 70
  %v609 = vpop.permute.xlu0 %608
  %610 = vrot.lane.b32.xlu0 %v86, 70
  %v611 = vpop.permute.xlu0 %610
  %612 = vrot.lane.b32.xlu0 %v87, 70
  %v613 = vpop.permute.xlu0 %612
  %614 = vrot.lane.b32.xlu0 %v88, 70
  %v615 = vpop.permute.xlu0 %614
  %vm616 = vcmask 572416
  %v617 = vsel %vm616, %v583, %v585
  %v618 = vsel %vm616, %v585, %v587
  %v619 = vsel %vm616, %v587, %v589
  %v620 = vsel %vm616, %v589, %v591
  %v621 = vsel %vm616, %v591, %v593
  %v622 = vsel %vm616, %v593, %v595
  %v623 = vsel %vm616, %v595, %v597
  %v624 = vsel %vm616, %v597, %v599
  %v625 = vsel %vm616, %v599, %v601
  %v626 = vsel %vm616, %v601, %v603
  %v627 = vsel %vm616, %v603, %v605
  %v628 = vsel %vm616, %v605, %v607
  %v629 = vsel %vm616, %v607, %v609
  %v630 = vsel %vm616, %v609, %v611
  %v631 = vsel %vm616, %v611, %v613
  %v632 = vsel %vm616, %v613, %v615
  %vm633 = vcmask 1040384
  %v634 = vsel %vm633, %v72, %v141
  %v635 = vsel %vm633, %v73, %v142
  %v636 = vsel %vm633, %v74, %v143
  %v637 = vsel %vm633, %v75, %v144
  %v638 = vsel %vm633, %v76, %v145
  %v639 = vsel %vm633, %v77, %v146
  %v640 = vsel %vm633, %v78, %v147
  %v641 = vsel %vm633, %v79, %v148
  %v642 = vsel %vm633, %v80, %v149
  %v643 = vsel %vm633, %v81, %v150
  %v644 = vsel %vm633, %v82, %v151
  %v645 = vsel %vm633, %v83, %v152
  %v646 = vsel %vm633, %v84, %v153
  %v647 = vsel %vm633, %v85, %v154
  %v648 = vsel %vm633, %v86, %v155
  %v649 = vsel %vm633, %v87, %v156
  %v650 = vsel %vm633, %v88, %v139
  %vm651 = vcmask 1041408
  %v652 = vsel %vm651, %v634, %v209
  %v653 = vsel %vm651, %v635, %v210
  %v654 = vsel %vm651, %v636, %v211
  %v655 = vsel %vm651, %v637, %v212
  %v656 = vsel %vm651, %v638, %v213
  %v657 = vsel %vm651, %v639, %v214
  %v658 = vsel %vm651, %v640, %v215
  %v659 = vsel %vm651, %v641, %v216
  %v660 = vsel %vm651, %v642, %v217
  %v661 = vsel %vm651, %v643, %v218
  %v662 = vsel %vm651, %v644, %v219
  %v663 = vsel %vm651, %v645, %v220
  %v664 = vsel %vm651, %v646, %v221
  %v665 = vsel %vm651, %v647, %v222
  %v666 = vsel %vm651, %v648, %v223
  %v667 = vsel %vm651, %v649, %v224
  %v668 = vsel %vm651, %v650, %v207
  %vm669 = vcmask 1042432
  %v670 = vsel %vm669, %v652, %v277
  %v671 = vsel %vm669, %v653, %v278
  %v672 = vsel %vm669, %v654, %v279
  %v673 = vsel %vm669, %v655, %v280
  %v674 = vsel %vm669, %v656, %v281
  %v675 = vsel %vm669, %v657, %v282
  %v676 = vsel %vm669, %v658, %v283
  %v677 = vsel %vm669, %v659, %v284
  %v678 = vsel %vm669, %v660, %v285
  %v679 = vsel %vm669, %v661, %v286
  %v680 = vsel %vm669, %v662, %v287
  %v681 = vsel %vm669, %v663, %v288
  %v682 = vsel %vm669, %v664, %v289
  %v683 = vsel %vm669, %v665, %v290
  %v684 = vsel %vm669, %v666, %v291
  %v685 = vsel %vm669, %v667, %v292
  %v686 = vsel %vm669, %v668, %v275
  %vm687 = vcmask 1043456
  %v688 = vsel %vm687, %v670, %v345
  %v689 = vsel %vm687, %v671, %v346
  %v690 = vsel %vm687, %v672, %v347
  %v691 = vsel %vm687, %v673, %v348
  %v692 = vsel %vm687, %v674, %v349
  %v693 = vsel %vm687, %v675, %v350
  %v694 = vsel %vm687, %v676, %v351
  %v695 = vsel %vm687, %v677, %v352
  %v696 = vsel %vm687, %v678, %v353
  %v697 = vsel %vm687, %v679, %v354
  %v698 = vsel %vm687, %v680, %v355
  %v699 = vsel %vm687, %v681, %v356
  %v700 = vsel %vm687, %v682, %v357
  %v701 = vsel %vm687, %v683, %v358
  %v702 = vsel %vm687, %v684, %v359
  %v703 = vsel %vm687, %v685, %v360
  %v704 = vsel %vm687, %v686, %v343
  %vm705 = vcmask 1044480
  %v706 = vsel %vm705, %v688, %v413
  %v707 = vsel %vm705, %v689, %v414
  %v708 = vsel %vm705, %v690, %v415
  %v709 = vsel %vm705, %v691, %v416
  %v710 = vsel %vm705, %v692, %v417
  %v711 = vsel %vm705, %v693, %v418
  %v712 = vsel %vm705, %v694, %v419
  %v713 = vsel %vm705, %v695, %v420
  %v714 = vsel %vm705, %v696, %v421
  %v715 = vsel %vm705, %v697, %v422
  %v716 = vsel %vm705, %v698, %v423
  %v717 = vsel %vm705, %v699, %v424
  %v718 = vsel %vm705, %v700, %v425
  %v719 = vsel %vm705, %v701, %v426
  %v720 = vsel %vm705, %v702, %v427
  %v721 = vsel %vm705, %v703, %v428
  %v722 = vsel %vm705, %v704, %v411
  %vm723 = vcmask 1045504
  %v724 = vsel %vm723, %v706, %v481
  %v725 = vsel %vm723, %v707, %v482
  %v726 = vsel %vm723, %v708, %v483
  %v727 = vsel %vm723, %v709, %v484
  %v728 = vsel %vm723, %v710, %v485
  %v729 = vsel %vm723, %v711, %v486
  %v730 = vsel %vm723, %v712, %v487
  %v731 = vsel %vm723, %v713, %v488
  %v732 = vsel %vm723, %v714, %v489
  %v733 = vsel %vm723, %v715, %v490
  %v734 = vsel %vm723, %v716, %v491
  %v735 = vsel %vm723, %v717, %v492
  %v736 = vsel %vm723, %v718, %v493
  %v737 = vsel %vm723, %v719, %v494
  %v738 = vsel %vm723, %v720, %v495
  %v739 = vsel %vm723, %v721, %v496
  %v740 = vsel %vm723, %v722, %v479
  %vm741 = vcmask 1046528
  %v742 = vsel %vm741, %v724, %v549
  %v743 = vsel %vm741, %v725, %v550
  %v744 = vsel %vm741, %v726, %v551
  %v745 = vsel %vm741, %v727, %v552
  %v746 = vsel %vm741, %v728, %v553
  %v747 = vsel %vm741, %v729, %v554
  %v748 = vsel %vm741, %v730, %v555
  %v749 = vsel %vm741, %v731, %v556
  %v750 = vsel %vm741, %v732, %v557
  %v751 = vsel %vm741, %v733, %v558
  %v752 = vsel %vm741, %v734, %v559
  %v753 = vsel %vm741, %v735, %v560
  %v754 = vsel %vm741, %v736, %v561
  %v755 = vsel %vm741, %v737, %v562
  %v756 = vsel %vm741, %v738, %v563
  %v757 = vsel %vm741, %v739, %v564
  %v758 = vsel %vm741, %v740, %v547
  %760 = vset.pattern.permute.xlu0 0
  %761 = vperm.xlu0 %760, %v50
  %v762 = vpop.permute.xlu0 %761
  %vm764 = vcmask 72704
  %v766 = vsel %vm764, %v23, 0
  %v768 = vsel %vm633, %v617, 0
  %v770 = vsel %vm633, %v618, 0
  %v772 = vsel %vm633, %v619, 0
  %v774 = vsel %vm633, %v620, 0
  %v776 = vsel %vm633, %v621, 0
  %v778 = vsel %vm633, %v622, 0
  %v780 = vsel %vm633, %v623, 0
  %v782 = vsel %vm633, %v624, 0
  %v784 = vsel %vm633, %v625, 0
  %v786 = vsel %vm633, %v626, 0
  %v788 = vsel %vm633, %v627, 0
  %v790 = vsel %vm633, %v628, 0
  %v792 = vsel %vm633, %v629, 0
  %v794 = vsel %vm633, %v630, 0
  %v796 = vsel %vm633, %v631, 0
  %v798 = vsel %vm633, %v632, 0
  %v800 = vsel %vm633, %v615, 0
  %802 = vmatpush.msra.mxu0 0.0
  %803 = vmatpush.msra.mxu0 0.0
  %804 = vmatpush.msra.mxu0 0.0
  %805 = vmatpush.msra.mxu0 0.0
  %806 = vmatpush.msra.mxu0 0.0
  %807 = vmatpush.msra.mxu0 0.0
  %808 = vmatpush.msra.mxu0 0.0
  %809 = vmatpush.msra.mxu0 0.0
  %810 = vmatpush.msra.mxu0 0.0
  %811 = vmatpush.msra.mxu0 0.0
  %812 = vmatpush.msra.mxu0 0.0
  %813 = vmatpush.msra.mxu0 0.0
  %814 = vmatpush.msra.mxu0 0.0
  %815 = vmatpush.msra.mxu0 0.0
  %816 = vmatpush.msra.mxu0 %v768
  %817 = vmatpush.msra.mxu0 %v742
  %818 = vmatmul.f32.gmra.mxu0 %v766
  %v819 = vpop.f32.mrf.mxu0
  %v820 = vadd.f32 %v762, %v819
  %821 = vdwg.mxu0
  %822 = vmatpush.msra.mxu0 0.0
  %823 = vmatpush.msra.mxu0 0.0
  %824 = vmatpush.msra.mxu0 0.0
  %825 = vmatpush.msra.mxu0 0.0
  %826 = vmatpush.msra.mxu0 0.0
  %827 = vmatpush.msra.mxu0 0.0
  %828 = vmatpush.msra.mxu0 0.0
  %829 = vmatpush.msra.mxu0 0.0
  %830 = vmatpush.msra.mxu0 0.0
  %831 = vmatpush.msra.mxu0 0.0
  %832 = vmatpush.msra.mxu0 0.0
  %833 = vmatpush.msra.mxu0 0.0
  %834 = vmatpush.msra.mxu0 0.0
  %835 = vmatpush.msra.mxu0 0.0
  %836 = vmatpush.msra.mxu0 %v770
  %837 = vmatpush.msra.mxu0 %v743
  %838 = vmatmul.f32.gmra.mxu0 %v766
  %v839 = vpop.f32.mrf.mxu0
  %v840 = vadd.f32 %v762, %v839
  %841 = vdwg.mxu0
  %842 = vmatpush.msra.mxu0 0.0
  %843 = vmatpush.msra.mxu0 0.0
  %844 = vmatpush.msra.mxu0 0.0
  %845 = vmatpush.msra.mxu0 0.0
  %846 = vmatpush.msra.mxu0 0.0
  %847 = vmatpush.msra.mxu0 0.0
  %848 = vmatpush.msra.mxu0 0.0
  %849 = vmatpush.msra.mxu0 0.0
  %850 = vmatpush.msra.mxu0 0.0
  %851 = vmatpush.msra.mxu0 0.0
  %852 = vmatpush.msra.mxu0 0.0
  %853 = vmatpush.msra.mxu0 0.0
  %854 = vmatpush.msra.mxu0 0.0
  %855 = vmatpush.msra.mxu0 0.0
  %856 = vmatpush.msra.mxu0 %v772
  %857 = vmatpush.msra.mxu0 %v744
  %858 = vmatmul.f32.gmra.mxu0 %v766
  %v859 = vpop.f32.mrf.mxu0
  %v860 = vadd.f32 %v762, %v859
  %861 = vdwg.mxu0
  %862 = vmatpush.msra.mxu0 0.0
  %863 = vmatpush.msra.mxu0 0.0
  %864 = vmatpush.msra.mxu0 0.0
  %865 = vmatpush.msra.mxu0 0.0
  %866 = vmatpush.msra.mxu0 0.0
  %867 = vmatpush.msra.mxu0 0.0
  %868 = vmatpush.msra.mxu0 0.0
  %869 = vmatpush.msra.mxu0 0.0
  %870 = vmatpush.msra.mxu0 0.0
  %871 = vmatpush.msra.mxu0 0.0
  %872 = vmatpush.msra.mxu0 0.0
  %873 = vmatpush.msra.mxu0 0.0
  %874 = vmatpush.msra.mxu0 0.0
  %875 = vmatpush.msra.mxu0 0.0
  %876 = vmatpush.msra.mxu0 %v774
  %877 = vmatpush.msra.mxu0 %v745
  %878 = vmatmul.f32.gmra.mxu0 %v766
  %v879 = vpop.f32.mrf.mxu0
  %v880 = vadd.f32 %v762, %v879
  %881 = vdwg.mxu0
  %882 = vmatpush.msra.mxu0 0.0
  %883 = vmatpush.msra.mxu0 0.0
  %884 = vmatpush.msra.mxu0 0.0
  %885 = vmatpush.msra.mxu0 0.0
  %886 = vmatpush.msra.mxu0 0.0
  %887 = vmatpush.msra.mxu0 0.0
  %888 = vmatpush.msra.mxu0 0.0
  %889 = vmatpush.msra.mxu0 0.0
  %890 = vmatpush.msra.mxu0 0.0
  %891 = vmatpush.msra.mxu0 0.0
  %892 = vmatpush.msra.mxu0 0.0
  %893 = vmatpush.msra.mxu0 0.0
  %894 = vmatpush.msra.mxu0 0.0
  %895 = vmatpush.msra.mxu0 0.0
  %896 = vmatpush.msra.mxu0 %v776
  %897 = vmatpush.msra.mxu0 %v746
  %898 = vmatmul.f32.gmra.mxu0 %v766
  %v899 = vpop.f32.mrf.mxu0
  %v900 = vadd.f32 %v762, %v899
  %901 = vdwg.mxu0
  %902 = vmatpush.msra.mxu0 0.0
  %903 = vmatpush.msra.mxu0 0.0
  %904 = vmatpush.msra.mxu0 0.0
  %905 = vmatpush.msra.mxu0 0.0
  %906 = vmatpush.msra.mxu0 0.0
  %907 = vmatpush.msra.mxu0 0.0
  %908 = vmatpush.msra.mxu0 0.0
  %909 = vmatpush.msra.mxu0 0.0
  %910 = vmatpush.msra.mxu0 0.0
  %911 = vmatpush.msra.mxu0 0.0
  %912 = vmatpush.msra.mxu0 0.0
  %913 = vmatpush.msra.mxu0 0.0
  %914 = vmatpush.msra.mxu0 0.0
  %915 = vmatpush.msra.mxu0 0.0
  %916 = vmatpush.msra.mxu0 %v778
  %917 = vmatpush.msra.mxu0 %v747
  %918 = vmatmul.f32.gmra.mxu0 %v766
  %v919 = vpop.f32.mrf.mxu0
  %v920 = vadd.f32 %v762, %v919
  %921 = vdwg.mxu0
  %922 = vmatpush.msra.mxu0 0.0
  %923 = vmatpush.msra.mxu0 0.0
  %924 = vmatpush.msra.mxu0 0.0
  %925 = vmatpush.msra.mxu0 0.0
  %926 = vmatpush.msra.mxu0 0.0
  %927 = vmatpush.msra.mxu0 0.0
  %928 = vmatpush.msra.mxu0 0.0
  %929 = vmatpush.msra.mxu0 0.0
  %930 = vmatpush.msra.mxu0 0.0
  %931 = vmatpush.msra.mxu0 0.0
  %932 = vmatpush.msra.mxu0 0.0
  %933 = vmatpush.msra.mxu0 0.0
  %934 = vmatpush.msra.mxu0 0.0
  %935 = vmatpush.msra.mxu0 0.0
  %936 = vmatpush.msra.mxu0 %v780
  %937 = vmatpush.msra.mxu0 %v748
  %938 = vmatmul.f32.gmra.mxu0 %v766
  %v939 = vpop.f32.mrf.mxu0
  %v940 = vadd.f32 %v762, %v939
  %941 = vdwg.mxu0
  %942 = vmatpush.msra.mxu0 0.0
  %943 = vmatpush.msra.mxu0 0.0
  %944 = vmatpush.msra.mxu0 0.0
  %945 = vmatpush.msra.mxu0 0.0
  %946 = vmatpush.msra.mxu0 0.0
  %947 = vmatpush.msra.mxu0 0.0
  %948 = vmatpush.msra.mxu0 0.0
  %949 = vmatpush.msra.mxu0 0.0
  %950 = vmatpush.msra.mxu0 0.0
  %951 = vmatpush.msra.mxu0 0.0
  %952 = vmatpush.msra.mxu0 0.0
  %953 = vmatpush.msra.mxu0 0.0
  %954 = vmatpush.msra.mxu0 0.0
  %955 = vmatpush.msra.mxu0 0.0
  %956 = vmatpush.msra.mxu0 %v782
  %957 = vmatpush.msra.mxu0 %v749
  %958 = vmatmul.f32.gmra.mxu0 %v766
  %v959 = vpop.f32.mrf.mxu0
  %v960 = vadd.f32 %v762, %v959
  %961 = vdwg.mxu0
  %962 = vmatpush.msra.mxu0 0.0
  %963 = vmatpush.msra.mxu0 0.0
  %964 = vmatpush.msra.mxu0 0.0
  %965 = vmatpush.msra.mxu0 0.0
  %966 = vmatpush.msra.mxu0 0.0
  %967 = vmatpush.msra.mxu0 0.0
  %968 = vmatpush.msra.mxu0 0.0
  %969 = vmatpush.msra.mxu0 0.0
  %970 = vmatpush.msra.mxu0 0.0
  %971 = vmatpush.msra.mxu0 0.0
  %972 = vmatpush.msra.mxu0 0.0
  %973 = vmatpush.msra.mxu0 0.0
  %974 = vmatpush.msra.mxu0 0.0
  %975 = vmatpush.msra.mxu0 0.0
  %976 = vmatpush.msra.mxu0 %v784
  %977 = vmatpush.msra.mxu0 %v750
  %978 = vmatmul.f32.gmra.mxu0 %v766
  %v979 = vpop.f32.mrf.mxu0
  %v980 = vadd.f32 %v762, %v979
  %981 = vdwg.mxu0
  %982 = vmatpush.msra.mxu0 0.0
  %983 = vmatpush.msra.mxu0 0.0
  %984 = vmatpush.msra.mxu0 0.0
  %985 = vmatpush.msra.mxu0 0.0
  %986 = vmatpush.msra.mxu0 0.0
  %987 = vmatpush.msra.mxu0 0.0
  %988 = vmatpush.msra.mxu0 0.0
  %989 = vmatpush.msra.mxu0 0.0
  %990 = vmatpush.msra.mxu0 0.0
  %991 = vmatpush.msra.mxu0 0.0
  %992 = vmatpush.msra.mxu0 0.0
  %993 = vmatpush.msra.mxu0 0.0
  %994 = vmatpush.msra.mxu0 0.0
  %995 = vmatpush.msra.mxu0 0.0
  %996 = vmatpush.msra.mxu0 %v786
  %997 = vmatpush.msra.mxu0 %v751
  %998 = vmatmul.f32.gmra.mxu0 %v766
  %v999 = vpop.f32.mrf.mxu0
  %v1000 = vadd.f32 %v762, %v999
  %1001 = vdwg.mxu0
  %1002 = vmatpush.msra.mxu0 0.0
  %1003 = vmatpush.msra.mxu0 0.0
  %1004 = vmatpush.msra.mxu0 0.0
  %1005 = vmatpush.msra.mxu0 0.0
  %1006 = vmatpush.msra.mxu0 0.0
  %1007 = vmatpush.msra.mxu0 0.0
  %1008 = vmatpush.msra.mxu0 0.0
  %1009 = vmatpush.msra.mxu0 0.0
  %1010 = vmatpush.msra.mxu0 0.0
  %1011 = vmatpush.msra.mxu0 0.0
  %1012 = vmatpush.msra.mxu0 0.0
  %1013 = vmatpush.msra.mxu0 0.0
  %1014 = vmatpush.msra.mxu0 0.0
  %1015 = vmatpush.msra.mxu0 0.0
  %1016 = vmatpush.msra.mxu0 %v788
  %1017 = vmatpush.msra.mxu0 %v752
  %1018 = vmatmul.f32.gmra.mxu0 %v766
  %v1019 = vpop.f32.mrf.mxu0
  %v1020 = vadd.f32 %v762, %v1019
  %1021 = vdwg.mxu0
  %1022 = vmatpush.msra.mxu0 0.0
  %1023 = vmatpush.msra.mxu0 0.0
  %1024 = vmatpush.msra.mxu0 0.0
  %1025 = vmatpush.msra.mxu0 0.0
  %1026 = vmatpush.msra.mxu0 0.0
  %1027 = vmatpush.msra.mxu0 0.0
  %1028 = vmatpush.msra.mxu0 0.0
  %1029 = vmatpush.msra.mxu0 0.0
  %1030 = vmatpush.msra.mxu0 0.0
  %1031 = vmatpush.msra.mxu0 0.0
  %1032 = vmatpush.msra.mxu0 0.0
  %1033 = vmatpush.msra.mxu0 0.0
  %1034 = vmatpush.msra.mxu0 0.0
  %1035 = vmatpush.msra.mxu0 0.0
  %1036 = vmatpush.msra.mxu0 %v790
  %1037 = vmatpush.msra.mxu0 %v753
  %1038 = vmatmul.f32.gmra.mxu0 %v766
  %v1039 = vpop.f32.mrf.mxu0
  %v1040 = vadd.f32 %v762, %v1039
  %1041 = vdwg.mxu0
  %1042 = vmatpush.msra.mxu0 0.0
  %1043 = vmatpush.msra.mxu0 0.0
  %1044 = vmatpush.msra.mxu0 0.0
  %1045 = vmatpush.msra.mxu0 0.0
  %1046 = vmatpush.msra.mxu0 0.0
  %1047 = vmatpush.msra.mxu0 0.0
  %1048 = vmatpush.msra.mxu0 0.0
  %1049 = vmatpush.msra.mxu0 0.0
  %1050 = vmatpush.msra.mxu0 0.0
  %1051 = vmatpush.msra.mxu0 0.0
  %1052 = vmatpush.msra.mxu0 0.0
  %1053 = vmatpush.msra.mxu0 0.0
  %1054 = vmatpush.msra.mxu0 0.0
  %1055 = vmatpush.msra.mxu0 0.0
  %1056 = vmatpush.msra.mxu0 %v792
  %1057 = vmatpush.msra.mxu0 %v754
  %1058 = vmatmul.f32.gmra.mxu0 %v766
  %v1059 = vpop.f32.mrf.mxu0
  %v1060 = vadd.f32 %v762, %v1059
  %1061 = vdwg.mxu0
  %1062 = vmatpush.msra.mxu0 0.0
  %1063 = vmatpush.msra.mxu0 0.0
  %1064 = vmatpush.msra.mxu0 0.0
  %1065 = vmatpush.msra.mxu0 0.0
  %1066 = vmatpush.msra.mxu0 0.0
  %1067 = vmatpush.msra.mxu0 0.0
  %1068 = vmatpush.msra.mxu0 0.0
  %1069 = vmatpush.msra.mxu0 0.0
  %1070 = vmatpush.msra.mxu0 0.0
  %1071 = vmatpush.msra.mxu0 0.0
  %1072 = vmatpush.msra.mxu0 0.0
  %1073 = vmatpush.msra.mxu0 0.0
  %1074 = vmatpush.msra.mxu0 0.0
  %1075 = vmatpush.msra.mxu0 0.0
  %1076 = vmatpush.msra.mxu0 %v794
  %1077 = vmatpush.msra.mxu0 %v755
  %1078 = vmatmul.f32.gmra.mxu0 %v766
  %v1079 = vpop.f32.mrf.mxu0
  %v1080 = vadd.f32 %v762, %v1079
  %1081 = vdwg.mxu0
  %1082 = vmatpush.msra.mxu0 0.0
  %1083 = vmatpush.msra.mxu0 0.0
  %1084 = vmatpush.msra.mxu0 0.0
  %1085 = vmatpush.msra.mxu0 0.0
  %1086 = vmatpush.msra.mxu0 0.0
  %1087 = vmatpush.msra.mxu0 0.0
  %1088 = vmatpush.msra.mxu0 0.0
  %1089 = vmatpush.msra.mxu0 0.0
  %1090 = vmatpush.msra.mxu0 0.0
  %1091 = vmatpush.msra.mxu0 0.0
  %1092 = vmatpush.msra.mxu0 0.0
  %1093 = vmatpush.msra.mxu0 0.0
  %1094 = vmatpush.msra.mxu0 0.0
  %1095 = vmatpush.msra.mxu0 0.0
  %1096 = vmatpush.msra.mxu0 %v796
  %1097 = vmatpush.msra.mxu0 %v756
  %1098 = vmatmul.f32.gmra.mxu0 %v766
  %v1099 = vpop.f32.mrf.mxu0
  %v1100 = vadd.f32 %v762, %v1099
  %1101 = vdwg.mxu0
  %1102 = vmatpush.msra.mxu0 0.0
  %1103 = vmatpush.msra.mxu0 0.0
  %1104 = vmatpush.msra.mxu0 0.0
  %1105 = vmatpush.msra.mxu0 0.0
  %1106 = vmatpush.msra.mxu0 0.0
  %1107 = vmatpush.msra.mxu0 0.0
  %1108 = vmatpush.msra.mxu0 0.0
  %1109 = vmatpush.msra.mxu0 0.0
  %1110 = vmatpush.msra.mxu0 0.0
  %1111 = vmatpush.msra.mxu0 0.0
  %1112 = vmatpush.msra.mxu0 0.0
  %1113 = vmatpush.msra.mxu0 0.0
  %1114 = vmatpush.msra.mxu0 0.0
  %1115 = vmatpush.msra.mxu0 0.0
  %1116 = vmatpush.msra.mxu0 %v798
  %1117 = vmatpush.msra.mxu0 %v757
  %1118 = vmatmul.f32.gmra.mxu0 %v766
  %v1119 = vpop.f32.mrf.mxu0
  %v1120 = vadd.f32 %v762, %v1119
  %1121 = vdwg.mxu0
  %1122 = vmatpush.msra.mxu0 0.0
  %1123 = vmatpush.msra.mxu0 0.0
  %1124 = vmatpush.msra.mxu0 0.0
  %1125 = vmatpush.msra.mxu0 0.0
  %1126 = vmatpush.msra.mxu0 0.0
  %1127 = vmatpush.msra.mxu0 0.0
  %1128 = vmatpush.msra.mxu0 0.0
  %1129 = vmatpush.msra.mxu0 0.0
  %1130 = vmatpush.msra.mxu0 0.0
  %1131 = vmatpush.msra.mxu0 0.0
  %1132 = vmatpush.msra.mxu0 0.0
  %1133 = vmatpush.msra.mxu0 0.0
  %1134 = vmatpush.msra.mxu0 0.0
  %1135 = vmatpush.msra.mxu0 0.0
  %1136 = vmatpush.msra.mxu0 %v800
  %1137 = vmatpush.msra.mxu0 %v758
  %1138 = vmatmul.f32.gmra.mxu0 %v766
  %v1139 = vpop.f32.mrf.mxu0
  %v1140 = vadd.f32 %v762, %v1139
  %1141 = vdwg.mxu0
  %v1142 = vmax.f32 %v820, 0.0
  %v1143 = vmax.f32 %v840, 0.0
  %v1144 = vmax.f32 %v860, 0.0
  %v1145 = vmax.f32 %v880, 0.0
  %v1146 = vmax.f32 %v900, 0.0
  %v1147 = vmax.f32 %v920, 0.0
  %v1148 = vmax.f32 %v940, 0.0
  %v1149 = vmax.f32 %v960, 0.0
  %v1150 = vmax.f32 %v980, 0.0
  %v1151 = vmax.f32 %v1000, 0.0
  %v1152 = vmax.f32 %v1020, 0.0
  %v1153 = vmax.f32 %v1040, 0.0
  %v1154 = vmax.f32 %v1060, 0.0
  %v1155 = vmax.f32 %v1080, 0.0
  %v1156 = vmax.f32 %v1100, 0.0
  %v1157 = vmax.f32 %v1120, 0.0
  %v1158 = vmax.f32 %v1140, 0.0
  %1175 = vrot.lane.b32.xlu0 %v1142, 127
  %v1176 = vpop.permute.xlu0 %1175
  %1177 = vrot.lane.b32.xlu0 %v1143, 127
  %v1178 = vpop.permute.xlu0 %1177
  %1179 = vrot.lane.b32.xlu0 %v1144, 127
  %v1180 = vpop.permute.xlu0 %1179
  %1181 = vrot.lane.b32.xlu0 %v1145, 127
  %v1182 = vpop.permute.xlu0 %1181
  %1183 = vrot.lane.b32.xlu0 %v1146, 127
  %v1184 = vpop.permute.xlu0 %1183
  %1185 = vrot.lane.b32.xlu0 %v1147, 127
  %v1186 = vpop.permute.xlu0 %1185
  %1187 = vrot.lane.b32.xlu0 %v1148, 127
  %v1188 = vpop.permute.xlu0 %1187
  %1189 = vrot.lane.b32.xlu0 %v1149, 127
  %v1190 = vpop.permute.xlu0 %1189
  %1191 = vrot.lane.b32.xlu0 %v1150, 127
  %v1192 = vpop.permute.xlu0 %1191
  %1193 = vrot.lane.b32.xlu0 %v1151, 127
  %v1194 = vpop.permute.xlu0 %1193
  %1195 = vrot.lane.b32.xlu0 %v1152, 127
  %v1196 = vpop.permute.xlu0 %1195
  %1197 = vrot.lane.b32.xlu0 %v1153, 127
  %v1198 = vpop.permute.xlu0 %1197
  %1199 = vrot.lane.b32.xlu0 %v1154, 127
  %v1200 = vpop.permute.xlu0 %1199
  %1201 = vrot.lane.b32.xlu0 %v1155, 127
  %v1202 = vpop.permute.xlu0 %1201
  %1203 = vrot.lane.b32.xlu0 %v1156, 127
  %v1204 = vpop.permute.xlu0 %1203
  %1205 = vrot.lane.b32.xlu0 %v1157, 127
  %v1206 = vpop.permute.xlu0 %1205
  %v1207 = vsel %vm140, %v1176, %v1178
  %v1208 = vsel %vm140, %v1178, %v1180
  %v1209 = vsel %vm140, %v1180, %v1182
  %v1210 = vsel %vm140, %v1182, %v1184
  %v1211 = vsel %vm140, %v1184, %v1186
  %v1212 = vsel %vm140, %v1186, %v1188
  %v1213 = vsel %vm140, %v1188, %v1190
  %v1214 = vsel %vm140, %v1190, %v1192
  %v1215 = vsel %vm140, %v1192, %v1194
  %v1216 = vsel %vm140, %v1194, %v1196
  %v1217 = vsel %vm140, %v1196, %v1198
  %v1218 = vsel %vm140, %v1198, %v1200
  %v1219 = vsel %vm140, %v1200, %v1202
  %v1220 = vsel %vm140, %v1202, %v1204
  %v1221 = vsel %vm140, %v1204, %v1206
  %1238 = vrot.lane.b32.xlu0 %v1142, 126
  %v1239 = vpop.permute.xlu0 %1238
  %1240 = vrot.lane.b32.xlu0 %v1143, 126
  %v1241 = vpop.permute.xlu0 %1240
  %1242 = vrot.lane.b32.xlu0 %v1144, 126
  %v1243 = vpop.permute.xlu0 %1242
  %1244 = vrot.lane.b32.xlu0 %v1145, 126
  %v1245 = vpop.permute.xlu0 %1244
  %1246 = vrot.lane.b32.xlu0 %v1146, 126
  %v1247 = vpop.permute.xlu0 %1246
  %1248 = vrot.lane.b32.xlu0 %v1147, 126
  %v1249 = vpop.permute.xlu0 %1248
  %1250 = vrot.lane.b32.xlu0 %v1148, 126
  %v1251 = vpop.permute.xlu0 %1250
  %1252 = vrot.lane.b32.xlu0 %v1149, 126
  %v1253 = vpop.permute.xlu0 %1252
  %1254 = vrot.lane.b32.xlu0 %v1150, 126
  %v1255 = vpop.permute.xlu0 %1254
  %1256 = vrot.lane.b32.xlu0 %v1151, 126
  %v1257 = vpop.permute.xlu0 %1256
  %1258 = vrot.lane.b32.xlu0 %v1152, 126
  %v1259 = vpop.permute.xlu0 %1258
  %1260 = vrot.lane.b32.xlu0 %v1153, 126
  %v1261 = vpop.permute.xlu0 %1260
  %1262 = vrot.lane.b32.xlu0 %v1154, 126
  %v1263 = vpop.permute.xlu0 %1262
  %1264 = vrot.lane.b32.xlu0 %v1155, 126
  %v1265 = vpop.permute.xlu0 %1264
  %1266 = vrot.lane.b32.xlu0 %v1156, 126
  %v1267 = vpop.permute.xlu0 %1266
  %1268 = vrot.lane.b32.xlu0 %v1157, 126
  %v1269 = vpop.permute.xlu0 %1268
  %v1270 = vsel %vm208, %v1239, %v1241
  %v1271 = vsel %vm208, %v1241, %v1243
  %v1272 = vsel %vm208, %v1243, %v1245
  %v1273 = vsel %vm208, %v1245, %v1247
  %v1274 = vsel %vm208, %v1247, %v1249
  %v1275 = vsel %vm208, %v1249, %v1251
  %v1276 = vsel %vm208, %v1251, %v1253
  %v1277 = vsel %vm208, %v1253, %v1255
  %v1278 = vsel %vm208, %v1255, %v1257
  %v1279 = vsel %vm208, %v1257, %v1259
  %v1280 = vsel %vm208, %v1259, %v1261
  %v1281 = vsel %vm208, %v1261, %v1263
  %v1282 = vsel %vm208, %v1263, %v1265
  %v1283 = vsel %vm208, %v1265, %v1267
  %v1284 = vsel %vm208, %v1267, %v1269
  %1302 = vrot.lane.b32.xlu0 %v1142, 100
  %v1303 = vpop.permute.xlu0 %1302
  %1304 = vrot.lane.b32.xlu0 %v1143, 100
  %v1305 = vpop.permute.xlu0 %1304
  %1306 = vrot.lane.b32.xlu0 %v1144, 100
  %v1307 = vpop.permute.xlu0 %1306
  %1308 = vrot.lane.b32.xlu0 %v1145, 100
  %v1309 = vpop.permute.xlu0 %1308
  %1310 = vrot.lane.b32.xlu0 %v1146, 100
  %v1311 = vpop.permute.xlu0 %1310
  %1312 = vrot.lane.b32.xlu0 %v1147, 100
  %v1313 = vpop.permute.xlu0 %1312
  %1314 = vrot.lane.b32.xlu0 %v1148, 100
  %v1315 = vpop.permute.xlu0 %1314
  %1316 = vrot.lane.b32.xlu0 %v1149, 100
  %v1317 = vpop.permute.xlu0 %1316
  %1318 = vrot.lane.b32.xlu0 %v1150, 100
  %v1319 = vpop.permute.xlu0 %1318
  %1320 = vrot.lane.b32.xlu0 %v1151, 100
  %v1321 = vpop.permute.xlu0 %1320
  %1322 = vrot.lane.b32.xlu0 %v1152, 100
  %v1323 = vpop.permute.xlu0 %1322
  %1324 = vrot.lane.b32.xlu0 %v1153, 100
  %v1325 = vpop.permute.xlu0 %1324
  %1326 = vrot.lane.b32.xlu0 %v1154, 100
  %v1327 = vpop.permute.xlu0 %1326
  %1328 = vrot.lane.b32.xlu0 %v1155, 100
  %v1329 = vpop.permute.xlu0 %1328
  %1330 = vrot.lane.b32.xlu0 %v1156, 100
  %v1331 = vpop.permute.xlu0 %1330
  %1332 = vrot.lane.b32.xlu0 %v1157, 100
  %v1333 = vpop.permute.xlu0 %1332
  %1334 = vrot.lane.b32.xlu0 %v1158, 100
  %v1335 = vpop.permute.xlu0 %1334
  %v1336 = vsel %vm276, %v1303, %v1305
  %v1337 = vsel %vm276, %v1305, %v1307
  %v1338 = vsel %vm276, %v1307, %v1309
  %v1339 = vsel %vm276, %v1309, %v1311
  %v1340 = vsel %vm276, %v1311, %v1313
  %v1341 = vsel %vm276, %v1313, %v1315
  %v1342 = vsel %vm276, %v1315, %v1317
  %v1343 = vsel %vm276, %v1317, %v1319
  %v1344 = vsel %vm276, %v1319, %v1321
  %v1345 = vsel %vm276, %v1321, %v1323
  %v1346 = vsel %vm276, %v1323, %v1325
  %v1347 = vsel %vm276, %v1325, %v1327
  %v1348 = vsel %vm276, %v1327, %v1329
  %v1349 = vsel %vm276, %v1329, %v1331
  %v1350 = vsel %vm276, %v1331, %v1333
  %v1351 = vsel %vm276, %v1333, %v1335
  %1368 = vrot.lane.b32.xlu0 %v1142, 99
  %v1369 = vpop.permute.xlu0 %1368
  %1370 = vrot.lane.b32.xlu0 %v1143, 99
  %v1371 = vpop.permute.xlu0 %1370
  %1372 = vrot.lane.b32.xlu0 %v1144, 99
  %v1373 = vpop.permute.xlu0 %1372
  %1374 = vrot.lane.b32.xlu0 %v1145, 99
  %v1375 = vpop.permute.xlu0 %1374
  %1376 = vrot.lane.b32.xlu0 %v1146, 99
  %v1377 = vpop.permute.xlu0 %1376
  %1378 = vrot.lane.b32.xlu0 %v1147, 99
  %v1379 = vpop.permute.xlu0 %1378
  %1380 = vrot.lane.b32.xlu0 %v1148, 99
  %v1381 = vpop.permute.xlu0 %1380
  %1382 = vrot.lane.b32.xlu0 %v1149, 99
  %v1383 = vpop.permute.xlu0 %1382
  %1384 = vrot.lane.b32.xlu0 %v1150, 99
  %v1385 = vpop.permute.xlu0 %1384
  %1386 = vrot.lane.b32.xlu0 %v1151, 99
  %v1387 = vpop.permute.xlu0 %1386
  %1388 = vrot.lane.b32.xlu0 %v1152, 99
  %v1389 = vpop.permute.xlu0 %1388
  %1390 = vrot.lane.b32.xlu0 %v1153, 99
  %v1391 = vpop.permute.xlu0 %1390
  %1392 = vrot.lane.b32.xlu0 %v1154, 99
  %v1393 = vpop.permute.xlu0 %1392
  %1394 = vrot.lane.b32.xlu0 %v1155, 99
  %v1395 = vpop.permute.xlu0 %1394
  %1396 = vrot.lane.b32.xlu0 %v1156, 99
  %v1397 = vpop.permute.xlu0 %1396
  %1398 = vrot.lane.b32.xlu0 %v1157, 99
  %v1399 = vpop.permute.xlu0 %1398
  %1400 = vrot.lane.b32.xlu0 %v1158, 99
  %v1401 = vpop.permute.xlu0 %1400
  %v1402 = vsel %vm344, %v1369, %v1371
  %v1403 = vsel %vm344, %v1371, %v1373
  %v1404 = vsel %vm344, %v1373, %v1375
  %v1405 = vsel %vm344, %v1375, %v1377
  %v1406 = vsel %vm344, %v1377, %v1379
  %v1407 = vsel %vm344, %v1379, %v1381
  %v1408 = vsel %vm344, %v1381, %v1383
  %v1409 = vsel %vm344, %v1383, %v1385
  %v1410 = vsel %vm344, %v1385, %v1387
  %v1411 = vsel %vm344, %v1387, %v1389
  %v1412 = vsel %vm344, %v1389, %v1391
  %v1413 = vsel %vm344, %v1391, %v1393
  %v1414 = vsel %vm344, %v1393, %v1395
  %v1415 = vsel %vm344, %v1395, %v1397
  %v1416 = vsel %vm344, %v1397, %v1399
  %v1417 = vsel %vm344, %v1399, %v1401
  %1434 = vrot.lane.b32.xlu0 %v1142, 98
  %v1435 = vpop.permute.xlu0 %1434
  %1436 = vrot.lane.b32.xlu0 %v1143, 98
  %v1437 = vpop.permute.xlu0 %1436
  %1438 = vrot.lane.b32.xlu0 %v1144, 98
  %v1439 = vpop.permute.xlu0 %1438
  %1440 = vrot.lane.b32.xlu0 %v1145, 98
  %v1441 = vpop.permute.xlu0 %1440
  %1442 = vrot.lane.b32.xlu0 %v1146, 98
  %v1443 = vpop.permute.xlu0 %1442
  %1444 = vrot.lane.b32.xlu0 %v1147, 98
  %v1445 = vpop.permute.xlu0 %1444
  %1446 = vrot.lane.b32.xlu0 %v1148, 98
  %v1447 = vpop.permute.xlu0 %1446
  %1448 = vrot.lane.b32.xlu0 %v1149, 98
  %v1449 = vpop.permute.xlu0 %1448
  %1450 = vrot.lane.b32.xlu0 %v1150, 98
  %v1451 = vpop.permute.xlu0 %1450
  %1452 = vrot.lane.b32.xlu0 %v1151, 98
  %v1453 = vpop.permute.xlu0 %1452
  %1454 = vrot.lane.b32.xlu0 %v1152, 98
  %v1455 = vpop.permute.xlu0 %1454
  %1456 = vrot.lane.b32.xlu0 %v1153, 98
  %v1457 = vpop.permute.xlu0 %1456
  %1458 = vrot.lane.b32.xlu0 %v1154, 98
  %v1459 = vpop.permute.xlu0 %1458
  %1460 = vrot.lane.b32.xlu0 %v1155, 98
  %v1461 = vpop.permute.xlu0 %1460
  %1462 = vrot.lane.b32.xlu0 %v1156, 98
  %v1463 = vpop.permute.xlu0 %1462
  %1464 = vrot.lane.b32.xlu0 %v1157, 98
  %v1465 = vpop.permute.xlu0 %1464
  %1466 = vrot.lane.b32.xlu0 %v1158, 98
  %v1467 = vpop.permute.xlu0 %1466
  %v1468 = vsel %vm412, %v1435, %v1437
  %v1469 = vsel %vm412, %v1437, %v1439
  %v1470 = vsel %vm412, %v1439, %v1441
  %v1471 = vsel %vm412, %v1441, %v1443
  %v1472 = vsel %vm412, %v1443, %v1445
  %v1473 = vsel %vm412, %v1445, %v1447
  %v1474 = vsel %vm412, %v1447, %v1449
  %v1475 = vsel %vm412, %v1449, %v1451
  %v1476 = vsel %vm412, %v1451, %v1453
  %v1477 = vsel %vm412, %v1453, %v1455
  %v1478 = vsel %vm412, %v1455, %v1457
  %v1479 = vsel %vm412, %v1457, %v1459
  %v1480 = vsel %vm412, %v1459, %v1461
  %v1481 = vsel %vm412, %v1461, %v1463
  %v1482 = vsel %vm412, %v1463, %v1465
  %v1483 = vsel %vm412, %v1465, %v1467
  %1500 = vrot.lane.b32.xlu0 %v1142, 72
  %v1501 = vpop.permute.xlu0 %1500
  %1502 = vrot.lane.b32.xlu0 %v1143, 72
  %v1503 = vpop.permute.xlu0 %1502
  %1504 = vrot.lane.b32.xlu0 %v1144, 72
  %v1505 = vpop.permute.xlu0 %1504
  %1506 = vrot.lane.b32.xlu0 %v1145, 72
  %v1507 = vpop.permute.xlu0 %1506
  %1508 = vrot.lane.b32.xlu0 %v1146, 72
  %v1509 = vpop.permute.xlu0 %1508
  %1510 = vrot.lane.b32.xlu0 %v1147, 72
  %v1511 = vpop.permute.xlu0 %1510
  %1512 = vrot.lane.b32.xlu0 %v1148, 72
  %v1513 = vpop.permute.xlu0 %1512
  %1514 = vrot.lane.b32.xlu0 %v1149, 72
  %v1515 = vpop.permute.xlu0 %1514
  %1516 = vrot.lane.b32.xlu0 %v1150, 72
  %v1517 = vpop.permute.xlu0 %1516
  %1518 = vrot.lane.b32.xlu0 %v1151, 72
  %v1519 = vpop.permute.xlu0 %1518
  %1520 = vrot.lane.b32.xlu0 %v1152, 72
  %v1521 = vpop.permute.xlu0 %1520
  %1522 = vrot.lane.b32.xlu0 %v1153, 72
  %v1523 = vpop.permute.xlu0 %1522
  %1524 = vrot.lane.b32.xlu0 %v1154, 72
  %v1525 = vpop.permute.xlu0 %1524
  %1526 = vrot.lane.b32.xlu0 %v1155, 72
  %v1527 = vpop.permute.xlu0 %1526
  %1528 = vrot.lane.b32.xlu0 %v1156, 72
  %v1529 = vpop.permute.xlu0 %1528
  %1530 = vrot.lane.b32.xlu0 %v1157, 72
  %v1531 = vpop.permute.xlu0 %1530
  %1532 = vrot.lane.b32.xlu0 %v1158, 72
  %v1533 = vpop.permute.xlu0 %1532
  %v1534 = vsel %vm480, %v1501, %v1503
  %v1535 = vsel %vm480, %v1503, %v1505
  %v1536 = vsel %vm480, %v1505, %v1507
  %v1537 = vsel %vm480, %v1507, %v1509
  %v1538 = vsel %vm480, %v1509, %v1511
  %v1539 = vsel %vm480, %v1511, %v1513
  %v1540 = vsel %vm480, %v1513, %v1515
  %v1541 = vsel %vm480, %v1515, %v1517
  %v1542 = vsel %vm480, %v1517, %v1519
  %v1543 = vsel %vm480, %v1519, %v1521
  %v1544 = vsel %vm480, %v1521, %v1523
  %v1545 = vsel %vm480, %v1523, %v1525
  %v1546 = vsel %vm480, %v1525, %v1527
  %v1547 = vsel %vm480, %v1527, %v1529
  %v1548 = vsel %vm480, %v1529, %v1531
  %v1549 = vsel %vm480, %v1531, %v1533
  %1566 = vrot.lane.b32.xlu0 %v1142, 71
  %v1567 = vpop.permute.xlu0 %1566
  %1568 = vrot.lane.b32.xlu0 %v1143, 71
  %v1569 = vpop.permute.xlu0 %1568
  %1570 = vrot.lane.b32.xlu0 %v1144, 71
  %v1571 = vpop.permute.xlu0 %1570
  %1572 = vrot.lane.b32.xlu0 %v1145, 71
  %v1573 = vpop.permute.xlu0 %1572
  %1574 = vrot.lane.b32.xlu0 %v1146, 71
  %v1575 = vpop.permute.xlu0 %1574
  %1576 = vrot.lane.b32.xlu0 %v1147, 71
  %v1577 = vpop.permute.xlu0 %1576
  %1578 = vrot.lane.b32.xlu0 %v1148, 71
  %v1579 = vpop.permute.xlu0 %1578
  %1580 = vrot.lane.b32.xlu0 %v1149, 71
  %v1581 = vpop.permute.xlu0 %1580
  %1582 = vrot.lane.b32.xlu0 %v1150, 71
  %v1583 = vpop.permute.xlu0 %1582
  %1584 = vrot.lane.b32.xlu0 %v1151, 71
  %v1585 = vpop.permute.xlu0 %1584
  %1586 = vrot.lane.b32.xlu0 %v1152, 71
  %v1587 = vpop.permute.xlu0 %1586
  %1588 = vrot.lane.b32.xlu0 %v1153, 71
  %v1589 = vpop.permute.xlu0 %1588
  %1590 = vrot.lane.b32.xlu0 %v1154, 71
  %v1591 = vpop.permute.xlu0 %1590
  %1592 = vrot.lane.b32.xlu0 %v1155, 71
  %v1593 = vpop.permute.xlu0 %1592
  %1594 = vrot.lane.b32.xlu0 %v1156, 71
  %v1595 = vpop.permute.xlu0 %1594
  %1596 = vrot.lane.b32.xlu0 %v1157, 71
  %v1597 = vpop.permute.xlu0 %1596
  %1598 = vrot.lane.b32.xlu0 %v1158, 71
  %v1599 = vpop.permute.xlu0 %1598
  %v1600 = vsel %vm548, %v1567, %v1569
  %v1601 = vsel %vm548, %v1569, %v1571
  %v1602 = vsel %vm548, %v1571, %v1573
  %v1603 = vsel %vm548, %v1573, %v1575
  %v1604 = vsel %vm548, %v1575, %v1577
  %v1605 = vsel %vm548, %v1577, %v1579
  %v1606 = vsel %vm548, %v1579, %v1581
  %v1607 = vsel %vm548, %v1581, %v1583
  %v1608 = vsel %vm548, %v1583, %v1585
  %v1609 = vsel %vm548, %v1585, %v1587
  %v1610 = vsel %vm548, %v1587, %v1589
  %v1611 = vsel %vm548, %v1589, %v1591
  %v1612 = vsel %vm548, %v1591, %v1593
  %v1613 = vsel %vm548, %v1593, %v1595
  %v1614 = vsel %vm548, %v1595, %v1597
  %v1615 = vsel %vm548, %v1597, %v1599
  %1632 = vrot.lane.b32.xlu0 %v1142, 70
  %v1633 = vpop.permute.xlu0 %1632
  %1634 = vrot.lane.b32.xlu0 %v1143, 70
  %v1635 = vpop.permute.xlu0 %1634
  %1636 = vrot.lane.b32.xlu0 %v1144, 70
  %v1637 = vpop.permute.xlu0 %1636
  %1638 = vrot.lane.b32.xlu0 %v1145, 70
  %v1639 = vpop.permute.xlu0 %1638
  %1640 = vrot.lane.b32.xlu0 %v1146, 70
  %v1641 = vpop.permute.xlu0 %1640
  %1642 = vrot.lane.b32.xlu0 %v1147, 70
  %v1643 = vpop.permute.xlu0 %1642
  %1644 = vrot.lane.b32.xlu0 %v1148, 70
  %v1645 = vpop.permute.xlu0 %1644
  %1646 = vrot.lane.b32.xlu0 %v1149, 70
  %v1647 = vpop.permute.xlu0 %1646
  %1648 = vrot.lane.b32.xlu0 %v1150, 70
  %v1649 = vpop.permute.xlu0 %1648
  %1650 = vrot.lane.b32.xlu0 %v1151, 70
  %v1651 = vpop.permute.xlu0 %1650
  %1652 = vrot.lane.b32.xlu0 %v1152, 70
  %v1653 = vpop.permute.xlu0 %1652
  %1654 = vrot.lane.b32.xlu0 %v1153, 70
  %v1655 = vpop.permute.xlu0 %1654
  %1656 = vrot.lane.b32.xlu0 %v1154, 70
  %v1657 = vpop.permute.xlu0 %1656
  %1658 = vrot.lane.b32.xlu0 %v1155, 70
  %v1659 = vpop.permute.xlu0 %1658
  %1660 = vrot.lane.b32.xlu0 %v1156, 70
  %v1661 = vpop.permute.xlu0 %1660
  %1662 = vrot.lane.b32.xlu0 %v1157, 70
  %v1663 = vpop.permute.xlu0 %1662
  %1664 = vrot.lane.b32.xlu0 %v1158, 70
  %v1665 = vpop.permute.xlu0 %1664
  %v1666 = vsel %vm616, %v1633, %v1635
  %v1667 = vsel %vm616, %v1635, %v1637
  %v1668 = vsel %vm616, %v1637, %v1639
  %v1669 = vsel %vm616, %v1639, %v1641
  %v1670 = vsel %vm616, %v1641, %v1643
  %v1671 = vsel %vm616, %v1643, %v1645
  %v1672 = vsel %vm616, %v1645, %v1647
  %v1673 = vsel %vm616, %v1647, %v1649
  %v1674 = vsel %vm616, %v1649, %v1651
  %v1675 = vsel %vm616, %v1651, %v1653
  %v1676 = vsel %vm616, %v1653, %v1655
  %v1677 = vsel %vm616, %v1655, %v1657
  %v1678 = vsel %vm616, %v1657, %v1659
  %v1679 = vsel %vm616, %v1659, %v1661
  %v1680 = vsel %vm616, %v1661, %v1663
  %v1681 = vsel %vm616, %v1663, %v1665
  %1699 = vset.pattern.permute.xlu0 0
  %1700 = vperm.xlu0 %1699, %v51
  %v1701 = vpop.permute.xlu0 %1700
  %1704 = vset.pattern.permute.xlu0 0
  %1705 = vperm.xlu0 %1704, %v52
  %v1706 = vpop.permute.xlu0 %1705
  %v1709 = vsel %vm480, %v24, 0
  %v1712 = vsel %vm480, %v25, 0
  %1714 = vmatpush.msra.mxu0 0.0
  %1715 = vmatpush.msra.mxu0 0.0
  %1716 = vmatpush.msra.mxu0 0.0
  %1717 = vmatpush.msra.mxu0 0.0
  %1718 = vmatpush.msra.mxu0 0.0
  %1719 = vmatpush.msra.mxu0 0.0
  %1720 = vmatpush.msra.mxu0 0.0
  %1721 = vmatpush.msra.mxu0 %v1666
  %1722 = vmatpush.msra.mxu0 %v1600
  %1723 = vmatpush.msra.mxu0 %v1534
  %1724 = vmatpush.msra.mxu0 %v1468
  %1725 = vmatpush.msra.mxu0 %v1402
  %1726 = vmatpush.msra.mxu0 %v1336
  %1727 = vmatpush.msra.mxu0 %v1270
  %1728 = vmatpush.msra.mxu0 %v1207
  %1729 = vmatpush.msra.mxu0 %v1142
  %1730 = vmatmul.f32.gmra.mxu0 %v1709
  %v1731 = vpop.f32.mrf.mxu0
  %v1732 = vadd.f32 %v1701, %v1731
  %1733 = vmatmul.f32.gmra.mxu0 %v1712
  %v1734 = vpop.f32.mrf.mxu0
  %v1735 = vadd.f32 %v1706, %v1734
  %1736 = vdwg.mxu0
  %1737 = vmatpush.msra.mxu0 0.0
  %1738 = vmatpush.msra.mxu0 0.0
  %1739 = vmatpush.msra.mxu0 0.0
  %1740 = vmatpush.msra.mxu0 0.0
  %1741 = vmatpush.msra.mxu0 0.0
  %1742 = vmatpush.msra.mxu0 0.0
  %1743 = vmatpush.msra.mxu0 0.0
  %1744 = vmatpush.msra.mxu0 %v1667
  %1745 = vmatpush.msra.mxu0 %v1601
  %1746 = vmatpush.msra.mxu0 %v1535
  %1747 = vmatpush.msra.mxu0 %v1469
  %1748 = vmatpush.msra.mxu0 %v1403
  %1749 = vmatpush.msra.mxu0 %v1337
  %1750 = vmatpush.msra.mxu0 %v1271
  %1751 = vmatpush.msra.mxu0 %v1208
  %1752 = vmatpush.msra.mxu0 %v1143
  %1753 = vmatmul.f32.gmra.mxu0 %v1709
  %v1754 = vpop.f32.mrf.mxu0
  %v1755 = vadd.f32 %v1701, %v1754
  %1756 = vmatmul.f32.gmra.mxu0 %v1712
  %v1757 = vpop.f32.mrf.mxu0
  %v1758 = vadd.f32 %v1706, %v1757
  %1759 = vdwg.mxu0
  %1760 = vmatpush.msra.mxu0 0.0
  %1761 = vmatpush.msra.mxu0 0.0
  %1762 = vmatpush.msra.mxu0 0.0
  %1763 = vmatpush.msra.mxu0 0.0
  %1764 = vmatpush.msra.mxu0 0.0
  %1765 = vmatpush.msra.mxu0 0.0
  %1766 = vmatpush.msra.mxu0 0.0
  %1767 = vmatpush.msra.mxu0 %v1668
  %1768 = vmatpush.msra.mxu0 %v1602
  %1769 = vmatpush.msra.mxu0 %v1536
  %1770 = vmatpush.msra.mxu0 %v1470
  %1771 = vmatpush.msra.mxu0 %v1404
  %1772 = vmatpush.msra.mxu0 %v1338
  %1773 = vmatpush.msra.mxu0 %v1272
  %1774 = vmatpush.msra.mxu0 %v1209
  %1775 = vmatpush.msra.mxu0 %v1144
  %1776 = vmatmul.f32.gmra.mxu0 %v1709
  %v1777 = vpop.f32.mrf.mxu0
  %v1778 = vadd.f32 %v1701, %v1777
  %1779 = vmatmul.f32.gmra.mxu0 %v1712
  %v1780 = vpop.f32.mrf.mxu0
  %v1781 = vadd.f32 %v1706, %v1780
  %1782 = vdwg.mxu0
  %1783 = vmatpush.msra.mxu0 0.0
  %1784 = vmatpush.msra.mxu0 0.0
  %1785 = vmatpush.msra.mxu0 0.0
  %1786 = vmatpush.msra.mxu0 0.0
  %1787 = vmatpush.msra.mxu0 0.0
  %1788 = vmatpush.msra.mxu0 0.0
  %1789 = vmatpush.msra.mxu0 0.0
  %1790 = vmatpush.msra.mxu0 %v1669
  %1791 = vmatpush.msra.mxu0 %v1603
  %1792 = vmatpush.msra.mxu0 %v1537
  %1793 = vmatpush.msra.mxu0 %v1471
  %1794 = vmatpush.msra.mxu0 %v1405
  %1795 = vmatpush.msra.mxu0 %v1339
  %1796 = vmatpush.msra.mxu0 %v1273
  %1797 = vmatpush.msra.mxu0 %v1210
  %1798 = vmatpush.msra.mxu0 %v1145
  %1799 = vmatmul.f32.gmra.mxu0 %v1709
  %v1800 = vpop.f32.mrf.mxu0
  %v1801 = vadd.f32 %v1701, %v1800
  %1802 = vmatmul.f32.gmra.mxu0 %v1712
  %v1803 = vpop.f32.mrf.mxu0
  %v1804 = vadd.f32 %v1706, %v1803
  %1805 = vdwg.mxu0
  %1806 = vmatpush.msra.mxu0 0.0
  %1807 = vmatpush.msra.mxu0 0.0
  %1808 = vmatpush.msra.mxu0 0.0
  %1809 = vmatpush.msra.mxu0 0.0
  %1810 = vmatpush.msra.mxu0 0.0
  %1811 = vmatpush.msra.mxu0 0.0
  %1812 = vmatpush.msra.mxu0 0.0
  %1813 = vmatpush.msra.mxu0 %v1670
  %1814 = vmatpush.msra.mxu0 %v1604
  %1815 = vmatpush.msra.mxu0 %v1538
  %1816 = vmatpush.msra.mxu0 %v1472
  %1817 = vmatpush.msra.mxu0 %v1406
  %1818 = vmatpush.msra.mxu0 %v1340
  %1819 = vmatpush.msra.mxu0 %v1274
  %1820 = vmatpush.msra.mxu0 %v1211
  %1821 = vmatpush.msra.mxu0 %v1146
  %1822 = vmatmul.f32.gmra.mxu0 %v1709
  %v1823 = vpop.f32.mrf.mxu0
  %v1824 = vadd.f32 %v1701, %v1823
  %1825 = vmatmul.f32.gmra.mxu0 %v1712
  %v1826 = vpop.f32.mrf.mxu0
  %v1827 = vadd.f32 %v1706, %v1826
  %1828 = vdwg.mxu0
  %1829 = vmatpush.msra.mxu0 0.0
  %1830 = vmatpush.msra.mxu0 0.0
  %1831 = vmatpush.msra.mxu0 0.0
  %1832 = vmatpush.msra.mxu0 0.0
  %1833 = vmatpush.msra.mxu0 0.0
  %1834 = vmatpush.msra.mxu0 0.0
  %1835 = vmatpush.msra.mxu0 0.0
  %1836 = vmatpush.msra.mxu0 %v1671
  %1837 = vmatpush.msra.mxu0 %v1605
  %1838 = vmatpush.msra.mxu0 %v1539
  %1839 = vmatpush.msra.mxu0 %v1473
  %1840 = vmatpush.msra.mxu0 %v1407
  %1841 = vmatpush.msra.mxu0 %v1341
  %1842 = vmatpush.msra.mxu0 %v1275
  %1843 = vmatpush.msra.mxu0 %v1212
  %1844 = vmatpush.msra.mxu0 %v1147
  %1845 = vmatmul.f32.gmra.mxu0 %v1709
  %v1846 = vpop.f32.mrf.mxu0
  %v1847 = vadd.f32 %v1701, %v1846
  %1848 = vmatmul.f32.gmra.mxu0 %v1712
  %v1849 = vpop.f32.mrf.mxu0
  %v1850 = vadd.f32 %v1706, %v1849
  %1851 = vdwg.mxu0
  %1852 = vmatpush.msra.mxu0 0.0
  %1853 = vmatpush.msra.mxu0 0.0
  %1854 = vmatpush.msra.mxu0 0.0
  %1855 = vmatpush.msra.mxu0 0.0
  %1856 = vmatpush.msra.mxu0 0.0
  %1857 = vmatpush.msra.mxu0 0.0
  %1858 = vmatpush.msra.mxu0 0.0
  %1859 = vmatpush.msra.mxu0 %v1672
  %1860 = vmatpush.msra.mxu0 %v1606
  %1861 = vmatpush.msra.mxu0 %v1540
  %1862 = vmatpush.msra.mxu0 %v1474
  %1863 = vmatpush.msra.mxu0 %v1408
  %1864 = vmatpush.msra.mxu0 %v1342
  %1865 = vmatpush.msra.mxu0 %v1276
  %1866 = vmatpush.msra.mxu0 %v1213
  %1867 = vmatpush.msra.mxu0 %v1148
  %1868 = vmatmul.f32.gmra.mxu0 %v1709
  %v1869 = vpop.f32.mrf.mxu0
  %v1870 = vadd.f32 %v1701, %v1869
  %1871 = vmatmul.f32.gmra.mxu0 %v1712
  %v1872 = vpop.f32.mrf.mxu0
  %v1873 = vadd.f32 %v1706, %v1872
  %1874 = vdwg.mxu0
  %1875 = vmatpush.msra.mxu0 0.0
  %1876 = vmatpush.msra.mxu0 0.0
  %1877 = vmatpush.msra.mxu0 0.0
  %1878 = vmatpush.msra.mxu0 0.0
  %1879 = vmatpush.msra.mxu0 0.0
  %1880 = vmatpush.msra.mxu0 0.0
  %1881 = vmatpush.msra.mxu0 0.0
  %1882 = vmatpush.msra.mxu0 %v1673
  %1883 = vmatpush.msra.mxu0 %v1607
  %1884 = vmatpush.msra.mxu0 %v1541
  %1885 = vmatpush.msra.mxu0 %v1475
  %1886 = vmatpush.msra.mxu0 %v1409
  %1887 = vmatpush.msra.mxu0 %v1343
  %1888 = vmatpush.msra.mxu0 %v1277
  %1889 = vmatpush.msra.mxu0 %v1214
  %1890 = vmatpush.msra.mxu0 %v1149
  %1891 = vmatmul.f32.gmra.mxu0 %v1709
  %v1892 = vpop.f32.mrf.mxu0
  %v1893 = vadd.f32 %v1701, %v1892
  %1894 = vmatmul.f32.gmra.mxu0 %v1712
  %v1895 = vpop.f32.mrf.mxu0
  %v1896 = vadd.f32 %v1706, %v1895
  %1897 = vdwg.mxu0
  %1898 = vmatpush.msra.mxu0 0.0
  %1899 = vmatpush.msra.mxu0 0.0
  %1900 = vmatpush.msra.mxu0 0.0
  %1901 = vmatpush.msra.mxu0 0.0
  %1902 = vmatpush.msra.mxu0 0.0
  %1903 = vmatpush.msra.mxu0 0.0
  %1904 = vmatpush.msra.mxu0 0.0
  %1905 = vmatpush.msra.mxu0 %v1674
  %1906 = vmatpush.msra.mxu0 %v1608
  %1907 = vmatpush.msra.mxu0 %v1542
  %1908 = vmatpush.msra.mxu0 %v1476
  %1909 = vmatpush.msra.mxu0 %v1410
  %1910 = vmatpush.msra.mxu0 %v1344
  %1911 = vmatpush.msra.mxu0 %v1278
  %1912 = vmatpush.msra.mxu0 %v1215
  %1913 = vmatpush.msra.mxu0 %v1150
  %1914 = vmatmul.f32.gmra.mxu0 %v1709
  %v1915 = vpop.f32.mrf.mxu0
  %v1916 = vadd.f32 %v1701, %v1915
  %1917 = vmatmul.f32.gmra.mxu0 %v1712
  %v1918 = vpop.f32.mrf.mxu0
  %v1919 = vadd.f32 %v1706, %v1918
  %1920 = vdwg.mxu0
  %1921 = vmatpush.msra.mxu0 0.0
  %1922 = vmatpush.msra.mxu0 0.0
  %1923 = vmatpush.msra.mxu0 0.0
  %1924 = vmatpush.msra.mxu0 0.0
  %1925 = vmatpush.msra.mxu0 0.0
  %1926 = vmatpush.msra.mxu0 0.0
  %1927 = vmatpush.msra.mxu0 0.0
  %1928 = vmatpush.msra.mxu0 %v1675
  %1929 = vmatpush.msra.mxu0 %v1609
  %1930 = vmatpush.msra.mxu0 %v1543
  %1931 = vmatpush.msra.mxu0 %v1477
  %1932 = vmatpush.msra.mxu0 %v1411
  %1933 = vmatpush.msra.mxu0 %v1345
  %1934 = vmatpush.msra.mxu0 %v1279
  %1935 = vmatpush.msra.mxu0 %v1216
  %1936 = vmatpush.msra.mxu0 %v1151
  %1937 = vmatmul.f32.gmra.mxu0 %v1709
  %v1938 = vpop.f32.mrf.mxu0
  %v1939 = vadd.f32 %v1701, %v1938
  %1940 = vmatmul.f32.gmra.mxu0 %v1712
  %v1941 = vpop.f32.mrf.mxu0
  %v1942 = vadd.f32 %v1706, %v1941
  %1943 = vdwg.mxu0
  %1944 = vmatpush.msra.mxu0 0.0
  %1945 = vmatpush.msra.mxu0 0.0
  %1946 = vmatpush.msra.mxu0 0.0
  %1947 = vmatpush.msra.mxu0 0.0
  %1948 = vmatpush.msra.mxu0 0.0
  %1949 = vmatpush.msra.mxu0 0.0
  %1950 = vmatpush.msra.mxu0 0.0
  %1951 = vmatpush.msra.mxu0 %v1676
  %1952 = vmatpush.msra.mxu0 %v1610
  %1953 = vmatpush.msra.mxu0 %v1544
  %1954 = vmatpush.msra.mxu0 %v1478
  %1955 = vmatpush.msra.mxu0 %v1412
  %1956 = vmatpush.msra.mxu0 %v1346
  %1957 = vmatpush.msra.mxu0 %v1280
  %1958 = vmatpush.msra.mxu0 %v1217
  %1959 = vmatpush.msra.mxu0 %v1152
  %1960 = vmatmul.f32.gmra.mxu0 %v1709
  %v1961 = vpop.f32.mrf.mxu0
  %v1962 = vadd.f32 %v1701, %v1961
  %1963 = vmatmul.f32.gmra.mxu0 %v1712
  %v1964 = vpop.f32.mrf.mxu0
  %v1965 = vadd.f32 %v1706, %v1964
  %1966 = vdwg.mxu0
  %1967 = vmatpush.msra.mxu0 0.0
  %1968 = vmatpush.msra.mxu0 0.0
  %1969 = vmatpush.msra.mxu0 0.0
  %1970 = vmatpush.msra.mxu0 0.0
  %1971 = vmatpush.msra.mxu0 0.0
  %1972 = vmatpush.msra.mxu0 0.0
  %1973 = vmatpush.msra.mxu0 0.0
  %1974 = vmatpush.msra.mxu0 %v1677
  %1975 = vmatpush.msra.mxu0 %v1611
  %1976 = vmatpush.msra.mxu0 %v1545
  %1977 = vmatpush.msra.mxu0 %v1479
  %1978 = vmatpush.msra.mxu0 %v1413
  %1979 = vmatpush.msra.mxu0 %v1347
  %1980 = vmatpush.msra.mxu0 %v1281
  %1981 = vmatpush.msra.mxu0 %v1218
  %1982 = vmatpush.msra.mxu0 %v1153
  %1983 = vmatmul.f32.gmra.mxu0 %v1709
  %v1984 = vpop.f32.mrf.mxu0
  %v1985 = vadd.f32 %v1701, %v1984
  %1986 = vmatmul.f32.gmra.mxu0 %v1712
  %v1987 = vpop.f32.mrf.mxu0
  %v1988 = vadd.f32 %v1706, %v1987
  %1989 = vdwg.mxu0
  %1990 = vmatpush.msra.mxu0 0.0
  %1991 = vmatpush.msra.mxu0 0.0
  %1992 = vmatpush.msra.mxu0 0.0
  %1993 = vmatpush.msra.mxu0 0.0
  %1994 = vmatpush.msra.mxu0 0.0
  %1995 = vmatpush.msra.mxu0 0.0
  %1996 = vmatpush.msra.mxu0 0.0
  %1997 = vmatpush.msra.mxu0 %v1678
  %1998 = vmatpush.msra.mxu0 %v1612
  %1999 = vmatpush.msra.mxu0 %v1546
  %2000 = vmatpush.msra.mxu0 %v1480
  %2001 = vmatpush.msra.mxu0 %v1414
  %2002 = vmatpush.msra.mxu0 %v1348
  %2003 = vmatpush.msra.mxu0 %v1282
  %2004 = vmatpush.msra.mxu0 %v1219
  %2005 = vmatpush.msra.mxu0 %v1154
  %2006 = vmatmul.f32.gmra.mxu0 %v1709
  %v2007 = vpop.f32.mrf.mxu0
  %v2008 = vadd.f32 %v1701, %v2007
  %2009 = vmatmul.f32.gmra.mxu0 %v1712
  %v2010 = vpop.f32.mrf.mxu0
  %v2011 = vadd.f32 %v1706, %v2010
  %2012 = vdwg.mxu0
  %2013 = vmatpush.msra.mxu0 0.0
  %2014 = vmatpush.msra.mxu0 0.0
  %2015 = vmatpush.msra.mxu0 0.0
  %2016 = vmatpush.msra.mxu0 0.0
  %2017 = vmatpush.msra.mxu0 0.0
  %2018 = vmatpush.msra.mxu0 0.0
  %2019 = vmatpush.msra.mxu0 0.0
  %2020 = vmatpush.msra.mxu0 %v1679
  %2021 = vmatpush.msra.mxu0 %v1613
  %2022 = vmatpush.msra.mxu0 %v1547
  %2023 = vmatpush.msra.mxu0 %v1481
  %2024 = vmatpush.msra.mxu0 %v1415
  %2025 = vmatpush.msra.mxu0 %v1349
  %2026 = vmatpush.msra.mxu0 %v1283
  %2027 = vmatpush.msra.mxu0 %v1220
  %2028 = vmatpush.msra.mxu0 %v1155
  %2029 = vmatmul.f32.gmra.mxu0 %v1709
  %v2030 = vpop.f32.mrf.mxu0
  %v2031 = vadd.f32 %v1701, %v2030
  %2032 = vmatmul.f32.gmra.mxu0 %v1712
  %v2033 = vpop.f32.mrf.mxu0
  %v2034 = vadd.f32 %v1706, %v2033
  %2035 = vdwg.mxu0
  %2036 = vmatpush.msra.mxu0 0.0
  %2037 = vmatpush.msra.mxu0 0.0
  %2038 = vmatpush.msra.mxu0 0.0
  %2039 = vmatpush.msra.mxu0 0.0
  %2040 = vmatpush.msra.mxu0 0.0
  %2041 = vmatpush.msra.mxu0 0.0
  %2042 = vmatpush.msra.mxu0 0.0
  %2043 = vmatpush.msra.mxu0 %v1680
  %2044 = vmatpush.msra.mxu0 %v1614
  %2045 = vmatpush.msra.mxu0 %v1548
  %2046 = vmatpush.msra.mxu0 %v1482
  %2047 = vmatpush.msra.mxu0 %v1416
  %2048 = vmatpush.msra.mxu0 %v1350
  %2049 = vmatpush.msra.mxu0 %v1284
  %2050 = vmatpush.msra.mxu0 %v1221
  %2051 = vmatpush.msra.mxu0 %v1156
  %2052 = vmatmul.f32.gmra.mxu0 %v1709
  %v2053 = vpop.f32.mrf.mxu0
  %v2054 = vadd.f32 %v1701, %v2053
  %2055 = vmatmul.f32.gmra.mxu0 %v1712
  %v2056 = vpop.f32.mrf.mxu0
  %v2057 = vadd.f32 %v1706, %v2056
  %2058 = vdwg.mxu0
  %2059 = vmatpush.msra.mxu0 0.0
  %2060 = vmatpush.msra.mxu0 0.0
  %2061 = vmatpush.msra.mxu0 0.0
  %2062 = vmatpush.msra.mxu0 0.0
  %2063 = vmatpush.msra.mxu0 0.0
  %2064 = vmatpush.msra.mxu0 0.0
  %2065 = vmatpush.msra.mxu0 0.0
  %2066 = vmatpush.msra.mxu0 %v1681
  %2067 = vmatpush.msra.mxu0 %v1615
  %2068 = vmatpush.msra.mxu0 %v1549
  %2069 = vmatpush.msra.mxu0 %v1483
  %2070 = vmatpush.msra.mxu0 %v1417
  %2071 = vmatpush.msra.mxu0 %v1351
  %2072 = vmatpush.msra.mxu0 %v1269
  %2073 = vmatpush.msra.mxu0 %v1206
  %2074 = vmatpush.msra.mxu0 %v1157
  %2075 = vmatmul.f32.gmra.mxu0 %v1709
  %v2076 = vpop.f32.mrf.mxu0
  %v2077 = vadd.f32 %v1701, %v2076
  %2078 = vmatmul.f32.gmra.mxu0 %v1712
  %v2079 = vpop.f32.mrf.mxu0
  %v2080 = vadd.f32 %v1706, %v2079
  %2081 = vdwg.mxu0
  %v2082 = vmax.f32 %v1732, 0.0
  %v2083 = vmax.f32 %v1755, 0.0
  %v2084 = vmax.f32 %v1778, 0.0
  %v2085 = vmax.f32 %v1801, 0.0
  %v2086 = vmax.f32 %v1824, 0.0
  %v2087 = vmax.f32 %v1847, 0.0
  %v2088 = vmax.f32 %v1870, 0.0
  %v2089 = vmax.f32 %v1893, 0.0
  %v2090 = vmax.f32 %v1916, 0.0
  %v2091 = vmax.f32 %v1939, 0.0
  %v2092 = vmax.f32 %v1962, 0.0
  %v2093 = vmax.f32 %v1985, 0.0
  %v2094 = vmax.f32 %v2008, 0.0
  %v2095 = vmax.f32 %v2031, 0.0
  %v2096 = vmax.f32 %v2054, 0.0
  %v2097 = vmax.f32 %v2077, 0.0
  %v2098 = vmax.f32 %v1735, 0.0
  %v2099 = vmax.f32 %v1758, 0.0
  %v2100 = vmax.f32 %v1781, 0.0
  %v2101 = vmax.f32 %v1804, 0.0
  %v2102 = vmax.f32 %v1827, 0.0
  %v2103 = vmax.f32 %v1850, 0.0
  %v2104 = vmax.f32 %v1873, 0.0
  %v2105 = vmax.f32 %v1896, 0.0
  %v2106 = vmax.f32 %v1919, 0.0
  %v2107 = vmax.f32 %v1942, 0.0
  %v2108 = vmax.f32 %v1965, 0.0
  %v2109 = vmax.f32 %v1988, 0.0
  %v2110 = vmax.f32 %v2011, 0.0
  %v2111 = vmax.f32 %v2034, 0.0
  %v2112 = vmax.f32 %v2057, 0.0
  %v2113 = vmax.f32 %v2080, 0.0
  %2146 = vrot.lane.b32.xlu0 %v2082, 127
  %v2147 = vpop.permute.xlu0 %2146
  %2148 = vrot.lane.b32.xlu0 %v2083, 127
  %v2149 = vpop.permute.xlu0 %2148
  %2150 = vrot.lane.b32.xlu0 %v2084, 127
  %v2151 = vpop.permute.xlu0 %2150
  %2152 = vrot.lane.b32.xlu0 %v2085, 127
  %v2153 = vpop.permute.xlu0 %2152
  %2154 = vrot.lane.b32.xlu0 %v2086, 127
  %v2155 = vpop.permute.xlu0 %2154
  %2156 = vrot.lane.b32.xlu0 %v2087, 127
  %v2157 = vpop.permute.xlu0 %2156
  %2158 = vrot.lane.b32.xlu0 %v2088, 127
  %v2159 = vpop.permute.xlu0 %2158
  %2160 = vrot.lane.b32.xlu0 %v2089, 127
  %v2161 = vpop.permute.xlu0 %2160
  %2162 = vrot.lane.b32.xlu0 %v2090, 127
  %v2163 = vpop.permute.xlu0 %2162
  %2164 = vrot.lane.b32.xlu0 %v2091, 127
  %v2165 = vpop.permute.xlu0 %2164
  %2166 = vrot.lane.b32.xlu0 %v2092, 127
  %v2167 = vpop.permute.xlu0 %2166
  %2168 = vrot.lane.b32.xlu0 %v2093, 127
  %v2169 = vpop.permute.xlu0 %2168
  %2170 = vrot.lane.b32.xlu0 %v2094, 127
  %v2171 = vpop.permute.xlu0 %2170
  %2172 = vrot.lane.b32.xlu0 %v2095, 127
  %v2173 = vpop.permute.xlu0 %2172
  %2174 = vrot.lane.b32.xlu0 %v2096, 127
  %v2175 = vpop.permute.xlu0 %2174
  %2176 = vrot.lane.b32.xlu0 %v2097, 127
  %v2177 = vpop.permute.xlu0 %2176
  %2178 = vrot.lane.b32.xlu0 %v2098, 127
  %v2179 = vpop.permute.xlu0 %2178
  %2180 = vrot.lane.b32.xlu0 %v2099, 127
  %v2181 = vpop.permute.xlu0 %2180
  %2182 = vrot.lane.b32.xlu0 %v2100, 127
  %v2183 = vpop.permute.xlu0 %2182
  %2184 = vrot.lane.b32.xlu0 %v2101, 127
  %v2185 = vpop.permute.xlu0 %2184
  %2186 = vrot.lane.b32.xlu0 %v2102, 127
  %v2187 = vpop.permute.xlu0 %2186
  %2188 = vrot.lane.b32.xlu0 %v2103, 127
  %v2189 = vpop.permute.xlu0 %2188
  %2190 = vrot.lane.b32.xlu0 %v2104, 127
  %v2191 = vpop.permute.xlu0 %2190
  %2192 = vrot.lane.b32.xlu0 %v2105, 127
  %v2193 = vpop.permute.xlu0 %2192
  %2194 = vrot.lane.b32.xlu0 %v2106, 127
  %v2195 = vpop.permute.xlu0 %2194
  %2196 = vrot.lane.b32.xlu0 %v2107, 127
  %v2197 = vpop.permute.xlu0 %2196
  %2198 = vrot.lane.b32.xlu0 %v2108, 127
  %v2199 = vpop.permute.xlu0 %2198
  %2200 = vrot.lane.b32.xlu0 %v2109, 127
  %v2201 = vpop.permute.xlu0 %2200
  %2202 = vrot.lane.b32.xlu0 %v2110, 127
  %v2203 = vpop.permute.xlu0 %2202
  %2204 = vrot.lane.b32.xlu0 %v2111, 127
  %v2205 = vpop.permute.xlu0 %2204
  %2206 = vrot.lane.b32.xlu0 %v2112, 127
  %v2207 = vpop.permute.xlu0 %2206
  %2208 = vrot.lane.b32.xlu0 %v2113, 127
  %v2209 = vpop.permute.xlu0 %2208
  %v2210 = vsel %vm140, %v2147, %v2149
  %v2211 = vsel %vm140, %v2149, %v2151
  %v2212 = vsel %vm140, %v2151, %v2153
  %v2213 = vsel %vm140, %v2153, %v2155
  %v2214 = vsel %vm140, %v2155, %v2157
  %v2215 = vsel %vm140, %v2157, %v2159
  %v2216 = vsel %vm140, %v2159, %v2161
  %v2217 = vsel %vm140, %v2161, %v2163
  %v2218 = vsel %vm140, %v2163, %v2165
  %v2219 = vsel %vm140, %v2165, %v2167
  %v2220 = vsel %vm140, %v2167, %v2169
  %v2221 = vsel %vm140, %v2169, %v2171
  %v2222 = vsel %vm140, %v2171, %v2173
  %v2223 = vsel %vm140, %v2173, %v2175
  %v2224 = vsel %vm140, %v2175, %v2177
  %v2225 = vsel %vm140, %v2179, %v2181
  %v2226 = vsel %vm140, %v2181, %v2183
  %v2227 = vsel %vm140, %v2183, %v2185
  %v2228 = vsel %vm140, %v2185, %v2187
  %v2229 = vsel %vm140, %v2187, %v2189
  %v2230 = vsel %vm140, %v2189, %v2191
  %v2231 = vsel %vm140, %v2191, %v2193
  %v2232 = vsel %vm140, %v2193, %v2195
  %v2233 = vsel %vm140, %v2195, %v2197
  %v2234 = vsel %vm140, %v2197, %v2199
  %v2235 = vsel %vm140, %v2199, %v2201
  %v2236 = vsel %vm140, %v2201, %v2203
  %v2237 = vsel %vm140, %v2203, %v2205
  %v2238 = vsel %vm140, %v2205, %v2207
  %v2239 = vsel %vm140, %v2207, %v2209
  %2272 = vrot.lane.b32.xlu0 %v2082, 126
  %v2273 = vpop.permute.xlu0 %2272
  %2274 = vrot.lane.b32.xlu0 %v2083, 126
  %v2275 = vpop.permute.xlu0 %2274
  %2276 = vrot.lane.b32.xlu0 %v2084, 126
  %v2277 = vpop.permute.xlu0 %2276
  %2278 = vrot.lane.b32.xlu0 %v2085, 126
  %v2279 = vpop.permute.xlu0 %2278
  %2280 = vrot.lane.b32.xlu0 %v2086, 126
  %v2281 = vpop.permute.xlu0 %2280
  %2282 = vrot.lane.b32.xlu0 %v2087, 126
  %v2283 = vpop.permute.xlu0 %2282
  %2284 = vrot.lane.b32.xlu0 %v2088, 126
  %v2285 = vpop.permute.xlu0 %2284
  %2286 = vrot.lane.b32.xlu0 %v2089, 126
  %v2287 = vpop.permute.xlu0 %2286
  %2288 = vrot.lane.b32.xlu0 %v2090, 126
  %v2289 = vpop.permute.xlu0 %2288
  %2290 = vrot.lane.b32.xlu0 %v2091, 126
  %v2291 = vpop.permute.xlu0 %2290
  %2292 = vrot.lane.b32.xlu0 %v2092, 126
  %v2293 = vpop.permute.xlu0 %2292
  %2294 = vrot.lane.b32.xlu0 %v2093, 126
  %v2295 = vpop.permute.xlu0 %2294
  %2296 = vrot.lane.b32.xlu0 %v2094, 126
  %v2297 = vpop.permute.xlu0 %2296
  %2298 = vrot.lane.b32.xlu0 %v2095, 126
  %v2299 = vpop.permute.xlu0 %2298
  %2300 = vrot.lane.b32.xlu0 %v2096, 126
  %v2301 = vpop.permute.xlu0 %2300
  %2302 = vrot.lane.b32.xlu0 %v2097, 126
  %v2303 = vpop.permute.xlu0 %2302
  %2304 = vrot.lane.b32.xlu0 %v2098, 126
  %v2305 = vpop.permute.xlu0 %2304
  %2306 = vrot.lane.b32.xlu0 %v2099, 126
  %v2307 = vpop.permute.xlu0 %2306
  %2308 = vrot.lane.b32.xlu0 %v2100, 126
  %v2309 = vpop.permute.xlu0 %2308
  %2310 = vrot.lane.b32.xlu0 %v2101, 126
  %v2311 = vpop.permute.xlu0 %2310
  %2312 = vrot.lane.b32.xlu0 %v2102, 126
  %v2313 = vpop.permute.xlu0 %2312
  %2314 = vrot.lane.b32.xlu0 %v2103, 126
  %v2315 = vpop.permute.xlu0 %2314
  %2316 = vrot.lane.b32.xlu0 %v2104, 126
  %v2317 = vpop.permute.xlu0 %2316
  %2318 = vrot.lane.b32.xlu0 %v2105, 126
  %v2319 = vpop.permute.xlu0 %2318
  %2320 = vrot.lane.b32.xlu0 %v2106, 126
  %v2321 = vpop.permute.xlu0 %2320
  %2322 = vrot.lane.b32.xlu0 %v2107, 126
  %v2323 = vpop.permute.xlu0 %2322
  %2324 = vrot.lane.b32.xlu0 %v2108, 126
  %v2325 = vpop.permute.xlu0 %2324
  %2326 = vrot.lane.b32.xlu0 %v2109, 126
  %v2327 = vpop.permute.xlu0 %2326
  %2328 = vrot.lane.b32.xlu0 %v2110, 126
  %v2329 = vpop.permute.xlu0 %2328
  %2330 = vrot.lane.b32.xlu0 %v2111, 126
  %v2331 = vpop.permute.xlu0 %2330
  %2332 = vrot.lane.b32.xlu0 %v2112, 126
  %v2333 = vpop.permute.xlu0 %2332
  %2334 = vrot.lane.b32.xlu0 %v2113, 126
  %v2335 = vpop.permute.xlu0 %2334
  %v2336 = vsel %vm208, %v2273, %v2275
  %v2337 = vsel %vm208, %v2275, %v2277
  %v2338 = vsel %vm208, %v2277, %v2279
  %v2339 = vsel %vm208, %v2279, %v2281
  %v2340 = vsel %vm208, %v2281, %v2283
  %v2341 = vsel %vm208, %v2283, %v2285
  %v2342 = vsel %vm208, %v2285, %v2287
  %v2343 = vsel %vm208, %v2287, %v2289
  %v2344 = vsel %vm208, %v2289, %v2291
  %v2345 = vsel %vm208, %v2291, %v2293
  %v2346 = vsel %vm208, %v2293, %v2295
  %v2347 = vsel %vm208, %v2295, %v2297
  %v2348 = vsel %vm208, %v2297, %v2299
  %v2349 = vsel %vm208, %v2299, %v2301
  %v2350 = vsel %vm208, %v2301, %v2303
  %v2351 = vsel %vm208, %v2305, %v2307
  %v2352 = vsel %vm208, %v2307, %v2309
  %v2353 = vsel %vm208, %v2309, %v2311
  %v2354 = vsel %vm208, %v2311, %v2313
  %v2355 = vsel %vm208, %v2313, %v2315
  %v2356 = vsel %vm208, %v2315, %v2317
  %v2357 = vsel %vm208, %v2317, %v2319
  %v2358 = vsel %vm208, %v2319, %v2321
  %v2359 = vsel %vm208, %v2321, %v2323
  %v2360 = vsel %vm208, %v2323, %v2325
  %v2361 = vsel %vm208, %v2325, %v2327
  %v2362 = vsel %vm208, %v2327, %v2329
  %v2363 = vsel %vm208, %v2329, %v2331
  %v2364 = vsel %vm208, %v2331, %v2333
  %v2365 = vsel %vm208, %v2333, %v2335
  %2398 = vrot.lane.b32.xlu0 %v2082, 100
  %v2399 = vpop.permute.xlu0 %2398
  %2400 = vrot.lane.b32.xlu0 %v2083, 100
  %v2401 = vpop.permute.xlu0 %2400
  %2402 = vrot.lane.b32.xlu0 %v2084, 100
  %v2403 = vpop.permute.xlu0 %2402
  %2404 = vrot.lane.b32.xlu0 %v2085, 100
  %v2405 = vpop.permute.xlu0 %2404
  %2406 = vrot.lane.b32.xlu0 %v2086, 100
  %v2407 = vpop.permute.xlu0 %2406
  %2408 = vrot.lane.b32.xlu0 %v2087, 100
  %v2409 = vpop.permute.xlu0 %2408
  %2410 = vrot.lane.b32.xlu0 %v2088, 100
  %v2411 = vpop.permute.xlu0 %2410
  %2412 = vrot.lane.b32.xlu0 %v2089, 100
  %v2413 = vpop.permute.xlu0 %2412
  %2414 = vrot.lane.b32.xlu0 %v2090, 100
  %v2415 = vpop.permute.xlu0 %2414
  %2416 = vrot.lane.b32.xlu0 %v2091, 100
  %v2417 = vpop.permute.xlu0 %2416
  %2418 = vrot.lane.b32.xlu0 %v2092, 100
  %v2419 = vpop.permute.xlu0 %2418
  %2420 = vrot.lane.b32.xlu0 %v2093, 100
  %v2421 = vpop.permute.xlu0 %2420
  %2422 = vrot.lane.b32.xlu0 %v2094, 100
  %v2423 = vpop.permute.xlu0 %2422
  %2424 = vrot.lane.b32.xlu0 %v2095, 100
  %v2425 = vpop.permute.xlu0 %2424
  %2426 = vrot.lane.b32.xlu0 %v2096, 100
  %v2427 = vpop.permute.xlu0 %2426
  %2428 = vrot.lane.b32.xlu0 %v2097, 100
  %v2429 = vpop.permute.xlu0 %2428
  %2430 = vrot.lane.b32.xlu0 %v2098, 100
  %v2431 = vpop.permute.xlu0 %2430
  %2432 = vrot.lane.b32.xlu0 %v2099, 100
  %v2433 = vpop.permute.xlu0 %2432
  %2434 = vrot.lane.b32.xlu0 %v2100, 100
  %v2435 = vpop.permute.xlu0 %2434
  %2436 = vrot.lane.b32.xlu0 %v2101, 100
  %v2437 = vpop.permute.xlu0 %2436
  %2438 = vrot.lane.b32.xlu0 %v2102, 100
  %v2439 = vpop.permute.xlu0 %2438
  %2440 = vrot.lane.b32.xlu0 %v2103, 100
  %v2441 = vpop.permute.xlu0 %2440
  %2442 = vrot.lane.b32.xlu0 %v2104, 100
  %v2443 = vpop.permute.xlu0 %2442
  %2444 = vrot.lane.b32.xlu0 %v2105, 100
  %v2445 = vpop.permute.xlu0 %2444
  %2446 = vrot.lane.b32.xlu0 %v2106, 100
  %v2447 = vpop.permute.xlu0 %2446
  %2448 = vrot.lane.b32.xlu0 %v2107, 100
  %v2449 = vpop.permute.xlu0 %2448
  %2450 = vrot.lane.b32.xlu0 %v2108, 100
  %v2451 = vpop.permute.xlu0 %2450
  %2452 = vrot.lane.b32.xlu0 %v2109, 100
  %v2453 = vpop.permute.xlu0 %2452
  %2454 = vrot.lane.b32.xlu0 %v2110, 100
  %v2455 = vpop.permute.xlu0 %2454
  %2456 = vrot.lane.b32.xlu0 %v2111, 100
  %v2457 = vpop.permute.xlu0 %2456
  %2458 = vrot.lane.b32.xlu0 %v2112, 100
  %v2459 = vpop.permute.xlu0 %2458
  %2460 = vrot.lane.b32.xlu0 %v2113, 100
  %v2461 = vpop.permute.xlu0 %2460
  %v2462 = vsel %vm276, %v2399, %v2401
  %v2463 = vsel %vm276, %v2401, %v2403
  %v2464 = vsel %vm276, %v2403, %v2405
  %v2465 = vsel %vm276, %v2405, %v2407
  %v2466 = vsel %vm276, %v2407, %v2409
  %v2467 = vsel %vm276, %v2409, %v2411
  %v2468 = vsel %vm276, %v2411, %v2413
  %v2469 = vsel %vm276, %v2413, %v2415
  %v2470 = vsel %vm276, %v2415, %v2417
  %v2471 = vsel %vm276, %v2417, %v2419
  %v2472 = vsel %vm276, %v2419, %v2421
  %v2473 = vsel %vm276, %v2421, %v2423
  %v2474 = vsel %vm276, %v2423, %v2425
  %v2475 = vsel %vm276, %v2425, %v2427
  %v2476 = vsel %vm276, %v2427, %v2429
  %v2477 = vsel %vm276, %v2431, %v2433
  %v2478 = vsel %vm276, %v2433, %v2435
  %v2479 = vsel %vm276, %v2435, %v2437
  %v2480 = vsel %vm276, %v2437, %v2439
  %v2481 = vsel %vm276, %v2439, %v2441
  %v2482 = vsel %vm276, %v2441, %v2443
  %v2483 = vsel %vm276, %v2443, %v2445
  %v2484 = vsel %vm276, %v2445, %v2447
  %v2485 = vsel %vm276, %v2447, %v2449
  %v2486 = vsel %vm276, %v2449, %v2451
  %v2487 = vsel %vm276, %v2451, %v2453
  %v2488 = vsel %vm276, %v2453, %v2455
  %v2489 = vsel %vm276, %v2455, %v2457
  %v2490 = vsel %vm276, %v2457, %v2459
  %v2491 = vsel %vm276, %v2459, %v2461
  %2524 = vrot.lane.b32.xlu0 %v2082, 99
  %v2525 = vpop.permute.xlu0 %2524
  %2526 = vrot.lane.b32.xlu0 %v2083, 99
  %v2527 = vpop.permute.xlu0 %2526
  %2528 = vrot.lane.b32.xlu0 %v2084, 99
  %v2529 = vpop.permute.xlu0 %2528
  %2530 = vrot.lane.b32.xlu0 %v2085, 99
  %v2531 = vpop.permute.xlu0 %2530
  %2532 = vrot.lane.b32.xlu0 %v2086, 99
  %v2533 = vpop.permute.xlu0 %2532
  %2534 = vrot.lane.b32.xlu0 %v2087, 99
  %v2535 = vpop.permute.xlu0 %2534
  %2536 = vrot.lane.b32.xlu0 %v2088, 99
  %v2537 = vpop.permute.xlu0 %2536
  %2538 = vrot.lane.b32.xlu0 %v2089, 99
  %v2539 = vpop.permute.xlu0 %2538
  %2540 = vrot.lane.b32.xlu0 %v2090, 99
  %v2541 = vpop.permute.xlu0 %2540
  %2542 = vrot.lane.b32.xlu0 %v2091, 99
  %v2543 = vpop.permute.xlu0 %2542
  %2544 = vrot.lane.b32.xlu0 %v2092, 99
  %v2545 = vpop.permute.xlu0 %2544
  %2546 = vrot.lane.b32.xlu0 %v2093, 99
  %v2547 = vpop.permute.xlu0 %2546
  %2548 = vrot.lane.b32.xlu0 %v2094, 99
  %v2549 = vpop.permute.xlu0 %2548
  %2550 = vrot.lane.b32.xlu0 %v2095, 99
  %v2551 = vpop.permute.xlu0 %2550
  %2552 = vrot.lane.b32.xlu0 %v2096, 99
  %v2553 = vpop.permute.xlu0 %2552
  %2554 = vrot.lane.b32.xlu0 %v2097, 99
  %v2555 = vpop.permute.xlu0 %2554
  %2556 = vrot.lane.b32.xlu0 %v2098, 99
  %v2557 = vpop.permute.xlu0 %2556
  %2558 = vrot.lane.b32.xlu0 %v2099, 99
  %v2559 = vpop.permute.xlu0 %2558
  %2560 = vrot.lane.b32.xlu0 %v2100, 99
  %v2561 = vpop.permute.xlu0 %2560
  %2562 = vrot.lane.b32.xlu0 %v2101, 99
  %v2563 = vpop.permute.xlu0 %2562
  %2564 = vrot.lane.b32.xlu0 %v2102, 99
  %v2565 = vpop.permute.xlu0 %2564
  %2566 = vrot.lane.b32.xlu0 %v2103, 99
  %v2567 = vpop.permute.xlu0 %2566
  %2568 = vrot.lane.b32.xlu0 %v2104, 99
  %v2569 = vpop.permute.xlu0 %2568
  %2570 = vrot.lane.b32.xlu0 %v2105, 99
  %v2571 = vpop.permute.xlu0 %2570
  %2572 = vrot.lane.b32.xlu0 %v2106, 99
  %v2573 = vpop.permute.xlu0 %2572
  %2574 = vrot.lane.b32.xlu0 %v2107, 99
  %v2575 = vpop.permute.xlu0 %2574
  %2576 = vrot.lane.b32.xlu0 %v2108, 99
  %v2577 = vpop.permute.xlu0 %2576
  %2578 = vrot.lane.b32.xlu0 %v2109, 99
  %v2579 = vpop.permute.xlu0 %2578
  %2580 = vrot.lane.b32.xlu0 %v2110, 99
  %v2581 = vpop.permute.xlu0 %2580
  %2582 = vrot.lane.b32.xlu0 %v2111, 99
  %v2583 = vpop.permute.xlu0 %2582
  %2584 = vrot.lane.b32.xlu0 %v2112, 99
  %v2585 = vpop.permute.xlu0 %2584
  %2586 = vrot.lane.b32.xlu0 %v2113, 99
  %v2587 = vpop.permute.xlu0 %2586
  %v2588 = vsel %vm344, %v2525, %v2527
  %v2589 = vsel %vm344, %v2527, %v2529
  %v2590 = vsel %vm344, %v2529, %v2531
  %v2591 = vsel %vm344, %v2531, %v2533
  %v2592 = vsel %vm344, %v2533, %v2535
  %v2593 = vsel %vm344, %v2535, %v2537
  %v2594 = vsel %vm344, %v2537, %v2539
  %v2595 = vsel %vm344, %v2539, %v2541
  %v2596 = vsel %vm344, %v2541, %v2543
  %v2597 = vsel %vm344, %v2543, %v2545
  %v2598 = vsel %vm344, %v2545, %v2547
  %v2599 = vsel %vm344, %v2547, %v2549
  %v2600 = vsel %vm344, %v2549, %v2551
  %v2601 = vsel %vm344, %v2551, %v2553
  %v2602 = vsel %vm344, %v2553, %v2555
  %v2603 = vsel %vm344, %v2557, %v2559
  %v2604 = vsel %vm344, %v2559, %v2561
  %v2605 = vsel %vm344, %v2561, %v2563
  %v2606 = vsel %vm344, %v2563, %v2565
  %v2607 = vsel %vm344, %v2565, %v2567
  %v2608 = vsel %vm344, %v2567, %v2569
  %v2609 = vsel %vm344, %v2569, %v2571
  %v2610 = vsel %vm344, %v2571, %v2573
  %v2611 = vsel %vm344, %v2573, %v2575
  %v2612 = vsel %vm344, %v2575, %v2577
  %v2613 = vsel %vm344, %v2577, %v2579
  %v2614 = vsel %vm344, %v2579, %v2581
  %v2615 = vsel %vm344, %v2581, %v2583
  %v2616 = vsel %vm344, %v2583, %v2585
  %v2617 = vsel %vm344, %v2585, %v2587
  %2650 = vrot.lane.b32.xlu0 %v2082, 98
  %v2651 = vpop.permute.xlu0 %2650
  %2652 = vrot.lane.b32.xlu0 %v2083, 98
  %v2653 = vpop.permute.xlu0 %2652
  %2654 = vrot.lane.b32.xlu0 %v2084, 98
  %v2655 = vpop.permute.xlu0 %2654
  %2656 = vrot.lane.b32.xlu0 %v2085, 98
  %v2657 = vpop.permute.xlu0 %2656
  %2658 = vrot.lane.b32.xlu0 %v2086, 98
  %v2659 = vpop.permute.xlu0 %2658
  %2660 = vrot.lane.b32.xlu0 %v2087, 98
  %v2661 = vpop.permute.xlu0 %2660
  %2662 = vrot.lane.b32.xlu0 %v2088, 98
  %v2663 = vpop.permute.xlu0 %2662
  %2664 = vrot.lane.b32.xlu0 %v2089, 98
  %v2665 = vpop.permute.xlu0 %2664
  %2666 = vrot.lane.b32.xlu0 %v2090, 98
  %v2667 = vpop.permute.xlu0 %2666
  %2668 = vrot.lane.b32.xlu0 %v2091, 98
  %v2669 = vpop.permute.xlu0 %2668
  %2670 = vrot.lane.b32.xlu0 %v2092, 98
  %v2671 = vpop.permute.xlu0 %2670
  %2672 = vrot.lane.b32.xlu0 %v2093, 98
  %v2673 = vpop.permute.xlu0 %2672
  %2674 = vrot.lane.b32.xlu0 %v2094, 98
  %v2675 = vpop.permute.xlu0 %2674
  %2676 = vrot.lane.b32.xlu0 %v2095, 98
  %v2677 = vpop.permute.xlu0 %2676
  %2678 = vrot.lane.b32.xlu0 %v2096, 98
  %v2679 = vpop.permute.xlu0 %2678
  %2680 = vrot.lane.b32.xlu0 %v2097, 98
  %v2681 = vpop.permute.xlu0 %2680
  %2682 = vrot.lane.b32.xlu0 %v2098, 98
  %v2683 = vpop.permute.xlu0 %2682
  %2684 = vrot.lane.b32.xlu0 %v2099, 98
  %v2685 = vpop.permute.xlu0 %2684
  %2686 = vrot.lane.b32.xlu0 %v2100, 98
  %v2687 = vpop.permute.xlu0 %2686
  %2688 = vrot.lane.b32.xlu0 %v2101, 98
  %v2689 = vpop.permute.xlu0 %2688
  %2690 = vrot.lane.b32.xlu0 %v2102, 98
  %v2691 = vpop.permute.xlu0 %2690
  %2692 = vrot.lane.b32.xlu0 %v2103, 98
  %v2693 = vpop.permute.xlu0 %2692
  %2694 = vrot.lane.b32.xlu0 %v2104, 98
  %v2695 = vpop.permute.xlu0 %2694
  %2696 = vrot.lane.b32.xlu0 %v2105, 98
  %v2697 = vpop.permute.xlu0 %2696
  %2698 = vrot.lane.b32.xlu0 %v2106, 98
  %v2699 = vpop.permute.xlu0 %2698
  %2700 = vrot.lane.b32.xlu0 %v2107, 98
  %v2701 = vpop.permute.xlu0 %2700
  %2702 = vrot.lane.b32.xlu0 %v2108, 98
  %v2703 = vpop.permute.xlu0 %2702
  %2704 = vrot.lane.b32.xlu0 %v2109, 98
  %v2705 = vpop.permute.xlu0 %2704
  %2706 = vrot.lane.b32.xlu0 %v2110, 98
  %v2707 = vpop.permute.xlu0 %2706
  %2708 = vrot.lane.b32.xlu0 %v2111, 98
  %v2709 = vpop.permute.xlu0 %2708
  %2710 = vrot.lane.b32.xlu0 %v2112, 98
  %v2711 = vpop.permute.xlu0 %2710
  %2712 = vrot.lane.b32.xlu0 %v2113, 98
  %v2713 = vpop.permute.xlu0 %2712
  %v2714 = vsel %vm412, %v2651, %v2653
  %v2715 = vsel %vm412, %v2653, %v2655
  %v2716 = vsel %vm412, %v2655, %v2657
  %v2717 = vsel %vm412, %v2657, %v2659
  %v2718 = vsel %vm412, %v2659, %v2661
  %v2719 = vsel %vm412, %v2661, %v2663
  %v2720 = vsel %vm412, %v2663, %v2665
  %v2721 = vsel %vm412, %v2665, %v2667
  %v2722 = vsel %vm412, %v2667, %v2669
  %v2723 = vsel %vm412, %v2669, %v2671
  %v2724 = vsel %vm412, %v2671, %v2673
  %v2725 = vsel %vm412, %v2673, %v2675
  %v2726 = vsel %vm412, %v2675, %v2677
  %v2727 = vsel %vm412, %v2677, %v2679
  %v2728 = vsel %vm412, %v2679, %v2681
  %v2729 = vsel %vm412, %v2683, %v2685
  %v2730 = vsel %vm412, %v2685, %v2687
  %v2731 = vsel %vm412, %v2687, %v2689
  %v2732 = vsel %vm412, %v2689, %v2691
  %v2733 = vsel %vm412, %v2691, %v2693
  %v2734 = vsel %vm412, %v2693, %v2695
  %v2735 = vsel %vm412, %v2695, %v2697
  %v2736 = vsel %vm412, %v2697, %v2699
  %v2737 = vsel %vm412, %v2699, %v2701
  %v2738 = vsel %vm412, %v2701, %v2703
  %v2739 = vsel %vm412, %v2703, %v2705
  %v2740 = vsel %vm412, %v2705, %v2707
  %v2741 = vsel %vm412, %v2707, %v2709
  %v2742 = vsel %vm412, %v2709, %v2711
  %v2743 = vsel %vm412, %v2711, %v2713
  %2776 = vrot.lane.b32.xlu0 %v2082, 72
  %v2777 = vpop.permute.xlu0 %2776
  %2778 = vrot.lane.b32.xlu0 %v2083, 72
  %v2779 = vpop.permute.xlu0 %2778
  %2780 = vrot.lane.b32.xlu0 %v2084, 72
  %v2781 = vpop.permute.xlu0 %2780
  %2782 = vrot.lane.b32.xlu0 %v2085, 72
  %v2783 = vpop.permute.xlu0 %2782
  %2784 = vrot.lane.b32.xlu0 %v2086, 72
  %v2785 = vpop.permute.xlu0 %2784
  %2786 = vrot.lane.b32.xlu0 %v2087, 72
  %v2787 = vpop.permute.xlu0 %2786
  %2788 = vrot.lane.b32.xlu0 %v2088, 72
  %v2789 = vpop.permute.xlu0 %2788
  %2790 = vrot.lane.b32.xlu0 %v2089, 72
  %v2791 = vpop.permute.xlu0 %2790
  %2792 = vrot.lane.b32.xlu0 %v2090, 72
  %v2793 = vpop.permute.xlu0 %2792
  %2794 = vrot.lane.b32.xlu0 %v2091, 72
  %v2795 = vpop.permute.xlu0 %2794
  %2796 = vrot.lane.b32.xlu0 %v2092, 72
  %v2797 = vpop.permute.xlu0 %2796
  %2798 = vrot.lane.b32.xlu0 %v2093, 72
  %v2799 = vpop.permute.xlu0 %2798
  %2800 = vrot.lane.b32.xlu0 %v2094, 72
  %v2801 = vpop.permute.xlu0 %2800
  %2802 = vrot.lane.b32.xlu0 %v2095, 72
  %v2803 = vpop.permute.xlu0 %2802
  %2804 = vrot.lane.b32.xlu0 %v2096, 72
  %v2805 = vpop.permute.xlu0 %2804
  %2806 = vrot.lane.b32.xlu0 %v2097, 72
  %v2807 = vpop.permute.xlu0 %2806
  %2808 = vrot.lane.b32.xlu0 %v2098, 72
  %v2809 = vpop.permute.xlu0 %2808
  %2810 = vrot.lane.b32.xlu0 %v2099, 72
  %v2811 = vpop.permute.xlu0 %2810
  %2812 = vrot.lane.b32.xlu0 %v2100, 72
  %v2813 = vpop.permute.xlu0 %2812
  %2814 = vrot.lane.b32.xlu0 %v2101, 72
  %v2815 = vpop.permute.xlu0 %2814
  %2816 = vrot.lane.b32.xlu0 %v2102, 72
  %v2817 = vpop.permute.xlu0 %2816
  %2818 = vrot.lane.b32.xlu0 %v2103, 72
  %v2819 = vpop.permute.xlu0 %2818
  %2820 = vrot.lane.b32.xlu0 %v2104, 72
  %v2821 = vpop.permute.xlu0 %2820
  %2822 = vrot.lane.b32.xlu0 %v2105, 72
  %v2823 = vpop.permute.xlu0 %2822
  %2824 = vrot.lane.b32.xlu0 %v2106, 72
  %v2825 = vpop.permute.xlu0 %2824
  %2826 = vrot.lane.b32.xlu0 %v2107, 72
  %v2827 = vpop.permute.xlu0 %2826
  %2828 = vrot.lane.b32.xlu0 %v2108, 72
  %v2829 = vpop.permute.xlu0 %2828
  %2830 = vrot.lane.b32.xlu0 %v2109, 72
  %v2831 = vpop.permute.xlu0 %2830
  %2832 = vrot.lane.b32.xlu0 %v2110, 72
  %v2833 = vpop.permute.xlu0 %2832
  %2834 = vrot.lane.b32.xlu0 %v2111, 72
  %v2835 = vpop.permute.xlu0 %2834
  %2836 = vrot.lane.b32.xlu0 %v2112, 72
  %v2837 = vpop.permute.xlu0 %2836
  %2838 = vrot.lane.b32.xlu0 %v2113, 72
  %v2839 = vpop.permute.xlu0 %2838
  %v2840 = vsel %vm480, %v2777, %v2779
  %v2841 = vsel %vm480, %v2779, %v2781
  %v2842 = vsel %vm480, %v2781, %v2783
  %v2843 = vsel %vm480, %v2783, %v2785
  %v2844 = vsel %vm480, %v2785, %v2787
  %v2845 = vsel %vm480, %v2787, %v2789
  %v2846 = vsel %vm480, %v2789, %v2791
  %v2847 = vsel %vm480, %v2791, %v2793
  %v2848 = vsel %vm480, %v2793, %v2795
  %v2849 = vsel %vm480, %v2795, %v2797
  %v2850 = vsel %vm480, %v2797, %v2799
  %v2851 = vsel %vm480, %v2799, %v2801
  %v2852 = vsel %vm480, %v2801, %v2803
  %v2853 = vsel %vm480, %v2803, %v2805
  %v2854 = vsel %vm480, %v2805, %v2807
  %v2855 = vsel %vm480, %v2809, %v2811
  %v2856 = vsel %vm480, %v2811, %v2813
  %v2857 = vsel %vm480, %v2813, %v2815
  %v2858 = vsel %vm480, %v2815, %v2817
  %v2859 = vsel %vm480, %v2817, %v2819
  %v2860 = vsel %vm480, %v2819, %v2821
  %v2861 = vsel %vm480, %v2821, %v2823
  %v2862 = vsel %vm480, %v2823, %v2825
  %v2863 = vsel %vm480, %v2825, %v2827
  %v2864 = vsel %vm480, %v2827, %v2829
  %v2865 = vsel %vm480, %v2829, %v2831
  %v2866 = vsel %vm480, %v2831, %v2833
  %v2867 = vsel %vm480, %v2833, %v2835
  %v2868 = vsel %vm480, %v2835, %v2837
  %v2869 = vsel %vm480, %v2837, %v2839
  %2902 = vrot.lane.b32.xlu0 %v2082, 71
  %v2903 = vpop.permute.xlu0 %2902
  %2904 = vrot.lane.b32.xlu0 %v2083, 71
  %v2905 = vpop.permute.xlu0 %2904
  %2906 = vrot.lane.b32.xlu0 %v2084, 71
  %v2907 = vpop.permute.xlu0 %2906
  %2908 = vrot.lane.b32.xlu0 %v2085, 71
  %v2909 = vpop.permute.xlu0 %2908
  %2910 = vrot.lane.b32.xlu0 %v2086, 71
  %v2911 = vpop.permute.xlu0 %2910
  %2912 = vrot.lane.b32.xlu0 %v2087, 71
  %v2913 = vpop.permute.xlu0 %2912
  %2914 = vrot.lane.b32.xlu0 %v2088, 71
  %v2915 = vpop.permute.xlu0 %2914
  %2916 = vrot.lane.b32.xlu0 %v2089, 71
  %v2917 = vpop.permute.xlu0 %2916
  %2918 = vrot.lane.b32.xlu0 %v2090, 71
  %v2919 = vpop.permute.xlu0 %2918
  %2920 = vrot.lane.b32.xlu0 %v2091, 71
  %v2921 = vpop.permute.xlu0 %2920
  %2922 = vrot.lane.b32.xlu0 %v2092, 71
  %v2923 = vpop.permute.xlu0 %2922
  %2924 = vrot.lane.b32.xlu0 %v2093, 71
  %v2925 = vpop.permute.xlu0 %2924
  %2926 = vrot.lane.b32.xlu0 %v2094, 71
  %v2927 = vpop.permute.xlu0 %2926
  %2928 = vrot.lane.b32.xlu0 %v2095, 71
  %v2929 = vpop.permute.xlu0 %2928
  %2930 = vrot.lane.b32.xlu0 %v2096, 71
  %v2931 = vpop.permute.xlu0 %2930
  %2932 = vrot.lane.b32.xlu0 %v2097, 71
  %v2933 = vpop.permute.xlu0 %2932
  %2934 = vrot.lane.b32.xlu0 %v2098, 71
  %v2935 = vpop.permute.xlu0 %2934
  %2936 = vrot.lane.b32.xlu0 %v2099, 71
  %v2937 = vpop.permute.xlu0 %2936
  %2938 = vrot.lane.b32.xlu0 %v2100, 71
  %v2939 = vpop.permute.xlu0 %2938
  %2940 = vrot.lane.b32.xlu0 %v2101, 71
  %v2941 = vpop.permute.xlu0 %2940
  %2942 = vrot.lane.b32.xlu0 %v2102, 71
  %v2943 = vpop.permute.xlu0 %2942
  %2944 = vrot.lane.b32.xlu0 %v2103, 71
  %v2945 = vpop.permute.xlu0 %2944
  %2946 = vrot.lane.b32.xlu0 %v2104, 71
  %v2947 = vpop.permute.xlu0 %2946
  %2948 = vrot.lane.b32.xlu0 %v2105, 71
  %v2949 = vpop.permute.xlu0 %2948
  %2950 = vrot.lane.b32.xlu0 %v2106, 71
  %v2951 = vpop.permute.xlu0 %2950
  %2952 = vrot.lane.b32.xlu0 %v2107, 71
  %v2953 = vpop.permute.xlu0 %2952
  %2954 = vrot.lane.b32.xlu0 %v2108, 71
  %v2955 = vpop.permute.xlu0 %2954
  %2956 = vrot.lane.b32.xlu0 %v2109, 71
  %v2957 = vpop.permute.xlu0 %2956
  %2958 = vrot.lane.b32.xlu0 %v2110, 71
  %v2959 = vpop.permute.xlu0 %2958
  %2960 = vrot.lane.b32.xlu0 %v2111, 71
  %v2961 = vpop.permute.xlu0 %2960
  %2962 = vrot.lane.b32.xlu0 %v2112, 71
  %v2963 = vpop.permute.xlu0 %2962
  %2964 = vrot.lane.b32.xlu0 %v2113, 71
  %v2965 = vpop.permute.xlu0 %2964
  %v2966 = vsel %vm548, %v2903, %v2905
  %v2967 = vsel %vm548, %v2905, %v2907
  %v2968 = vsel %vm548, %v2907, %v2909
  %v2969 = vsel %vm548, %v2909, %v2911
  %v2970 = vsel %vm548, %v2911, %v2913
  %v2971 = vsel %vm548, %v2913, %v2915
  %v2972 = vsel %vm548, %v2915, %v2917
  %v2973 = vsel %vm548, %v2917, %v2919
  %v2974 = vsel %vm548, %v2919, %v2921
  %v2975 = vsel %vm548, %v2921, %v2923
  %v2976 = vsel %vm548, %v2923, %v2925
  %v2977 = vsel %vm548, %v2925, %v2927
  %v2978 = vsel %vm548, %v2927, %v2929
  %v2979 = vsel %vm548, %v2929, %v2931
  %v2980 = vsel %vm548, %v2931, %v2933
  %v2981 = vsel %vm548, %v2935, %v2937
  %v2982 = vsel %vm548, %v2937, %v2939
  %v2983 = vsel %vm548, %v2939, %v2941
  %v2984 = vsel %vm548, %v2941, %v2943
  %v2985 = vsel %vm548, %v2943, %v2945
  %v2986 = vsel %vm548, %v2945, %v2947
  %v2987 = vsel %vm548, %v2947, %v2949
  %v2988 = vsel %vm548, %v2949, %v2951
  %v2989 = vsel %vm548, %v2951, %v2953
  %v2990 = vsel %vm548, %v2953, %v2955
  %v2991 = vsel %vm548, %v2955, %v2957
  %v2992 = vsel %vm548, %v2957, %v2959
  %v2993 = vsel %vm548, %v2959, %v2961
  %v2994 = vsel %vm548, %v2961, %v2963
  %v2995 = vsel %vm548, %v2963, %v2965
  %3028 = vrot.lane.b32.xlu0 %v2082, 70
  %v3029 = vpop.permute.xlu0 %3028
  %3030 = vrot.lane.b32.xlu0 %v2083, 70
  %v3031 = vpop.permute.xlu0 %3030
  %3032 = vrot.lane.b32.xlu0 %v2084, 70
  %v3033 = vpop.permute.xlu0 %3032
  %3034 = vrot.lane.b32.xlu0 %v2085, 70
  %v3035 = vpop.permute.xlu0 %3034
  %3036 = vrot.lane.b32.xlu0 %v2086, 70
  %v3037 = vpop.permute.xlu0 %3036
  %3038 = vrot.lane.b32.xlu0 %v2087, 70
  %v3039 = vpop.permute.xlu0 %3038
  %3040 = vrot.lane.b32.xlu0 %v2088, 70
  %v3041 = vpop.permute.xlu0 %3040
  %3042 = vrot.lane.b32.xlu0 %v2089, 70
  %v3043 = vpop.permute.xlu0 %3042
  %3044 = vrot.lane.b32.xlu0 %v2090, 70
  %v3045 = vpop.permute.xlu0 %3044
  %3046 = vrot.lane.b32.xlu0 %v2091, 70
  %v3047 = vpop.permute.xlu0 %3046
  %3048 = vrot.lane.b32.xlu0 %v2092, 70
  %v3049 = vpop.permute.xlu0 %3048
  %3050 = vrot.lane.b32.xlu0 %v2093, 70
  %v3051 = vpop.permute.xlu0 %3050
  %3052 = vrot.lane.b32.xlu0 %v2094, 70
  %v3053 = vpop.permute.xlu0 %3052
  %3054 = vrot.lane.b32.xlu0 %v2095, 70
  %v3055 = vpop.permute.xlu0 %3054
  %3056 = vrot.lane.b32.xlu0 %v2096, 70
  %v3057 = vpop.permute.xlu0 %3056
  %3058 = vrot.lane.b32.xlu0 %v2097, 70
  %v3059 = vpop.permute.xlu0 %3058
  %3060 = vrot.lane.b32.xlu0 %v2098, 70
  %v3061 = vpop.permute.xlu0 %3060
  %3062 = vrot.lane.b32.xlu0 %v2099, 70
  %v3063 = vpop.permute.xlu0 %3062
  %3064 = vrot.lane.b32.xlu0 %v2100, 70
  %v3065 = vpop.permute.xlu0 %3064
  %3066 = vrot.lane.b32.xlu0 %v2101, 70
  %v3067 = vpop.permute.xlu0 %3066
  %3068 = vrot.lane.b32.xlu0 %v2102, 70
  %v3069 = vpop.permute.xlu0 %3068
  %3070 = vrot.lane.b32.xlu0 %v2103, 70
  %v3071 = vpop.permute.xlu0 %3070
  %3072 = vrot.lane.b32.xlu0 %v2104, 70
  %v3073 = vpop.permute.xlu0 %3072
  %3074 = vrot.lane.b32.xlu0 %v2105, 70
  %v3075 = vpop.permute.xlu0 %3074
  %3076 = vrot.lane.b32.xlu0 %v2106, 70
  %v3077 = vpop.permute.xlu0 %3076
  %3078 = vrot.lane.b32.xlu0 %v2107, 70
  %v3079 = vpop.permute.xlu0 %3078
  %3080 = vrot.lane.b32.xlu0 %v2108, 70
  %v3081 = vpop.permute.xlu0 %3080
  %3082 = vrot.lane.b32.xlu0 %v2109, 70
  %v3083 = vpop.permute.xlu0 %3082
  %3084 = vrot.lane.b32.xlu0 %v2110, 70
  %v3085 = vpop.permute.xlu0 %3084
  %3086 = vrot.lane.b32.xlu0 %v2111, 70
  %v3087 = vpop.permute.xlu0 %3086
  %3088 = vrot.lane.b32.xlu0 %v2112, 70
  %v3089 = vpop.permute.xlu0 %3088
  %3090 = vrot.lane.b32.xlu0 %v2113, 70
  %v3091 = vpop.permute.xlu0 %3090
  %v3092 = vsel %vm616, %v3029, %v3031
  %v3093 = vsel %vm616, %v3031, %v3033
  %v3094 = vsel %vm616, %v3033, %v3035
  %v3095 = vsel %vm616, %v3035, %v3037
  %v3096 = vsel %vm616, %v3037, %v3039
  %v3097 = vsel %vm616, %v3039, %v3041
  %v3098 = vsel %vm616, %v3041, %v3043
  %v3099 = vsel %vm616, %v3043, %v3045
  %v3100 = vsel %vm616, %v3045, %v3047
  %v3101 = vsel %vm616, %v3047, %v3049
  %v3102 = vsel %vm616, %v3049, %v3051
  %v3103 = vsel %vm616, %v3051, %v3053
  %v3104 = vsel %vm616, %v3053, %v3055
  %v3105 = vsel %vm616, %v3055, %v3057
  %v3106 = vsel %vm616, %v3057, %v3059
  %v3107 = vsel %vm616, %v3061, %v3063
  %v3108 = vsel %vm616, %v3063, %v3065
  %v3109 = vsel %vm616, %v3065, %v3067
  %v3110 = vsel %vm616, %v3067, %v3069
  %v3111 = vsel %vm616, %v3069, %v3071
  %v3112 = vsel %vm616, %v3071, %v3073
  %v3113 = vsel %vm616, %v3073, %v3075
  %v3114 = vsel %vm616, %v3075, %v3077
  %v3115 = vsel %vm616, %v3077, %v3079
  %v3116 = vsel %vm616, %v3079, %v3081
  %v3117 = vsel %vm616, %v3081, %v3083
  %v3118 = vsel %vm616, %v3083, %v3085
  %v3119 = vsel %vm616, %v3085, %v3087
  %v3120 = vsel %vm616, %v3087, %v3089
  %v3121 = vsel %vm616, %v3089, %v3091
  %3155 = vset.pattern.permute.xlu0 0
  %3156 = vperm.xlu0 %3155, %v53
  %v3157 = vpop.permute.xlu0 %3156
  %3160 = vset.pattern.permute.xlu0 0
  %3161 = vperm.xlu0 %3160, %v54
  %v3162 = vpop.permute.xlu0 %3161
  %vm3164 = vcmask 130048
  %v3166 = vsel %vm3164, %v27, 0
  %v3169 = vsel %vm3164, %v29, 0
  %3171 = vmatpush.msra.mxu0 %v2981
  %3172 = vmatpush.msra.mxu0 %v2966
  %3173 = vmatpush.msra.mxu0 %v2855
  %3174 = vmatpush.msra.mxu0 %v2840
  %3175 = vmatpush.msra.mxu0 %v2729
  %3176 = vmatpush.msra.mxu0 %v2714
  %3177 = vmatpush.msra.mxu0 %v2603
  %3178 = vmatpush.msra.mxu0 %v2588
  %3179 = vmatpush.msra.mxu0 %v2477
  %3180 = vmatpush.msra.mxu0 %v2462
  %3181 = vmatpush.msra.mxu0 %v2351
  %3182 = vmatpush.msra.mxu0 %v2336
  %3183 = vmatpush.msra.mxu0 %v2225
  %3184 = vmatpush.msra.mxu0 %v2210
  %3185 = vmatpush.msra.mxu0 %v2098
  %3186 = vmatpush.msra.mxu0 %v2082
  %3187 = vmatmul.f32.gmra.mxu0 %v26
  %v3188 = vpop.f32.mrf.mxu0
  %v3189 = vadd.f32 %v3157, %v3188
  %3190 = vmatmul.f32.gmra.mxu0 %v28
  %v3191 = vpop.f32.mrf.mxu0
  %v3192 = vadd.f32 %v3162, %v3191
  %3193 = vdwg.mxu0
  %3194 = vmatpush.msra.mxu0 0.0
  %3195 = vmatpush.msra.mxu0 0.0
  %3196 = vmatpush.msra.mxu0 0.0
  %3197 = vmatpush.msra.mxu0 0.0
  %3198 = vmatpush.msra.mxu0 0.0
  %3199 = vmatpush.msra.mxu0 0.0
  %3200 = vmatpush.msra.mxu0 0.0
  %3201 = vmatpush.msra.mxu0 0.0
  %3202 = vmatpush.msra.mxu0 0.0
  %3203 = vmatpush.msra.mxu0 0.0
  %3204 = vmatpush.msra.mxu0 0.0
  %3205 = vmatpush.msra.mxu0 0.0
  %3206 = vmatpush.msra.mxu0 0.0
  %3207 = vmatpush.msra.mxu0 0.0
  %3208 = vmatpush.msra.mxu0 %v3107
  %3209 = vmatpush.msra.mxu0 %v3092
  %3210 = vmatmul.f32.gmra.mxu0 %v3166
  %v3211 = vpop.f32.mrf.mxu0
  %v3212 = vadd.f32 %v3189, %v3211
  %3213 = vmatmul.f32.gmra.mxu0 %v3169
  %v3214 = vpop.f32.mrf.mxu0
  %v3215 = vadd.f32 %v3192, %v3214
  %3216 = vdwg.mxu0
  %3217 = vmatpush.msra.mxu0 %v2982
  %3218 = vmatpush.msra.mxu0 %v2967
  %3219 = vmatpush.msra.mxu0 %v2856
  %3220 = vmatpush.msra.mxu0 %v2841
  %3221 = vmatpush.msra.mxu0 %v2730
  %3222 = vmatpush.msra.mxu0 %v2715
  %3223 = vmatpush.msra.mxu0 %v2604
  %3224 = vmatpush.msra.mxu0 %v2589
  %3225 = vmatpush.msra.mxu0 %v2478
  %3226 = vmatpush.msra.mxu0 %v2463
  %3227 = vmatpush.msra.mxu0 %v2352
  %3228 = vmatpush.msra.mxu0 %v2337
  %3229 = vmatpush.msra.mxu0 %v2226
  %3230 = vmatpush.msra.mxu0 %v2211
  %3231 = vmatpush.msra.mxu0 %v2099
  %3232 = vmatpush.msra.mxu0 %v2083
  %3233 = vmatmul.f32.gmra.mxu0 %v26
  %v3234 = vpop.f32.mrf.mxu0
  %v3235 = vadd.f32 %v3157, %v3234
  %3236 = vmatmul.f32.gmra.mxu0 %v28
  %v3237 = vpop.f32.mrf.mxu0
  %v3238 = vadd.f32 %v3162, %v3237
  %3239 = vdwg.mxu0
  %3240 = vmatpush.msra.mxu0 0.0
  %3241 = vmatpush.msra.mxu0 0.0
  %3242 = vmatpush.msra.mxu0 0.0
  %3243 = vmatpush.msra.mxu0 0.0
  %3244 = vmatpush.msra.mxu0 0.0
  %3245 = vmatpush.msra.mxu0 0.0
  %3246 = vmatpush.msra.mxu0 0.0
  %3247 = vmatpush.msra.mxu0 0.0
  %3248 = vmatpush.msra.mxu0 0.0
  %3249 = vmatpush.msra.mxu0 0.0
  %3250 = vmatpush.msra.mxu0 0.0
  %3251 = vmatpush.msra.mxu0 0.0
  %3252 = vmatpush.msra.mxu0 0.0
  %3253 = vmatpush.msra.mxu0 0.0
  %3254 = vmatpush.msra.mxu0 %v3108
  %3255 = vmatpush.msra.mxu0 %v3093
  %3256 = vmatmul.f32.gmra.mxu0 %v3166
  %v3257 = vpop.f32.mrf.mxu0
  %v3258 = vadd.f32 %v3235, %v3257
  %3259 = vmatmul.f32.gmra.mxu0 %v3169
  %v3260 = vpop.f32.mrf.mxu0
  %v3261 = vadd.f32 %v3238, %v3260
  %3262 = vdwg.mxu0
  %3263 = vmatpush.msra.mxu0 %v2983
  %3264 = vmatpush.msra.mxu0 %v2968
  %3265 = vmatpush.msra.mxu0 %v2857
  %3266 = vmatpush.msra.mxu0 %v2842
  %3267 = vmatpush.msra.mxu0 %v2731
  %3268 = vmatpush.msra.mxu0 %v2716
  %3269 = vmatpush.msra.mxu0 %v2605
  %3270 = vmatpush.msra.mxu0 %v2590
  %3271 = vmatpush.msra.mxu0 %v2479
  %3272 = vmatpush.msra.mxu0 %v2464
  %3273 = vmatpush.msra.mxu0 %v2353
  %3274 = vmatpush.msra.mxu0 %v2338
  %3275 = vmatpush.msra.mxu0 %v2227
  %3276 = vmatpush.msra.mxu0 %v2212
  %3277 = vmatpush.msra.mxu0 %v2100
  %3278 = vmatpush.msra.mxu0 %v2084
  %3279 = vmatmul.f32.gmra.mxu0 %v26
  %v3280 = vpop.f32.mrf.mxu0
  %v3281 = vadd.f32 %v3157, %v3280
  %3282 = vmatmul.f32.gmra.mxu0 %v28
  %v3283 = vpop.f32.mrf.mxu0
  %v3284 = vadd.f32 %v3162, %v3283
  %3285 = vdwg.mxu0
  %3286 = vmatpush.msra.mxu0 0.0
  %3287 = vmatpush.msra.mxu0 0.0
  %3288 = vmatpush.msra.mxu0 0.0
  %3289 = vmatpush.msra.mxu0 0.0
  %3290 = vmatpush.msra.mxu0 0.0
  %3291 = vmatpush.msra.mxu0 0.0
  %3292 = vmatpush.msra.mxu0 0.0
  %3293 = vmatpush.msra.mxu0 0.0
  %3294 = vmatpush.msra.mxu0 0.0
  %3295 = vmatpush.msra.mxu0 0.0
  %3296 = vmatpush.msra.mxu0 0.0
  %3297 = vmatpush.msra.mxu0 0.0
  %3298 = vmatpush.msra.mxu0 0.0
  %3299 = vmatpush.msra.mxu0 0.0
  %3300 = vmatpush.msra.mxu0 %v3109
  %3301 = vmatpush.msra.mxu0 %v3094
  %3302 = vmatmul.f32.gmra.mxu0 %v3166
  %v3303 = vpop.f32.mrf.mxu0
  %v3304 = vadd.f32 %v3281, %v3303
  %3305 = vmatmul.f32.gmra.mxu0 %v3169
  %v3306 = vpop.f32.mrf.mxu0
  %v3307 = vadd.f32 %v3284, %v3306
  %3308 = vdwg.mxu0
  %3309 = vmatpush.msra.mxu0 %v2984
  %3310 = vmatpush.msra.mxu0 %v2969
  %3311 = vmatpush.msra.mxu0 %v2858
  %3312 = vmatpush.msra.mxu0 %v2843
  %3313 = vmatpush.msra.mxu0 %v2732
  %3314 = vmatpush.msra.mxu0 %v2717
  %3315 = vmatpush.msra.mxu0 %v2606
  %3316 = vmatpush.msra.mxu0 %v2591
  %3317 = vmatpush.msra.mxu0 %v2480
  %3318 = vmatpush.msra.mxu0 %v2465
  %3319 = vmatpush.msra.mxu0 %v2354
  %3320 = vmatpush.msra.mxu0 %v2339
  %3321 = vmatpush.msra.mxu0 %v2228
  %3322 = vmatpush.msra.mxu0 %v2213
  %3323 = vmatpush.msra.mxu0 %v2101
  %3324 = vmatpush.msra.mxu0 %v2085
  %3325 = vmatmul.f32.gmra.mxu0 %v26
  %v3326 = vpop.f32.mrf.mxu0
  %v3327 = vadd.f32 %v3157, %v3326
  %3328 = vmatmul.f32.gmra.mxu0 %v28
  %v3329 = vpop.f32.mrf.mxu0
  %v3330 = vadd.f32 %v3162, %v3329
  %3331 = vdwg.mxu0
  %3332 = vmatpush.msra.mxu0 0.0
  %3333 = vmatpush.msra.mxu0 0.0
  %3334 = vmatpush.msra.mxu0 0.0
  %3335 = vmatpush.msra.mxu0 0.0
  %3336 = vmatpush.msra.mxu0 0.0
  %3337 = vmatpush.msra.mxu0 0.0
  %3338 = vmatpush.msra.mxu0 0.0
  %3339 = vmatpush.msra.mxu0 0.0
  %3340 = vmatpush.msra.mxu0 0.0
  %3341 = vmatpush.msra.mxu0 0.0
  %3342 = vmatpush.msra.mxu0 0.0
  %3343 = vmatpush.msra.mxu0 0.0
  %3344 = vmatpush.msra.mxu0 0.0
  %3345 = vmatpush.msra.mxu0 0.0
  %3346 = vmatpush.msra.mxu0 %v3110
  %3347 = vmatpush.msra.mxu0 %v3095
  %3348 = vmatmul.f32.gmra.mxu0 %v3166
  %v3349 = vpop.f32.mrf.mxu0
  %v3350 = vadd.f32 %v3327, %v3349
  %3351 = vmatmul.f32.gmra.mxu0 %v3169
  %v3352 = vpop.f32.mrf.mxu0
  %v3353 = vadd.f32 %v3330, %v3352
  %3354 = vdwg.mxu0
  %3355 = vmatpush.msra.mxu0 %v2985
  %3356 = vmatpush.msra.mxu0 %v2970
  %3357 = vmatpush.msra.mxu0 %v2859
  %3358 = vmatpush.msra.mxu0 %v2844
  %3359 = vmatpush.msra.mxu0 %v2733
  %3360 = vmatpush.msra.mxu0 %v2718
  %3361 = vmatpush.msra.mxu0 %v2607
  %3362 = vmatpush.msra.mxu0 %v2592
  %3363 = vmatpush.msra.mxu0 %v2481
  %3364 = vmatpush.msra.mxu0 %v2466
  %3365 = vmatpush.msra.mxu0 %v2355
  %3366 = vmatpush.msra.mxu0 %v2340
  %3367 = vmatpush.msra.mxu0 %v2229
  %3368 = vmatpush.msra.mxu0 %v2214
  %3369 = vmatpush.msra.mxu0 %v2102
  %3370 = vmatpush.msra.mxu0 %v2086
  %3371 = vmatmul.f32.gmra.mxu0 %v26
  %v3372 = vpop.f32.mrf.mxu0
  %v3373 = vadd.f32 %v3157, %v3372
  %3374 = vmatmul.f32.gmra.mxu0 %v28
  %v3375 = vpop.f32.mrf.mxu0
  %v3376 = vadd.f32 %v3162, %v3375
  %3377 = vdwg.mxu0
  %3378 = vmatpush.msra.mxu0 0.0
  %3379 = vmatpush.msra.mxu0 0.0
  %3380 = vmatpush.msra.mxu0 0.0
  %3381 = vmatpush.msra.mxu0 0.0
  %3382 = vmatpush.msra.mxu0 0.0
  %3383 = vmatpush.msra.mxu0 0.0
  %3384 = vmatpush.msra.mxu0 0.0
  %3385 = vmatpush.msra.mxu0 0.0
  %3386 = vmatpush.msra.mxu0 0.0
  %3387 = vmatpush.msra.mxu0 0.0
  %3388 = vmatpush.msra.mxu0 0.0
  %3389 = vmatpush.msra.mxu0 0.0
  %3390 = vmatpush.msra.mxu0 0.0
  %3391 = vmatpush.msra.mxu0 0.0
  %3392 = vmatpush.msra.mxu0 %v3111
  %3393 = vmatpush.msra.mxu0 %v3096
  %3394 = vmatmul.f32.gmra.mxu0 %v3166
  %v3395 = vpop.f32.mrf.mxu0
  %v3396 = vadd.f32 %v3373, %v3395
  %3397 = vmatmul.f32.gmra.mxu0 %v3169
  %v3398 = vpop.f32.mrf.mxu0
  %v3399 = vadd.f32 %v3376, %v3398
  %3400 = vdwg.mxu0
  %3401 = vmatpush.msra.mxu0 %v2986
  %3402 = vmatpush.msra.mxu0 %v2971
  %3403 = vmatpush.msra.mxu0 %v2860
  %3404 = vmatpush.msra.mxu0 %v2845
  %3405 = vmatpush.msra.mxu0 %v2734
  %3406 = vmatpush.msra.mxu0 %v2719
  %3407 = vmatpush.msra.mxu0 %v2608
  %3408 = vmatpush.msra.mxu0 %v2593
  %3409 = vmatpush.msra.mxu0 %v2482
  %3410 = vmatpush.msra.mxu0 %v2467
  %3411 = vmatpush.msra.mxu0 %v2356
  %3412 = vmatpush.msra.mxu0 %v2341
  %3413 = vmatpush.msra.mxu0 %v2230
  %3414 = vmatpush.msra.mxu0 %v2215
  %3415 = vmatpush.msra.mxu0 %v2103
  %3416 = vmatpush.msra.mxu0 %v2087
  %3417 = vmatmul.f32.gmra.mxu0 %v26
  %v3418 = vpop.f32.mrf.mxu0
  %v3419 = vadd.f32 %v3157, %v3418
  %3420 = vmatmul.f32.gmra.mxu0 %v28
  %v3421 = vpop.f32.mrf.mxu0
  %v3422 = vadd.f32 %v3162, %v3421
  %3423 = vdwg.mxu0
  %3424 = vmatpush.msra.mxu0 0.0
  %3425 = vmatpush.msra.mxu0 0.0
  %3426 = vmatpush.msra.mxu0 0.0
  %3427 = vmatpush.msra.mxu0 0.0
  %3428 = vmatpush.msra.mxu0 0.0
  %3429 = vmatpush.msra.mxu0 0.0
  %3430 = vmatpush.msra.mxu0 0.0
  %3431 = vmatpush.msra.mxu0 0.0
  %3432 = vmatpush.msra.mxu0 0.0
  %3433 = vmatpush.msra.mxu0 0.0
  %3434 = vmatpush.msra.mxu0 0.0
  %3435 = vmatpush.msra.mxu0 0.0
  %3436 = vmatpush.msra.mxu0 0.0
  %3437 = vmatpush.msra.mxu0 0.0
  %3438 = vmatpush.msra.mxu0 %v3112
  %3439 = vmatpush.msra.mxu0 %v3097
  %3440 = vmatmul.f32.gmra.mxu0 %v3166
  %v3441 = vpop.f32.mrf.mxu0
  %v3442 = vadd.f32 %v3419, %v3441
  %3443 = vmatmul.f32.gmra.mxu0 %v3169
  %v3444 = vpop.f32.mrf.mxu0
  %v3445 = vadd.f32 %v3422, %v3444
  %3446 = vdwg.mxu0
  %3447 = vmatpush.msra.mxu0 %v2987
  %3448 = vmatpush.msra.mxu0 %v2972
  %3449 = vmatpush.msra.mxu0 %v2861
  %3450 = vmatpush.msra.mxu0 %v2846
  %3451 = vmatpush.msra.mxu0 %v2735
  %3452 = vmatpush.msra.mxu0 %v2720
  %3453 = vmatpush.msra.mxu0 %v2609
  %3454 = vmatpush.msra.mxu0 %v2594
  %3455 = vmatpush.msra.mxu0 %v2483
  %3456 = vmatpush.msra.mxu0 %v2468
  %3457 = vmatpush.msra.mxu0 %v2357
  %3458 = vmatpush.msra.mxu0 %v2342
  %3459 = vmatpush.msra.mxu0 %v2231
  %3460 = vmatpush.msra.mxu0 %v2216
  %3461 = vmatpush.msra.mxu0 %v2104
  %3462 = vmatpush.msra.mxu0 %v2088
  %3463 = vmatmul.f32.gmra.mxu0 %v26
  %v3464 = vpop.f32.mrf.mxu0
  %v3465 = vadd.f32 %v3157, %v3464
  %3466 = vmatmul.f32.gmra.mxu0 %v28
  %v3467 = vpop.f32.mrf.mxu0
  %v3468 = vadd.f32 %v3162, %v3467
  %3469 = vdwg.mxu0
  %3470 = vmatpush.msra.mxu0 0.0
  %3471 = vmatpush.msra.mxu0 0.0
  %3472 = vmatpush.msra.mxu0 0.0
  %3473 = vmatpush.msra.mxu0 0.0
  %3474 = vmatpush.msra.mxu0 0.0
  %3475 = vmatpush.msra.mxu0 0.0
  %3476 = vmatpush.msra.mxu0 0.0
  %3477 = vmatpush.msra.mxu0 0.0
  %3478 = vmatpush.msra.mxu0 0.0
  %3479 = vmatpush.msra.mxu0 0.0
  %3480 = vmatpush.msra.mxu0 0.0
  %3481 = vmatpush.msra.mxu0 0.0
  %3482 = vmatpush.msra.mxu0 0.0
  %3483 = vmatpush.msra.mxu0 0.0
  %3484 = vmatpush.msra.mxu0 %v3113
  %3485 = vmatpush.msra.mxu0 %v3098
  %3486 = vmatmul.f32.gmra.mxu0 %v3166
  %v3487 = vpop.f32.mrf.mxu0
  %v3488 = vadd.f32 %v3465, %v3487
  %3489 = vmatmul.f32.gmra.mxu0 %v3169
  %v3490 = vpop.f32.mrf.mxu0
  %v3491 = vadd.f32 %v3468, %v3490
  %3492 = vdwg.mxu0
  %3493 = vmatpush.msra.mxu0 %v2988
  %3494 = vmatpush.msra.mxu0 %v2973
  %3495 = vmatpush.msra.mxu0 %v2862
  %3496 = vmatpush.msra.mxu0 %v2847
  %3497 = vmatpush.msra.mxu0 %v2736
  %3498 = vmatpush.msra.mxu0 %v2721
  %3499 = vmatpush.msra.mxu0 %v2610
  %3500 = vmatpush.msra.mxu0 %v2595
  %3501 = vmatpush.msra.mxu0 %v2484
  %3502 = vmatpush.msra.mxu0 %v2469
  %3503 = vmatpush.msra.mxu0 %v2358
  %3504 = vmatpush.msra.mxu0 %v2343
  %3505 = vmatpush.msra.mxu0 %v2232
  %3506 = vmatpush.msra.mxu0 %v2217
  %3507 = vmatpush.msra.mxu0 %v2105
  %3508 = vmatpush.msra.mxu0 %v2089
  %3509 = vmatmul.f32.gmra.mxu0 %v26
  %v3510 = vpop.f32.mrf.mxu0
  %v3511 = vadd.f32 %v3157, %v3510
  %3512 = vmatmul.f32.gmra.mxu0 %v28
  %v3513 = vpop.f32.mrf.mxu0
  %v3514 = vadd.f32 %v3162, %v3513
  %3515 = vdwg.mxu0
  %3516 = vmatpush.msra.mxu0 0.0
  %3517 = vmatpush.msra.mxu0 0.0
  %3518 = vmatpush.msra.mxu0 0.0
  %3519 = vmatpush.msra.mxu0 0.0
  %3520 = vmatpush.msra.mxu0 0.0
  %3521 = vmatpush.msra.mxu0 0.0
  %3522 = vmatpush.msra.mxu0 0.0
  %3523 = vmatpush.msra.mxu0 0.0
  %3524 = vmatpush.msra.mxu0 0.0
  %3525 = vmatpush.msra.mxu0 0.0
  %3526 = vmatpush.msra.mxu0 0.0
  %3527 = vmatpush.msra.mxu0 0.0
  %3528 = vmatpush.msra.mxu0 0.0
  %3529 = vmatpush.msra.mxu0 0.0
  %3530 = vmatpush.msra.mxu0 %v3114
  %3531 = vmatpush.msra.mxu0 %v3099
  %3532 = vmatmul.f32.gmra.mxu0 %v3166
  %v3533 = vpop.f32.mrf.mxu0
  %v3534 = vadd.f32 %v3511, %v3533
  %3535 = vmatmul.f32.gmra.mxu0 %v3169
  %v3536 = vpop.f32.mrf.mxu0
  %v3537 = vadd.f32 %v3514, %v3536
  %3538 = vdwg.mxu0
  %3539 = vmatpush.msra.mxu0 %v2989
  %3540 = vmatpush.msra.mxu0 %v2974
  %3541 = vmatpush.msra.mxu0 %v2863
  %3542 = vmatpush.msra.mxu0 %v2848
  %3543 = vmatpush.msra.mxu0 %v2737
  %3544 = vmatpush.msra.mxu0 %v2722
  %3545 = vmatpush.msra.mxu0 %v2611
  %3546 = vmatpush.msra.mxu0 %v2596
  %3547 = vmatpush.msra.mxu0 %v2485
  %3548 = vmatpush.msra.mxu0 %v2470
  %3549 = vmatpush.msra.mxu0 %v2359
  %3550 = vmatpush.msra.mxu0 %v2344
  %3551 = vmatpush.msra.mxu0 %v2233
  %3552 = vmatpush.msra.mxu0 %v2218
  %3553 = vmatpush.msra.mxu0 %v2106
  %3554 = vmatpush.msra.mxu0 %v2090
  %3555 = vmatmul.f32.gmra.mxu0 %v26
  %v3556 = vpop.f32.mrf.mxu0
  %v3557 = vadd.f32 %v3157, %v3556
  %3558 = vmatmul.f32.gmra.mxu0 %v28
  %v3559 = vpop.f32.mrf.mxu0
  %v3560 = vadd.f32 %v3162, %v3559
  %3561 = vdwg.mxu0
  %3562 = vmatpush.msra.mxu0 0.0
  %3563 = vmatpush.msra.mxu0 0.0
  %3564 = vmatpush.msra.mxu0 0.0
  %3565 = vmatpush.msra.mxu0 0.0
  %3566 = vmatpush.msra.mxu0 0.0
  %3567 = vmatpush.msra.mxu0 0.0
  %3568 = vmatpush.msra.mxu0 0.0
  %3569 = vmatpush.msra.mxu0 0.0
  %3570 = vmatpush.msra.mxu0 0.0
  %3571 = vmatpush.msra.mxu0 0.0
  %3572 = vmatpush.msra.mxu0 0.0
  %3573 = vmatpush.msra.mxu0 0.0
  %3574 = vmatpush.msra.mxu0 0.0
  %3575 = vmatpush.msra.mxu0 0.0
  %3576 = vmatpush.msra.mxu0 %v3115
  %3577 = vmatpush.msra.mxu0 %v3100
  %3578 = vmatmul.f32.gmra.mxu0 %v3166
  %v3579 = vpop.f32.mrf.mxu0
  %v3580 = vadd.f32 %v3557, %v3579
  %3581 = vmatmul.f32.gmra.mxu0 %v3169
  %v3582 = vpop.f32.mrf.mxu0
  %v3583 = vadd.f32 %v3560, %v3582
  %3584 = vdwg.mxu0
  %3585 = vmatpush.msra.mxu0 %v2990
  %3586 = vmatpush.msra.mxu0 %v2975
  %3587 = vmatpush.msra.mxu0 %v2864
  %3588 = vmatpush.msra.mxu0 %v2849
  %3589 = vmatpush.msra.mxu0 %v2738
  %3590 = vmatpush.msra.mxu0 %v2723
  %3591 = vmatpush.msra.mxu0 %v2612
  %3592 = vmatpush.msra.mxu0 %v2597
  %3593 = vmatpush.msra.mxu0 %v2486
  %3594 = vmatpush.msra.mxu0 %v2471
  %3595 = vmatpush.msra.mxu0 %v2360
  %3596 = vmatpush.msra.mxu0 %v2345
  %3597 = vmatpush.msra.mxu0 %v2234
  %3598 = vmatpush.msra.mxu0 %v2219
  %3599 = vmatpush.msra.mxu0 %v2107
  %3600 = vmatpush.msra.mxu0 %v2091
  %3601 = vmatmul.f32.gmra.mxu0 %v26
  %v3602 = vpop.f32.mrf.mxu0
  %v3603 = vadd.f32 %v3157, %v3602
  %3604 = vmatmul.f32.gmra.mxu0 %v28
  %v3605 = vpop.f32.mrf.mxu0
  %v3606 = vadd.f32 %v3162, %v3605
  %3607 = vdwg.mxu0
  %3608 = vmatpush.msra.mxu0 0.0
  %3609 = vmatpush.msra.mxu0 0.0
  %3610 = vmatpush.msra.mxu0 0.0
  %3611 = vmatpush.msra.mxu0 0.0
  %3612 = vmatpush.msra.mxu0 0.0
  %3613 = vmatpush.msra.mxu0 0.0
  %3614 = vmatpush.msra.mxu0 0.0
  %3615 = vmatpush.msra.mxu0 0.0
  %3616 = vmatpush.msra.mxu0 0.0
  %3617 = vmatpush.msra.mxu0 0.0
  %3618 = vmatpush.msra.mxu0 0.0
  %3619 = vmatpush.msra.mxu0 0.0
  %3620 = vmatpush.msra.mxu0 0.0
  %3621 = vmatpush.msra.mxu0 0.0
  %3622 = vmatpush.msra.mxu0 %v3116
  %3623 = vmatpush.msra.mxu0 %v3101
  %3624 = vmatmul.f32.gmra.mxu0 %v3166
  %v3625 = vpop.f32.mrf.mxu0
  %v3626 = vadd.f32 %v3603, %v3625
  %3627 = vmatmul.f32.gmra.mxu0 %v3169
  %v3628 = vpop.f32.mrf.mxu0
  %v3629 = vadd.f32 %v3606, %v3628
  %3630 = vdwg.mxu0
  %3631 = vmatpush.msra.mxu0 %v2991
  %3632 = vmatpush.msra.mxu0 %v2976
  %3633 = vmatpush.msra.mxu0 %v2865
  %3634 = vmatpush.msra.mxu0 %v2850
  %3635 = vmatpush.msra.mxu0 %v2739
  %3636 = vmatpush.msra.mxu0 %v2724
  %3637 = vmatpush.msra.mxu0 %v2613
  %3638 = vmatpush.msra.mxu0 %v2598
  %3639 = vmatpush.msra.mxu0 %v2487
  %3640 = vmatpush.msra.mxu0 %v2472
  %3641 = vmatpush.msra.mxu0 %v2361
  %3642 = vmatpush.msra.mxu0 %v2346
  %3643 = vmatpush.msra.mxu0 %v2235
  %3644 = vmatpush.msra.mxu0 %v2220
  %3645 = vmatpush.msra.mxu0 %v2108
  %3646 = vmatpush.msra.mxu0 %v2092
  %3647 = vmatmul.f32.gmra.mxu0 %v26
  %v3648 = vpop.f32.mrf.mxu0
  %v3649 = vadd.f32 %v3157, %v3648
  %3650 = vmatmul.f32.gmra.mxu0 %v28
  %v3651 = vpop.f32.mrf.mxu0
  %v3652 = vadd.f32 %v3162, %v3651
  %3653 = vdwg.mxu0
  %3654 = vmatpush.msra.mxu0 0.0
  %3655 = vmatpush.msra.mxu0 0.0
  %3656 = vmatpush.msra.mxu0 0.0
  %3657 = vmatpush.msra.mxu0 0.0
  %3658 = vmatpush.msra.mxu0 0.0
  %3659 = vmatpush.msra.mxu0 0.0
  %3660 = vmatpush.msra.mxu0 0.0
  %3661 = vmatpush.msra.mxu0 0.0
  %3662 = vmatpush.msra.mxu0 0.0
  %3663 = vmatpush.msra.mxu0 0.0
  %3664 = vmatpush.msra.mxu0 0.0
  %3665 = vmatpush.msra.mxu0 0.0
  %3666 = vmatpush.msra.mxu0 0.0
  %3667 = vmatpush.msra.mxu0 0.0
  %3668 = vmatpush.msra.mxu0 %v3117
  %3669 = vmatpush.msra.mxu0 %v3102
  %3670 = vmatmul.f32.gmra.mxu0 %v3166
  %v3671 = vpop.f32.mrf.mxu0
  %v3672 = vadd.f32 %v3649, %v3671
  %3673 = vmatmul.f32.gmra.mxu0 %v3169
  %v3674 = vpop.f32.mrf.mxu0
  %v3675 = vadd.f32 %v3652, %v3674
  %3676 = vdwg.mxu0
  %3677 = vmatpush.msra.mxu0 %v2992
  %3678 = vmatpush.msra.mxu0 %v2977
  %3679 = vmatpush.msra.mxu0 %v2866
  %3680 = vmatpush.msra.mxu0 %v2851
  %3681 = vmatpush.msra.mxu0 %v2740
  %3682 = vmatpush.msra.mxu0 %v2725
  %3683 = vmatpush.msra.mxu0 %v2614
  %3684 = vmatpush.msra.mxu0 %v2599
  %3685 = vmatpush.msra.mxu0 %v2488
  %3686 = vmatpush.msra.mxu0 %v2473
  %3687 = vmatpush.msra.mxu0 %v2362
  %3688 = vmatpush.msra.mxu0 %v2347
  %3689 = vmatpush.msra.mxu0 %v2236
  %3690 = vmatpush.msra.mxu0 %v2221
  %3691 = vmatpush.msra.mxu0 %v2109
  %3692 = vmatpush.msra.mxu0 %v2093
  %3693 = vmatmul.f32.gmra.mxu0 %v26
  %v3694 = vpop.f32.mrf.mxu0
  %v3695 = vadd.f32 %v3157, %v3694
  %3696 = vmatmul.f32.gmra.mxu0 %v28
  %v3697 = vpop.f32.mrf.mxu0
  %v3698 = vadd.f32 %v3162, %v3697
  %3699 = vdwg.mxu0
  %3700 = vmatpush.msra.mxu0 0.0
  %3701 = vmatpush.msra.mxu0 0.0
  %3702 = vmatpush.msra.mxu0 0.0
  %3703 = vmatpush.msra.mxu0 0.0
  %3704 = vmatpush.msra.mxu0 0.0
  %3705 = vmatpush.msra.mxu0 0.0
  %3706 = vmatpush.msra.mxu0 0.0
  %3707 = vmatpush.msra.mxu0 0.0
  %3708 = vmatpush.msra.mxu0 0.0
  %3709 = vmatpush.msra.mxu0 0.0
  %3710 = vmatpush.msra.mxu0 0.0
  %3711 = vmatpush.msra.mxu0 0.0
  %3712 = vmatpush.msra.mxu0 0.0
  %3713 = vmatpush.msra.mxu0 0.0
  %3714 = vmatpush.msra.mxu0 %v3118
  %3715 = vmatpush.msra.mxu0 %v3103
  %3716 = vmatmul.f32.gmra.mxu0 %v3166
  %v3717 = vpop.f32.mrf.mxu0
  %v3718 = vadd.f32 %v3695, %v3717
  %3719 = vmatmul.f32.gmra.mxu0 %v3169
  %v3720 = vpop.f32.mrf.mxu0
  %v3721 = vadd.f32 %v3698, %v3720
  %3722 = vdwg.mxu0
  %3723 = vmatpush.msra.mxu0 %v2993
  %3724 = vmatpush.msra.mxu0 %v2978
  %3725 = vmatpush.msra.mxu0 %v2867
  %3726 = vmatpush.msra.mxu0 %v2852
  %3727 = vmatpush.msra.mxu0 %v2741
  %3728 = vmatpush.msra.mxu0 %v2726
  %3729 = vmatpush.msra.mxu0 %v2615
  %3730 = vmatpush.msra.mxu0 %v2600
  %3731 = vmatpush.msra.mxu0 %v2489
  %3732 = vmatpush.msra.mxu0 %v2474
  %3733 = vmatpush.msra.mxu0 %v2363
  %3734 = vmatpush.msra.mxu0 %v2348
  %3735 = vmatpush.msra.mxu0 %v2237
  %3736 = vmatpush.msra.mxu0 %v2222
  %3737 = vmatpush.msra.mxu0 %v2110
  %3738 = vmatpush.msra.mxu0 %v2094
  %3739 = vmatmul.f32.gmra.mxu0 %v26
  %v3740 = vpop.f32.mrf.mxu0
  %v3741 = vadd.f32 %v3157, %v3740
  %3742 = vmatmul.f32.gmra.mxu0 %v28
  %v3743 = vpop.f32.mrf.mxu0
  %v3744 = vadd.f32 %v3162, %v3743
  %3745 = vdwg.mxu0
  %3746 = vmatpush.msra.mxu0 0.0
  %3747 = vmatpush.msra.mxu0 0.0
  %3748 = vmatpush.msra.mxu0 0.0
  %3749 = vmatpush.msra.mxu0 0.0
  %3750 = vmatpush.msra.mxu0 0.0
  %3751 = vmatpush.msra.mxu0 0.0
  %3752 = vmatpush.msra.mxu0 0.0
  %3753 = vmatpush.msra.mxu0 0.0
  %3754 = vmatpush.msra.mxu0 0.0
  %3755 = vmatpush.msra.mxu0 0.0
  %3756 = vmatpush.msra.mxu0 0.0
  %3757 = vmatpush.msra.mxu0 0.0
  %3758 = vmatpush.msra.mxu0 0.0
  %3759 = vmatpush.msra.mxu0 0.0
  %3760 = vmatpush.msra.mxu0 %v3119
  %3761 = vmatpush.msra.mxu0 %v3104
  %3762 = vmatmul.f32.gmra.mxu0 %v3166
  %v3763 = vpop.f32.mrf.mxu0
  %v3764 = vadd.f32 %v3741, %v3763
  %3765 = vmatmul.f32.gmra.mxu0 %v3169
  %v3766 = vpop.f32.mrf.mxu0
  %v3767 = vadd.f32 %v3744, %v3766
  %3768 = vdwg.mxu0
  %3769 = vmatpush.msra.mxu0 %v2994
  %3770 = vmatpush.msra.mxu0 %v2979
  %3771 = vmatpush.msra.mxu0 %v2868
  %3772 = vmatpush.msra.mxu0 %v2853
  %3773 = vmatpush.msra.mxu0 %v2742
  %3774 = vmatpush.msra.mxu0 %v2727
  %3775 = vmatpush.msra.mxu0 %v2616
  %3776 = vmatpush.msra.mxu0 %v2601
  %3777 = vmatpush.msra.mxu0 %v2490
  %3778 = vmatpush.msra.mxu0 %v2475
  %3779 = vmatpush.msra.mxu0 %v2364
  %3780 = vmatpush.msra.mxu0 %v2349
  %3781 = vmatpush.msra.mxu0 %v2238
  %3782 = vmatpush.msra.mxu0 %v2223
  %3783 = vmatpush.msra.mxu0 %v2111
  %3784 = vmatpush.msra.mxu0 %v2095
  %3785 = vmatmul.f32.gmra.mxu0 %v26
  %v3786 = vpop.f32.mrf.mxu0
  %v3787 = vadd.f32 %v3157, %v3786
  %3788 = vmatmul.f32.gmra.mxu0 %v28
  %v3789 = vpop.f32.mrf.mxu0
  %v3790 = vadd.f32 %v3162, %v3789
  %3791 = vdwg.mxu0
  %3792 = vmatpush.msra.mxu0 0.0
  %3793 = vmatpush.msra.mxu0 0.0
  %3794 = vmatpush.msra.mxu0 0.0
  %3795 = vmatpush.msra.mxu0 0.0
  %3796 = vmatpush.msra.mxu0 0.0
  %3797 = vmatpush.msra.mxu0 0.0
  %3798 = vmatpush.msra.mxu0 0.0
  %3799 = vmatpush.msra.mxu0 0.0
  %3800 = vmatpush.msra.mxu0 0.0
  %3801 = vmatpush.msra.mxu0 0.0
  %3802 = vmatpush.msra.mxu0 0.0
  %3803 = vmatpush.msra.mxu0 0.0
  %3804 = vmatpush.msra.mxu0 0.0
  %3805 = vmatpush.msra.mxu0 0.0
  %3806 = vmatpush.msra.mxu0 %v3120
  %3807 = vmatpush.msra.mxu0 %v3105
  %3808 = vmatmul.f32.gmra.mxu0 %v3166
  %v3809 = vpop.f32.mrf.mxu0
  %v3810 = vadd.f32 %v3787, %v3809
  %3811 = vmatmul.f32.gmra.mxu0 %v3169
  %v3812 = vpop.f32.mrf.mxu0
  %v3813 = vadd.f32 %v3790, %v3812
  %3814 = vdwg.mxu0
  %3815 = vmatpush.msra.mxu0 %v2995
  %3816 = vmatpush.msra.mxu0 %v2980
  %3817 = vmatpush.msra.mxu0 %v2869
  %3818 = vmatpush.msra.mxu0 %v2854
  %3819 = vmatpush.msra.mxu0 %v2743
  %3820 = vmatpush.msra.mxu0 %v2728
  %3821 = vmatpush.msra.mxu0 %v2617
  %3822 = vmatpush.msra.mxu0 %v2602
  %3823 = vmatpush.msra.mxu0 %v2491
  %3824 = vmatpush.msra.mxu0 %v2476
  %3825 = vmatpush.msra.mxu0 %v2365
  %3826 = vmatpush.msra.mxu0 %v2350
  %3827 = vmatpush.msra.mxu0 %v2239
  %3828 = vmatpush.msra.mxu0 %v2224
  %3829 = vmatpush.msra.mxu0 %v2112
  %3830 = vmatpush.msra.mxu0 %v2096
  %3831 = vmatmul.f32.gmra.mxu0 %v26
  %v3832 = vpop.f32.mrf.mxu0
  %v3833 = vadd.f32 %v3157, %v3832
  %3834 = vmatmul.f32.gmra.mxu0 %v28
  %v3835 = vpop.f32.mrf.mxu0
  %v3836 = vadd.f32 %v3162, %v3835
  %3837 = vdwg.mxu0
  %3838 = vmatpush.msra.mxu0 0.0
  %3839 = vmatpush.msra.mxu0 0.0
  %3840 = vmatpush.msra.mxu0 0.0
  %3841 = vmatpush.msra.mxu0 0.0
  %3842 = vmatpush.msra.mxu0 0.0
  %3843 = vmatpush.msra.mxu0 0.0
  %3844 = vmatpush.msra.mxu0 0.0
  %3845 = vmatpush.msra.mxu0 0.0
  %3846 = vmatpush.msra.mxu0 0.0
  %3847 = vmatpush.msra.mxu0 0.0
  %3848 = vmatpush.msra.mxu0 0.0
  %3849 = vmatpush.msra.mxu0 0.0
  %3850 = vmatpush.msra.mxu0 0.0
  %3851 = vmatpush.msra.mxu0 0.0
  %3852 = vmatpush.msra.mxu0 %v3121
  %3853 = vmatpush.msra.mxu0 %v3106
  %3854 = vmatmul.f32.gmra.mxu0 %v3166
  %v3855 = vpop.f32.mrf.mxu0
  %v3856 = vadd.f32 %v3833, %v3855
  %3857 = vmatmul.f32.gmra.mxu0 %v3169
  %v3858 = vpop.f32.mrf.mxu0
  %v3859 = vadd.f32 %v3836, %v3858
  %3860 = vdwg.mxu0
  %3861 = vmatpush.msra.mxu0 %v2965
  %3862 = vmatpush.msra.mxu0 %v2933
  %3863 = vmatpush.msra.mxu0 %v2839
  %3864 = vmatpush.msra.mxu0 %v2807
  %3865 = vmatpush.msra.mxu0 %v2713
  %3866 = vmatpush.msra.mxu0 %v2681
  %3867 = vmatpush.msra.mxu0 %v2587
  %3868 = vmatpush.msra.mxu0 %v2555
  %3869 = vmatpush.msra.mxu0 %v2461
  %3870 = vmatpush.msra.mxu0 %v2429
  %3871 = vmatpush.msra.mxu0 %v2335
  %3872 = vmatpush.msra.mxu0 %v2303
  %3873 = vmatpush.msra.mxu0 %v2209
  %3874 = vmatpush.msra.mxu0 %v2177
  %3875 = vmatpush.msra.mxu0 %v2113
  %3876 = vmatpush.msra.mxu0 %v2097
  %3877 = vmatmul.f32.gmra.mxu0 %v26
  %v3878 = vpop.f32.mrf.mxu0
  %v3879 = vadd.f32 %v3157, %v3878
  %3880 = vmatmul.f32.gmra.mxu0 %v28
  %v3881 = vpop.f32.mrf.mxu0
  %v3882 = vadd.f32 %v3162, %v3881
  %3883 = vdwg.mxu0
  %3884 = vmatpush.msra.mxu0 0.0
  %3885 = vmatpush.msra.mxu0 0.0
  %3886 = vmatpush.msra.mxu0 0.0
  %3887 = vmatpush.msra.mxu0 0.0
  %3888 = vmatpush.msra.mxu0 0.0
  %3889 = vmatpush.msra.mxu0 0.0
  %3890 = vmatpush.msra.mxu0 0.0
  %3891 = vmatpush.msra.mxu0 0.0
  %3892 = vmatpush.msra.mxu0 0.0
  %3893 = vmatpush.msra.mxu0 0.0
  %3894 = vmatpush.msra.mxu0 0.0
  %3895 = vmatpush.msra.mxu0 0.0
  %3896 = vmatpush.msra.mxu0 0.0
  %3897 = vmatpush.msra.mxu0 0.0
  %3898 = vmatpush.msra.mxu0 %v3091
  %3899 = vmatpush.msra.mxu0 %v3059
  %3900 = vmatmul.f32.gmra.mxu0 %v3166
  %v3901 = vpop.f32.mrf.mxu0
  %v3902 = vadd.f32 %v3879, %v3901
  %3903 = vmatmul.f32.gmra.mxu0 %v3169
  %v3904 = vpop.f32.mrf.mxu0
  %v3905 = vadd.f32 %v3882, %v3904
  %3906 = vdwg.mxu0
  %v3907 = vmax.f32 %v3212, 0.0
  %v3908 = vmax.f32 %v3258, 0.0
  %v3909 = vmax.f32 %v3304, 0.0
  %v3910 = vmax.f32 %v3350, 0.0
  %v3911 = vmax.f32 %v3396, 0.0
  %v3912 = vmax.f32 %v3442, 0.0
  %v3913 = vmax.f32 %v3488, 0.0
  %v3914 = vmax.f32 %v3534, 0.0
  %v3915 = vmax.f32 %v3580, 0.0
  %v3916 = vmax.f32 %v3626, 0.0
  %v3917 = vmax.f32 %v3672, 0.0
  %v3918 = vmax.f32 %v3718, 0.0
  %v3919 = vmax.f32 %v3764, 0.0
  %v3920 = vmax.f32 %v3810, 0.0
  %v3921 = vmax.f32 %v3856, 0.0
  %v3922 = vmax.f32 %v3902, 0.0
  %v3923 = vmax.f32 %v3215, 0.0
  %v3924 = vmax.f32 %v3261, 0.0
  %v3925 = vmax.f32 %v3307, 0.0
  %v3926 = vmax.f32 %v3353, 0.0
  %v3927 = vmax.f32 %v3399, 0.0
  %v3928 = vmax.f32 %v3445, 0.0
  %v3929 = vmax.f32 %v3491, 0.0
  %v3930 = vmax.f32 %v3537, 0.0
  %v3931 = vmax.f32 %v3583, 0.0
  %v3932 = vmax.f32 %v3629, 0.0
  %v3933 = vmax.f32 %v3675, 0.0
  %v3934 = vmax.f32 %v3721, 0.0
  %v3935 = vmax.f32 %v3767, 0.0
  %v3936 = vmax.f32 %v3813, 0.0
  %v3937 = vmax.f32 %v3859, 0.0
  %v3938 = vmax.f32 %v3905, 0.0
  %3969 = vrot.lane.b32.xlu0 %v3907, 127
  %v3970 = vpop.permute.xlu0 %3969
  %3971 = vrot.lane.b32.xlu0 %v3908, 127
  %v3972 = vpop.permute.xlu0 %3971
  %3973 = vrot.lane.b32.xlu0 %v3909, 127
  %v3974 = vpop.permute.xlu0 %3973
  %3975 = vrot.lane.b32.xlu0 %v3910, 127
  %v3976 = vpop.permute.xlu0 %3975
  %3977 = vrot.lane.b32.xlu0 %v3911, 127
  %v3978 = vpop.permute.xlu0 %3977
  %3979 = vrot.lane.b32.xlu0 %v3912, 127
  %v3980 = vpop.permute.xlu0 %3979
  %3981 = vrot.lane.b32.xlu0 %v3913, 127
  %v3982 = vpop.permute.xlu0 %3981
  %3983 = vrot.lane.b32.xlu0 %v3914, 127
  %v3984 = vpop.permute.xlu0 %3983
  %3985 = vrot.lane.b32.xlu0 %v3915, 127
  %v3986 = vpop.permute.xlu0 %3985
  %3987 = vrot.lane.b32.xlu0 %v3916, 127
  %v3988 = vpop.permute.xlu0 %3987
  %3989 = vrot.lane.b32.xlu0 %v3917, 127
  %v3990 = vpop.permute.xlu0 %3989
  %3991 = vrot.lane.b32.xlu0 %v3918, 127
  %v3992 = vpop.permute.xlu0 %3991
  %3993 = vrot.lane.b32.xlu0 %v3919, 127
  %v3994 = vpop.permute.xlu0 %3993
  %3995 = vrot.lane.b32.xlu0 %v3920, 127
  %v3996 = vpop.permute.xlu0 %3995
  %3997 = vrot.lane.b32.xlu0 %v3921, 127
  %v3998 = vpop.permute.xlu0 %3997
  %3999 = vrot.lane.b32.xlu0 %v3923, 127
  %v4000 = vpop.permute.xlu0 %3999
  %4001 = vrot.lane.b32.xlu0 %v3924, 127
  %v4002 = vpop.permute.xlu0 %4001
  %4003 = vrot.lane.b32.xlu0 %v3925, 127
  %v4004 = vpop.permute.xlu0 %4003
  %4005 = vrot.lane.b32.xlu0 %v3926, 127
  %v4006 = vpop.permute.xlu0 %4005
  %4007 = vrot.lane.b32.xlu0 %v3927, 127
  %v4008 = vpop.permute.xlu0 %4007
  %4009 = vrot.lane.b32.xlu0 %v3928, 127
  %v4010 = vpop.permute.xlu0 %4009
  %4011 = vrot.lane.b32.xlu0 %v3929, 127
  %v4012 = vpop.permute.xlu0 %4011
  %4013 = vrot.lane.b32.xlu0 %v3930, 127
  %v4014 = vpop.permute.xlu0 %4013
  %4015 = vrot.lane.b32.xlu0 %v3931, 127
  %v4016 = vpop.permute.xlu0 %4015
  %4017 = vrot.lane.b32.xlu0 %v3932, 127
  %v4018 = vpop.permute.xlu0 %4017
  %4019 = vrot.lane.b32.xlu0 %v3933, 127
  %v4020 = vpop.permute.xlu0 %4019
  %4021 = vrot.lane.b32.xlu0 %v3934, 127
  %v4022 = vpop.permute.xlu0 %4021
  %4023 = vrot.lane.b32.xlu0 %v3935, 127
  %v4024 = vpop.permute.xlu0 %4023
  %4025 = vrot.lane.b32.xlu0 %v3936, 127
  %v4026 = vpop.permute.xlu0 %4025
  %4027 = vrot.lane.b32.xlu0 %v3937, 127
  %v4028 = vpop.permute.xlu0 %4027
  %v4029 = vsel %vm140, %v3970, %v3972
  %v4030 = vsel %vm140, %v3972, %v3974
  %v4031 = vsel %vm140, %v3974, %v3976
  %v4032 = vsel %vm140, %v3976, %v3978
  %v4033 = vsel %vm140, %v3978, %v3980
  %v4034 = vsel %vm140, %v3980, %v3982
  %v4035 = vsel %vm140, %v3982, %v3984
  %v4036 = vsel %vm140, %v3986, %v3988
  %v4037 = vsel %vm140, %v3988, %v3990
  %v4038 = vsel %vm140, %v3990, %v3992
  %v4039 = vsel %vm140, %v3992, %v3994
  %v4040 = vsel %vm140, %v3994, %v3996
  %v4041 = vsel %vm140, %v3996, %v3998
  %v4042 = vsel %vm140, %v4000, %v4002
  %v4043 = vsel %vm140, %v4002, %v4004
  %v4044 = vsel %vm140, %v4004, %v4006
  %v4045 = vsel %vm140, %v4006, %v4008
  %v4046 = vsel %vm140, %v4008, %v4010
  %v4047 = vsel %vm140, %v4010, %v4012
  %v4048 = vsel %vm140, %v4012, %v4014
  %v4049 = vsel %vm140, %v4016, %v4018
  %v4050 = vsel %vm140, %v4018, %v4020
  %v4051 = vsel %vm140, %v4020, %v4022
  %v4052 = vsel %vm140, %v4022, %v4024
  %v4053 = vsel %vm140, %v4024, %v4026
  %v4054 = vsel %vm140, %v4026, %v4028
  %4083 = vrot.lane.b32.xlu0 %v3907, 126
  %v4084 = vpop.permute.xlu0 %4083
  %4085 = vrot.lane.b32.xlu0 %v3908, 126
  %v4086 = vpop.permute.xlu0 %4085
  %4087 = vrot.lane.b32.xlu0 %v3909, 126
  %v4088 = vpop.permute.xlu0 %4087
  %4089 = vrot.lane.b32.xlu0 %v3910, 126
  %v4090 = vpop.permute.xlu0 %4089
  %4091 = vrot.lane.b32.xlu0 %v3911, 126
  %v4092 = vpop.permute.xlu0 %4091
  %4093 = vrot.lane.b32.xlu0 %v3912, 126
  %v4094 = vpop.permute.xlu0 %4093
  %4095 = vrot.lane.b32.xlu0 %v3913, 126
  %v4096 = vpop.permute.xlu0 %4095
  %4097 = vrot.lane.b32.xlu0 %v3914, 126
  %v4098 = vpop.permute.xlu0 %4097
  %4099 = vrot.lane.b32.xlu0 %v3915, 126
  %v4100 = vpop.permute.xlu0 %4099
  %4101 = vrot.lane.b32.xlu0 %v3916, 126
  %v4102 = vpop.permute.xlu0 %4101
  %4103 = vrot.lane.b32.xlu0 %v3917, 126
  %v4104 = vpop.permute.xlu0 %4103
  %4105 = vrot.lane.b32.xlu0 %v3918, 126
  %v4106 = vpop.permute.xlu0 %4105
  %4107 = vrot.lane.b32.xlu0 %v3919, 126
  %v4108 = vpop.permute.xlu0 %4107
  %4109 = vrot.lane.b32.xlu0 %v3920, 126
  %v4110 = vpop.permute.xlu0 %4109
  %4111 = vrot.lane.b32.xlu0 %v3921, 126
  %v4112 = vpop.permute.xlu0 %4111
  %4113 = vrot.lane.b32.xlu0 %v3923, 126
  %v4114 = vpop.permute.xlu0 %4113
  %4115 = vrot.lane.b32.xlu0 %v3924, 126
  %v4116 = vpop.permute.xlu0 %4115
  %4117 = vrot.lane.b32.xlu0 %v3925, 126
  %v4118 = vpop.permute.xlu0 %4117
  %4119 = vrot.lane.b32.xlu0 %v3926, 126
  %v4120 = vpop.permute.xlu0 %4119
  %4121 = vrot.lane.b32.xlu0 %v3927, 126
  %v4122 = vpop.permute.xlu0 %4121
  %4123 = vrot.lane.b32.xlu0 %v3928, 126
  %v4124 = vpop.permute.xlu0 %4123
  %4125 = vrot.lane.b32.xlu0 %v3929, 126
  %v4126 = vpop.permute.xlu0 %4125
  %4127 = vrot.lane.b32.xlu0 %v3930, 126
  %v4128 = vpop.permute.xlu0 %4127
  %4129 = vrot.lane.b32.xlu0 %v3931, 126
  %v4130 = vpop.permute.xlu0 %4129
  %4131 = vrot.lane.b32.xlu0 %v3932, 126
  %v4132 = vpop.permute.xlu0 %4131
  %4133 = vrot.lane.b32.xlu0 %v3933, 126
  %v4134 = vpop.permute.xlu0 %4133
  %4135 = vrot.lane.b32.xlu0 %v3934, 126
  %v4136 = vpop.permute.xlu0 %4135
  %4137 = vrot.lane.b32.xlu0 %v3935, 126
  %v4138 = vpop.permute.xlu0 %4137
  %4139 = vrot.lane.b32.xlu0 %v3936, 126
  %v4140 = vpop.permute.xlu0 %4139
  %4141 = vrot.lane.b32.xlu0 %v3937, 126
  %v4142 = vpop.permute.xlu0 %4141
  %v4143 = vsel %vm208, %v4084, %v4086
  %v4144 = vsel %vm208, %v4086, %v4088
  %v4145 = vsel %vm208, %v4088, %v4090
  %v4146 = vsel %vm208, %v4090, %v4092
  %v4147 = vsel %vm208, %v4092, %v4094
  %v4148 = vsel %vm208, %v4094, %v4096
  %v4149 = vsel %vm208, %v4096, %v4098
  %v4150 = vsel %vm208, %v4100, %v4102
  %v4151 = vsel %vm208, %v4102, %v4104
  %v4152 = vsel %vm208, %v4104, %v4106
  %v4153 = vsel %vm208, %v4106, %v4108
  %v4154 = vsel %vm208, %v4108, %v4110
  %v4155 = vsel %vm208, %v4110, %v4112
  %v4156 = vsel %vm208, %v4114, %v4116
  %v4157 = vsel %vm208, %v4116, %v4118
  %v4158 = vsel %vm208, %v4118, %v4120
  %v4159 = vsel %vm208, %v4120, %v4122
  %v4160 = vsel %vm208, %v4122, %v4124
  %v4161 = vsel %vm208, %v4124, %v4126
  %v4162 = vsel %vm208, %v4126, %v4128
  %v4163 = vsel %vm208, %v4130, %v4132
  %v4164 = vsel %vm208, %v4132, %v4134
  %v4165 = vsel %vm208, %v4134, %v4136
  %v4166 = vsel %vm208, %v4136, %v4138
  %v4167 = vsel %vm208, %v4138, %v4140
  %v4168 = vsel %vm208, %v4140, %v4142
  %4199 = vrot.lane.b32.xlu0 %v3907, 100
  %v4200 = vpop.permute.xlu0 %4199
  %4201 = vrot.lane.b32.xlu0 %v3908, 100
  %v4202 = vpop.permute.xlu0 %4201
  %4203 = vrot.lane.b32.xlu0 %v3909, 100
  %v4204 = vpop.permute.xlu0 %4203
  %4205 = vrot.lane.b32.xlu0 %v3910, 100
  %v4206 = vpop.permute.xlu0 %4205
  %4207 = vrot.lane.b32.xlu0 %v3911, 100
  %v4208 = vpop.permute.xlu0 %4207
  %4209 = vrot.lane.b32.xlu0 %v3912, 100
  %v4210 = vpop.permute.xlu0 %4209
  %4211 = vrot.lane.b32.xlu0 %v3913, 100
  %v4212 = vpop.permute.xlu0 %4211
  %4213 = vrot.lane.b32.xlu0 %v3914, 100
  %v4214 = vpop.permute.xlu0 %4213
  %4215 = vrot.lane.b32.xlu0 %v3915, 100
  %v4216 = vpop.permute.xlu0 %4215
  %4217 = vrot.lane.b32.xlu0 %v3916, 100
  %v4218 = vpop.permute.xlu0 %4217
  %4219 = vrot.lane.b32.xlu0 %v3917, 100
  %v4220 = vpop.permute.xlu0 %4219
  %4221 = vrot.lane.b32.xlu0 %v3918, 100
  %v4222 = vpop.permute.xlu0 %4221
  %4223 = vrot.lane.b32.xlu0 %v3919, 100
  %v4224 = vpop.permute.xlu0 %4223
  %4225 = vrot.lane.b32.xlu0 %v3920, 100
  %v4226 = vpop.permute.xlu0 %4225
  %4227 = vrot.lane.b32.xlu0 %v3921, 100
  %v4228 = vpop.permute.xlu0 %4227
  %4229 = vrot.lane.b32.xlu0 %v3922, 100
  %v4230 = vpop.permute.xlu0 %4229
  %4231 = vrot.lane.b32.xlu0 %v3923, 100
  %v4232 = vpop.permute.xlu0 %4231
  %4233 = vrot.lane.b32.xlu0 %v3924, 100
  %v4234 = vpop.permute.xlu0 %4233
  %4235 = vrot.lane.b32.xlu0 %v3925, 100
  %v4236 = vpop.permute.xlu0 %4235
  %4237 = vrot.lane.b32.xlu0 %v3926, 100
  %v4238 = vpop.permute.xlu0 %4237
  %4239 = vrot.lane.b32.xlu0 %v3927, 100
  %v4240 = vpop.permute.xlu0 %4239
  %4241 = vrot.lane.b32.xlu0 %v3928, 100
  %v4242 = vpop.permute.xlu0 %4241
  %4243 = vrot.lane.b32.xlu0 %v3929, 100
  %v4244 = vpop.permute.xlu0 %4243
  %4245 = vrot.lane.b32.xlu0 %v3930, 100
  %v4246 = vpop.permute.xlu0 %4245
  %4247 = vrot.lane.b32.xlu0 %v3931, 100
  %v4248 = vpop.permute.xlu0 %4247
  %4249 = vrot.lane.b32.xlu0 %v3932, 100
  %v4250 = vpop.permute.xlu0 %4249
  %4251 = vrot.lane.b32.xlu0 %v3933, 100
  %v4252 = vpop.permute.xlu0 %4251
  %4253 = vrot.lane.b32.xlu0 %v3934, 100
  %v4254 = vpop.permute.xlu0 %4253
  %4255 = vrot.lane.b32.xlu0 %v3935, 100
  %v4256 = vpop.permute.xlu0 %4255
  %4257 = vrot.lane.b32.xlu0 %v3936, 100
  %v4258 = vpop.permute.xlu0 %4257
  %4259 = vrot.lane.b32.xlu0 %v3937, 100
  %v4260 = vpop.permute.xlu0 %4259
  %4261 = vrot.lane.b32.xlu0 %v3938, 100
  %v4262 = vpop.permute.xlu0 %4261
  %v4263 = vsel %vm276, %v4200, %v4202
  %v4264 = vsel %vm276, %v4202, %v4204
  %v4265 = vsel %vm276, %v4204, %v4206
  %v4266 = vsel %vm276, %v4206, %v4208
  %v4267 = vsel %vm276, %v4208, %v4210
  %v4268 = vsel %vm276, %v4210, %v4212
  %v4269 = vsel %vm276, %v4212, %v4214
  %v4270 = vsel %vm276, %v4216, %v4218
  %v4271 = vsel %vm276, %v4218, %v4220
  %v4272 = vsel %vm276, %v4220, %v4222
  %v4273 = vsel %vm276, %v4222, %v4224
  %v4274 = vsel %vm276, %v4224, %v4226
  %v4275 = vsel %vm276, %v4226, %v4228
  %v4276 = vsel %vm276, %v4228, %v4230
  %v4277 = vsel %vm276, %v4232, %v4234
  %v4278 = vsel %vm276, %v4234, %v4236
  %v4279 = vsel %vm276, %v4236, %v4238
  %v4280 = vsel %vm276, %v4238, %v4240
  %v4281 = vsel %vm276, %v4240, %v4242
  %v4282 = vsel %vm276, %v4242, %v4244
  %v4283 = vsel %vm276, %v4244, %v4246
  %v4284 = vsel %vm276, %v4248, %v4250
  %v4285 = vsel %vm276, %v4250, %v4252
  %v4286 = vsel %vm276, %v4252, %v4254
  %v4287 = vsel %vm276, %v4254, %v4256
  %v4288 = vsel %vm276, %v4256, %v4258
  %v4289 = vsel %vm276, %v4258, %v4260
  %v4290 = vsel %vm276, %v4260, %v4262
  %4319 = vrot.lane.b32.xlu0 %v3907, 99
  %v4320 = vpop.permute.xlu0 %4319
  %4321 = vrot.lane.b32.xlu0 %v3908, 99
  %v4322 = vpop.permute.xlu0 %4321
  %4323 = vrot.lane.b32.xlu0 %v3909, 99
  %v4324 = vpop.permute.xlu0 %4323
  %4325 = vrot.lane.b32.xlu0 %v3910, 99
  %v4326 = vpop.permute.xlu0 %4325
  %4327 = vrot.lane.b32.xlu0 %v3911, 99
  %v4328 = vpop.permute.xlu0 %4327
  %4329 = vrot.lane.b32.xlu0 %v3912, 99
  %v4330 = vpop.permute.xlu0 %4329
  %4331 = vrot.lane.b32.xlu0 %v3913, 99
  %v4332 = vpop.permute.xlu0 %4331
  %4333 = vrot.lane.b32.xlu0 %v3914, 99
  %v4334 = vpop.permute.xlu0 %4333
  %4335 = vrot.lane.b32.xlu0 %v3915, 99
  %v4336 = vpop.permute.xlu0 %4335
  %4337 = vrot.lane.b32.xlu0 %v3916, 99
  %v4338 = vpop.permute.xlu0 %4337
  %4339 = vrot.lane.b32.xlu0 %v3917, 99
  %v4340 = vpop.permute.xlu0 %4339
  %4341 = vrot.lane.b32.xlu0 %v3918, 99
  %v4342 = vpop.permute.xlu0 %4341
  %4343 = vrot.lane.b32.xlu0 %v3919, 99
  %v4344 = vpop.permute.xlu0 %4343
  %4345 = vrot.lane.b32.xlu0 %v3920, 99
  %v4346 = vpop.permute.xlu0 %4345
  %4347 = vrot.lane.b32.xlu0 %v3921, 99
  %v4348 = vpop.permute.xlu0 %4347
  %4349 = vrot.lane.b32.xlu0 %v3922, 99
  %v4350 = vpop.permute.xlu0 %4349
  %4351 = vrot.lane.b32.xlu0 %v3923, 99
  %v4352 = vpop.permute.xlu0 %4351
  %4353 = vrot.lane.b32.xlu0 %v3924, 99
  %v4354 = vpop.permute.xlu0 %4353
  %4355 = vrot.lane.b32.xlu0 %v3925, 99
  %v4356 = vpop.permute.xlu0 %4355
  %4357 = vrot.lane.b32.xlu0 %v3926, 99
  %v4358 = vpop.permute.xlu0 %4357
  %4359 = vrot.lane.b32.xlu0 %v3927, 99
  %v4360 = vpop.permute.xlu0 %4359
  %4361 = vrot.lane.b32.xlu0 %v3928, 99
  %v4362 = vpop.permute.xlu0 %4361
  %4363 = vrot.lane.b32.xlu0 %v3929, 99
  %v4364 = vpop.permute.xlu0 %4363
  %4365 = vrot.lane.b32.xlu0 %v3930, 99
  %v4366 = vpop.permute.xlu0 %4365
  %4367 = vrot.lane.b32.xlu0 %v3931, 99
  %v4368 = vpop.permute.xlu0 %4367
  %4369 = vrot.lane.b32.xlu0 %v3932, 99
  %v4370 = vpop.permute.xlu0 %4369
  %4371 = vrot.lane.b32.xlu0 %v3933, 99
  %v4372 = vpop.permute.xlu0 %4371
  %4373 = vrot.lane.b32.xlu0 %v3934, 99
  %v4374 = vpop.permute.xlu0 %4373
  %4375 = vrot.lane.b32.xlu0 %v3935, 99
  %v4376 = vpop.permute.xlu0 %4375
  %4377 = vrot.lane.b32.xlu0 %v3936, 99
  %v4378 = vpop.permute.xlu0 %4377
  %4379 = vrot.lane.b32.xlu0 %v3937, 99
  %v4380 = vpop.permute.xlu0 %4379
  %4381 = vrot.lane.b32.xlu0 %v3938, 99
  %v4382 = vpop.permute.xlu0 %4381
  %v4383 = vsel %vm344, %v4320, %v4322
  %v4384 = vsel %vm344, %v4322, %v4324
  %v4385 = vsel %vm344, %v4324, %v4326
  %v4386 = vsel %vm344, %v4326, %v4328
  %v4387 = vsel %vm344, %v4328, %v4330
  %v4388 = vsel %vm344, %v4330, %v4332
  %v4389 = vsel %vm344, %v4332, %v4334
  %v4390 = vsel %vm344, %v4336, %v4338
  %v4391 = vsel %vm344, %v4338, %v4340
  %v4392 = vsel %vm344, %v4340, %v4342
  %v4393 = vsel %vm344, %v4342, %v4344
  %v4394 = vsel %vm344, %v4344, %v4346
  %v4395 = vsel %vm344, %v4346, %v4348
  %v4396 = vsel %vm344, %v4348, %v4350
  %v4397 = vsel %vm344, %v4352, %v4354
  %v4398 = vsel %vm344, %v4354, %v4356
  %v4399 = vsel %vm344, %v4356, %v4358
  %v4400 = vsel %vm344, %v4358, %v4360
  %v4401 = vsel %vm344, %v4360, %v4362
  %v4402 = vsel %vm344, %v4362, %v4364
  %v4403 = vsel %vm344, %v4364, %v4366
  %v4404 = vsel %vm344, %v4368, %v4370
  %v4405 = vsel %vm344, %v4370, %v4372
  %v4406 = vsel %vm344, %v4372, %v4374
  %v4407 = vsel %vm344, %v4374, %v4376
  %v4408 = vsel %vm344, %v4376, %v4378
  %v4409 = vsel %vm344, %v4378, %v4380
  %v4410 = vsel %vm344, %v4380, %v4382
  %4439 = vrot.lane.b32.xlu0 %v3907, 98
  %v4440 = vpop.permute.xlu0 %4439
  %4441 = vrot.lane.b32.xlu0 %v3908, 98
  %v4442 = vpop.permute.xlu0 %4441
  %4443 = vrot.lane.b32.xlu0 %v3909, 98
  %v4444 = vpop.permute.xlu0 %4443
  %4445 = vrot.lane.b32.xlu0 %v3910, 98
  %v4446 = vpop.permute.xlu0 %4445
  %4447 = vrot.lane.b32.xlu0 %v3911, 98
  %v4448 = vpop.permute.xlu0 %4447
  %4449 = vrot.lane.b32.xlu0 %v3912, 98
  %v4450 = vpop.permute.xlu0 %4449
  %4451 = vrot.lane.b32.xlu0 %v3913, 98
  %v4452 = vpop.permute.xlu0 %4451
  %4453 = vrot.lane.b32.xlu0 %v3914, 98
  %v4454 = vpop.permute.xlu0 %4453
  %4455 = vrot.lane.b32.xlu0 %v3915, 98
  %v4456 = vpop.permute.xlu0 %4455
  %4457 = vrot.lane.b32.xlu0 %v3916, 98
  %v4458 = vpop.permute.xlu0 %4457
  %4459 = vrot.lane.b32.xlu0 %v3917, 98
  %v4460 = vpop.permute.xlu0 %4459
  %4461 = vrot.lane.b32.xlu0 %v3918, 98
  %v4462 = vpop.permute.xlu0 %4461
  %4463 = vrot.lane.b32.xlu0 %v3919, 98
  %v4464 = vpop.permute.xlu0 %4463
  %4465 = vrot.lane.b32.xlu0 %v3920, 98
  %v4466 = vpop.permute.xlu0 %4465
  %4467 = vrot.lane.b32.xlu0 %v3921, 98
  %v4468 = vpop.permute.xlu0 %4467
  %4469 = vrot.lane.b32.xlu0 %v3922, 98
  %v4470 = vpop.permute.xlu0 %4469
  %4471 = vrot.lane.b32.xlu0 %v3923, 98
  %v4472 = vpop.permute.xlu0 %4471
  %4473 = vrot.lane.b32.xlu0 %v3924, 98
  %v4474 = vpop.permute.xlu0 %4473
  %4475 = vrot.lane.b32.xlu0 %v3925, 98
  %v4476 = vpop.permute.xlu0 %4475
  %4477 = vrot.lane.b32.xlu0 %v3926, 98
  %v4478 = vpop.permute.xlu0 %4477
  %4479 = vrot.lane.b32.xlu0 %v3927, 98
  %v4480 = vpop.permute.xlu0 %4479
  %4481 = vrot.lane.b32.xlu0 %v3928, 98
  %v4482 = vpop.permute.xlu0 %4481
  %4483 = vrot.lane.b32.xlu0 %v3929, 98
  %v4484 = vpop.permute.xlu0 %4483
  %4485 = vrot.lane.b32.xlu0 %v3930, 98
  %v4486 = vpop.permute.xlu0 %4485
  %4487 = vrot.lane.b32.xlu0 %v3931, 98
  %v4488 = vpop.permute.xlu0 %4487
  %4489 = vrot.lane.b32.xlu0 %v3932, 98
  %v4490 = vpop.permute.xlu0 %4489
  %4491 = vrot.lane.b32.xlu0 %v3933, 98
  %v4492 = vpop.permute.xlu0 %4491
  %4493 = vrot.lane.b32.xlu0 %v3934, 98
  %v4494 = vpop.permute.xlu0 %4493
  %4495 = vrot.lane.b32.xlu0 %v3935, 98
  %v4496 = vpop.permute.xlu0 %4495
  %4497 = vrot.lane.b32.xlu0 %v3936, 98
  %v4498 = vpop.permute.xlu0 %4497
  %4499 = vrot.lane.b32.xlu0 %v3937, 98
  %v4500 = vpop.permute.xlu0 %4499
  %4501 = vrot.lane.b32.xlu0 %v3938, 98
  %v4502 = vpop.permute.xlu0 %4501
  %v4503 = vsel %vm412, %v4440, %v4442
  %v4504 = vsel %vm412, %v4442, %v4444
  %v4505 = vsel %vm412, %v4444, %v4446
  %v4506 = vsel %vm412, %v4446, %v4448
  %v4507 = vsel %vm412, %v4448, %v4450
  %v4508 = vsel %vm412, %v4450, %v4452
  %v4509 = vsel %vm412, %v4452, %v4454
  %v4510 = vsel %vm412, %v4456, %v4458
  %v4511 = vsel %vm412, %v4458, %v4460
  %v4512 = vsel %vm412, %v4460, %v4462
  %v4513 = vsel %vm412, %v4462, %v4464
  %v4514 = vsel %vm412, %v4464, %v4466
  %v4515 = vsel %vm412, %v4466, %v4468
  %v4516 = vsel %vm412, %v4468, %v4470
  %v4517 = vsel %vm412, %v4472, %v4474
  %v4518 = vsel %vm412, %v4474, %v4476
  %v4519 = vsel %vm412, %v4476, %v4478
  %v4520 = vsel %vm412, %v4478, %v4480
  %v4521 = vsel %vm412, %v4480, %v4482
  %v4522 = vsel %vm412, %v4482, %v4484
  %v4523 = vsel %vm412, %v4484, %v4486
  %v4524 = vsel %vm412, %v4488, %v4490
  %v4525 = vsel %vm412, %v4490, %v4492
  %v4526 = vsel %vm412, %v4492, %v4494
  %v4527 = vsel %vm412, %v4494, %v4496
  %v4528 = vsel %vm412, %v4496, %v4498
  %v4529 = vsel %vm412, %v4498, %v4500
  %v4530 = vsel %vm412, %v4500, %v4502
  %4559 = vrot.lane.b32.xlu0 %v3907, 72
  %v4560 = vpop.permute.xlu0 %4559
  %4561 = vrot.lane.b32.xlu0 %v3908, 72
  %v4562 = vpop.permute.xlu0 %4561
  %4563 = vrot.lane.b32.xlu0 %v3909, 72
  %v4564 = vpop.permute.xlu0 %4563
  %4565 = vrot.lane.b32.xlu0 %v3910, 72
  %v4566 = vpop.permute.xlu0 %4565
  %4567 = vrot.lane.b32.xlu0 %v3911, 72
  %v4568 = vpop.permute.xlu0 %4567
  %4569 = vrot.lane.b32.xlu0 %v3912, 72
  %v4570 = vpop.permute.xlu0 %4569
  %4571 = vrot.lane.b32.xlu0 %v3913, 72
  %v4572 = vpop.permute.xlu0 %4571
  %4573 = vrot.lane.b32.xlu0 %v3914, 72
  %v4574 = vpop.permute.xlu0 %4573
  %4575 = vrot.lane.b32.xlu0 %v3915, 72
  %v4576 = vpop.permute.xlu0 %4575
  %4577 = vrot.lane.b32.xlu0 %v3916, 72
  %v4578 = vpop.permute.xlu0 %4577
  %4579 = vrot.lane.b32.xlu0 %v3917, 72
  %v4580 = vpop.permute.xlu0 %4579
  %4581 = vrot.lane.b32.xlu0 %v3918, 72
  %v4582 = vpop.permute.xlu0 %4581
  %4583 = vrot.lane.b32.xlu0 %v3919, 72
  %v4584 = vpop.permute.xlu0 %4583
  %4585 = vrot.lane.b32.xlu0 %v3920, 72
  %v4586 = vpop.permute.xlu0 %4585
  %4587 = vrot.lane.b32.xlu0 %v3921, 72
  %v4588 = vpop.permute.xlu0 %4587
  %4589 = vrot.lane.b32.xlu0 %v3922, 72
  %v4590 = vpop.permute.xlu0 %4589
  %4591 = vrot.lane.b32.xlu0 %v3923, 72
  %v4592 = vpop.permute.xlu0 %4591
  %4593 = vrot.lane.b32.xlu0 %v3924, 72
  %v4594 = vpop.permute.xlu0 %4593
  %4595 = vrot.lane.b32.xlu0 %v3925, 72
  %v4596 = vpop.permute.xlu0 %4595
  %4597 = vrot.lane.b32.xlu0 %v3926, 72
  %v4598 = vpop.permute.xlu0 %4597
  %4599 = vrot.lane.b32.xlu0 %v3927, 72
  %v4600 = vpop.permute.xlu0 %4599
  %4601 = vrot.lane.b32.xlu0 %v3928, 72
  %v4602 = vpop.permute.xlu0 %4601
  %4603 = vrot.lane.b32.xlu0 %v3929, 72
  %v4604 = vpop.permute.xlu0 %4603
  %4605 = vrot.lane.b32.xlu0 %v3930, 72
  %v4606 = vpop.permute.xlu0 %4605
  %4607 = vrot.lane.b32.xlu0 %v3931, 72
  %v4608 = vpop.permute.xlu0 %4607
  %4609 = vrot.lane.b32.xlu0 %v3932, 72
  %v4610 = vpop.permute.xlu0 %4609
  %4611 = vrot.lane.b32.xlu0 %v3933, 72
  %v4612 = vpop.permute.xlu0 %4611
  %4613 = vrot.lane.b32.xlu0 %v3934, 72
  %v4614 = vpop.permute.xlu0 %4613
  %4615 = vrot.lane.b32.xlu0 %v3935, 72
  %v4616 = vpop.permute.xlu0 %4615
  %4617 = vrot.lane.b32.xlu0 %v3936, 72
  %v4618 = vpop.permute.xlu0 %4617
  %4619 = vrot.lane.b32.xlu0 %v3937, 72
  %v4620 = vpop.permute.xlu0 %4619
  %4621 = vrot.lane.b32.xlu0 %v3938, 72
  %v4622 = vpop.permute.xlu0 %4621
  %v4623 = vsel %vm480, %v4560, %v4562
  %v4624 = vsel %vm480, %v4562, %v4564
  %v4625 = vsel %vm480, %v4564, %v4566
  %v4626 = vsel %vm480, %v4566, %v4568
  %v4627 = vsel %vm480, %v4568, %v4570
  %v4628 = vsel %vm480, %v4570, %v4572
  %v4629 = vsel %vm480, %v4572, %v4574
  %v4630 = vsel %vm480, %v4576, %v4578
  %v4631 = vsel %vm480, %v4578, %v4580
  %v4632 = vsel %vm480, %v4580, %v4582
  %v4633 = vsel %vm480, %v4582, %v4584
  %v4634 = vsel %vm480, %v4584, %v4586
  %v4635 = vsel %vm480, %v4586, %v4588
  %v4636 = vsel %vm480, %v4588, %v4590
  %v4637 = vsel %vm480, %v4592, %v4594
  %v4638 = vsel %vm480, %v4594, %v4596
  %v4639 = vsel %vm480, %v4596, %v4598
  %v4640 = vsel %vm480, %v4598, %v4600
  %v4641 = vsel %vm480, %v4600, %v4602
  %v4642 = vsel %vm480, %v4602, %v4604
  %v4643 = vsel %vm480, %v4604, %v4606
  %v4644 = vsel %vm480, %v4608, %v4610
  %v4645 = vsel %vm480, %v4610, %v4612
  %v4646 = vsel %vm480, %v4612, %v4614
  %v4647 = vsel %vm480, %v4614, %v4616
  %v4648 = vsel %vm480, %v4616, %v4618
  %v4649 = vsel %vm480, %v4618, %v4620
  %v4650 = vsel %vm480, %v4620, %v4622
  %4679 = vrot.lane.b32.xlu0 %v3907, 71
  %v4680 = vpop.permute.xlu0 %4679
  %4681 = vrot.lane.b32.xlu0 %v3908, 71
  %v4682 = vpop.permute.xlu0 %4681
  %4683 = vrot.lane.b32.xlu0 %v3909, 71
  %v4684 = vpop.permute.xlu0 %4683
  %4685 = vrot.lane.b32.xlu0 %v3910, 71
  %v4686 = vpop.permute.xlu0 %4685
  %4687 = vrot.lane.b32.xlu0 %v3911, 71
  %v4688 = vpop.permute.xlu0 %4687
  %4689 = vrot.lane.b32.xlu0 %v3912, 71
  %v4690 = vpop.permute.xlu0 %4689
  %4691 = vrot.lane.b32.xlu0 %v3913, 71
  %v4692 = vpop.permute.xlu0 %4691
  %4693 = vrot.lane.b32.xlu0 %v3914, 71
  %v4694 = vpop.permute.xlu0 %4693
  %4695 = vrot.lane.b32.xlu0 %v3915, 71
  %v4696 = vpop.permute.xlu0 %4695
  %4697 = vrot.lane.b32.xlu0 %v3916, 71
  %v4698 = vpop.permute.xlu0 %4697
  %4699 = vrot.lane.b32.xlu0 %v3917, 71
  %v4700 = vpop.permute.xlu0 %4699
  %4701 = vrot.lane.b32.xlu0 %v3918, 71
  %v4702 = vpop.permute.xlu0 %4701
  %4703 = vrot.lane.b32.xlu0 %v3919, 71
  %v4704 = vpop.permute.xlu0 %4703
  %4705 = vrot.lane.b32.xlu0 %v3920, 71
  %v4706 = vpop.permute.xlu0 %4705
  %4707 = vrot.lane.b32.xlu0 %v3921, 71
  %v4708 = vpop.permute.xlu0 %4707
  %4709 = vrot.lane.b32.xlu0 %v3922, 71
  %v4710 = vpop.permute.xlu0 %4709
  %4711 = vrot.lane.b32.xlu0 %v3923, 71
  %v4712 = vpop.permute.xlu0 %4711
  %4713 = vrot.lane.b32.xlu0 %v3924, 71
  %v4714 = vpop.permute.xlu0 %4713
  %4715 = vrot.lane.b32.xlu0 %v3925, 71
  %v4716 = vpop.permute.xlu0 %4715
  %4717 = vrot.lane.b32.xlu0 %v3926, 71
  %v4718 = vpop.permute.xlu0 %4717
  %4719 = vrot.lane.b32.xlu0 %v3927, 71
  %v4720 = vpop.permute.xlu0 %4719
  %4721 = vrot.lane.b32.xlu0 %v3928, 71
  %v4722 = vpop.permute.xlu0 %4721
  %4723 = vrot.lane.b32.xlu0 %v3929, 71
  %v4724 = vpop.permute.xlu0 %4723
  %4725 = vrot.lane.b32.xlu0 %v3930, 71
  %v4726 = vpop.permute.xlu0 %4725
  %4727 = vrot.lane.b32.xlu0 %v3931, 71
  %v4728 = vpop.permute.xlu0 %4727
  %4729 = vrot.lane.b32.xlu0 %v3932, 71
  %v4730 = vpop.permute.xlu0 %4729
  %4731 = vrot.lane.b32.xlu0 %v3933, 71
  %v4732 = vpop.permute.xlu0 %4731
  %4733 = vrot.lane.b32.xlu0 %v3934, 71
  %v4734 = vpop.permute.xlu0 %4733
  %4735 = vrot.lane.b32.xlu0 %v3935, 71
  %v4736 = vpop.permute.xlu0 %4735
  %4737 = vrot.lane.b32.xlu0 %v3936, 71
  %v4738 = vpop.permute.xlu0 %4737
  %4739 = vrot.lane.b32.xlu0 %v3937, 71
  %v4740 = vpop.permute.xlu0 %4739
  %4741 = vrot.lane.b32.xlu0 %v3938, 71
  %v4742 = vpop.permute.xlu0 %4741
  %v4743 = vsel %vm548, %v4680, %v4682
  %v4744 = vsel %vm548, %v4682, %v4684
  %v4745 = vsel %vm548, %v4684, %v4686
  %v4746 = vsel %vm548, %v4686, %v4688
  %v4747 = vsel %vm548, %v4688, %v4690
  %v4748 = vsel %vm548, %v4690, %v4692
  %v4749 = vsel %vm548, %v4692, %v4694
  %v4750 = vsel %vm548, %v4696, %v4698
  %v4751 = vsel %vm548, %v4698, %v4700
  %v4752 = vsel %vm548, %v4700, %v4702
  %v4753 = vsel %vm548, %v4702, %v4704
  %v4754 = vsel %vm548, %v4704, %v4706
  %v4755 = vsel %vm548, %v4706, %v4708
  %v4756 = vsel %vm548, %v4708, %v4710
  %v4757 = vsel %vm548, %v4712, %v4714
  %v4758 = vsel %vm548, %v4714, %v4716
  %v4759 = vsel %vm548, %v4716, %v4718
  %v4760 = vsel %vm548, %v4718, %v4720
  %v4761 = vsel %vm548, %v4720, %v4722
  %v4762 = vsel %vm548, %v4722, %v4724
  %v4763 = vsel %vm548, %v4724, %v4726
  %v4764 = vsel %vm548, %v4728, %v4730
  %v4765 = vsel %vm548, %v4730, %v4732
  %v4766 = vsel %vm548, %v4732, %v4734
  %v4767 = vsel %vm548, %v4734, %v4736
  %v4768 = vsel %vm548, %v4736, %v4738
  %v4769 = vsel %vm548, %v4738, %v4740
  %v4770 = vsel %vm548, %v4740, %v4742
  %4799 = vrot.lane.b32.xlu0 %v3907, 70
  %v4800 = vpop.permute.xlu0 %4799
  %4801 = vrot.lane.b32.xlu0 %v3908, 70
  %v4802 = vpop.permute.xlu0 %4801
  %4803 = vrot.lane.b32.xlu0 %v3909, 70
  %v4804 = vpop.permute.xlu0 %4803
  %4805 = vrot.lane.b32.xlu0 %v3910, 70
  %v4806 = vpop.permute.xlu0 %4805
  %4807 = vrot.lane.b32.xlu0 %v3911, 70
  %v4808 = vpop.permute.xlu0 %4807
  %4809 = vrot.lane.b32.xlu0 %v3912, 70
  %v4810 = vpop.permute.xlu0 %4809
  %4811 = vrot.lane.b32.xlu0 %v3913, 70
  %v4812 = vpop.permute.xlu0 %4811
  %4813 = vrot.lane.b32.xlu0 %v3914, 70
  %v4814 = vpop.permute.xlu0 %4813
  %4815 = vrot.lane.b32.xlu0 %v3915, 70
  %v4816 = vpop.permute.xlu0 %4815
  %4817 = vrot.lane.b32.xlu0 %v3916, 70
  %v4818 = vpop.permute.xlu0 %4817
  %4819 = vrot.lane.b32.xlu0 %v3917, 70
  %v4820 = vpop.permute.xlu0 %4819
  %4821 = vrot.lane.b32.xlu0 %v3918, 70
  %v4822 = vpop.permute.xlu0 %4821
  %4823 = vrot.lane.b32.xlu0 %v3919, 70
  %v4824 = vpop.permute.xlu0 %4823
  %4825 = vrot.lane.b32.xlu0 %v3920, 70
  %v4826 = vpop.permute.xlu0 %4825
  %4827 = vrot.lane.b32.xlu0 %v3921, 70
  %v4828 = vpop.permute.xlu0 %4827
  %4829 = vrot.lane.b32.xlu0 %v3922, 70
  %v4830 = vpop.permute.xlu0 %4829
  %4831 = vrot.lane.b32.xlu0 %v3923, 70
  %v4832 = vpop.permute.xlu0 %4831
  %4833 = vrot.lane.b32.xlu0 %v3924, 70
  %v4834 = vpop.permute.xlu0 %4833
  %4835 = vrot.lane.b32.xlu0 %v3925, 70
  %v4836 = vpop.permute.xlu0 %4835
  %4837 = vrot.lane.b32.xlu0 %v3926, 70
  %v4838 = vpop.permute.xlu0 %4837
  %4839 = vrot.lane.b32.xlu0 %v3927, 70
  %v4840 = vpop.permute.xlu0 %4839
  %4841 = vrot.lane.b32.xlu0 %v3928, 70
  %v4842 = vpop.permute.xlu0 %4841
  %4843 = vrot.lane.b32.xlu0 %v3929, 70
  %v4844 = vpop.permute.xlu0 %4843
  %4845 = vrot.lane.b32.xlu0 %v3930, 70
  %v4846 = vpop.permute.xlu0 %4845
  %4847 = vrot.lane.b32.xlu0 %v3931, 70
  %v4848 = vpop.permute.xlu0 %4847
  %4849 = vrot.lane.b32.xlu0 %v3932, 70
  %v4850 = vpop.permute.xlu0 %4849
  %4851 = vrot.lane.b32.xlu0 %v3933, 70
  %v4852 = vpop.permute.xlu0 %4851
  %4853 = vrot.lane.b32.xlu0 %v3934, 70
  %v4854 = vpop.permute.xlu0 %4853
  %4855 = vrot.lane.b32.xlu0 %v3935, 70
  %v4856 = vpop.permute.xlu0 %4855
  %4857 = vrot.lane.b32.xlu0 %v3936, 70
  %v4858 = vpop.permute.xlu0 %4857
  %4859 = vrot.lane.b32.xlu0 %v3937, 70
  %v4860 = vpop.permute.xlu0 %4859
  %4861 = vrot.lane.b32.xlu0 %v3938, 70
  %v4862 = vpop.permute.xlu0 %4861
  %v4863 = vsel %vm616, %v4800, %v4802
  %v4864 = vsel %vm616, %v4802, %v4804
  %v4865 = vsel %vm616, %v4804, %v4806
  %v4866 = vsel %vm616, %v4806, %v4808
  %v4867 = vsel %vm616, %v4808, %v4810
  %v4868 = vsel %vm616, %v4810, %v4812
  %v4869 = vsel %vm616, %v4812, %v4814
  %v4870 = vsel %vm616, %v4816, %v4818
  %v4871 = vsel %vm616, %v4818, %v4820
  %v4872 = vsel %vm616, %v4820, %v4822
  %v4873 = vsel %vm616, %v4822, %v4824
  %v4874 = vsel %vm616, %v4824, %v4826
  %v4875 = vsel %vm616, %v4826, %v4828
  %v4876 = vsel %vm616, %v4828, %v4830
  %v4877 = vsel %vm616, %v4832, %v4834
  %v4878 = vsel %vm616, %v4834, %v4836
  %v4879 = vsel %vm616, %v4836, %v4838
  %v4880 = vsel %vm616, %v4838, %v4840
  %v4881 = vsel %vm616, %v4840, %v4842
  %v4882 = vsel %vm616, %v4842, %v4844
  %v4883 = vsel %vm616, %v4844, %v4846
  %v4884 = vsel %vm616, %v4848, %v4850
  %v4885 = vsel %vm616, %v4850, %v4852
  %v4886 = vsel %vm616, %v4852, %v4854
  %v4887 = vsel %vm616, %v4854, %v4856
  %v4888 = vsel %vm616, %v4856, %v4858
  %v4889 = vsel %vm616, %v4858, %v4860
  %v4890 = vsel %vm616, %v4860, %v4862
  %4920 = vset.pattern.permute.xlu0 0
  %4921 = vperm.xlu0 %4920, %v55
  %v4922 = vpop.permute.xlu0 %4921
  %4925 = vset.pattern.permute.xlu0 0
  %4926 = vperm.xlu0 %4925, %v56
  %v4927 = vpop.permute.xlu0 %4926
  %v4930 = vsel %vm3164, %v31, 0
  %v4933 = vsel %vm3164, %v33, 0
  %4935 = vmatpush.msra.mxu0 %v4757
  %4936 = vmatpush.msra.mxu0 %v4743
  %4937 = vmatpush.msra.mxu0 %v4637
  %4938 = vmatpush.msra.mxu0 %v4623
  %4939 = vmatpush.msra.mxu0 %v4517
  %4940 = vmatpush.msra.mxu0 %v4503
  %4941 = vmatpush.msra.mxu0 %v4397
  %4942 = vmatpush.msra.mxu0 %v4383
  %4943 = vmatpush.msra.mxu0 %v4277
  %4944 = vmatpush.msra.mxu0 %v4263
  %4945 = vmatpush.msra.mxu0 %v4156
  %4946 = vmatpush.msra.mxu0 %v4143
  %4947 = vmatpush.msra.mxu0 %v4042
  %4948 = vmatpush.msra.mxu0 %v4029
  %4949 = vmatpush.msra.mxu0 %v3923
  %4950 = vmatpush.msra.mxu0 %v3907
  %4951 = vmatmul.f32.gmra.mxu0 %v30
  %v4952 = vpop.f32.mrf.mxu0
  %v4953 = vadd.f32 %v4922, %v4952
  %4954 = vmatmul.f32.gmra.mxu0 %v32
  %v4955 = vpop.f32.mrf.mxu0
  %v4956 = vadd.f32 %v4927, %v4955
  %4957 = vdwg.mxu0
  %4958 = vmatpush.msra.mxu0 0.0
  %4959 = vmatpush.msra.mxu0 0.0
  %4960 = vmatpush.msra.mxu0 0.0
  %4961 = vmatpush.msra.mxu0 0.0
  %4962 = vmatpush.msra.mxu0 0.0
  %4963 = vmatpush.msra.mxu0 0.0
  %4964 = vmatpush.msra.mxu0 0.0
  %4965 = vmatpush.msra.mxu0 0.0
  %4966 = vmatpush.msra.mxu0 0.0
  %4967 = vmatpush.msra.mxu0 0.0
  %4968 = vmatpush.msra.mxu0 0.0
  %4969 = vmatpush.msra.mxu0 0.0
  %4970 = vmatpush.msra.mxu0 0.0
  %4971 = vmatpush.msra.mxu0 0.0
  %4972 = vmatpush.msra.mxu0 %v4877
  %4973 = vmatpush.msra.mxu0 %v4863
  %4974 = vmatmul.f32.gmra.mxu0 %v4930
  %v4975 = vpop.f32.mrf.mxu0
  %v4976 = vadd.f32 %v4953, %v4975
  %4977 = vmatmul.f32.gmra.mxu0 %v4933
  %v4978 = vpop.f32.mrf.mxu0
  %v4979 = vadd.f32 %v4956, %v4978
  %4980 = vdwg.mxu0
  %4981 = vmatpush.msra.mxu0 %v4758
  %4982 = vmatpush.msra.mxu0 %v4744
  %4983 = vmatpush.msra.mxu0 %v4638
  %4984 = vmatpush.msra.mxu0 %v4624
  %4985 = vmatpush.msra.mxu0 %v4518
  %4986 = vmatpush.msra.mxu0 %v4504
  %4987 = vmatpush.msra.mxu0 %v4398
  %4988 = vmatpush.msra.mxu0 %v4384
  %4989 = vmatpush.msra.mxu0 %v4278
  %4990 = vmatpush.msra.mxu0 %v4264
  %4991 = vmatpush.msra.mxu0 %v4157
  %4992 = vmatpush.msra.mxu0 %v4144
  %4993 = vmatpush.msra.mxu0 %v4043
  %4994 = vmatpush.msra.mxu0 %v4030
  %4995 = vmatpush.msra.mxu0 %v3924
  %4996 = vmatpush.msra.mxu0 %v3908
  %4997 = vmatmul.f32.gmra.mxu0 %v30
  %v4998 = vpop.f32.mrf.mxu0
  %v4999 = vadd.f32 %v4922, %v4998
  %5000 = vmatmul.f32.gmra.mxu0 %v32
  %v5001 = vpop.f32.mrf.mxu0
  %v5002 = vadd.f32 %v4927, %v5001
  %5003 = vdwg.mxu0
  %5004 = vmatpush.msra.mxu0 0.0
  %5005 = vmatpush.msra.mxu0 0.0
  %5006 = vmatpush.msra.mxu0 0.0
  %5007 = vmatpush.msra.mxu0 0.0
  %5008 = vmatpush.msra.mxu0 0.0
  %5009 = vmatpush.msra.mxu0 0.0
  %5010 = vmatpush.msra.mxu0 0.0
  %5011 = vmatpush.msra.mxu0 0.0
  %5012 = vmatpush.msra.mxu0 0.0
  %5013 = vmatpush.msra.mxu0 0.0
  %5014 = vmatpush.msra.mxu0 0.0
  %5015 = vmatpush.msra.mxu0 0.0
  %5016 = vmatpush.msra.mxu0 0.0
  %5017 = vmatpush.msra.mxu0 0.0
  %5018 = vmatpush.msra.mxu0 %v4878
  %5019 = vmatpush.msra.mxu0 %v4864
  %5020 = vmatmul.f32.gmra.mxu0 %v4930
  %v5021 = vpop.f32.mrf.mxu0
  %v5022 = vadd.f32 %v4999, %v5021
  %5023 = vmatmul.f32.gmra.mxu0 %v4933
  %v5024 = vpop.f32.mrf.mxu0
  %v5025 = vadd.f32 %v5002, %v5024
  %5026 = vdwg.mxu0
  %5027 = vmatpush.msra.mxu0 %v4759
  %5028 = vmatpush.msra.mxu0 %v4745
  %5029 = vmatpush.msra.mxu0 %v4639
  %5030 = vmatpush.msra.mxu0 %v4625
  %5031 = vmatpush.msra.mxu0 %v4519
  %5032 = vmatpush.msra.mxu0 %v4505
  %5033 = vmatpush.msra.mxu0 %v4399
  %5034 = vmatpush.msra.mxu0 %v4385
  %5035 = vmatpush.msra.mxu0 %v4279
  %5036 = vmatpush.msra.mxu0 %v4265
  %5037 = vmatpush.msra.mxu0 %v4158
  %5038 = vmatpush.msra.mxu0 %v4145
  %5039 = vmatpush.msra.mxu0 %v4044
  %5040 = vmatpush.msra.mxu0 %v4031
  %5041 = vmatpush.msra.mxu0 %v3925
  %5042 = vmatpush.msra.mxu0 %v3909
  %5043 = vmatmul.f32.gmra.mxu0 %v30
  %v5044 = vpop.f32.mrf.mxu0
  %v5045 = vadd.f32 %v4922, %v5044
  %5046 = vmatmul.f32.gmra.mxu0 %v32
  %v5047 = vpop.f32.mrf.mxu0
  %v5048 = vadd.f32 %v4927, %v5047
  %5049 = vdwg.mxu0
  %5050 = vmatpush.msra.mxu0 0.0
  %5051 = vmatpush.msra.mxu0 0.0
  %5052 = vmatpush.msra.mxu0 0.0
  %5053 = vmatpush.msra.mxu0 0.0
  %5054 = vmatpush.msra.mxu0 0.0
  %5055 = vmatpush.msra.mxu0 0.0
  %5056 = vmatpush.msra.mxu0 0.0
  %5057 = vmatpush.msra.mxu0 0.0
  %5058 = vmatpush.msra.mxu0 0.0
  %5059 = vmatpush.msra.mxu0 0.0
  %5060 = vmatpush.msra.mxu0 0.0
  %5061 = vmatpush.msra.mxu0 0.0
  %5062 = vmatpush.msra.mxu0 0.0
  %5063 = vmatpush.msra.mxu0 0.0
  %5064 = vmatpush.msra.mxu0 %v4879
  %5065 = vmatpush.msra.mxu0 %v4865
  %5066 = vmatmul.f32.gmra.mxu0 %v4930
  %v5067 = vpop.f32.mrf.mxu0
  %v5068 = vadd.f32 %v5045, %v5067
  %5069 = vmatmul.f32.gmra.mxu0 %v4933
  %v5070 = vpop.f32.mrf.mxu0
  %v5071 = vadd.f32 %v5048, %v5070
  %5072 = vdwg.mxu0
  %5073 = vmatpush.msra.mxu0 %v4760
  %5074 = vmatpush.msra.mxu0 %v4746
  %5075 = vmatpush.msra.mxu0 %v4640
  %5076 = vmatpush.msra.mxu0 %v4626
  %5077 = vmatpush.msra.mxu0 %v4520
  %5078 = vmatpush.msra.mxu0 %v4506
  %5079 = vmatpush.msra.mxu0 %v4400
  %5080 = vmatpush.msra.mxu0 %v4386
  %5081 = vmatpush.msra.mxu0 %v4280
  %5082 = vmatpush.msra.mxu0 %v4266
  %5083 = vmatpush.msra.mxu0 %v4159
  %5084 = vmatpush.msra.mxu0 %v4146
  %5085 = vmatpush.msra.mxu0 %v4045
  %5086 = vmatpush.msra.mxu0 %v4032
  %5087 = vmatpush.msra.mxu0 %v3926
  %5088 = vmatpush.msra.mxu0 %v3910
  %5089 = vmatmul.f32.gmra.mxu0 %v30
  %v5090 = vpop.f32.mrf.mxu0
  %v5091 = vadd.f32 %v4922, %v5090
  %5092 = vmatmul.f32.gmra.mxu0 %v32
  %v5093 = vpop.f32.mrf.mxu0
  %v5094 = vadd.f32 %v4927, %v5093
  %5095 = vdwg.mxu0
  %5096 = vmatpush.msra.mxu0 0.0
  %5097 = vmatpush.msra.mxu0 0.0
  %5098 = vmatpush.msra.mxu0 0.0
  %5099 = vmatpush.msra.mxu0 0.0
  %5100 = vmatpush.msra.mxu0 0.0
  %5101 = vmatpush.msra.mxu0 0.0
  %5102 = vmatpush.msra.mxu0 0.0
  %5103 = vmatpush.msra.mxu0 0.0
  %5104 = vmatpush.msra.mxu0 0.0
  %5105 = vmatpush.msra.mxu0 0.0
  %5106 = vmatpush.msra.mxu0 0.0
  %5107 = vmatpush.msra.mxu0 0.0
  %5108 = vmatpush.msra.mxu0 0.0
  %5109 = vmatpush.msra.mxu0 0.0
  %5110 = vmatpush.msra.mxu0 %v4880
  %5111 = vmatpush.msra.mxu0 %v4866
  %5112 = vmatmul.f32.gmra.mxu0 %v4930
  %v5113 = vpop.f32.mrf.mxu0
  %v5114 = vadd.f32 %v5091, %v5113
  %5115 = vmatmul.f32.gmra.mxu0 %v4933
  %v5116 = vpop.f32.mrf.mxu0
  %v5117 = vadd.f32 %v5094, %v5116
  %5118 = vdwg.mxu0
  %5119 = vmatpush.msra.mxu0 %v4761
  %5120 = vmatpush.msra.mxu0 %v4747
  %5121 = vmatpush.msra.mxu0 %v4641
  %5122 = vmatpush.msra.mxu0 %v4627
  %5123 = vmatpush.msra.mxu0 %v4521
  %5124 = vmatpush.msra.mxu0 %v4507
  %5125 = vmatpush.msra.mxu0 %v4401
  %5126 = vmatpush.msra.mxu0 %v4387
  %5127 = vmatpush.msra.mxu0 %v4281
  %5128 = vmatpush.msra.mxu0 %v4267
  %5129 = vmatpush.msra.mxu0 %v4160
  %5130 = vmatpush.msra.mxu0 %v4147
  %5131 = vmatpush.msra.mxu0 %v4046
  %5132 = vmatpush.msra.mxu0 %v4033
  %5133 = vmatpush.msra.mxu0 %v3927
  %5134 = vmatpush.msra.mxu0 %v3911
  %5135 = vmatmul.f32.gmra.mxu0 %v30
  %v5136 = vpop.f32.mrf.mxu0
  %v5137 = vadd.f32 %v4922, %v5136
  %5138 = vmatmul.f32.gmra.mxu0 %v32
  %v5139 = vpop.f32.mrf.mxu0
  %v5140 = vadd.f32 %v4927, %v5139
  %5141 = vdwg.mxu0
  %5142 = vmatpush.msra.mxu0 0.0
  %5143 = vmatpush.msra.mxu0 0.0
  %5144 = vmatpush.msra.mxu0 0.0
  %5145 = vmatpush.msra.mxu0 0.0
  %5146 = vmatpush.msra.mxu0 0.0
  %5147 = vmatpush.msra.mxu0 0.0
  %5148 = vmatpush.msra.mxu0 0.0
  %5149 = vmatpush.msra.mxu0 0.0
  %5150 = vmatpush.msra.mxu0 0.0
  %5151 = vmatpush.msra.mxu0 0.0
  %5152 = vmatpush.msra.mxu0 0.0
  %5153 = vmatpush.msra.mxu0 0.0
  %5154 = vmatpush.msra.mxu0 0.0
  %5155 = vmatpush.msra.mxu0 0.0
  %5156 = vmatpush.msra.mxu0 %v4881
  %5157 = vmatpush.msra.mxu0 %v4867
  %5158 = vmatmul.f32.gmra.mxu0 %v4930
  %v5159 = vpop.f32.mrf.mxu0
  %v5160 = vadd.f32 %v5137, %v5159
  %5161 = vmatmul.f32.gmra.mxu0 %v4933
  %v5162 = vpop.f32.mrf.mxu0
  %v5163 = vadd.f32 %v5140, %v5162
  %5164 = vdwg.mxu0
  %5165 = vmatpush.msra.mxu0 %v4762
  %5166 = vmatpush.msra.mxu0 %v4748
  %5167 = vmatpush.msra.mxu0 %v4642
  %5168 = vmatpush.msra.mxu0 %v4628
  %5169 = vmatpush.msra.mxu0 %v4522
  %5170 = vmatpush.msra.mxu0 %v4508
  %5171 = vmatpush.msra.mxu0 %v4402
  %5172 = vmatpush.msra.mxu0 %v4388
  %5173 = vmatpush.msra.mxu0 %v4282
  %5174 = vmatpush.msra.mxu0 %v4268
  %5175 = vmatpush.msra.mxu0 %v4161
  %5176 = vmatpush.msra.mxu0 %v4148
  %5177 = vmatpush.msra.mxu0 %v4047
  %5178 = vmatpush.msra.mxu0 %v4034
  %5179 = vmatpush.msra.mxu0 %v3928
  %5180 = vmatpush.msra.mxu0 %v3912
  %5181 = vmatmul.f32.gmra.mxu0 %v30
  %v5182 = vpop.f32.mrf.mxu0
  %v5183 = vadd.f32 %v4922, %v5182
  %5184 = vmatmul.f32.gmra.mxu0 %v32
  %v5185 = vpop.f32.mrf.mxu0
  %v5186 = vadd.f32 %v4927, %v5185
  %5187 = vdwg.mxu0
  %5188 = vmatpush.msra.mxu0 0.0
  %5189 = vmatpush.msra.mxu0 0.0
  %5190 = vmatpush.msra.mxu0 0.0
  %5191 = vmatpush.msra.mxu0 0.0
  %5192 = vmatpush.msra.mxu0 0.0
  %5193 = vmatpush.msra.mxu0 0.0
  %5194 = vmatpush.msra.mxu0 0.0
  %5195 = vmatpush.msra.mxu0 0.0
  %5196 = vmatpush.msra.mxu0 0.0
  %5197 = vmatpush.msra.mxu0 0.0
  %5198 = vmatpush.msra.mxu0 0.0
  %5199 = vmatpush.msra.mxu0 0.0
  %5200 = vmatpush.msra.mxu0 0.0
  %5201 = vmatpush.msra.mxu0 0.0
  %5202 = vmatpush.msra.mxu0 %v4882
  %5203 = vmatpush.msra.mxu0 %v4868
  %5204 = vmatmul.f32.gmra.mxu0 %v4930
  %v5205 = vpop.f32.mrf.mxu0
  %v5206 = vadd.f32 %v5183, %v5205
  %5207 = vmatmul.f32.gmra.mxu0 %v4933
  %v5208 = vpop.f32.mrf.mxu0
  %v5209 = vadd.f32 %v5186, %v5208
  %5210 = vdwg.mxu0
  %5211 = vmatpush.msra.mxu0 %v4763
  %5212 = vmatpush.msra.mxu0 %v4749
  %5213 = vmatpush.msra.mxu0 %v4643
  %5214 = vmatpush.msra.mxu0 %v4629
  %5215 = vmatpush.msra.mxu0 %v4523
  %5216 = vmatpush.msra.mxu0 %v4509
  %5217 = vmatpush.msra.mxu0 %v4403
  %5218 = vmatpush.msra.mxu0 %v4389
  %5219 = vmatpush.msra.mxu0 %v4283
  %5220 = vmatpush.msra.mxu0 %v4269
  %5221 = vmatpush.msra.mxu0 %v4162
  %5222 = vmatpush.msra.mxu0 %v4149
  %5223 = vmatpush.msra.mxu0 %v4048
  %5224 = vmatpush.msra.mxu0 %v4035
  %5225 = vmatpush.msra.mxu0 %v3929
  %5226 = vmatpush.msra.mxu0 %v3913
  %5227 = vmatmul.f32.gmra.mxu0 %v30
  %v5228 = vpop.f32.mrf.mxu0
  %v5229 = vadd.f32 %v4922, %v5228
  %5230 = vmatmul.f32.gmra.mxu0 %v32
  %v5231 = vpop.f32.mrf.mxu0
  %v5232 = vadd.f32 %v4927, %v5231
  %5233 = vdwg.mxu0
  %5234 = vmatpush.msra.mxu0 0.0
  %5235 = vmatpush.msra.mxu0 0.0
  %5236 = vmatpush.msra.mxu0 0.0
  %5237 = vmatpush.msra.mxu0 0.0
  %5238 = vmatpush.msra.mxu0 0.0
  %5239 = vmatpush.msra.mxu0 0.0
  %5240 = vmatpush.msra.mxu0 0.0
  %5241 = vmatpush.msra.mxu0 0.0
  %5242 = vmatpush.msra.mxu0 0.0
  %5243 = vmatpush.msra.mxu0 0.0
  %5244 = vmatpush.msra.mxu0 0.0
  %5245 = vmatpush.msra.mxu0 0.0
  %5246 = vmatpush.msra.mxu0 0.0
  %5247 = vmatpush.msra.mxu0 0.0
  %5248 = vmatpush.msra.mxu0 %v4883
  %5249 = vmatpush.msra.mxu0 %v4869
  %5250 = vmatmul.f32.gmra.mxu0 %v4930
  %v5251 = vpop.f32.mrf.mxu0
  %v5252 = vadd.f32 %v5229, %v5251
  %5253 = vmatmul.f32.gmra.mxu0 %v4933
  %v5254 = vpop.f32.mrf.mxu0
  %v5255 = vadd.f32 %v5232, %v5254
  %5256 = vdwg.mxu0
  %5257 = vmatpush.msra.mxu0 %v4764
  %5258 = vmatpush.msra.mxu0 %v4750
  %5259 = vmatpush.msra.mxu0 %v4644
  %5260 = vmatpush.msra.mxu0 %v4630
  %5261 = vmatpush.msra.mxu0 %v4524
  %5262 = vmatpush.msra.mxu0 %v4510
  %5263 = vmatpush.msra.mxu0 %v4404
  %5264 = vmatpush.msra.mxu0 %v4390
  %5265 = vmatpush.msra.mxu0 %v4284
  %5266 = vmatpush.msra.mxu0 %v4270
  %5267 = vmatpush.msra.mxu0 %v4163
  %5268 = vmatpush.msra.mxu0 %v4150
  %5269 = vmatpush.msra.mxu0 %v4049
  %5270 = vmatpush.msra.mxu0 %v4036
  %5271 = vmatpush.msra.mxu0 %v3931
  %5272 = vmatpush.msra.mxu0 %v3915
  %5273 = vmatmul.f32.gmra.mxu0 %v30
  %v5274 = vpop.f32.mrf.mxu0
  %v5275 = vadd.f32 %v4922, %v5274
  %5276 = vmatmul.f32.gmra.mxu0 %v32
  %v5277 = vpop.f32.mrf.mxu0
  %v5278 = vadd.f32 %v4927, %v5277
  %5279 = vdwg.mxu0
  %5280 = vmatpush.msra.mxu0 0.0
  %5281 = vmatpush.msra.mxu0 0.0
  %5282 = vmatpush.msra.mxu0 0.0
  %5283 = vmatpush.msra.mxu0 0.0
  %5284 = vmatpush.msra.mxu0 0.0
  %5285 = vmatpush.msra.mxu0 0.0
  %5286 = vmatpush.msra.mxu0 0.0
  %5287 = vmatpush.msra.mxu0 0.0
  %5288 = vmatpush.msra.mxu0 0.0
  %5289 = vmatpush.msra.mxu0 0.0
  %5290 = vmatpush.msra.mxu0 0.0
  %5291 = vmatpush.msra.mxu0 0.0
  %5292 = vmatpush.msra.mxu0 0.0
  %5293 = vmatpush.msra.mxu0 0.0
  %5294 = vmatpush.msra.mxu0 %v4884
  %5295 = vmatpush.msra.mxu0 %v4870
  %5296 = vmatmul.f32.gmra.mxu0 %v4930
  %v5297 = vpop.f32.mrf.mxu0
  %v5298 = vadd.f32 %v5275, %v5297
  %5299 = vmatmul.f32.gmra.mxu0 %v4933
  %v5300 = vpop.f32.mrf.mxu0
  %v5301 = vadd.f32 %v5278, %v5300
  %5302 = vdwg.mxu0
  %5303 = vmatpush.msra.mxu0 %v4765
  %5304 = vmatpush.msra.mxu0 %v4751
  %5305 = vmatpush.msra.mxu0 %v4645
  %5306 = vmatpush.msra.mxu0 %v4631
  %5307 = vmatpush.msra.mxu0 %v4525
  %5308 = vmatpush.msra.mxu0 %v4511
  %5309 = vmatpush.msra.mxu0 %v4405
  %5310 = vmatpush.msra.mxu0 %v4391
  %5311 = vmatpush.msra.mxu0 %v4285
  %5312 = vmatpush.msra.mxu0 %v4271
  %5313 = vmatpush.msra.mxu0 %v4164
  %5314 = vmatpush.msra.mxu0 %v4151
  %5315 = vmatpush.msra.mxu0 %v4050
  %5316 = vmatpush.msra.mxu0 %v4037
  %5317 = vmatpush.msra.mxu0 %v3932
  %5318 = vmatpush.msra.mxu0 %v3916
  %5319 = vmatmul.f32.gmra.mxu0 %v30
  %v5320 = vpop.f32.mrf.mxu0
  %v5321 = vadd.f32 %v4922, %v5320
  %5322 = vmatmul.f32.gmra.mxu0 %v32
  %v5323 = vpop.f32.mrf.mxu0
  %v5324 = vadd.f32 %v4927, %v5323
  %5325 = vdwg.mxu0
  %5326 = vmatpush.msra.mxu0 0.0
  %5327 = vmatpush.msra.mxu0 0.0
  %5328 = vmatpush.msra.mxu0 0.0
  %5329 = vmatpush.msra.mxu0 0.0
  %5330 = vmatpush.msra.mxu0 0.0
  %5331 = vmatpush.msra.mxu0 0.0
  %5332 = vmatpush.msra.mxu0 0.0
  %5333 = vmatpush.msra.mxu0 0.0
  %5334 = vmatpush.msra.mxu0 0.0
  %5335 = vmatpush.msra.mxu0 0.0
  %5336 = vmatpush.msra.mxu0 0.0
  %5337 = vmatpush.msra.mxu0 0.0
  %5338 = vmatpush.msra.mxu0 0.0
  %5339 = vmatpush.msra.mxu0 0.0
  %5340 = vmatpush.msra.mxu0 %v4885
  %5341 = vmatpush.msra.mxu0 %v4871
  %5342 = vmatmul.f32.gmra.mxu0 %v4930
  %v5343 = vpop.f32.mrf.mxu0
  %v5344 = vadd.f32 %v5321, %v5343
  %5345 = vmatmul.f32.gmra.mxu0 %v4933
  %v5346 = vpop.f32.mrf.mxu0
  %v5347 = vadd.f32 %v5324, %v5346
  %5348 = vdwg.mxu0
  %5349 = vmatpush.msra.mxu0 %v4766
  %5350 = vmatpush.msra.mxu0 %v4752
  %5351 = vmatpush.msra.mxu0 %v4646
  %5352 = vmatpush.msra.mxu0 %v4632
  %5353 = vmatpush.msra.mxu0 %v4526
  %5354 = vmatpush.msra.mxu0 %v4512
  %5355 = vmatpush.msra.mxu0 %v4406
  %5356 = vmatpush.msra.mxu0 %v4392
  %5357 = vmatpush.msra.mxu0 %v4286
  %5358 = vmatpush.msra.mxu0 %v4272
  %5359 = vmatpush.msra.mxu0 %v4165
  %5360 = vmatpush.msra.mxu0 %v4152
  %5361 = vmatpush.msra.mxu0 %v4051
  %5362 = vmatpush.msra.mxu0 %v4038
  %5363 = vmatpush.msra.mxu0 %v3933
  %5364 = vmatpush.msra.mxu0 %v3917
  %5365 = vmatmul.f32.gmra.mxu0 %v30
  %v5366 = vpop.f32.mrf.mxu0
  %v5367 = vadd.f32 %v4922, %v5366
  %5368 = vmatmul.f32.gmra.mxu0 %v32
  %v5369 = vpop.f32.mrf.mxu0
  %v5370 = vadd.f32 %v4927, %v5369
  %5371 = vdwg.mxu0
  %5372 = vmatpush.msra.mxu0 0.0
  %5373 = vmatpush.msra.mxu0 0.0
  %5374 = vmatpush.msra.mxu0 0.0
  %5375 = vmatpush.msra.mxu0 0.0
  %5376 = vmatpush.msra.mxu0 0.0
  %5377 = vmatpush.msra.mxu0 0.0
  %5378 = vmatpush.msra.mxu0 0.0
  %5379 = vmatpush.msra.mxu0 0.0
  %5380 = vmatpush.msra.mxu0 0.0
  %5381 = vmatpush.msra.mxu0 0.0
  %5382 = vmatpush.msra.mxu0 0.0
  %5383 = vmatpush.msra.mxu0 0.0
  %5384 = vmatpush.msra.mxu0 0.0
  %5385 = vmatpush.msra.mxu0 0.0
  %5386 = vmatpush.msra.mxu0 %v4886
  %5387 = vmatpush.msra.mxu0 %v4872
  %5388 = vmatmul.f32.gmra.mxu0 %v4930
  %v5389 = vpop.f32.mrf.mxu0
  %v5390 = vadd.f32 %v5367, %v5389
  %5391 = vmatmul.f32.gmra.mxu0 %v4933
  %v5392 = vpop.f32.mrf.mxu0
  %v5393 = vadd.f32 %v5370, %v5392
  %5394 = vdwg.mxu0
  %5395 = vmatpush.msra.mxu0 %v4767
  %5396 = vmatpush.msra.mxu0 %v4753
  %5397 = vmatpush.msra.mxu0 %v4647
  %5398 = vmatpush.msra.mxu0 %v4633
  %5399 = vmatpush.msra.mxu0 %v4527
  %5400 = vmatpush.msra.mxu0 %v4513
  %5401 = vmatpush.msra.mxu0 %v4407
  %5402 = vmatpush.msra.mxu0 %v4393
  %5403 = vmatpush.msra.mxu0 %v4287
  %5404 = vmatpush.msra.mxu0 %v4273
  %5405 = vmatpush.msra.mxu0 %v4166
  %5406 = vmatpush.msra.mxu0 %v4153
  %5407 = vmatpush.msra.mxu0 %v4052
  %5408 = vmatpush.msra.mxu0 %v4039
  %5409 = vmatpush.msra.mxu0 %v3934
  %5410 = vmatpush.msra.mxu0 %v3918
  %5411 = vmatmul.f32.gmra.mxu0 %v30
  %v5412 = vpop.f32.mrf.mxu0
  %v5413 = vadd.f32 %v4922, %v5412
  %5414 = vmatmul.f32.gmra.mxu0 %v32
  %v5415 = vpop.f32.mrf.mxu0
  %v5416 = vadd.f32 %v4927, %v5415
  %5417 = vdwg.mxu0
  %5418 = vmatpush.msra.mxu0 0.0
  %5419 = vmatpush.msra.mxu0 0.0
  %5420 = vmatpush.msra.mxu0 0.0
  %5421 = vmatpush.msra.mxu0 0.0
  %5422 = vmatpush.msra.mxu0 0.0
  %5423 = vmatpush.msra.mxu0 0.0
  %5424 = vmatpush.msra.mxu0 0.0
  %5425 = vmatpush.msra.mxu0 0.0
  %5426 = vmatpush.msra.mxu0 0.0
  %5427 = vmatpush.msra.mxu0 0.0
  %5428 = vmatpush.msra.mxu0 0.0
  %5429 = vmatpush.msra.mxu0 0.0
  %5430 = vmatpush.msra.mxu0 0.0
  %5431 = vmatpush.msra.mxu0 0.0
  %5432 = vmatpush.msra.mxu0 %v4887
  %5433 = vmatpush.msra.mxu0 %v4873
  %5434 = vmatmul.f32.gmra.mxu0 %v4930
  %v5435 = vpop.f32.mrf.mxu0
  %v5436 = vadd.f32 %v5413, %v5435
  %5437 = vmatmul.f32.gmra.mxu0 %v4933
  %v5438 = vpop.f32.mrf.mxu0
  %v5439 = vadd.f32 %v5416, %v5438
  %5440 = vdwg.mxu0
  %5441 = vmatpush.msra.mxu0 %v4768
  %5442 = vmatpush.msra.mxu0 %v4754
  %5443 = vmatpush.msra.mxu0 %v4648
  %5444 = vmatpush.msra.mxu0 %v4634
  %5445 = vmatpush.msra.mxu0 %v4528
  %5446 = vmatpush.msra.mxu0 %v4514
  %5447 = vmatpush.msra.mxu0 %v4408
  %5448 = vmatpush.msra.mxu0 %v4394
  %5449 = vmatpush.msra.mxu0 %v4288
  %5450 = vmatpush.msra.mxu0 %v4274
  %5451 = vmatpush.msra.mxu0 %v4167
  %5452 = vmatpush.msra.mxu0 %v4154
  %5453 = vmatpush.msra.mxu0 %v4053
  %5454 = vmatpush.msra.mxu0 %v4040
  %5455 = vmatpush.msra.mxu0 %v3935
  %5456 = vmatpush.msra.mxu0 %v3919
  %5457 = vmatmul.f32.gmra.mxu0 %v30
  %v5458 = vpop.f32.mrf.mxu0
  %v5459 = vadd.f32 %v4922, %v5458
  %5460 = vmatmul.f32.gmra.mxu0 %v32
  %v5461 = vpop.f32.mrf.mxu0
  %v5462 = vadd.f32 %v4927, %v5461
  %5463 = vdwg.mxu0
  %5464 = vmatpush.msra.mxu0 0.0
  %5465 = vmatpush.msra.mxu0 0.0
  %5466 = vmatpush.msra.mxu0 0.0
  %5467 = vmatpush.msra.mxu0 0.0
  %5468 = vmatpush.msra.mxu0 0.0
  %5469 = vmatpush.msra.mxu0 0.0
  %5470 = vmatpush.msra.mxu0 0.0
  %5471 = vmatpush.msra.mxu0 0.0
  %5472 = vmatpush.msra.mxu0 0.0
  %5473 = vmatpush.msra.mxu0 0.0
  %5474 = vmatpush.msra.mxu0 0.0
  %5475 = vmatpush.msra.mxu0 0.0
  %5476 = vmatpush.msra.mxu0 0.0
  %5477 = vmatpush.msra.mxu0 0.0
  %5478 = vmatpush.msra.mxu0 %v4888
  %5479 = vmatpush.msra.mxu0 %v4874
  %5480 = vmatmul.f32.gmra.mxu0 %v4930
  %v5481 = vpop.f32.mrf.mxu0
  %v5482 = vadd.f32 %v5459, %v5481
  %5483 = vmatmul.f32.gmra.mxu0 %v4933
  %v5484 = vpop.f32.mrf.mxu0
  %v5485 = vadd.f32 %v5462, %v5484
  %5486 = vdwg.mxu0
  %5487 = vmatpush.msra.mxu0 %v4769
  %5488 = vmatpush.msra.mxu0 %v4755
  %5489 = vmatpush.msra.mxu0 %v4649
  %5490 = vmatpush.msra.mxu0 %v4635
  %5491 = vmatpush.msra.mxu0 %v4529
  %5492 = vmatpush.msra.mxu0 %v4515
  %5493 = vmatpush.msra.mxu0 %v4409
  %5494 = vmatpush.msra.mxu0 %v4395
  %5495 = vmatpush.msra.mxu0 %v4289
  %5496 = vmatpush.msra.mxu0 %v4275
  %5497 = vmatpush.msra.mxu0 %v4168
  %5498 = vmatpush.msra.mxu0 %v4155
  %5499 = vmatpush.msra.mxu0 %v4054
  %5500 = vmatpush.msra.mxu0 %v4041
  %5501 = vmatpush.msra.mxu0 %v3936
  %5502 = vmatpush.msra.mxu0 %v3920
  %5503 = vmatmul.f32.gmra.mxu0 %v30
  %v5504 = vpop.f32.mrf.mxu0
  %v5505 = vadd.f32 %v4922, %v5504
  %5506 = vmatmul.f32.gmra.mxu0 %v32
  %v5507 = vpop.f32.mrf.mxu0
  %v5508 = vadd.f32 %v4927, %v5507
  %5509 = vdwg.mxu0
  %5510 = vmatpush.msra.mxu0 0.0
  %5511 = vmatpush.msra.mxu0 0.0
  %5512 = vmatpush.msra.mxu0 0.0
  %5513 = vmatpush.msra.mxu0 0.0
  %5514 = vmatpush.msra.mxu0 0.0
  %5515 = vmatpush.msra.mxu0 0.0
  %5516 = vmatpush.msra.mxu0 0.0
  %5517 = vmatpush.msra.mxu0 0.0
  %5518 = vmatpush.msra.mxu0 0.0
  %5519 = vmatpush.msra.mxu0 0.0
  %5520 = vmatpush.msra.mxu0 0.0
  %5521 = vmatpush.msra.mxu0 0.0
  %5522 = vmatpush.msra.mxu0 0.0
  %5523 = vmatpush.msra.mxu0 0.0
  %5524 = vmatpush.msra.mxu0 %v4889
  %5525 = vmatpush.msra.mxu0 %v4875
  %5526 = vmatmul.f32.gmra.mxu0 %v4930
  %v5527 = vpop.f32.mrf.mxu0
  %v5528 = vadd.f32 %v5505, %v5527
  %5529 = vmatmul.f32.gmra.mxu0 %v4933
  %v5530 = vpop.f32.mrf.mxu0
  %v5531 = vadd.f32 %v5508, %v5530
  %5532 = vdwg.mxu0
  %5533 = vmatpush.msra.mxu0 %v4770
  %5534 = vmatpush.msra.mxu0 %v4756
  %5535 = vmatpush.msra.mxu0 %v4650
  %5536 = vmatpush.msra.mxu0 %v4636
  %5537 = vmatpush.msra.mxu0 %v4530
  %5538 = vmatpush.msra.mxu0 %v4516
  %5539 = vmatpush.msra.mxu0 %v4410
  %5540 = vmatpush.msra.mxu0 %v4396
  %5541 = vmatpush.msra.mxu0 %v4290
  %5542 = vmatpush.msra.mxu0 %v4276
  %5543 = vmatpush.msra.mxu0 %v4142
  %5544 = vmatpush.msra.mxu0 %v4112
  %5545 = vmatpush.msra.mxu0 %v4028
  %5546 = vmatpush.msra.mxu0 %v3998
  %5547 = vmatpush.msra.mxu0 %v3937
  %5548 = vmatpush.msra.mxu0 %v3921
  %5549 = vmatmul.f32.gmra.mxu0 %v30
  %v5550 = vpop.f32.mrf.mxu0
  %v5551 = vadd.f32 %v4922, %v5550
  %5552 = vmatmul.f32.gmra.mxu0 %v32
  %v5553 = vpop.f32.mrf.mxu0
  %v5554 = vadd.f32 %v4927, %v5553
  %5555 = vdwg.mxu0
  %5556 = vmatpush.msra.mxu0 0.0
  %5557 = vmatpush.msra.mxu0 0.0
  %5558 = vmatpush.msra.mxu0 0.0
  %5559 = vmatpush.msra.mxu0 0.0
  %5560 = vmatpush.msra.mxu0 0.0
  %5561 = vmatpush.msra.mxu0 0.0
  %5562 = vmatpush.msra.mxu0 0.0
  %5563 = vmatpush.msra.mxu0 0.0
  %5564 = vmatpush.msra.mxu0 0.0
  %5565 = vmatpush.msra.mxu0 0.0
  %5566 = vmatpush.msra.mxu0 0.0
  %5567 = vmatpush.msra.mxu0 0.0
  %5568 = vmatpush.msra.mxu0 0.0
  %5569 = vmatpush.msra.mxu0 0.0
  %5570 = vmatpush.msra.mxu0 %v4890
  %5571 = vmatpush.msra.mxu0 %v4876
  %5572 = vmatmul.f32.gmra.mxu0 %v4930
  %v5573 = vpop.f32.mrf.mxu0
  %v5574 = vadd.f32 %v5551, %v5573
  %5575 = vmatmul.f32.gmra.mxu0 %v4933
  %v5576 = vpop.f32.mrf.mxu0
  %v5577 = vadd.f32 %v5554, %v5576
  %5578 = vdwg.mxu0
  %v5579 = vmax.f32 %v4976, 0.0
  %v5580 = vmax.f32 %v5022, 0.0
  %v5581 = vmax.f32 %v5068, 0.0
  %v5582 = vmax.f32 %v5114, 0.0
  %v5583 = vmax.f32 %v5160, 0.0
  %v5584 = vmax.f32 %v5206, 0.0
  %v5585 = vmax.f32 %v5252, 0.0
  %v5586 = vmax.f32 %v5298, 0.0
  %v5587 = vmax.f32 %v5344, 0.0
  %v5588 = vmax.f32 %v5390, 0.0
  %v5589 = vmax.f32 %v5436, 0.0
  %v5590 = vmax.f32 %v5482, 0.0
  %v5591 = vmax.f32 %v5528, 0.0
  %v5592 = vmax.f32 %v5574, 0.0
  %v5593 = vmax.f32 %v4979, 0.0
  %v5594 = vmax.f32 %v5025, 0.0
  %v5595 = vmax.f32 %v5071, 0.0
  %v5596 = vmax.f32 %v5117, 0.0
  %v5597 = vmax.f32 %v5163, 0.0
  %v5598 = vmax.f32 %v5209, 0.0
  %v5599 = vmax.f32 %v5255, 0.0
  %v5600 = vmax.f32 %v5301, 0.0
  %v5601 = vmax.f32 %v5347, 0.0
  %v5602 = vmax.f32 %v5393, 0.0
  %v5603 = vmax.f32 %v5439, 0.0
  %v5604 = vmax.f32 %v5485, 0.0
  %v5605 = vmax.f32 %v5531, 0.0
  %v5606 = vmax.f32 %v5577, 0.0
  %5635 = vrot.lane.b32.xlu0 %v5579, 127
  %v5636 = vpop.permute.xlu0 %5635
  %5637 = vrot.lane.b32.xlu0 %v5580, 127
  %v5638 = vpop.permute.xlu0 %5637
  %5639 = vrot.lane.b32.xlu0 %v5581, 127
  %v5640 = vpop.permute.xlu0 %5639
  %5641 = vrot.lane.b32.xlu0 %v5582, 127
  %v5642 = vpop.permute.xlu0 %5641
  %5643 = vrot.lane.b32.xlu0 %v5583, 127
  %v5644 = vpop.permute.xlu0 %5643
  %5645 = vrot.lane.b32.xlu0 %v5584, 127
  %v5646 = vpop.permute.xlu0 %5645
  %5647 = vrot.lane.b32.xlu0 %v5585, 127
  %v5648 = vpop.permute.xlu0 %5647
  %5649 = vrot.lane.b32.xlu0 %v5586, 127
  %v5650 = vpop.permute.xlu0 %5649
  %5651 = vrot.lane.b32.xlu0 %v5587, 127
  %v5652 = vpop.permute.xlu0 %5651
  %5653 = vrot.lane.b32.xlu0 %v5588, 127
  %v5654 = vpop.permute.xlu0 %5653
  %5655 = vrot.lane.b32.xlu0 %v5589, 127
  %v5656 = vpop.permute.xlu0 %5655
  %5657 = vrot.lane.b32.xlu0 %v5590, 127
  %v5658 = vpop.permute.xlu0 %5657
  %5659 = vrot.lane.b32.xlu0 %v5591, 127
  %v5660 = vpop.permute.xlu0 %5659
  %5661 = vrot.lane.b32.xlu0 %v5592, 127
  %v5662 = vpop.permute.xlu0 %5661
  %5663 = vrot.lane.b32.xlu0 %v5593, 127
  %v5664 = vpop.permute.xlu0 %5663
  %5665 = vrot.lane.b32.xlu0 %v5594, 127
  %v5666 = vpop.permute.xlu0 %5665
  %5667 = vrot.lane.b32.xlu0 %v5595, 127
  %v5668 = vpop.permute.xlu0 %5667
  %5669 = vrot.lane.b32.xlu0 %v5596, 127
  %v5670 = vpop.permute.xlu0 %5669
  %5671 = vrot.lane.b32.xlu0 %v5597, 127
  %v5672 = vpop.permute.xlu0 %5671
  %5673 = vrot.lane.b32.xlu0 %v5598, 127
  %v5674 = vpop.permute.xlu0 %5673
  %5675 = vrot.lane.b32.xlu0 %v5599, 127
  %v5676 = vpop.permute.xlu0 %5675
  %5677 = vrot.lane.b32.xlu0 %v5600, 127
  %v5678 = vpop.permute.xlu0 %5677
  %5679 = vrot.lane.b32.xlu0 %v5601, 127
  %v5680 = vpop.permute.xlu0 %5679
  %5681 = vrot.lane.b32.xlu0 %v5602, 127
  %v5682 = vpop.permute.xlu0 %5681
  %5683 = vrot.lane.b32.xlu0 %v5603, 127
  %v5684 = vpop.permute.xlu0 %5683
  %5685 = vrot.lane.b32.xlu0 %v5604, 127
  %v5686 = vpop.permute.xlu0 %5685
  %5687 = vrot.lane.b32.xlu0 %v5605, 127
  %v5688 = vpop.permute.xlu0 %5687
  %5689 = vrot.lane.b32.xlu0 %v5606, 127
  %v5690 = vpop.permute.xlu0 %5689
  %v5691 = vsel %vm140, %v5636, %v5638
  %v5692 = vsel %vm140, %v5638, %v5640
  %v5693 = vsel %vm140, %v5640, %v5642
  %v5694 = vsel %vm140, %v5642, %v5644
  %v5695 = vsel %vm140, %v5644, %v5646
  %v5696 = vsel %vm140, %v5646, %v5648
  %v5697 = vsel %vm140, %v5650, %v5652
  %v5698 = vsel %vm140, %v5652, %v5654
  %v5699 = vsel %vm140, %v5654, %v5656
  %v5700 = vsel %vm140, %v5656, %v5658
  %v5701 = vsel %vm140, %v5658, %v5660
  %v5702 = vsel %vm140, %v5660, %v5662
  %v5703 = vsel %vm140, %v5664, %v5666
  %v5704 = vsel %vm140, %v5666, %v5668
  %v5705 = vsel %vm140, %v5668, %v5670
  %v5706 = vsel %vm140, %v5670, %v5672
  %v5707 = vsel %vm140, %v5672, %v5674
  %v5708 = vsel %vm140, %v5674, %v5676
  %v5709 = vsel %vm140, %v5678, %v5680
  %v5710 = vsel %vm140, %v5680, %v5682
  %v5711 = vsel %vm140, %v5682, %v5684
  %v5712 = vsel %vm140, %v5684, %v5686
  %v5713 = vsel %vm140, %v5686, %v5688
  %v5714 = vsel %vm140, %v5688, %v5690
  %5741 = vrot.lane.b32.xlu0 %v5579, 126
  %v5742 = vpop.permute.xlu0 %5741
  %5743 = vrot.lane.b32.xlu0 %v5580, 126
  %v5744 = vpop.permute.xlu0 %5743
  %5745 = vrot.lane.b32.xlu0 %v5581, 126
  %v5746 = vpop.permute.xlu0 %5745
  %5747 = vrot.lane.b32.xlu0 %v5582, 126
  %v5748 = vpop.permute.xlu0 %5747
  %5749 = vrot.lane.b32.xlu0 %v5583, 126
  %v5750 = vpop.permute.xlu0 %5749
  %5751 = vrot.lane.b32.xlu0 %v5584, 126
  %v5752 = vpop.permute.xlu0 %5751
  %5753 = vrot.lane.b32.xlu0 %v5585, 126
  %v5754 = vpop.permute.xlu0 %5753
  %5755 = vrot.lane.b32.xlu0 %v5586, 126
  %v5756 = vpop.permute.xlu0 %5755
  %5757 = vrot.lane.b32.xlu0 %v5587, 126
  %v5758 = vpop.permute.xlu0 %5757
  %5759 = vrot.lane.b32.xlu0 %v5588, 126
  %v5760 = vpop.permute.xlu0 %5759
  %5761 = vrot.lane.b32.xlu0 %v5589, 126
  %v5762 = vpop.permute.xlu0 %5761
  %5763 = vrot.lane.b32.xlu0 %v5590, 126
  %v5764 = vpop.permute.xlu0 %5763
  %5765 = vrot.lane.b32.xlu0 %v5591, 126
  %v5766 = vpop.permute.xlu0 %5765
  %5767 = vrot.lane.b32.xlu0 %v5592, 126
  %v5768 = vpop.permute.xlu0 %5767
  %5769 = vrot.lane.b32.xlu0 %v5593, 126
  %v5770 = vpop.permute.xlu0 %5769
  %5771 = vrot.lane.b32.xlu0 %v5594, 126
  %v5772 = vpop.permute.xlu0 %5771
  %5773 = vrot.lane.b32.xlu0 %v5595, 126
  %v5774 = vpop.permute.xlu0 %5773
  %5775 = vrot.lane.b32.xlu0 %v5596, 126
  %v5776 = vpop.permute.xlu0 %5775
  %5777 = vrot.lane.b32.xlu0 %v5597, 126
  %v5778 = vpop.permute.xlu0 %5777
  %5779 = vrot.lane.b32.xlu0 %v5598, 126
  %v5780 = vpop.permute.xlu0 %5779
  %5781 = vrot.lane.b32.xlu0 %v5599, 126
  %v5782 = vpop.permute.xlu0 %5781
  %5783 = vrot.lane.b32.xlu0 %v5600, 126
  %v5784 = vpop.permute.xlu0 %5783
  %5785 = vrot.lane.b32.xlu0 %v5601, 126
  %v5786 = vpop.permute.xlu0 %5785
  %5787 = vrot.lane.b32.xlu0 %v5602, 126
  %v5788 = vpop.permute.xlu0 %5787
  %5789 = vrot.lane.b32.xlu0 %v5603, 126
  %v5790 = vpop.permute.xlu0 %5789
  %5791 = vrot.lane.b32.xlu0 %v5604, 126
  %v5792 = vpop.permute.xlu0 %5791
  %5793 = vrot.lane.b32.xlu0 %v5605, 126
  %v5794 = vpop.permute.xlu0 %5793
  %5795 = vrot.lane.b32.xlu0 %v5606, 126
  %v5796 = vpop.permute.xlu0 %5795
  %v5797 = vsel %vm208, %v5742, %v5744
  %v5798 = vsel %vm208, %v5744, %v5746
  %v5799 = vsel %vm208, %v5746, %v5748
  %v5800 = vsel %vm208, %v5748, %v5750
  %v5801 = vsel %vm208, %v5750, %v5752
  %v5802 = vsel %vm208, %v5752, %v5754
  %v5803 = vsel %vm208, %v5756, %v5758
  %v5804 = vsel %vm208, %v5758, %v5760
  %v5805 = vsel %vm208, %v5760, %v5762
  %v5806 = vsel %vm208, %v5762, %v5764
  %v5807 = vsel %vm208, %v5764, %v5766
  %v5808 = vsel %vm208, %v5766, %v5768
  %v5809 = vsel %vm208, %v5770, %v5772
  %v5810 = vsel %vm208, %v5772, %v5774
  %v5811 = vsel %vm208, %v5774, %v5776
  %v5812 = vsel %vm208, %v5776, %v5778
  %v5813 = vsel %vm208, %v5778, %v5780
  %v5814 = vsel %vm208, %v5780, %v5782
  %v5815 = vsel %vm208, %v5784, %v5786
  %v5816 = vsel %vm208, %v5786, %v5788
  %v5817 = vsel %vm208, %v5788, %v5790
  %v5818 = vsel %vm208, %v5790, %v5792
  %v5819 = vsel %vm208, %v5792, %v5794
  %v5820 = vsel %vm208, %v5794, %v5796
  %5847 = vrot.lane.b32.xlu0 %v5579, 100
  %v5848 = vpop.permute.xlu0 %5847
  %5849 = vrot.lane.b32.xlu0 %v5580, 100
  %v5850 = vpop.permute.xlu0 %5849
  %5851 = vrot.lane.b32.xlu0 %v5581, 100
  %v5852 = vpop.permute.xlu0 %5851
  %5853 = vrot.lane.b32.xlu0 %v5582, 100
  %v5854 = vpop.permute.xlu0 %5853
  %5855 = vrot.lane.b32.xlu0 %v5583, 100
  %v5856 = vpop.permute.xlu0 %5855
  %5857 = vrot.lane.b32.xlu0 %v5584, 100
  %v5858 = vpop.permute.xlu0 %5857
  %5859 = vrot.lane.b32.xlu0 %v5585, 100
  %v5860 = vpop.permute.xlu0 %5859
  %5861 = vrot.lane.b32.xlu0 %v5586, 100
  %v5862 = vpop.permute.xlu0 %5861
  %5863 = vrot.lane.b32.xlu0 %v5587, 100
  %v5864 = vpop.permute.xlu0 %5863
  %5865 = vrot.lane.b32.xlu0 %v5588, 100
  %v5866 = vpop.permute.xlu0 %5865
  %5867 = vrot.lane.b32.xlu0 %v5589, 100
  %v5868 = vpop.permute.xlu0 %5867
  %5869 = vrot.lane.b32.xlu0 %v5590, 100
  %v5870 = vpop.permute.xlu0 %5869
  %5871 = vrot.lane.b32.xlu0 %v5591, 100
  %v5872 = vpop.permute.xlu0 %5871
  %5873 = vrot.lane.b32.xlu0 %v5592, 100
  %v5874 = vpop.permute.xlu0 %5873
  %5875 = vrot.lane.b32.xlu0 %v5593, 100
  %v5876 = vpop.permute.xlu0 %5875
  %5877 = vrot.lane.b32.xlu0 %v5594, 100
  %v5878 = vpop.permute.xlu0 %5877
  %5879 = vrot.lane.b32.xlu0 %v5595, 100
  %v5880 = vpop.permute.xlu0 %5879
  %5881 = vrot.lane.b32.xlu0 %v5596, 100
  %v5882 = vpop.permute.xlu0 %5881
  %5883 = vrot.lane.b32.xlu0 %v5597, 100
  %v5884 = vpop.permute.xlu0 %5883
  %5885 = vrot.lane.b32.xlu0 %v5598, 100
  %v5886 = vpop.permute.xlu0 %5885
  %5887 = vrot.lane.b32.xlu0 %v5599, 100
  %v5888 = vpop.permute.xlu0 %5887
  %5889 = vrot.lane.b32.xlu0 %v5600, 100
  %v5890 = vpop.permute.xlu0 %5889
  %5891 = vrot.lane.b32.xlu0 %v5601, 100
  %v5892 = vpop.permute.xlu0 %5891
  %5893 = vrot.lane.b32.xlu0 %v5602, 100
  %v5894 = vpop.permute.xlu0 %5893
  %5895 = vrot.lane.b32.xlu0 %v5603, 100
  %v5896 = vpop.permute.xlu0 %5895
  %5897 = vrot.lane.b32.xlu0 %v5604, 100
  %v5898 = vpop.permute.xlu0 %5897
  %5899 = vrot.lane.b32.xlu0 %v5605, 100
  %v5900 = vpop.permute.xlu0 %5899
  %5901 = vrot.lane.b32.xlu0 %v5606, 100
  %v5902 = vpop.permute.xlu0 %5901
  %v5903 = vsel %vm276, %v5848, %v5850
  %v5904 = vsel %vm276, %v5850, %v5852
  %v5905 = vsel %vm276, %v5852, %v5854
  %v5906 = vsel %vm276, %v5854, %v5856
  %v5907 = vsel %vm276, %v5856, %v5858
  %v5908 = vsel %vm276, %v5858, %v5860
  %v5909 = vsel %vm276, %v5862, %v5864
  %v5910 = vsel %vm276, %v5864, %v5866
  %v5911 = vsel %vm276, %v5866, %v5868
  %v5912 = vsel %vm276, %v5868, %v5870
  %v5913 = vsel %vm276, %v5870, %v5872
  %v5914 = vsel %vm276, %v5872, %v5874
  %v5915 = vsel %vm276, %v5876, %v5878
  %v5916 = vsel %vm276, %v5878, %v5880
  %v5917 = vsel %vm276, %v5880, %v5882
  %v5918 = vsel %vm276, %v5882, %v5884
  %v5919 = vsel %vm276, %v5884, %v5886
  %v5920 = vsel %vm276, %v5886, %v5888
  %v5921 = vsel %vm276, %v5890, %v5892
  %v5922 = vsel %vm276, %v5892, %v5894
  %v5923 = vsel %vm276, %v5894, %v5896
  %v5924 = vsel %vm276, %v5896, %v5898
  %v5925 = vsel %vm276, %v5898, %v5900
  %v5926 = vsel %vm276, %v5900, %v5902
  %5953 = vrot.lane.b32.xlu0 %v5579, 99
  %v5954 = vpop.permute.xlu0 %5953
  %5955 = vrot.lane.b32.xlu0 %v5580, 99
  %v5956 = vpop.permute.xlu0 %5955
  %5957 = vrot.lane.b32.xlu0 %v5581, 99
  %v5958 = vpop.permute.xlu0 %5957
  %5959 = vrot.lane.b32.xlu0 %v5582, 99
  %v5960 = vpop.permute.xlu0 %5959
  %5961 = vrot.lane.b32.xlu0 %v5583, 99
  %v5962 = vpop.permute.xlu0 %5961
  %5963 = vrot.lane.b32.xlu0 %v5584, 99
  %v5964 = vpop.permute.xlu0 %5963
  %5965 = vrot.lane.b32.xlu0 %v5585, 99
  %v5966 = vpop.permute.xlu0 %5965
  %5967 = vrot.lane.b32.xlu0 %v5586, 99
  %v5968 = vpop.permute.xlu0 %5967
  %5969 = vrot.lane.b32.xlu0 %v5587, 99
  %v5970 = vpop.permute.xlu0 %5969
  %5971 = vrot.lane.b32.xlu0 %v5588, 99
  %v5972 = vpop.permute.xlu0 %5971
  %5973 = vrot.lane.b32.xlu0 %v5589, 99
  %v5974 = vpop.permute.xlu0 %5973
  %5975 = vrot.lane.b32.xlu0 %v5590, 99
  %v5976 = vpop.permute.xlu0 %5975
  %5977 = vrot.lane.b32.xlu0 %v5591, 99
  %v5978 = vpop.permute.xlu0 %5977
  %5979 = vrot.lane.b32.xlu0 %v5592, 99
  %v5980 = vpop.permute.xlu0 %5979
  %5981 = vrot.lane.b32.xlu0 %v5593, 99
  %v5982 = vpop.permute.xlu0 %5981
  %5983 = vrot.lane.b32.xlu0 %v5594, 99
  %v5984 = vpop.permute.xlu0 %5983
  %5985 = vrot.lane.b32.xlu0 %v5595, 99
  %v5986 = vpop.permute.xlu0 %5985
  %5987 = vrot.lane.b32.xlu0 %v5596, 99
  %v5988 = vpop.permute.xlu0 %5987
  %5989 = vrot.lane.b32.xlu0 %v5597, 99
  %v5990 = vpop.permute.xlu0 %5989
  %5991 = vrot.lane.b32.xlu0 %v5598, 99
  %v5992 = vpop.permute.xlu0 %5991
  %5993 = vrot.lane.b32.xlu0 %v5599, 99
  %v5994 = vpop.permute.xlu0 %5993
  %5995 = vrot.lane.b32.xlu0 %v5600, 99
  %v5996 = vpop.permute.xlu0 %5995
  %5997 = vrot.lane.b32.xlu0 %v5601, 99
  %v5998 = vpop.permute.xlu0 %5997
  %5999 = vrot.lane.b32.xlu0 %v5602, 99
  %v6000 = vpop.permute.xlu0 %5999
  %6001 = vrot.lane.b32.xlu0 %v5603, 99
  %v6002 = vpop.permute.xlu0 %6001
  %6003 = vrot.lane.b32.xlu0 %v5604, 99
  %v6004 = vpop.permute.xlu0 %6003
  %6005 = vrot.lane.b32.xlu0 %v5605, 99
  %v6006 = vpop.permute.xlu0 %6005
  %6007 = vrot.lane.b32.xlu0 %v5606, 99
  %v6008 = vpop.permute.xlu0 %6007
  %v6009 = vsel %vm344, %v5954, %v5956
  %v6010 = vsel %vm344, %v5956, %v5958
  %v6011 = vsel %vm344, %v5958, %v5960
  %v6012 = vsel %vm344, %v5960, %v5962
  %v6013 = vsel %vm344, %v5962, %v5964
  %v6014 = vsel %vm344, %v5964, %v5966
  %v6015 = vsel %vm344, %v5968, %v5970
  %v6016 = vsel %vm344, %v5970, %v5972
  %v6017 = vsel %vm344, %v5972, %v5974
  %v6018 = vsel %vm344, %v5974, %v5976
  %v6019 = vsel %vm344, %v5976, %v5978
  %v6020 = vsel %vm344, %v5978, %v5980
  %v6021 = vsel %vm344, %v5982, %v5984
  %v6022 = vsel %vm344, %v5984, %v5986
  %v6023 = vsel %vm344, %v5986, %v5988
  %v6024 = vsel %vm344, %v5988, %v5990
  %v6025 = vsel %vm344, %v5990, %v5992
  %v6026 = vsel %vm344, %v5992, %v5994
  %v6027 = vsel %vm344, %v5996, %v5998
  %v6028 = vsel %vm344, %v5998, %v6000
  %v6029 = vsel %vm344, %v6000, %v6002
  %v6030 = vsel %vm344, %v6002, %v6004
  %v6031 = vsel %vm344, %v6004, %v6006
  %v6032 = vsel %vm344, %v6006, %v6008
  %6059 = vrot.lane.b32.xlu0 %v5579, 98
  %v6060 = vpop.permute.xlu0 %6059
  %6061 = vrot.lane.b32.xlu0 %v5580, 98
  %v6062 = vpop.permute.xlu0 %6061
  %6063 = vrot.lane.b32.xlu0 %v5581, 98
  %v6064 = vpop.permute.xlu0 %6063
  %6065 = vrot.lane.b32.xlu0 %v5582, 98
  %v6066 = vpop.permute.xlu0 %6065
  %6067 = vrot.lane.b32.xlu0 %v5583, 98
  %v6068 = vpop.permute.xlu0 %6067
  %6069 = vrot.lane.b32.xlu0 %v5584, 98
  %v6070 = vpop.permute.xlu0 %6069
  %6071 = vrot.lane.b32.xlu0 %v5585, 98
  %v6072 = vpop.permute.xlu0 %6071
  %6073 = vrot.lane.b32.xlu0 %v5586, 98
  %v6074 = vpop.permute.xlu0 %6073
  %6075 = vrot.lane.b32.xlu0 %v5587, 98
  %v6076 = vpop.permute.xlu0 %6075
  %6077 = vrot.lane.b32.xlu0 %v5588, 98
  %v6078 = vpop.permute.xlu0 %6077
  %6079 = vrot.lane.b32.xlu0 %v5589, 98
  %v6080 = vpop.permute.xlu0 %6079
  %6081 = vrot.lane.b32.xlu0 %v5590, 98
  %v6082 = vpop.permute.xlu0 %6081
  %6083 = vrot.lane.b32.xlu0 %v5591, 98
  %v6084 = vpop.permute.xlu0 %6083
  %6085 = vrot.lane.b32.xlu0 %v5592, 98
  %v6086 = vpop.permute.xlu0 %6085
  %6087 = vrot.lane.b32.xlu0 %v5593, 98
  %v6088 = vpop.permute.xlu0 %6087
  %6089 = vrot.lane.b32.xlu0 %v5594, 98
  %v6090 = vpop.permute.xlu0 %6089
  %6091 = vrot.lane.b32.xlu0 %v5595, 98
  %v6092 = vpop.permute.xlu0 %6091
  %6093 = vrot.lane.b32.xlu0 %v5596, 98
  %v6094 = vpop.permute.xlu0 %6093
  %6095 = vrot.lane.b32.xlu0 %v5597, 98
  %v6096 = vpop.permute.xlu0 %6095
  %6097 = vrot.lane.b32.xlu0 %v5598, 98
  %v6098 = vpop.permute.xlu0 %6097
  %6099 = vrot.lane.b32.xlu0 %v5599, 98
  %v6100 = vpop.permute.xlu0 %6099
  %6101 = vrot.lane.b32.xlu0 %v5600, 98
  %v6102 = vpop.permute.xlu0 %6101
  %6103 = vrot.lane.b32.xlu0 %v5601, 98
  %v6104 = vpop.permute.xlu0 %6103
  %6105 = vrot.lane.b32.xlu0 %v5602, 98
  %v6106 = vpop.permute.xlu0 %6105
  %6107 = vrot.lane.b32.xlu0 %v5603, 98
  %v6108 = vpop.permute.xlu0 %6107
  %6109 = vrot.lane.b32.xlu0 %v5604, 98
  %v6110 = vpop.permute.xlu0 %6109
  %6111 = vrot.lane.b32.xlu0 %v5605, 98
  %v6112 = vpop.permute.xlu0 %6111
  %6113 = vrot.lane.b32.xlu0 %v5606, 98
  %v6114 = vpop.permute.xlu0 %6113
  %v6115 = vsel %vm412, %v6060, %v6062
  %v6116 = vsel %vm412, %v6062, %v6064
  %v6117 = vsel %vm412, %v6064, %v6066
  %v6118 = vsel %vm412, %v6066, %v6068
  %v6119 = vsel %vm412, %v6068, %v6070
  %v6120 = vsel %vm412, %v6070, %v6072
  %v6121 = vsel %vm412, %v6074, %v6076
  %v6122 = vsel %vm412, %v6076, %v6078
  %v6123 = vsel %vm412, %v6078, %v6080
  %v6124 = vsel %vm412, %v6080, %v6082
  %v6125 = vsel %vm412, %v6082, %v6084
  %v6126 = vsel %vm412, %v6084, %v6086
  %v6127 = vsel %vm412, %v6088, %v6090
  %v6128 = vsel %vm412, %v6090, %v6092
  %v6129 = vsel %vm412, %v6092, %v6094
  %v6130 = vsel %vm412, %v6094, %v6096
  %v6131 = vsel %vm412, %v6096, %v6098
  %v6132 = vsel %vm412, %v6098, %v6100
  %v6133 = vsel %vm412, %v6102, %v6104
  %v6134 = vsel %vm412, %v6104, %v6106
  %v6135 = vsel %vm412, %v6106, %v6108
  %v6136 = vsel %vm412, %v6108, %v6110
  %v6137 = vsel %vm412, %v6110, %v6112
  %v6138 = vsel %vm412, %v6112, %v6114
  %6165 = vrot.lane.b32.xlu0 %v5579, 72
  %v6166 = vpop.permute.xlu0 %6165
  %6167 = vrot.lane.b32.xlu0 %v5580, 72
  %v6168 = vpop.permute.xlu0 %6167
  %6169 = vrot.lane.b32.xlu0 %v5581, 72
  %v6170 = vpop.permute.xlu0 %6169
  %6171 = vrot.lane.b32.xlu0 %v5582, 72
  %v6172 = vpop.permute.xlu0 %6171
  %6173 = vrot.lane.b32.xlu0 %v5583, 72
  %v6174 = vpop.permute.xlu0 %6173
  %6175 = vrot.lane.b32.xlu0 %v5584, 72
  %v6176 = vpop.permute.xlu0 %6175
  %6177 = vrot.lane.b32.xlu0 %v5585, 72
  %v6178 = vpop.permute.xlu0 %6177
  %6179 = vrot.lane.b32.xlu0 %v5586, 72
  %v6180 = vpop.permute.xlu0 %6179
  %6181 = vrot.lane.b32.xlu0 %v5587, 72
  %v6182 = vpop.permute.xlu0 %6181
  %6183 = vrot.lane.b32.xlu0 %v5588, 72
  %v6184 = vpop.permute.xlu0 %6183
  %6185 = vrot.lane.b32.xlu0 %v5589, 72
  %v6186 = vpop.permute.xlu0 %6185
  %6187 = vrot.lane.b32.xlu0 %v5590, 72
  %v6188 = vpop.permute.xlu0 %6187
  %6189 = vrot.lane.b32.xlu0 %v5591, 72
  %v6190 = vpop.permute.xlu0 %6189
  %6191 = vrot.lane.b32.xlu0 %v5592, 72
  %v6192 = vpop.permute.xlu0 %6191
  %6193 = vrot.lane.b32.xlu0 %v5593, 72
  %v6194 = vpop.permute.xlu0 %6193
  %6195 = vrot.lane.b32.xlu0 %v5594, 72
  %v6196 = vpop.permute.xlu0 %6195
  %6197 = vrot.lane.b32.xlu0 %v5595, 72
  %v6198 = vpop.permute.xlu0 %6197
  %6199 = vrot.lane.b32.xlu0 %v5596, 72
  %v6200 = vpop.permute.xlu0 %6199
  %6201 = vrot.lane.b32.xlu0 %v5597, 72
  %v6202 = vpop.permute.xlu0 %6201
  %6203 = vrot.lane.b32.xlu0 %v5598, 72
  %v6204 = vpop.permute.xlu0 %6203
  %6205 = vrot.lane.b32.xlu0 %v5599, 72
  %v6206 = vpop.permute.xlu0 %6205
  %6207 = vrot.lane.b32.xlu0 %v5600, 72
  %v6208 = vpop.permute.xlu0 %6207
  %6209 = vrot.lane.b32.xlu0 %v5601, 72
  %v6210 = vpop.permute.xlu0 %6209
  %6211 = vrot.lane.b32.xlu0 %v5602, 72
  %v6212 = vpop.permute.xlu0 %6211
  %6213 = vrot.lane.b32.xlu0 %v5603, 72
  %v6214 = vpop.permute.xlu0 %6213
  %6215 = vrot.lane.b32.xlu0 %v5604, 72
  %v6216 = vpop.permute.xlu0 %6215
  %6217 = vrot.lane.b32.xlu0 %v5605, 72
  %v6218 = vpop.permute.xlu0 %6217
  %6219 = vrot.lane.b32.xlu0 %v5606, 72
  %v6220 = vpop.permute.xlu0 %6219
  %v6221 = vsel %vm480, %v6166, %v6168
  %v6222 = vsel %vm480, %v6168, %v6170
  %v6223 = vsel %vm480, %v6170, %v6172
  %v6224 = vsel %vm480, %v6172, %v6174
  %v6225 = vsel %vm480, %v6174, %v6176
  %v6226 = vsel %vm480, %v6176, %v6178
  %v6227 = vsel %vm480, %v6180, %v6182
  %v6228 = vsel %vm480, %v6182, %v6184
  %v6229 = vsel %vm480, %v6184, %v6186
  %v6230 = vsel %vm480, %v6186, %v6188
  %v6231 = vsel %vm480, %v6188, %v6190
  %v6232 = vsel %vm480, %v6190, %v6192
  %v6233 = vsel %vm480, %v6194, %v6196
  %v6234 = vsel %vm480, %v6196, %v6198
  %v6235 = vsel %vm480, %v6198, %v6200
  %v6236 = vsel %vm480, %v6200, %v6202
  %v6237 = vsel %vm480, %v6202, %v6204
  %v6238 = vsel %vm480, %v6204, %v6206
  %v6239 = vsel %vm480, %v6208, %v6210
  %v6240 = vsel %vm480, %v6210, %v6212
  %v6241 = vsel %vm480, %v6212, %v6214
  %v6242 = vsel %vm480, %v6214, %v6216
  %v6243 = vsel %vm480, %v6216, %v6218
  %v6244 = vsel %vm480, %v6218, %v6220
  %6271 = vrot.lane.b32.xlu0 %v5579, 71
  %v6272 = vpop.permute.xlu0 %6271
  %6273 = vrot.lane.b32.xlu0 %v5580, 71
  %v6274 = vpop.permute.xlu0 %6273
  %6275 = vrot.lane.b32.xlu0 %v5581, 71
  %v6276 = vpop.permute.xlu0 %6275
  %6277 = vrot.lane.b32.xlu0 %v5582, 71
  %v6278 = vpop.permute.xlu0 %6277
  %6279 = vrot.lane.b32.xlu0 %v5583, 71
  %v6280 = vpop.permute.xlu0 %6279
  %6281 = vrot.lane.b32.xlu0 %v5584, 71
  %v6282 = vpop.permute.xlu0 %6281
  %6283 = vrot.lane.b32.xlu0 %v5585, 71
  %v6284 = vpop.permute.xlu0 %6283
  %6285 = vrot.lane.b32.xlu0 %v5586, 71
  %v6286 = vpop.permute.xlu0 %6285
  %6287 = vrot.lane.b32.xlu0 %v5587, 71
  %v6288 = vpop.permute.xlu0 %6287
  %6289 = vrot.lane.b32.xlu0 %v5588, 71
  %v6290 = vpop.permute.xlu0 %6289
  %6291 = vrot.lane.b32.xlu0 %v5589, 71
  %v6292 = vpop.permute.xlu0 %6291
  %6293 = vrot.lane.b32.xlu0 %v5590, 71
  %v6294 = vpop.permute.xlu0 %6293
  %6295 = vrot.lane.b32.xlu0 %v5591, 71
  %v6296 = vpop.permute.xlu0 %6295
  %6297 = vrot.lane.b32.xlu0 %v5592, 71
  %v6298 = vpop.permute.xlu0 %6297
  %6299 = vrot.lane.b32.xlu0 %v5593, 71
  %v6300 = vpop.permute.xlu0 %6299
  %6301 = vrot.lane.b32.xlu0 %v5594, 71
  %v6302 = vpop.permute.xlu0 %6301
  %6303 = vrot.lane.b32.xlu0 %v5595, 71
  %v6304 = vpop.permute.xlu0 %6303
  %6305 = vrot.lane.b32.xlu0 %v5596, 71
  %v6306 = vpop.permute.xlu0 %6305
  %6307 = vrot.lane.b32.xlu0 %v5597, 71
  %v6308 = vpop.permute.xlu0 %6307
  %6309 = vrot.lane.b32.xlu0 %v5598, 71
  %v6310 = vpop.permute.xlu0 %6309
  %6311 = vrot.lane.b32.xlu0 %v5599, 71
  %v6312 = vpop.permute.xlu0 %6311
  %6313 = vrot.lane.b32.xlu0 %v5600, 71
  %v6314 = vpop.permute.xlu0 %6313
  %6315 = vrot.lane.b32.xlu0 %v5601, 71
  %v6316 = vpop.permute.xlu0 %6315
  %6317 = vrot.lane.b32.xlu0 %v5602, 71
  %v6318 = vpop.permute.xlu0 %6317
  %6319 = vrot.lane.b32.xlu0 %v5603, 71
  %v6320 = vpop.permute.xlu0 %6319
  %6321 = vrot.lane.b32.xlu0 %v5604, 71
  %v6322 = vpop.permute.xlu0 %6321
  %6323 = vrot.lane.b32.xlu0 %v5605, 71
  %v6324 = vpop.permute.xlu0 %6323
  %6325 = vrot.lane.b32.xlu0 %v5606, 71
  %v6326 = vpop.permute.xlu0 %6325
  %v6327 = vsel %vm548, %v6272, %v6274
  %v6328 = vsel %vm548, %v6274, %v6276
  %v6329 = vsel %vm548, %v6276, %v6278
  %v6330 = vsel %vm548, %v6278, %v6280
  %v6331 = vsel %vm548, %v6280, %v6282
  %v6332 = vsel %vm548, %v6282, %v6284
  %v6333 = vsel %vm548, %v6286, %v6288
  %v6334 = vsel %vm548, %v6288, %v6290
  %v6335 = vsel %vm548, %v6290, %v6292
  %v6336 = vsel %vm548, %v6292, %v6294
  %v6337 = vsel %vm548, %v6294, %v6296
  %v6338 = vsel %vm548, %v6296, %v6298
  %v6339 = vsel %vm548, %v6300, %v6302
  %v6340 = vsel %vm548, %v6302, %v6304
  %v6341 = vsel %vm548, %v6304, %v6306
  %v6342 = vsel %vm548, %v6306, %v6308
  %v6343 = vsel %vm548, %v6308, %v6310
  %v6344 = vsel %vm548, %v6310, %v6312
  %v6345 = vsel %vm548, %v6314, %v6316
  %v6346 = vsel %vm548, %v6316, %v6318
  %v6347 = vsel %vm548, %v6318, %v6320
  %v6348 = vsel %vm548, %v6320, %v6322
  %v6349 = vsel %vm548, %v6322, %v6324
  %v6350 = vsel %vm548, %v6324, %v6326
  %6377 = vrot.lane.b32.xlu0 %v5579, 70
  %v6378 = vpop.permute.xlu0 %6377
  %6379 = vrot.lane.b32.xlu0 %v5580, 70
  %v6380 = vpop.permute.xlu0 %6379
  %6381 = vrot.lane.b32.xlu0 %v5581, 70
  %v6382 = vpop.permute.xlu0 %6381
  %6383 = vrot.lane.b32.xlu0 %v5582, 70
  %v6384 = vpop.permute.xlu0 %6383
  %6385 = vrot.lane.b32.xlu0 %v5583, 70
  %v6386 = vpop.permute.xlu0 %6385
  %6387 = vrot.lane.b32.xlu0 %v5584, 70
  %v6388 = vpop.permute.xlu0 %6387
  %6389 = vrot.lane.b32.xlu0 %v5585, 70
  %v6390 = vpop.permute.xlu0 %6389
  %6391 = vrot.lane.b32.xlu0 %v5586, 70
  %v6392 = vpop.permute.xlu0 %6391
  %6393 = vrot.lane.b32.xlu0 %v5587, 70
  %v6394 = vpop.permute.xlu0 %6393
  %6395 = vrot.lane.b32.xlu0 %v5588, 70
  %v6396 = vpop.permute.xlu0 %6395
  %6397 = vrot.lane.b32.xlu0 %v5589, 70
  %v6398 = vpop.permute.xlu0 %6397
  %6399 = vrot.lane.b32.xlu0 %v5590, 70
  %v6400 = vpop.permute.xlu0 %6399
  %6401 = vrot.lane.b32.xlu0 %v5591, 70
  %v6402 = vpop.permute.xlu0 %6401
  %6403 = vrot.lane.b32.xlu0 %v5592, 70
  %v6404 = vpop.permute.xlu0 %6403
  %6405 = vrot.lane.b32.xlu0 %v5593, 70
  %v6406 = vpop.permute.xlu0 %6405
  %6407 = vrot.lane.b32.xlu0 %v5594, 70
  %v6408 = vpop.permute.xlu0 %6407
  %6409 = vrot.lane.b32.xlu0 %v5595, 70
  %v6410 = vpop.permute.xlu0 %6409
  %6411 = vrot.lane.b32.xlu0 %v5596, 70
  %v6412 = vpop.permute.xlu0 %6411
  %6413 = vrot.lane.b32.xlu0 %v5597, 70
  %v6414 = vpop.permute.xlu0 %6413
  %6415 = vrot.lane.b32.xlu0 %v5598, 70
  %v6416 = vpop.permute.xlu0 %6415
  %6417 = vrot.lane.b32.xlu0 %v5599, 70
  %v6418 = vpop.permute.xlu0 %6417
  %6419 = vrot.lane.b32.xlu0 %v5600, 70
  %v6420 = vpop.permute.xlu0 %6419
  %6421 = vrot.lane.b32.xlu0 %v5601, 70
  %v6422 = vpop.permute.xlu0 %6421
  %6423 = vrot.lane.b32.xlu0 %v5602, 70
  %v6424 = vpop.permute.xlu0 %6423
  %6425 = vrot.lane.b32.xlu0 %v5603, 70
  %v6426 = vpop.permute.xlu0 %6425
  %6427 = vrot.lane.b32.xlu0 %v5604, 70
  %v6428 = vpop.permute.xlu0 %6427
  %6429 = vrot.lane.b32.xlu0 %v5605, 70
  %v6430 = vpop.permute.xlu0 %6429
  %6431 = vrot.lane.b32.xlu0 %v5606, 70
  %v6432 = vpop.permute.xlu0 %6431
  %v6433 = vsel %vm616, %v6378, %v6380
  %v6434 = vsel %vm616, %v6380, %v6382
  %v6435 = vsel %vm616, %v6382, %v6384
  %v6436 = vsel %vm616, %v6384, %v6386
  %v6437 = vsel %vm616, %v6386, %v6388
  %v6438 = vsel %vm616, %v6388, %v6390
  %v6439 = vsel %vm616, %v6392, %v6394
  %v6440 = vsel %vm616, %v6394, %v6396
  %v6441 = vsel %vm616, %v6396, %v6398
  %v6442 = vsel %vm616, %v6398, %v6400
  %v6443 = vsel %vm616, %v6400, %v6402
  %v6444 = vsel %vm616, %v6402, %v6404
  %v6445 = vsel %vm616, %v6406, %v6408
  %v6446 = vsel %vm616, %v6408, %v6410
  %v6447 = vsel %vm616, %v6410, %v6412
  %v6448 = vsel %vm616, %v6412, %v6414
  %v6449 = vsel %vm616, %v6414, %v6416
  %v6450 = vsel %vm616, %v6416, %v6418
  %v6451 = vsel %vm616, %v6420, %v6422
  %v6452 = vsel %vm616, %v6422, %v6424
  %v6453 = vsel %vm616, %v6424, %v6426
  %v6454 = vsel %vm616, %v6426, %v6428
  %v6455 = vsel %vm616, %v6428, %v6430
  %v6456 = vsel %vm616, %v6430, %v6432
  %6484 = vset.pattern.permute.xlu0 0
  %6485 = vperm.xlu0 %6484, %v57
  %v6486 = vpop.permute.xlu0 %6485
  %v6489 = vsel %vm3164, %v35, 0
  %6491 = vmatpush.msra.mxu0 %v6339
  %6492 = vmatpush.msra.mxu0 %v6327
  %6493 = vmatpush.msra.mxu0 %v6233
  %6494 = vmatpush.msra.mxu0 %v6221
  %6495 = vmatpush.msra.mxu0 %v6127
  %6496 = vmatpush.msra.mxu0 %v6115
  %6497 = vmatpush.msra.mxu0 %v6021
  %6498 = vmatpush.msra.mxu0 %v6009
  %6499 = vmatpush.msra.mxu0 %v5915
  %6500 = vmatpush.msra.mxu0 %v5903
  %6501 = vmatpush.msra.mxu0 %v5809
  %6502 = vmatpush.msra.mxu0 %v5797
  %6503 = vmatpush.msra.mxu0 %v5703
  %6504 = vmatpush.msra.mxu0 %v5691
  %6505 = vmatpush.msra.mxu0 %v5593
  %6506 = vmatpush.msra.mxu0 %v5579
  %6507 = vmatmul.f32.gmra.mxu0 %v34
  %v6508 = vpop.f32.mrf.mxu0
  %v6509 = vadd.f32 %v6486, %v6508
  %6510 = vdwg.mxu0
  %6511 = vmatpush.msra.mxu0 0.0
  %6512 = vmatpush.msra.mxu0 0.0
  %6513 = vmatpush.msra.mxu0 0.0
  %6514 = vmatpush.msra.mxu0 0.0
  %6515 = vmatpush.msra.mxu0 0.0
  %6516 = vmatpush.msra.mxu0 0.0
  %6517 = vmatpush.msra.mxu0 0.0
  %6518 = vmatpush.msra.mxu0 0.0
  %6519 = vmatpush.msra.mxu0 0.0
  %6520 = vmatpush.msra.mxu0 0.0
  %6521 = vmatpush.msra.mxu0 0.0
  %6522 = vmatpush.msra.mxu0 0.0
  %6523 = vmatpush.msra.mxu0 0.0
  %6524 = vmatpush.msra.mxu0 0.0
  %6525 = vmatpush.msra.mxu0 %v6445
  %6526 = vmatpush.msra.mxu0 %v6433
  %6527 = vmatmul.f32.gmra.mxu0 %v6489
  %v6528 = vpop.f32.mrf.mxu0
  %v6529 = vadd.f32 %v6509, %v6528
  %6530 = vdwg.mxu0
  %6531 = vmatpush.msra.mxu0 %v6340
  %6532 = vmatpush.msra.mxu0 %v6328
  %6533 = vmatpush.msra.mxu0 %v6234
  %6534 = vmatpush.msra.mxu0 %v6222
  %6535 = vmatpush.msra.mxu0 %v6128
  %6536 = vmatpush.msra.mxu0 %v6116
  %6537 = vmatpush.msra.mxu0 %v6022
  %6538 = vmatpush.msra.mxu0 %v6010
  %6539 = vmatpush.msra.mxu0 %v5916
  %6540 = vmatpush.msra.mxu0 %v5904
  %6541 = vmatpush.msra.mxu0 %v5810
  %6542 = vmatpush.msra.mxu0 %v5798
  %6543 = vmatpush.msra.mxu0 %v5704
  %6544 = vmatpush.msra.mxu0 %v5692
  %6545 = vmatpush.msra.mxu0 %v5594
  %6546 = vmatpush.msra.mxu0 %v5580
  %6547 = vmatmul.f32.gmra.mxu0 %v34
  %v6548 = vpop.f32.mrf.mxu0
  %v6549 = vadd.f32 %v6486, %v6548
  %6550 = vdwg.mxu0
  %6551 = vmatpush.msra.mxu0 0.0
  %6552 = vmatpush.msra.mxu0 0.0
  %6553 = vmatpush.msra.mxu0 0.0
  %6554 = vmatpush.msra.mxu0 0.0
  %6555 = vmatpush.msra.mxu0 0.0
  %6556 = vmatpush.msra.mxu0 0.0
  %6557 = vmatpush.msra.mxu0 0.0
  %6558 = vmatpush.msra.mxu0 0.0
  %6559 = vmatpush.msra.mxu0 0.0
  %6560 = vmatpush.msra.mxu0 0.0
  %6561 = vmatpush.msra.mxu0 0.0
  %6562 = vmatpush.msra.mxu0 0.0
  %6563 = vmatpush.msra.mxu0 0.0
  %6564 = vmatpush.msra.mxu0 0.0
  %6565 = vmatpush.msra.mxu0 %v6446
  %6566 = vmatpush.msra.mxu0 %v6434
  %6567 = vmatmul.f32.gmra.mxu0 %v6489
  %v6568 = vpop.f32.mrf.mxu0
  %v6569 = vadd.f32 %v6549, %v6568
  %6570 = vdwg.mxu0
  %6571 = vmatpush.msra.mxu0 %v6341
  %6572 = vmatpush.msra.mxu0 %v6329
  %6573 = vmatpush.msra.mxu0 %v6235
  %6574 = vmatpush.msra.mxu0 %v6223
  %6575 = vmatpush.msra.mxu0 %v6129
  %6576 = vmatpush.msra.mxu0 %v6117
  %6577 = vmatpush.msra.mxu0 %v6023
  %6578 = vmatpush.msra.mxu0 %v6011
  %6579 = vmatpush.msra.mxu0 %v5917
  %6580 = vmatpush.msra.mxu0 %v5905
  %6581 = vmatpush.msra.mxu0 %v5811
  %6582 = vmatpush.msra.mxu0 %v5799
  %6583 = vmatpush.msra.mxu0 %v5705
  %6584 = vmatpush.msra.mxu0 %v5693
  %6585 = vmatpush.msra.mxu0 %v5595
  %6586 = vmatpush.msra.mxu0 %v5581
  %6587 = vmatmul.f32.gmra.mxu0 %v34
  %v6588 = vpop.f32.mrf.mxu0
  %v6589 = vadd.f32 %v6486, %v6588
  %6590 = vdwg.mxu0
  %6591 = vmatpush.msra.mxu0 0.0
  %6592 = vmatpush.msra.mxu0 0.0
  %6593 = vmatpush.msra.mxu0 0.0
  %6594 = vmatpush.msra.mxu0 0.0
  %6595 = vmatpush.msra.mxu0 0.0
  %6596 = vmatpush.msra.mxu0 0.0
  %6597 = vmatpush.msra.mxu0 0.0
  %6598 = vmatpush.msra.mxu0 0.0
  %6599 = vmatpush.msra.mxu0 0.0
  %6600 = vmatpush.msra.mxu0 0.0
  %6601 = vmatpush.msra.mxu0 0.0
  %6602 = vmatpush.msra.mxu0 0.0
  %6603 = vmatpush.msra.mxu0 0.0
  %6604 = vmatpush.msra.mxu0 0.0
  %6605 = vmatpush.msra.mxu0 %v6447
  %6606 = vmatpush.msra.mxu0 %v6435
  %6607 = vmatmul.f32.gmra.mxu0 %v6489
  %v6608 = vpop.f32.mrf.mxu0
  %v6609 = vadd.f32 %v6589, %v6608
  %6610 = vdwg.mxu0
  %6611 = vmatpush.msra.mxu0 %v6342
  %6612 = vmatpush.msra.mxu0 %v6330
  %6613 = vmatpush.msra.mxu0 %v6236
  %6614 = vmatpush.msra.mxu0 %v6224
  %6615 = vmatpush.msra.mxu0 %v6130
  %6616 = vmatpush.msra.mxu0 %v6118
  %6617 = vmatpush.msra.mxu0 %v6024
  %6618 = vmatpush.msra.mxu0 %v6012
  %6619 = vmatpush.msra.mxu0 %v5918
  %6620 = vmatpush.msra.mxu0 %v5906
  %6621 = vmatpush.msra.mxu0 %v5812
  %6622 = vmatpush.msra.mxu0 %v5800
  %6623 = vmatpush.msra.mxu0 %v5706
  %6624 = vmatpush.msra.mxu0 %v5694
  %6625 = vmatpush.msra.mxu0 %v5596
  %6626 = vmatpush.msra.mxu0 %v5582
  %6627 = vmatmul.f32.gmra.mxu0 %v34
  %v6628 = vpop.f32.mrf.mxu0
  %v6629 = vadd.f32 %v6486, %v6628
  %6630 = vdwg.mxu0
  %6631 = vmatpush.msra.mxu0 0.0
  %6632 = vmatpush.msra.mxu0 0.0
  %6633 = vmatpush.msra.mxu0 0.0
  %6634 = vmatpush.msra.mxu0 0.0
  %6635 = vmatpush.msra.mxu0 0.0
  %6636 = vmatpush.msra.mxu0 0.0
  %6637 = vmatpush.msra.mxu0 0.0
  %6638 = vmatpush.msra.mxu0 0.0
  %6639 = vmatpush.msra.mxu0 0.0
  %6640 = vmatpush.msra.mxu0 0.0
  %6641 = vmatpush.msra.mxu0 0.0
  %6642 = vmatpush.msra.mxu0 0.0
  %6643 = vmatpush.msra.mxu0 0.0
  %6644 = vmatpush.msra.mxu0 0.0
  %6645 = vmatpush.msra.mxu0 %v6448
  %6646 = vmatpush.msra.mxu0 %v6436
  %6647 = vmatmul.f32.gmra.mxu0 %v6489
  %v6648 = vpop.f32.mrf.mxu0
  %v6649 = vadd.f32 %v6629, %v6648
  %6650 = vdwg.mxu0
  %6651 = vmatpush.msra.mxu0 %v6343
  %6652 = vmatpush.msra.mxu0 %v6331
  %6653 = vmatpush.msra.mxu0 %v6237
  %6654 = vmatpush.msra.mxu0 %v6225
  %6655 = vmatpush.msra.mxu0 %v6131
  %6656 = vmatpush.msra.mxu0 %v6119
  %6657 = vmatpush.msra.mxu0 %v6025
  %6658 = vmatpush.msra.mxu0 %v6013
  %6659 = vmatpush.msra.mxu0 %v5919
  %6660 = vmatpush.msra.mxu0 %v5907
  %6661 = vmatpush.msra.mxu0 %v5813
  %6662 = vmatpush.msra.mxu0 %v5801
  %6663 = vmatpush.msra.mxu0 %v5707
  %6664 = vmatpush.msra.mxu0 %v5695
  %6665 = vmatpush.msra.mxu0 %v5597
  %6666 = vmatpush.msra.mxu0 %v5583
  %6667 = vmatmul.f32.gmra.mxu0 %v34
  %v6668 = vpop.f32.mrf.mxu0
  %v6669 = vadd.f32 %v6486, %v6668
  %6670 = vdwg.mxu0
  %6671 = vmatpush.msra.mxu0 0.0
  %6672 = vmatpush.msra.mxu0 0.0
  %6673 = vmatpush.msra.mxu0 0.0
  %6674 = vmatpush.msra.mxu0 0.0
  %6675 = vmatpush.msra.mxu0 0.0
  %6676 = vmatpush.msra.mxu0 0.0
  %6677 = vmatpush.msra.mxu0 0.0
  %6678 = vmatpush.msra.mxu0 0.0
  %6679 = vmatpush.msra.mxu0 0.0
  %6680 = vmatpush.msra.mxu0 0.0
  %6681 = vmatpush.msra.mxu0 0.0
  %6682 = vmatpush.msra.mxu0 0.0
  %6683 = vmatpush.msra.mxu0 0.0
  %6684 = vmatpush.msra.mxu0 0.0
  %6685 = vmatpush.msra.mxu0 %v6449
  %6686 = vmatpush.msra.mxu0 %v6437
  %6687 = vmatmul.f32.gmra.mxu0 %v6489
  %v6688 = vpop.f32.mrf.mxu0
  %v6689 = vadd.f32 %v6669, %v6688
  %6690 = vdwg.mxu0
  %6691 = vmatpush.msra.mxu0 %v6344
  %6692 = vmatpush.msra.mxu0 %v6332
  %6693 = vmatpush.msra.mxu0 %v6238
  %6694 = vmatpush.msra.mxu0 %v6226
  %6695 = vmatpush.msra.mxu0 %v6132
  %6696 = vmatpush.msra.mxu0 %v6120
  %6697 = vmatpush.msra.mxu0 %v6026
  %6698 = vmatpush.msra.mxu0 %v6014
  %6699 = vmatpush.msra.mxu0 %v5920
  %6700 = vmatpush.msra.mxu0 %v5908
  %6701 = vmatpush.msra.mxu0 %v5814
  %6702 = vmatpush.msra.mxu0 %v5802
  %6703 = vmatpush.msra.mxu0 %v5708
  %6704 = vmatpush.msra.mxu0 %v5696
  %6705 = vmatpush.msra.mxu0 %v5598
  %6706 = vmatpush.msra.mxu0 %v5584
  %6707 = vmatmul.f32.gmra.mxu0 %v34
  %v6708 = vpop.f32.mrf.mxu0
  %v6709 = vadd.f32 %v6486, %v6708
  %6710 = vdwg.mxu0
  %6711 = vmatpush.msra.mxu0 0.0
  %6712 = vmatpush.msra.mxu0 0.0
  %6713 = vmatpush.msra.mxu0 0.0
  %6714 = vmatpush.msra.mxu0 0.0
  %6715 = vmatpush.msra.mxu0 0.0
  %6716 = vmatpush.msra.mxu0 0.0
  %6717 = vmatpush.msra.mxu0 0.0
  %6718 = vmatpush.msra.mxu0 0.0
  %6719 = vmatpush.msra.mxu0 0.0
  %6720 = vmatpush.msra.mxu0 0.0
  %6721 = vmatpush.msra.mxu0 0.0
  %6722 = vmatpush.msra.mxu0 0.0
  %6723 = vmatpush.msra.mxu0 0.0
  %6724 = vmatpush.msra.mxu0 0.0
  %6725 = vmatpush.msra.mxu0 %v6450
  %6726 = vmatpush.msra.mxu0 %v6438
  %6727 = vmatmul.f32.gmra.mxu0 %v6489
  %v6728 = vpop.f32.mrf.mxu0
  %v6729 = vadd.f32 %v6709, %v6728
  %6730 = vdwg.mxu0
  %6731 = vmatpush.msra.mxu0 %v6345
  %6732 = vmatpush.msra.mxu0 %v6333
  %6733 = vmatpush.msra.mxu0 %v6239
  %6734 = vmatpush.msra.mxu0 %v6227
  %6735 = vmatpush.msra.mxu0 %v6133
  %6736 = vmatpush.msra.mxu0 %v6121
  %6737 = vmatpush.msra.mxu0 %v6027
  %6738 = vmatpush.msra.mxu0 %v6015
  %6739 = vmatpush.msra.mxu0 %v5921
  %6740 = vmatpush.msra.mxu0 %v5909
  %6741 = vmatpush.msra.mxu0 %v5815
  %6742 = vmatpush.msra.mxu0 %v5803
  %6743 = vmatpush.msra.mxu0 %v5709
  %6744 = vmatpush.msra.mxu0 %v5697
  %6745 = vmatpush.msra.mxu0 %v5600
  %6746 = vmatpush.msra.mxu0 %v5586
  %6747 = vmatmul.f32.gmra.mxu0 %v34
  %v6748 = vpop.f32.mrf.mxu0
  %v6749 = vadd.f32 %v6486, %v6748
  %6750 = vdwg.mxu0
  %6751 = vmatpush.msra.mxu0 0.0
  %6752 = vmatpush.msra.mxu0 0.0
  %6753 = vmatpush.msra.mxu0 0.0
  %6754 = vmatpush.msra.mxu0 0.0
  %6755 = vmatpush.msra.mxu0 0.0
  %6756 = vmatpush.msra.mxu0 0.0
  %6757 = vmatpush.msra.mxu0 0.0
  %6758 = vmatpush.msra.mxu0 0.0
  %6759 = vmatpush.msra.mxu0 0.0
  %6760 = vmatpush.msra.mxu0 0.0
  %6761 = vmatpush.msra.mxu0 0.0
  %6762 = vmatpush.msra.mxu0 0.0
  %6763 = vmatpush.msra.mxu0 0.0
  %6764 = vmatpush.msra.mxu0 0.0
  %6765 = vmatpush.msra.mxu0 %v6451
  %6766 = vmatpush.msra.mxu0 %v6439
  %6767 = vmatmul.f32.gmra.mxu0 %v6489
  %v6768 = vpop.f32.mrf.mxu0
  %v6769 = vadd.f32 %v6749, %v6768
  %6770 = vdwg.mxu0
  %6771 = vmatpush.msra.mxu0 %v6346
  %6772 = vmatpush.msra.mxu0 %v6334
  %6773 = vmatpush.msra.mxu0 %v6240
  %6774 = vmatpush.msra.mxu0 %v6228
  %6775 = vmatpush.msra.mxu0 %v6134
  %6776 = vmatpush.msra.mxu0 %v6122
  %6777 = vmatpush.msra.mxu0 %v6028
  %6778 = vmatpush.msra.mxu0 %v6016
  %6779 = vmatpush.msra.mxu0 %v5922
  %6780 = vmatpush.msra.mxu0 %v5910
  %6781 = vmatpush.msra.mxu0 %v5816
  %6782 = vmatpush.msra.mxu0 %v5804
  %6783 = vmatpush.msra.mxu0 %v5710
  %6784 = vmatpush.msra.mxu0 %v5698
  %6785 = vmatpush.msra.mxu0 %v5601
  %6786 = vmatpush.msra.mxu0 %v5587
  %6787 = vmatmul.f32.gmra.mxu0 %v34
  %v6788 = vpop.f32.mrf.mxu0
  %v6789 = vadd.f32 %v6486, %v6788
  %6790 = vdwg.mxu0
  %6791 = vmatpush.msra.mxu0 0.0
  %6792 = vmatpush.msra.mxu0 0.0
  %6793 = vmatpush.msra.mxu0 0.0
  %6794 = vmatpush.msra.mxu0 0.0
  %6795 = vmatpush.msra.mxu0 0.0
  %6796 = vmatpush.msra.mxu0 0.0
  %6797 = vmatpush.msra.mxu0 0.0
  %6798 = vmatpush.msra.mxu0 0.0
  %6799 = vmatpush.msra.mxu0 0.0
  %6800 = vmatpush.msra.mxu0 0.0
  %6801 = vmatpush.msra.mxu0 0.0
  %6802 = vmatpush.msra.mxu0 0.0
  %6803 = vmatpush.msra.mxu0 0.0
  %6804 = vmatpush.msra.mxu0 0.0
  %6805 = vmatpush.msra.mxu0 %v6452
  %6806 = vmatpush.msra.mxu0 %v6440
  %6807 = vmatmul.f32.gmra.mxu0 %v6489
  %v6808 = vpop.f32.mrf.mxu0
  %v6809 = vadd.f32 %v6789, %v6808
  %6810 = vdwg.mxu0
  %6811 = vmatpush.msra.mxu0 %v6347
  %6812 = vmatpush.msra.mxu0 %v6335
  %6813 = vmatpush.msra.mxu0 %v6241
  %6814 = vmatpush.msra.mxu0 %v6229
  %6815 = vmatpush.msra.mxu0 %v6135
  %6816 = vmatpush.msra.mxu0 %v6123
  %6817 = vmatpush.msra.mxu0 %v6029
  %6818 = vmatpush.msra.mxu0 %v6017
  %6819 = vmatpush.msra.mxu0 %v5923
  %6820 = vmatpush.msra.mxu0 %v5911
  %6821 = vmatpush.msra.mxu0 %v5817
  %6822 = vmatpush.msra.mxu0 %v5805
  %6823 = vmatpush.msra.mxu0 %v5711
  %6824 = vmatpush.msra.mxu0 %v5699
  %6825 = vmatpush.msra.mxu0 %v5602
  %6826 = vmatpush.msra.mxu0 %v5588
  %6827 = vmatmul.f32.gmra.mxu0 %v34
  %v6828 = vpop.f32.mrf.mxu0
  %v6829 = vadd.f32 %v6486, %v6828
  %6830 = vdwg.mxu0
  %6831 = vmatpush.msra.mxu0 0.0
  %6832 = vmatpush.msra.mxu0 0.0
  %6833 = vmatpush.msra.mxu0 0.0
  %6834 = vmatpush.msra.mxu0 0.0
  %6835 = vmatpush.msra.mxu0 0.0
  %6836 = vmatpush.msra.mxu0 0.0
  %6837 = vmatpush.msra.mxu0 0.0
  %6838 = vmatpush.msra.mxu0 0.0
  %6839 = vmatpush.msra.mxu0 0.0
  %6840 = vmatpush.msra.mxu0 0.0
  %6841 = vmatpush.msra.mxu0 0.0
  %6842 = vmatpush.msra.mxu0 0.0
  %6843 = vmatpush.msra.mxu0 0.0
  %6844 = vmatpush.msra.mxu0 0.0
  %6845 = vmatpush.msra.mxu0 %v6453
  %6846 = vmatpush.msra.mxu0 %v6441
  %6847 = vmatmul.f32.gmra.mxu0 %v6489
  %v6848 = vpop.f32.mrf.mxu0
  %v6849 = vadd.f32 %v6829, %v6848
  %6850 = vdwg.mxu0
  %6851 = vmatpush.msra.mxu0 %v6348
  %6852 = vmatpush.msra.mxu0 %v6336
  %6853 = vmatpush.msra.mxu0 %v6242
  %6854 = vmatpush.msra.mxu0 %v6230
  %6855 = vmatpush.msra.mxu0 %v6136
  %6856 = vmatpush.msra.mxu0 %v6124
  %6857 = vmatpush.msra.mxu0 %v6030
  %6858 = vmatpush.msra.mxu0 %v6018
  %6859 = vmatpush.msra.mxu0 %v5924
  %6860 = vmatpush.msra.mxu0 %v5912
  %6861 = vmatpush.msra.mxu0 %v5818
  %6862 = vmatpush.msra.mxu0 %v5806
  %6863 = vmatpush.msra.mxu0 %v5712
  %6864 = vmatpush.msra.mxu0 %v5700
  %6865 = vmatpush.msra.mxu0 %v5603
  %6866 = vmatpush.msra.mxu0 %v5589
  %6867 = vmatmul.f32.gmra.mxu0 %v34
  %v6868 = vpop.f32.mrf.mxu0
  %v6869 = vadd.f32 %v6486, %v6868
  %6870 = vdwg.mxu0
  %6871 = vmatpush.msra.mxu0 0.0
  %6872 = vmatpush.msra.mxu0 0.0
  %6873 = vmatpush.msra.mxu0 0.0
  %6874 = vmatpush.msra.mxu0 0.0
  %6875 = vmatpush.msra.mxu0 0.0
  %6876 = vmatpush.msra.mxu0 0.0
  %6877 = vmatpush.msra.mxu0 0.0
  %6878 = vmatpush.msra.mxu0 0.0
  %6879 = vmatpush.msra.mxu0 0.0
  %6880 = vmatpush.msra.mxu0 0.0
  %6881 = vmatpush.msra.mxu0 0.0
  %6882 = vmatpush.msra.mxu0 0.0
  %6883 = vmatpush.msra.mxu0 0.0
  %6884 = vmatpush.msra.mxu0 0.0
  %6885 = vmatpush.msra.mxu0 %v6454
  %6886 = vmatpush.msra.mxu0 %v6442
  %6887 = vmatmul.f32.gmra.mxu0 %v6489
  %v6888 = vpop.f32.mrf.mxu0
  %v6889 = vadd.f32 %v6869, %v6888
  %6890 = vdwg.mxu0
  %6891 = vmatpush.msra.mxu0 %v6349
  %6892 = vmatpush.msra.mxu0 %v6337
  %6893 = vmatpush.msra.mxu0 %v6243
  %6894 = vmatpush.msra.mxu0 %v6231
  %6895 = vmatpush.msra.mxu0 %v6137
  %6896 = vmatpush.msra.mxu0 %v6125
  %6897 = vmatpush.msra.mxu0 %v6031
  %6898 = vmatpush.msra.mxu0 %v6019
  %6899 = vmatpush.msra.mxu0 %v5925
  %6900 = vmatpush.msra.mxu0 %v5913
  %6901 = vmatpush.msra.mxu0 %v5819
  %6902 = vmatpush.msra.mxu0 %v5807
  %6903 = vmatpush.msra.mxu0 %v5713
  %6904 = vmatpush.msra.mxu0 %v5701
  %6905 = vmatpush.msra.mxu0 %v5604
  %6906 = vmatpush.msra.mxu0 %v5590
  %6907 = vmatmul.f32.gmra.mxu0 %v34
  %v6908 = vpop.f32.mrf.mxu0
  %v6909 = vadd.f32 %v6486, %v6908
  %6910 = vdwg.mxu0
  %6911 = vmatpush.msra.mxu0 0.0
  %6912 = vmatpush.msra.mxu0 0.0
  %6913 = vmatpush.msra.mxu0 0.0
  %6914 = vmatpush.msra.mxu0 0.0
  %6915 = vmatpush.msra.mxu0 0.0
  %6916 = vmatpush.msra.mxu0 0.0
  %6917 = vmatpush.msra.mxu0 0.0
  %6918 = vmatpush.msra.mxu0 0.0
  %6919 = vmatpush.msra.mxu0 0.0
  %6920 = vmatpush.msra.mxu0 0.0
  %6921 = vmatpush.msra.mxu0 0.0
  %6922 = vmatpush.msra.mxu0 0.0
  %6923 = vmatpush.msra.mxu0 0.0
  %6924 = vmatpush.msra.mxu0 0.0
  %6925 = vmatpush.msra.mxu0 %v6455
  %6926 = vmatpush.msra.mxu0 %v6443
  %6927 = vmatmul.f32.gmra.mxu0 %v6489
  %v6928 = vpop.f32.mrf.mxu0
  %v6929 = vadd.f32 %v6909, %v6928
  %6930 = vdwg.mxu0
  %6931 = vmatpush.msra.mxu0 %v6350
  %6932 = vmatpush.msra.mxu0 %v6338
  %6933 = vmatpush.msra.mxu0 %v6244
  %6934 = vmatpush.msra.mxu0 %v6232
  %6935 = vmatpush.msra.mxu0 %v6138
  %6936 = vmatpush.msra.mxu0 %v6126
  %6937 = vmatpush.msra.mxu0 %v6032
  %6938 = vmatpush.msra.mxu0 %v6020
  %6939 = vmatpush.msra.mxu0 %v5926
  %6940 = vmatpush.msra.mxu0 %v5914
  %6941 = vmatpush.msra.mxu0 %v5820
  %6942 = vmatpush.msra.mxu0 %v5808
  %6943 = vmatpush.msra.mxu0 %v5714
  %6944 = vmatpush.msra.mxu0 %v5702
  %6945 = vmatpush.msra.mxu0 %v5605
  %6946 = vmatpush.msra.mxu0 %v5591
  %6947 = vmatmul.f32.gmra.mxu0 %v34
  %v6948 = vpop.f32.mrf.mxu0
  %v6949 = vadd.f32 %v6486, %v6948
  %6950 = vdwg.mxu0
  %6951 = vmatpush.msra.mxu0 0.0
  %6952 = vmatpush.msra.mxu0 0.0
  %6953 = vmatpush.msra.mxu0 0.0
  %6954 = vmatpush.msra.mxu0 0.0
  %6955 = vmatpush.msra.mxu0 0.0
  %6956 = vmatpush.msra.mxu0 0.0
  %6957 = vmatpush.msra.mxu0 0.0
  %6958 = vmatpush.msra.mxu0 0.0
  %6959 = vmatpush.msra.mxu0 0.0
  %6960 = vmatpush.msra.mxu0 0.0
  %6961 = vmatpush.msra.mxu0 0.0
  %6962 = vmatpush.msra.mxu0 0.0
  %6963 = vmatpush.msra.mxu0 0.0
  %6964 = vmatpush.msra.mxu0 0.0
  %6965 = vmatpush.msra.mxu0 %v6456
  %6966 = vmatpush.msra.mxu0 %v6444
  %6967 = vmatmul.f32.gmra.mxu0 %v6489
  %v6968 = vpop.f32.mrf.mxu0
  %v6969 = vadd.f32 %v6949, %v6968
  %6970 = vdwg.mxu0
  %6971 = vmatpush.msra.mxu0 %v6326
  %6972 = vmatpush.msra.mxu0 %v6298
  %6973 = vmatpush.msra.mxu0 %v6220
  %6974 = vmatpush.msra.mxu0 %v6192
  %6975 = vmatpush.msra.mxu0 %v6114
  %6976 = vmatpush.msra.mxu0 %v6086
  %6977 = vmatpush.msra.mxu0 %v6008
  %6978 = vmatpush.msra.mxu0 %v5980
  %6979 = vmatpush.msra.mxu0 %v5902
  %6980 = vmatpush.msra.mxu0 %v5874
  %6981 = vmatpush.msra.mxu0 %v5796
  %6982 = vmatpush.msra.mxu0 %v5768
  %6983 = vmatpush.msra.mxu0 %v5690
  %6984 = vmatpush.msra.mxu0 %v5662
  %6985 = vmatpush.msra.mxu0 %v5606
  %6986 = vmatpush.msra.mxu0 %v5592
  %6987 = vmatmul.f32.gmra.mxu0 %v34
  %v6988 = vpop.f32.mrf.mxu0
  %v6989 = vadd.f32 %v6486, %v6988
  %6990 = vdwg.mxu0
  %6991 = vmatpush.msra.mxu0 0.0
  %6992 = vmatpush.msra.mxu0 0.0
  %6993 = vmatpush.msra.mxu0 0.0
  %6994 = vmatpush.msra.mxu0 0.0
  %6995 = vmatpush.msra.mxu0 0.0
  %6996 = vmatpush.msra.mxu0 0.0
  %6997 = vmatpush.msra.mxu0 0.0
  %6998 = vmatpush.msra.mxu0 0.0
  %6999 = vmatpush.msra.mxu0 0.0
  %7000 = vmatpush.msra.mxu0 0.0
  %7001 = vmatpush.msra.mxu0 0.0
  %7002 = vmatpush.msra.mxu0 0.0
  %7003 = vmatpush.msra.mxu0 0.0
  %7004 = vmatpush.msra.mxu0 0.0
  %7005 = vmatpush.msra.mxu0 %v6432
  %7006 = vmatpush.msra.mxu0 %v6404
  %7007 = vmatmul.f32.gmra.mxu0 %v6489
  %v7008 = vpop.f32.mrf.mxu0
  %v7009 = vadd.f32 %v6989, %v7008
  %7010 = vdwg.mxu0
  %v7011 = vmax.f32 %v6529, 0.0
  %v7012 = vmax.f32 %v6569, 0.0
  %v7013 = vmax.f32 %v6609, 0.0
  %v7014 = vmax.f32 %v6649, 0.0
  %v7015 = vmax.f32 %v6689, 0.0
  %v7016 = vmax.f32 %v6729, 0.0
  %v7017 = vmax.f32 %v6769, 0.0
  %v7018 = vmax.f32 %v6809, 0.0
  %v7019 = vmax.f32 %v6849, 0.0
  %v7020 = vmax.f32 %v6889, 0.0
  %v7021 = vmax.f32 %v6929, 0.0
  %v7022 = vmax.f32 %v6969, 0.0
  %v7023 = vmax.f32 %v7009, 0.0
  %7035 = vrot.lane.b32.xlu0 %v7011, 127
  %v7036 = vpop.permute.xlu0 %7035
  %7037 = vrot.lane.b32.xlu0 %v7012, 127
  %v7038 = vpop.permute.xlu0 %7037
  %7039 = vrot.lane.b32.xlu0 %v7013, 127
  %v7040 = vpop.permute.xlu0 %7039
  %7041 = vrot.lane.b32.xlu0 %v7014, 127
  %v7042 = vpop.permute.xlu0 %7041
  %7043 = vrot.lane.b32.xlu0 %v7015, 127
  %v7044 = vpop.permute.xlu0 %7043
  %7045 = vrot.lane.b32.xlu0 %v7017, 127
  %v7046 = vpop.permute.xlu0 %7045
  %7047 = vrot.lane.b32.xlu0 %v7018, 127
  %v7048 = vpop.permute.xlu0 %7047
  %7049 = vrot.lane.b32.xlu0 %v7019, 127
  %v7050 = vpop.permute.xlu0 %7049
  %7051 = vrot.lane.b32.xlu0 %v7020, 127
  %v7052 = vpop.permute.xlu0 %7051
  %7053 = vrot.lane.b32.xlu0 %v7021, 127
  %v7054 = vpop.permute.xlu0 %7053
  %7055 = vrot.lane.b32.xlu0 %v7022, 127
  %v7056 = vpop.permute.xlu0 %7055
  %v7057 = vsel %vm140, %v7036, %v7038
  %v7058 = vsel %vm140, %v7038, %v7040
  %v7059 = vsel %vm140, %v7040, %v7042
  %v7060 = vsel %vm140, %v7042, %v7044
  %v7061 = vsel %vm140, %v7046, %v7048
  %v7062 = vsel %vm140, %v7048, %v7050
  %v7063 = vsel %vm140, %v7050, %v7052
  %v7064 = vsel %vm140, %v7052, %v7054
  %v7065 = vsel %vm140, %v7054, %v7056
  %v7075 = vmax.f32 %v7011, %v7057
  %v7076 = vmax.f32 %v7012, %v7058
  %v7077 = vmax.f32 %v7013, %v7059
  %v7078 = vmax.f32 %v7014, %v7060
  %v7079 = vmax.f32 %v7017, %v7061
  %v7080 = vmax.f32 %v7018, %v7062
  %v7081 = vmax.f32 %v7019, %v7063
  %v7082 = vmax.f32 %v7020, %v7064
  %v7083 = vmax.f32 %v7021, %v7065
  %7086 = vrot.lane.b32.xlu0 %v7016, 127
  %v7087 = vpop.permute.xlu0 %7086
  %7088 = vrot.lane.b32.xlu0 %v7023, 127
  %v7089 = vpop.permute.xlu0 %7088
  %v7090 = vsel %vm140, %v7044, %v7087
  %v7091 = vsel %vm140, %v7056, %v7089
  %v7094 = vmax.f32 %v7015, %v7090
  %v7095 = vmax.f32 %v7022, %v7091
  %7107 = vrot.lane.b32.xlu0 %v7075, 100
  %v7108 = vpop.permute.xlu0 %7107
  %7109 = vrot.lane.b32.xlu0 %v7076, 100
  %v7110 = vpop.permute.xlu0 %7109
  %7111 = vrot.lane.b32.xlu0 %v7077, 100
  %v7112 = vpop.permute.xlu0 %7111
  %7113 = vrot.lane.b32.xlu0 %v7078, 100
  %v7114 = vpop.permute.xlu0 %7113
  %7115 = vrot.lane.b32.xlu0 %v7094, 100
  %v7116 = vpop.permute.xlu0 %7115
  %7117 = vrot.lane.b32.xlu0 %v7079, 100
  %v7118 = vpop.permute.xlu0 %7117
  %7119 = vrot.lane.b32.xlu0 %v7080, 100
  %v7120 = vpop.permute.xlu0 %7119
  %7121 = vrot.lane.b32.xlu0 %v7081, 100
  %v7122 = vpop.permute.xlu0 %7121
  %7123 = vrot.lane.b32.xlu0 %v7082, 100
  %v7124 = vpop.permute.xlu0 %7123
  %7125 = vrot.lane.b32.xlu0 %v7083, 100
  %v7126 = vpop.permute.xlu0 %7125
  %7127 = vrot.lane.b32.xlu0 %v7095, 100
  %v7128 = vpop.permute.xlu0 %7127
  %v7129 = vsel %vm276, %v7108, %v7110
  %v7130 = vsel %vm276, %v7110, %v7112
  %v7131 = vsel %vm276, %v7112, %v7114
  %v7132 = vsel %vm276, %v7114, %v7116
  %v7133 = vsel %vm276, %v7118, %v7120
  %v7134 = vsel %vm276, %v7120, %v7122
  %v7135 = vsel %vm276, %v7122, %v7124
  %v7136 = vsel %vm276, %v7124, %v7126
  %v7137 = vsel %vm276, %v7126, %v7128
  %v7147 = vmax.f32 %v7075, %v7129
  %v7148 = vmax.f32 %v7076, %v7130
  %v7149 = vmax.f32 %v7077, %v7131
  %v7150 = vmax.f32 %v7078, %v7132
  %v7151 = vmax.f32 %v7079, %v7133
  %v7152 = vmax.f32 %v7080, %v7134
  %v7153 = vmax.f32 %v7081, %v7135
  %v7154 = vmax.f32 %v7082, %v7136
  %v7155 = vmax.f32 %v7083, %v7137
  %v7156 = vld [vmem:[%s4] sm:$0xff]
  %v7157 = vld [vmem:[%s4 + $0x8] sm:$0xff]
  %v7158 = vld [vmem:[%s4 + $0x10] sm:$0xff]
  %v7159 = vld [vmem:[%s4 + $0x18] sm:$0xff]
  %v7160 = vld [vmem:[%s4 + $0x20] sm:$0xff]
  %v7161 = vld [vmem:[%s4 + $0x28] sm:$0xff]
  %v7162 = vld [vmem:[%s4 + $0x30] sm:$0xff]
  %v7163 = vld [vmem:[%s4 + $0x38] sm:$0xff]
  %v7164 = vld [vmem:[%s4 + $0x40] sm:$0xff]
  %v7165 = vld [vmem:[%s4 + $0x48] sm:$0xff]
  %v7166 = vld [vmem:[%s4 + $0x50] sm:$0xff]
  %v7167 = vld [vmem:[%s4 + $0x58] sm:$0xff]
  %v7168 = vld [vmem:[%s4 + $0x60] sm:$0xff]
  %v7169 = vld [vmem:[%s4 + $0x68] sm:$0xff]
  %v7170 = vld [vmem:[%s4 + $0x70] sm:$0xff]
  %v7171 = vld [vmem:[%s4 + $0x78] sm:$0xff]
  %v7172 = vld [vmem:[%s4 + $0x80] sm:$0xff]
  %v7173 = vld [vmem:[%s4 + $0x88] sm:$0xff]
  %v7174 = vld [vmem:[%s4 + $0x90] sm:$0xff]
  %v7175 = vld [vmem:[%s4 + $0x98] sm:$0xff]
  %v7176 = vld [vmem:[%s4 + $0xa0] sm:$0xff]
  %v7177 = vld [vmem:[%s4 + $0xa8] sm:$0xff]
  %v7178 = vld [vmem:[%s4 + $0xb0] sm:$0xff]
  %v7179 = vld [vmem:[%s4 + $0xb8] sm:$0xff]
  %v7180 = vld [vmem:[%s4 + $0xc0] sm:$0xff]
  %v7181 = vld [vmem:[%s4 + $0xc8] sm:$0xff]
  %v7182 = vld [vmem:[%s4 + $0xd0] sm:$0xff]
  %v7183 = vld [vmem:[%s4 + $0xd8] sm:$0xff]
  %v7184 = vld [vmem:[%s4 + $0xe0] sm:$0xff]
  %v7185 = vld [vmem:[%s4 + $0xe8] sm:$0xff]
  %v7186 = vld [vmem:[%s4 + $0xf0] sm:$0xff]
  %v7187 = vld [vmem:[%s4 + $0xf8] sm:$0xff]
  %v7188 = vld [vmem:[%s4 + $0x100] sm:$0xff]
  %v7189 = vld [vmem:[%s4 + $0x108] sm:$0xff]
  %v7190 = vld [vmem:[%s4 + $0x110] sm:$0xff]
  %v7191 = vld [vmem:[%s4 + $0x118] sm:$0xff]
  %v7192 = vld [vmem:[%s4 + $0x120] sm:$0xff]
  %v7193 = vld [vmem:[%s4 + $0x128] sm:$0xff]
  %v7194 = vld [vmem:[%s4 + $0x130] sm:$0xff]
  %v7195 = vld [vmem:[%s4 + $0x138] sm:$0xff]
  %v7196 = vld [vmem:[%s4 + $0x140] sm:$0xff]
  %v7197 = vld [vmem:[%s4 + $0x148] sm:$0xff]
  %v7198 = vld [vmem:[%s4 + $0x150] sm:$0xff]
  %v7199 = vld [vmem:[%s4 + $0x158] sm:$0xff]
  %v7200 = vld [vmem:[%s4 + $0x160] sm:$0xff]
  %v7201 = vld [vmem:[%s4 + $0x168] sm:$0xff]
  %v7202 = vld [vmem:[%s4 + $0x170] sm:$0xff]
  %v7203 = vld [vmem:[%s4 + $0x178] sm:$0xff]
  %v7204 = vld [vmem:[%s4 + $0x180] sm:$0xff]
  %v7205 = vld [vmem:[%s4 + $0x188] sm:$0xff]
  %v7206 = vld [vmem:[%s4 + $0x190] sm:$0xff]
  %v7207 = vld [vmem:[%s4 + $0x198] sm:$0xff]
  %v7208 = vld [vmem:[%s4 + $0x1a0] sm:$0xff]
  %v7209 = vld [vmem:[%s4 + $0x1a8] sm:$0xff]
  %v7210 = vld [vmem:[%s4 + $0x1b0] sm:$0xff]
  %v7211 = vld [vmem:[%s4 + $0x1b8] sm:$0xff]
  %v7212 = vld [vmem:[%s4 + $0x1c0] sm:$0xff]
  %v7213 = vld [vmem:[%s4 + $0x1c8] sm:$0xff]
  %v7214 = vld [vmem:[%s4 + $0x1d0] sm:$0x1]
  %vm7215 = vcmask 662528
  %v7217 = vsel %vm7215, %v7150, 0
  %v7220 = vsel %vm633, %v7214, 0
  %7222 = vmatpush.msra.mxu0 %v7171
  %7223 = vmatpush.msra.mxu0 %v7170
  %7224 = vmatpush.msra.mxu0 %v7169
  %7225 = vmatpush.msra.mxu0 %v7168
  %7226 = vmatpush.msra.mxu0 %v7167
  %7227 = vmatpush.msra.mxu0 %v7166
  %7228 = vmatpush.msra.mxu0 %v7165
  %7229 = vmatpush.msra.mxu0 %v7164
  %7230 = vmatpush.msra.mxu0 %v7163
  %7231 = vmatpush.msra.mxu0 %v7162
  %7232 = vmatpush.msra.mxu0 %v7161
  %7233 = vmatpush.msra.mxu0 %v7160
  %7234 = vmatpush.msra.mxu0 %v7159
  %7235 = vmatpush.msra.mxu0 %v7158
  %7236 = vmatpush.msra.mxu0 %v7157
  %7237 = vmatpush.msra.mxu0 %v7156
  %7238 = vmatmul.f32.gmra.mxu0 %v7147
  %v7239 = vpop.f32.mrf.mxu0
  %v7240 = vadd.f32 0.0, %v7239
  %7241 = vdwg.mxu0
  %7242 = vmatpush.msra.mxu0 %v7187
  %7243 = vmatpush.msra.mxu0 %v7186
  %7244 = vmatpush.msra.mxu0 %v7185
  %7245 = vmatpush.msra.mxu0 %v7184
  %7246 = vmatpush.msra.mxu0 %v7183
  %7247 = vmatpush.msra.mxu0 %v7182
  %7248 = vmatpush.msra.mxu0 %v7181
  %7249 = vmatpush.msra.mxu0 %v7180
  %7250 = vmatpush.msra.mxu0 %v7179
  %7251 = vmatpush.msra.mxu0 %v7178
  %7252 = vmatpush.msra.mxu0 %v7177
  %7253 = vmatpush.msra.mxu0 %v7176
  %7254 = vmatpush.msra.mxu0 %v7175
  %7255 = vmatpush.msra.mxu0 %v7174
  %7256 = vmatpush.msra.mxu0 %v7173
  %7257 = vmatpush.msra.mxu0 %v7172
  %7258 = vmatmul.f32.gmra.mxu0 %v7148
  %v7259 = vpop.f32.mrf.mxu0
  %v7260 = vadd.f32 %v7240, %v7259
  %7261 = vdwg.mxu0
  %7262 = vmatpush.msra.mxu0 %v7203
  %7263 = vmatpush.msra.mxu0 %v7202
  %7264 = vmatpush.msra.mxu0 %v7201
  %7265 = vmatpush.msra.mxu0 %v7200
  %7266 = vmatpush.msra.mxu0 %v7199
  %7267 = vmatpush.msra.mxu0 %v7198
  %7268 = vmatpush.msra.mxu0 %v7197
  %7269 = vmatpush.msra.mxu0 %v7196
  %7270 = vmatpush.msra.mxu0 %v7195
  %7271 = vmatpush.msra.mxu0 %v7194
  %7272 = vmatpush.msra.mxu0 %v7193
  %7273 = vmatpush.msra.mxu0 %v7192
  %7274 = vmatpush.msra.mxu0 %v7191
  %7275 = vmatpush.msra.mxu0 %v7190
  %7276 = vmatpush.msra.mxu0 %v7189
  %7277 = vmatpush.msra.mxu0 %v7188
  %7278 = vmatmul.f32.gmra.mxu0 %v7149
  %v7279 = vpop.f32.mrf.mxu0
  %v7280 = vadd.f32 %v7260, %v7279
  %7281 = vdwg.mxu0
  %7282 = vmatpush.msra.mxu0 0.0
  %7283 = vmatpush.msra.mxu0 0.0
  %7284 = vmatpush.msra.mxu0 0.0
  %7285 = vmatpush.msra.mxu0 0.0
  %7286 = vmatpush.msra.mxu0 0.0
  %7287 = vmatpush.msra.mxu0 %v7220
  %7288 = vmatpush.msra.mxu0 %v7213
  %7289 = vmatpush.msra.mxu0 %v7212
  %7290 = vmatpush.msra.mxu0 %v7211
  %7291 = vmatpush.msra.mxu0 %v7210
  %7292 = vmatpush.msra.mxu0 %v7209
  %7293 = vmatpush.msra.mxu0 %v7208
  %7294 = vmatpush.msra.mxu0 %v7207
  %7295 = vmatpush.msra.mxu0 %v7206
  %7296 = vmatpush.msra.mxu0 %v7205
  %7297 = vmatpush.msra.mxu0 %v7204
  %7298 = vmatmul.f32.gmra.mxu0 %v7217
  %v7299 = vpop.f32.mrf.mxu0
  %v7300 = vadd.f32 %v7280, %v7299
  %7301 = vdwg.mxu0
  %7307 = vrot.lane.b32.xlu0 %v7151, 78
  %v7308 = vpop.permute.xlu0 %7307
  %7309 = vrot.lane.b32.xlu0 %v7152, 78
  %v7310 = vpop.permute.xlu0 %7309
  %7311 = vrot.lane.b32.xlu0 %v7153, 78
  %v7312 = vpop.permute.xlu0 %7311
  %7313 = vrot.lane.b32.xlu0 %v7154, 78
  %v7314 = vpop.permute.xlu0 %7313
  %7315 = vrot.lane.b32.xlu0 %v7155, 78
  %v7316 = vpop.permute.xlu0 %7315
  %vm7317 = vcmask 637952
  %v7318 = vsel %vm7317, %v7308, %v7310
  %v7319 = vsel %vm7317, %v7310, %v7312
  %v7320 = vsel %vm7317, %v7312, %v7314
  %v7321 = vsel %vm7317, %v7314, %v7316
  %v7325 = vsel %vm7215, %v7321, 0
  %7327 = vmatpush.msra.mxu0 %v7171
  %7328 = vmatpush.msra.mxu0 %v7170
  %7329 = vmatpush.msra.mxu0 %v7169
  %7330 = vmatpush.msra.mxu0 %v7168
  %7331 = vmatpush.msra.mxu0 %v7167
  %7332 = vmatpush.msra.mxu0 %v7166
  %7333 = vmatpush.msra.mxu0 %v7165
  %7334 = vmatpush.msra.mxu0 %v7164
  %7335 = vmatpush.msra.mxu0 %v7163
  %7336 = vmatpush.msra.mxu0 %v7162
  %7337 = vmatpush.msra.mxu0 %v7161
  %7338 = vmatpush.msra.mxu0 %v7160
  %7339 = vmatpush.msra.mxu0 %v7159
  %7340 = vmatpush.msra.mxu0 %v7158
  %7341 = vmatpush.msra.mxu0 %v7157
  %7342 = vmatpush.msra.mxu0 %v7156
  %7343 = vmatmul.f32.gmra.mxu0 %v7318
  %v7344 = vpop.f32.mrf.mxu0
  %v7345 = vadd.f32 0.0, %v7344
  %7346 = vdwg.mxu0
  %7347 = vmatpush.msra.mxu0 %v7187
  %7348 = vmatpush.msra.mxu0 %v7186
  %7349 = vmatpush.msra.mxu0 %v7185
  %7350 = vmatpush.msra.mxu0 %v7184
  %7351 = vmatpush.msra.mxu0 %v7183
  %7352 = vmatpush.msra.mxu0 %v7182
  %7353 = vmatpush.msra.mxu0 %v7181
  %7354 = vmatpush.msra.mxu0 %v7180
  %7355 = vmatpush.msra.mxu0 %v7179
  %7356 = vmatpush.msra.mxu0 %v7178
  %7357 = vmatpush.msra.mxu0 %v7177
  %7358 = vmatpush.msra.mxu0 %v7176
  %7359 = vmatpush.msra.mxu0 %v7175
  %7360 = vmatpush.msra.mxu0 %v7174
  %7361 = vmatpush.msra.mxu0 %v7173
  %7362 = vmatpush.msra.mxu0 %v7172
  %7363 = vmatmul.f32.gmra.mxu0 %v7319
  %v7364 = vpop.f32.mrf.mxu0
  %v7365 = vadd.f32 %v7345, %v7364
  %7366 = vdwg.mxu0
  %7367 = vmatpush.msra.mxu0 %v7203
  %7368 = vmatpush.msra.mxu0 %v7202
  %7369 = vmatpush.msra.mxu0 %v7201
  %7370 = vmatpush.msra.mxu0 %v7200
  %7371 = vmatpush.msra.mxu0 %v7199
  %7372 = vmatpush.msra.mxu0 %v7198
  %7373 = vmatpush.msra.mxu0 %v7197
  %7374 = vmatpush.msra.mxu0 %v7196
  %7375 = vmatpush.msra.mxu0 %v7195
  %7376 = vmatpush.msra.mxu0 %v7194
  %7377 = vmatpush.msra.mxu0 %v7193
  %7378 = vmatpush.msra.mxu0 %v7192
  %7379 = vmatpush.msra.mxu0 %v7191
  %7380 = vmatpush.msra.mxu0 %v7190
  %7381 = vmatpush.msra.mxu0 %v7189
  %7382 = vmatpush.msra.mxu0 %v7188
  %7383 = vmatmul.f32.gmra.mxu0 %v7320
  %v7384 = vpop.f32.mrf.mxu0
  %v7385 = vadd.f32 %v7365, %v7384
  %7386 = vdwg.mxu0
  %7387 = vmatpush.msra.mxu0 0.0
  %7388 = vmatpush.msra.mxu0 0.0
  %7389 = vmatpush.msra.mxu0 0.0
  %7390 = vmatpush.msra.mxu0 0.0
  %7391 = vmatpush.msra.mxu0 0.0
  %7392 = vmatpush.msra.mxu0 %v7220
  %7393 = vmatpush.msra.mxu0 %v7213
  %7394 = vmatpush.msra.mxu0 %v7212
  %7395 = vmatpush.msra.mxu0 %v7211
  %7396 = vmatpush.msra.mxu0 %v7210
  %7397 = vmatpush.msra.mxu0 %v7209
  %7398 = vmatpush.msra.mxu0 %v7208
  %7399 = vmatpush.msra.mxu0 %v7207
  %7400 = vmatpush.msra.mxu0 %v7206
  %7401 = vmatpush.msra.mxu0 %v7205
  %7402 = vmatpush.msra.mxu0 %v7204
  %7403 = vmatmul.f32.gmra.mxu0 %v7325
  %v7404 = vpop.f32.mrf.mxu0
  %v7405 = vadd.f32 %v7385, %v7404
  %7406 = vdwg.mxu0
  %7408 = vrot.lane.b32.xlu0 %v7405, 81
  %v7409 = vpop.permute.xlu0 %7408
  %v7411 = vsel %vm7215, %v7300, %v7409
  %7413 = vrot.lane.b32.xlu0 %v7411, 127
  %v7414 = vpop.permute.xlu0 %7413
  %7415 = vrot.lane.b32.xlu0 %v7409, 127
  %v7416 = vpop.permute.xlu0 %7415
  %v7417 = vsel %vm140, %v7414, %v7416
  %7420 = vrot.lane.b32.xlu0 %v7411, 126
  %v7421 = vpop.permute.xlu0 %7420
  %7422 = vrot.lane.b32.xlu0 %v7409, 126
  %v7423 = vpop.permute.xlu0 %7422
  %v7424 = vsel %vm208, %v7421, %v7423
  %7427 = vrot.lane.b32.xlu0 %v7411, 119
  %v7428 = vpop.permute.xlu0 %7427
  %7429 = vrot.lane.b32.xlu0 %v7409, 119
  %v7430 = vpop.permute.xlu0 %7429
  %vm7431 = vcmask 973824
  %v7432 = vsel %vm7431, %v7428, %v7430
  %7435 = vrot.lane.b32.xlu0 %v7411, 118
  %v7436 = vpop.permute.xlu0 %7435
  %7437 = vrot.lane.b32.xlu0 %v7409, 118
  %v7438 = vpop.permute.xlu0 %7437
  %vm7439 = vcmask 965632
  %v7440 = vsel %vm7439, %v7436, %v7438
  %7443 = vrot.lane.b32.xlu0 %v7411, 117
  %v7444 = vpop.permute.xlu0 %7443
  %7445 = vrot.lane.b32.xlu0 %v7409, 117
  %v7446 = vpop.permute.xlu0 %7445
  %vm7447 = vcmask 957440
  %v7448 = vsel %vm7447, %v7444, %v7446
  %7451 = vrot.lane.b32.xlu0 %v7411, 110
  %v7452 = vpop.permute.xlu0 %7451
  %7453 = vrot.lane.b32.xlu0 %v7409, 110
  %v7454 = vpop.permute.xlu0 %7453
  %vm7455 = vcmask 900096
  %v7456 = vsel %vm7455, %v7452, %v7454
  %7459 = vrot.lane.b32.xlu0 %v7411, 109
  %v7460 = vpop.permute.xlu0 %7459
  %7461 = vrot.lane.b32.xlu0 %v7409, 109
  %v7462 = vpop.permute.xlu0 %7461
  %vm7463 = vcmask 891904
  %v7464 = vsel %vm7463, %v7460, %v7462
  %7467 = vrot.lane.b32.xlu0 %v7411, 108
  %v7468 = vpop.permute.xlu0 %7467
  %7469 = vrot.lane.b32.xlu0 %v7409, 108
  %v7470 = vpop.permute.xlu0 %7469
  %vm7471 = vcmask 883712
  %v7472 = vsel %vm7471, %v7468, %v7470
  %7476 = vset.pattern.permute.xlu0 0
  %7477 = vperm.xlu0 %7476, %v58
  %v7478 = vpop.permute.xlu0 %7477
  %7481 = vset.pattern.permute.xlu0 0
  %7482 = vperm.xlu0 %7481, %v59
  %v7483 = vpop.permute.xlu0 %7482
  %v7486 = vsel %vm480, %v36, 0
  %v7489 = vsel %vm480, %v37, 0
  %7491 = vmatpush.msra.mxu0 0.0
  %7492 = vmatpush.msra.mxu0 0.0
  %7493 = vmatpush.msra.mxu0 0.0
  %7494 = vmatpush.msra.mxu0 0.0
  %7495 = vmatpush.msra.mxu0 0.0
  %7496 = vmatpush.msra.mxu0 0.0
  %7497 = vmatpush.msra.mxu0 0.0
  %7498 = vmatpush.msra.mxu0 %v7472
  %7499 = vmatpush.msra.mxu0 %v7464
  %7500 = vmatpush.msra.mxu0 %v7456
  %7501 = vmatpush.msra.mxu0 %v7448
  %7502 = vmatpush.msra.mxu0 %v7440
  %7503 = vmatpush.msra.mxu0 %v7432
  %7504 = vmatpush.msra.mxu0 %v7424
  %7505 = vmatpush.msra.mxu0 %v7417
  %7506 = vmatpush.msra.mxu0 %v7411
  %7507 = vmatmul.f32.gmra.mxu0 %v7486
  %v7508 = vpop.f32.mrf.mxu0
  %v7509 = vadd.f32 %v7478, %v7508
  %7510 = vmatmul.f32.gmra.mxu0 %v7489
  %v7511 = vpop.f32.mrf.mxu0
  %v7512 = vadd.f32 %v7483, %v7511
  %7513 = vdwg.mxu0
  %7514 = vmatpush.msra.mxu0 0.0
  %7515 = vmatpush.msra.mxu0 0.0
  %7516 = vmatpush.msra.mxu0 0.0
  %7517 = vmatpush.msra.mxu0 0.0
  %7518 = vmatpush.msra.mxu0 0.0
  %7519 = vmatpush.msra.mxu0 0.0
  %7520 = vmatpush.msra.mxu0 0.0
  %7521 = vmatpush.msra.mxu0 %v7470
  %7522 = vmatpush.msra.mxu0 %v7462
  %7523 = vmatpush.msra.mxu0 %v7454
  %7524 = vmatpush.msra.mxu0 %v7446
  %7525 = vmatpush.msra.mxu0 %v7438
  %7526 = vmatpush.msra.mxu0 %v7430
  %7527 = vmatpush.msra.mxu0 %v7423
  %7528 = vmatpush.msra.mxu0 %v7416
  %7529 = vmatpush.msra.mxu0 %v7409
  %7530 = vmatmul.f32.gmra.mxu0 %v7486
  %v7531 = vpop.f32.mrf.mxu0
  %v7532 = vadd.f32 %v7478, %v7531
  %7533 = vmatmul.f32.gmra.mxu0 %v7489
  %v7534 = vpop.f32.mrf.mxu0
  %v7535 = vadd.f32 %v7483, %v7534
  %7536 = vdwg.mxu0
  %v7537 = vmax.f32 %v7509, 0.0
  %v7538 = vmax.f32 %v7532, 0.0
  %v7539 = vmax.f32 %v7512, 0.0
  %v7540 = vmax.f32 %v7535, 0.0
  %7543 = vrot.lane.b32.xlu0 %v7537, 127
  %v7544 = vpop.permute.xlu0 %7543
  %7545 = vrot.lane.b32.xlu0 %v7539, 127
  %v7546 = vpop.permute.xlu0 %7545
  %7549 = vrot.lane.b32.xlu0 %v7537, 126
  %v7550 = vpop.permute.xlu0 %7549
  %7551 = vrot.lane.b32.xlu0 %v7539, 126
  %v7552 = vpop.permute.xlu0 %7551
  %7557 = vrot.lane.b32.xlu0 %v7537, 119
  %v7558 = vpop.permute.xlu0 %7557
  %7559 = vrot.lane.b32.xlu0 %v7538, 119
  %v7560 = vpop.permute.xlu0 %7559
  %7561 = vrot.lane.b32.xlu0 %v7539, 119
  %v7562 = vpop.permute.xlu0 %7561
  %7563 = vrot.lane.b32.xlu0 %v7540, 119
  %v7564 = vpop.permute.xlu0 %7563
  %v7565 = vsel %vm7431, %v7558, %v7560
  %v7566 = vsel %vm7431, %v7562, %v7564
  %7569 = vrot.lane.b32.xlu0 %v7537, 118
  %v7570 = vpop.permute.xlu0 %7569
  %7571 = vrot.lane.b32.xlu0 %v7538, 118
  %v7572 = vpop.permute.xlu0 %7571
  %7573 = vrot.lane.b32.xlu0 %v7539, 118
  %v7574 = vpop.permute.xlu0 %7573
  %7575 = vrot.lane.b32.xlu0 %v7540, 118
  %v7576 = vpop.permute.xlu0 %7575
  %v7577 = vsel %vm7439, %v7570, %v7572
  %v7578 = vsel %vm7439, %v7574, %v7576
  %7581 = vrot.lane.b32.xlu0 %v7537, 117
  %v7582 = vpop.permute.xlu0 %7581
  %7583 = vrot.lane.b32.xlu0 %v7538, 117
  %v7584 = vpop.permute.xlu0 %7583
  %7585 = vrot.lane.b32.xlu0 %v7539, 117
  %v7586 = vpop.permute.xlu0 %7585
  %7587 = vrot.lane.b32.xlu0 %v7540, 117
  %v7588 = vpop.permute.xlu0 %7587
  %v7589 = vsel %vm7447, %v7582, %v7584
  %v7590 = vsel %vm7447, %v7586, %v7588
  %7593 = vrot.lane.b32.xlu0 %v7537, 110
  %v7594 = vpop.permute.xlu0 %7593
  %7595 = vrot.lane.b32.xlu0 %v7538, 110
  %v7596 = vpop.permute.xlu0 %7595
  %7597 = vrot.lane.b32.xlu0 %v7539, 110
  %v7598 = vpop.permute.xlu0 %7597
  %7599 = vrot.lane.b32.xlu0 %v7540, 110
  %v7600 = vpop.permute.xlu0 %7599
  %v7601 = vsel %vm7455, %v7594, %v7596
  %v7602 = vsel %vm7455, %v7598, %v7600
  %7605 = vrot.lane.b32.xlu0 %v7537, 109
  %v7606 = vpop.permute.xlu0 %7605
  %7607 = vrot.lane.b32.xlu0 %v7538, 109
  %v7608 = vpop.permute.xlu0 %7607
  %7609 = vrot.lane.b32.xlu0 %v7539, 109
  %v7610 = vpop.permute.xlu0 %7609
  %7611 = vrot.lane.b32.xlu0 %v7540, 109
  %v7612 = vpop.permute.xlu0 %7611
  %v7613 = vsel %vm7463, %v7606, %v7608
  %v7614 = vsel %vm7463, %v7610, %v7612
  %7617 = vrot.lane.b32.xlu0 %v7537, 108
  %v7618 = vpop.permute.xlu0 %7617
  %7619 = vrot.lane.b32.xlu0 %v7538, 108
  %v7620 = vpop.permute.xlu0 %7619
  %7621 = vrot.lane.b32.xlu0 %v7539, 108
  %v7622 = vpop.permute.xlu0 %7621
  %7623 = vrot.lane.b32.xlu0 %v7540, 108
  %v7624 = vpop.permute.xlu0 %7623
  %v7625 = vsel %vm7471, %v7618, %v7620
  %v7626 = vsel %vm7471, %v7622, %v7624
  %7630 = vset.pattern.permute.xlu0 0
  %7631 = vperm.xlu0 %7630, %v60
  %v7632 = vpop.permute.xlu0 %7631
  %7635 = vset.pattern.permute.xlu0 0
  %7636 = vperm.xlu0 %7635, %v61
  %v7637 = vpop.permute.xlu0 %7636
  %v7640 = vsel %vm3164, %v39, 0
  %v7643 = vsel %vm3164, %v41, 0
  %7645 = vmatpush.msra.mxu0 %v7614
  %7646 = vmatpush.msra.mxu0 %v7613
  %7647 = vmatpush.msra.mxu0 %v7602
  %7648 = vmatpush.msra.mxu0 %v7601
  %7649 = vmatpush.msra.mxu0 %v7590
  %7650 = vmatpush.msra.mxu0 %v7589
  %7651 = vmatpush.msra.mxu0 %v7578
  %7652 = vmatpush.msra.mxu0 %v7577
  %7653 = vmatpush.msra.mxu0 %v7566
  %7654 = vmatpush.msra.mxu0 %v7565
  %7655 = vmatpush.msra.mxu0 %v7552
  %7656 = vmatpush.msra.mxu0 %v7550
  %7657 = vmatpush.msra.mxu0 %v7546
  %7658 = vmatpush.msra.mxu0 %v7544
  %7659 = vmatpush.msra.mxu0 %v7539
  %7660 = vmatpush.msra.mxu0 %v7537
  %7661 = vmatmul.f32.gmra.mxu0 %v38
  %v7662 = vpop.f32.mrf.mxu0
  %v7663 = vadd.f32 %v7632, %v7662
  %7664 = vmatmul.f32.gmra.mxu0 %v40
  %v7665 = vpop.f32.mrf.mxu0
  %v7666 = vadd.f32 %v7637, %v7665
  %7667 = vdwg.mxu0
  %7668 = vmatpush.msra.mxu0 0.0
  %7669 = vmatpush.msra.mxu0 0.0
  %7670 = vmatpush.msra.mxu0 0.0
  %7671 = vmatpush.msra.mxu0 0.0
  %7672 = vmatpush.msra.mxu0 0.0
  %7673 = vmatpush.msra.mxu0 0.0
  %7674 = vmatpush.msra.mxu0 0.0
  %7675 = vmatpush.msra.mxu0 0.0
  %7676 = vmatpush.msra.mxu0 0.0
  %7677 = vmatpush.msra.mxu0 0.0
  %7678 = vmatpush.msra.mxu0 0.0
  %7679 = vmatpush.msra.mxu0 0.0
  %7680 = vmatpush.msra.mxu0 0.0
  %7681 = vmatpush.msra.mxu0 0.0
  %7682 = vmatpush.msra.mxu0 %v7626
  %7683 = vmatpush.msra.mxu0 %v7625
  %7684 = vmatmul.f32.gmra.mxu0 %v7640
  %v7685 = vpop.f32.mrf.mxu0
  %v7686 = vadd.f32 %v7663, %v7685
  %7687 = vmatmul.f32.gmra.mxu0 %v7643
  %v7688 = vpop.f32.mrf.mxu0
  %v7689 = vadd.f32 %v7666, %v7688
  %7690 = vdwg.mxu0
  %v7691 = vmax.f32 %v7686, 0.0
  %v7692 = vmax.f32 %v7689, 0.0
  %7695 = vrot.lane.b32.xlu0 %v7691, 127
  %v7696 = vpop.permute.xlu0 %7695
  %7697 = vrot.lane.b32.xlu0 %v7692, 127
  %v7698 = vpop.permute.xlu0 %7697
  %7701 = vrot.lane.b32.xlu0 %v7691, 126
  %v7702 = vpop.permute.xlu0 %7701
  %7703 = vrot.lane.b32.xlu0 %v7692, 126
  %v7704 = vpop.permute.xlu0 %7703
  %7707 = vrot.lane.b32.xlu0 %v7691, 119
  %v7708 = vpop.permute.xlu0 %7707
  %7709 = vrot.lane.b32.xlu0 %v7692, 119
  %v7710 = vpop.permute.xlu0 %7709
  %7713 = vrot.lane.b32.xlu0 %v7691, 118
  %v7714 = vpop.permute.xlu0 %7713
  %7715 = vrot.lane.b32.xlu0 %v7692, 118
  %v7716 = vpop.permute.xlu0 %7715
  %7719 = vrot.lane.b32.xlu0 %v7691, 117
  %v7720 = vpop.permute.xlu0 %7719
  %7721 = vrot.lane.b32.xlu0 %v7692, 117
  %v7722 = vpop.permute.xlu0 %7721
  %7725 = vrot.lane.b32.xlu0 %v7691, 110
  %v7726 = vpop.permute.xlu0 %7725
  %7727 = vrot.lane.b32.xlu0 %v7692, 110
  %v7728 = vpop.permute.xlu0 %7727
  %7731 = vrot.lane.b32.xlu0 %v7691, 109
  %v7732 = vpop.permute.xlu0 %7731
  %7733 = vrot.lane.b32.xlu0 %v7692, 109
  %v7734 = vpop.permute.xlu0 %7733
  %7737 = vrot.lane.b32.xlu0 %v7691, 108
  %v7738 = vpop.permute.xlu0 %7737
  %7739 = vrot.lane.b32.xlu0 %v7692, 108
  %v7740 = vpop.permute.xlu0 %7739
  %7744 = vset.pattern.permute.xlu0 0
  %7745 = vperm.xlu0 %7744, %v62
  %v7746 = vpop.permute.xlu0 %7745
  %7749 = vset.pattern.permute.xlu0 0
  %7750 = vperm.xlu0 %7749, %v63
  %v7751 = vpop.permute.xlu0 %7750
  %7754 = vset.pattern.permute.xlu0 0
  %7755 = vperm.xlu0 %7754, %v64
  %v7756 = vpop.permute.xlu0 %7755
  %7759 = vset.pattern.permute.xlu0 0
  %7760 = vperm.xlu0 %7759, %v65
  %v7761 = vpop.permute.xlu0 %7760
  %v7764 = vsel %vm3164, %v43, 0
  %v7767 = vsel %vm3164, %v45, 0
  %v7770 = vsel %vm3164, %v47, 0
  %v7773 = vsel %vm3164, %v49, 0
  %7775 = vmatpush.msra.mxu0 %v7734
  %7776 = vmatpush.msra.mxu0 %v7732
  %7777 = vmatpush.msra.mxu0 %v7728
  %7778 = vmatpush.msra.mxu0 %v7726
  %7779 = vmatpush.msra.mxu0 %v7722
  %7780 = vmatpush.msra.mxu0 %v7720
  %7781 = vmatpush.msra.mxu0 %v7716
  %7782 = vmatpush.msra.mxu0 %v7714
  %7783 = vmatpush.msra.mxu0 %v7710
  %7784 = vmatpush.msra.mxu0 %v7708
  %7785 = vmatpush.msra.mxu0 %v7704
  %7786 = vmatpush.msra.mxu0 %v7702
  %7787 = vmatpush.msra.mxu0 %v7698
  %7788 = vmatpush.msra.mxu0 %v7696
  %7789 = vmatpush.msra.mxu0 %v7692
  %7790 = vmatpush.msra.mxu0 %v7691
  %7791 = vmatmul.f32.gmra.mxu0 %v42
  %v7792 = vpop.f32.mrf.mxu0
  %v7793 = vadd.f32 %v7746, %v7792
  %7794 = vmatmul.f32.gmra.mxu0 %v44
  %v7795 = vpop.f32.mrf.mxu0
  %v7796 = vadd.f32 %v7751, %v7795
  %7797 = vmatmul.f32.gmra.mxu0 %v46
  %v7798 = vpop.f32.mrf.mxu0
  %v7799 = vadd.f32 %v7756, %v7798
  %7800 = vmatmul.f32.gmra.mxu0 %v48
  %v7801 = vpop.f32.mrf.mxu0
  %v7802 = vadd.f32 %v7761, %v7801
  %7803 = vdwg.mxu0
  %7804 = vmatpush.msra.mxu0 0.0
  %7805 = vmatpush.msra.mxu0 0.0
  %7806 = vmatpush.msra.mxu0 0.0
  %7807 = vmatpush.msra.mxu0 0.0
  %7808 = vmatpush.msra.mxu0 0.0
  %7809 = vmatpush.msra.mxu0 0.0
  %7810 = vmatpush.msra.mxu0 0.0
  %7811 = vmatpush.msra.mxu0 0.0
  %7812 = vmatpush.msra.mxu0 0.0
  %7813 = vmatpush.msra.mxu0 0.0
  %7814 = vmatpush.msra.mxu0 0.0
  %7815 = vmatpush.msra.mxu0 0.0
  %7816 = vmatpush.msra.mxu0 0.0
  %7817 = vmatpush.msra.mxu0 0.0
  %7818 = vmatpush.msra.mxu0 %v7740
  %7819 = vmatpush.msra.mxu0 %v7738
  %7820 = vmatmul.f32.gmra.mxu0 %v7764
  %v7821 = vpop.f32.mrf.mxu0
  %v7822 = vadd.f32 %v7793, %v7821
  %7823 = vmatmul.f32.gmra.mxu0 %v7767
  %v7824 = vpop.f32.mrf.mxu0
  %v7825 = vadd.f32 %v7796, %v7824
  %7826 = vmatmul.f32.gmra.mxu0 %v7770
  %v7827 = vpop.f32.mrf.mxu0
  %v7828 = vadd.f32 %v7799, %v7827
  %7829 = vmatmul.f32.gmra.mxu0 %v7773
  %v7830 = vpop.f32.mrf.mxu0
  %v7831 = vadd.f32 %v7802, %v7830
  %7832 = vdwg.mxu0
  %v7833 = vmax.f32 %v7822, 0.0
  %v7834 = vmax.f32 %v7825, 0.0
  %v7835 = vmax.f32 %v7828, 0.0
  %v7836 = vmax.f32 %v7831, 0.0
  %v7837 = vld [vmem:[%s5] sm:$0xff]
  %v7838 = vld [vmem:[%s5 + $0x8] sm:$0xff]
  %v7839 = vld [vmem:[%s5 + $0x10] sm:$0xff]
  %v7840 = vld [vmem:[%s5 + $0x18] sm:$0xff]
  %v7841 = vld [vmem:[%s5 + $0x20] sm:$0xff]
  %v7842 = vld [vmem:[%s5 + $0x28] sm:$0xff]
  %v7843 = vld [vmem:[%s5 + $0x30] sm:$0xff]
  %v7844 = vld [vmem:[%s5 + $0x38] sm:$0xff]
  %v7845 = vld [vmem:[%s5 + $0x40] sm:$0xff]
  %v7846 = vld [vmem:[%s5 + $0x48] sm:$0xff]
  %v7847 = vld [vmem:[%s5 + $0x50] sm:$0xff]
  %v7848 = vld [vmem:[%s5 + $0x58] sm:$0xff]
  %v7849 = vld [vmem:[%s5 + $0x60] sm:$0x3f]
  %vm7850 = vcmask 834560
  %v7852 = vsel %vm7850, %v7833, 0
  %v7855 = vsel %vm7850, %v7834, 0
  %v7858 = vsel %vm7850, %v7835, 0
  %v7861 = vsel %vm7850, %v7836, 0
  %v7864 = vsel %vm723, %v7849, 0
  %7866 = vmatpush.msra.mxu0 0.0
  %7867 = vmatpush.msra.mxu0 0.0
  %7868 = vmatpush.msra.mxu0 0.0
  %7869 = vmatpush.msra.mxu0 %v7864
  %7870 = vmatpush.msra.mxu0 %v7848
  %7871 = vmatpush.msra.mxu0 %v7847
  %7872 = vmatpush.msra.mxu0 %v7846
  %7873 = vmatpush.msra.mxu0 %v7845
  %7874 = vmatpush.msra.mxu0 %v7844
  %7875 = vmatpush.msra.mxu0 %v7843
  %7876 = vmatpush.msra.mxu0 %v7842
  %7877 = vmatpush.msra.mxu0 %v7841
  %7878 = vmatpush.msra.mxu0 %v7840
  %7879 = vmatpush.msra.mxu0 %v7839
  %7880 = vmatpush.msra.mxu0 %v7838
  %7881 = vmatpush.msra.mxu0 %v7837
  %7882 = vmatmul.f32.gmra.mxu0 %v7852
  %v7883 = vpop.f32.mrf.mxu0
  %v7884 = vadd.f32 0.0, %v7883
  %7885 = vmatmul.f32.gmra.mxu0 %v7855
  %v7886 = vpop.f32.mrf.mxu0
  %v7887 = vadd.f32 0.0, %v7886
  %7888 = vmatmul.f32.gmra.mxu0 %v7858
  %v7889 = vpop.f32.mrf.mxu0
  %v7890 = vadd.f32 0.0, %v7889
  %7891 = vmatmul.f32.gmra.mxu0 %v7861
  %v7892 = vpop.f32.mrf.mxu0
  %v7893 = vadd.f32 0.0, %v7892
  %7894 = vdwg.mxu0
  %v7895 = vld [vmem:[%s3] sm:$0xff]
  %v7896 = vld [vmem:[%s3 + $0x8] sm:$0x3]
  %vm7897 = vcmask 261120
  %v7899 = vsel %vm7897, %v7895, 0
  %v7902 = vsel %vm7897, %v7896, 0
  %7904 = vmatpush.msra.mxu0 0.0
  %7905 = vmatpush.msra.mxu0 0.0
  %7906 = vmatpush.msra.mxu0 0.0
  %7907 = vmatpush.msra.mxu0 0.0
  %7908 = vmatpush.msra.mxu0 0.0
  %7909 = vmatpush.msra.mxu0 0.0
  %7910 = vmatpush.msra.mxu0 0.0
  %7911 = vmatpush.msra.mxu0 0.0
  %7912 = vmatpush.msra.mxu0 0.0
  %7913 = vmatpush.msra.mxu0 0.0
  %7914 = vmatpush.msra.mxu0 0.0
  %7915 = vmatpush.msra.mxu0 0.0
  %7916 = vmatpush.msra.mxu0 %v7893
  %7917 = vmatpush.msra.mxu0 %v7890
  %7918 = vmatpush.msra.mxu0 %v7887
  %7919 = vmatpush.msra.mxu0 %v7884
  %7920 = vmatmul.f32.gmra.mxu0 %v7899
  %v7921 = vpop.f32.mrf.mxu0
  %v7922 = vadd.f32 0.0, %v7921
  %7923 = vmatmul.f32.gmra.mxu0 %v7902
  %v7924 = vpop.f32.mrf.mxu0
  %v7925 = vadd.f32 0.0, %v7924
  %7926 = vdwg.mxu0
  %vm7927 = vcmask 15360
  %v7928 = vsel %vm7927, %v7922, -inf
  %vm7929 = vcmask 9216
  %v7930 = vsel %vm7929, %v7925, -inf
  %v7931 = vmax.f32 %v7928, %v7930
  %v7932 = vrot.slane %v7931, 4
  %v7933 = vmax.f32 %v7931, %v7932
  %v7934 = vrot.slane %v7933, 2
  %v7935 = vmax.f32 %v7933, %v7934
  %v7936 = vrot.slane %v7935, 1
  %v7937 = vmax.f32 %v7935, %v7936
  %v7938 = vsub.f32 %v7922, %v7937
  %v7939 = vsub.f32 %v7925, %v7937
  %v7940 = vmul.f32 %v7938, 1.442695
  %v7941 = vpow.pop %v7940
  %v7942 = vmul.f32 %v7939, 1.442695
  %v7943 = vpow.pop %v7942
  %v7944 = vsel %vm7927, %v7941, 0.0
  %v7945 = vsel %vm7929, %v7943, 0.0
  %v7946 = vadd.f32 %v7944, %v7945
  %v7947 = vrot.slane %v7946, 4
  %v7948 = vadd.f32 %v7946, %v7947
  %v7949 = vrot.slane %v7948, 2
  %v7950 = vadd.f32 %v7948, %v7949
  %v7951 = vrot.slane %v7950, 1
  %v7952 = vadd.f32 %v7950, %v7951
  %v7953 = vlog2.pop %v7952
  %v7954 = vmul.f32 %v7953, 0.6931472
  %v7955 = vsub.f32 %v7938, %v7954
  %v7956 = vsub.f32 %v7939, %v7954
  %7957 = vst.msk [vmem:[%s6] sm:$0xff] %vm7927, %v7955
  %7958 = vst.msk [vmem:[%s6 + $0x8] sm:$0x3] %vm7929, %v7956
  // Predicated region
  $region26: #{net_forward.1} parent=0 // pred_check
    _
  $region27: #{net_forward.1} parent=0 // pred_check_branch
    %7960 = sbr.rel (0) target = $region29
  $region28: #{net_forward.1} parent=0 // pred_region
    _
  $region29: #{net_forward.1} parent=0 // pred_fallthru
    _
  // Predicated region
  $region30: #{net_forward.1} parent=0 // pred_check
    _
  $region31: #{net_forward.1} parent=0 // pred_check_branch
    %7962 = sbr.rel (0) target = $region33
  $region32: #{net_forward.1} parent=0 // pred_region
    _
  $region33: #{net_forward.1} parent=0 // pred_fallthru
    _

</llo_original>
